<compile_context>
chip_gen: v5e
topology: v5e:2x2
jax: 0.10.0
libtpu: 0.0.40
codegen_flags: <defaults>
</compile_context>

<pallas_src>
import functools

import jax
import jax.numpy as jnp
from jax.experimental import pallas as pl
from jax.experimental.pallas import tpu as pltpu

STEM_CH = 40        # EfficientNet-B3 stem output channels
STEM_CH_PAD = 128   # padded to 128 lanes (zero scale/shift + zero head rows -> inert)
HEAD_CH = 1536      # EfficientNet-B3 head (1x1 conv) output channels
FC_HIDDEN = 512


def _round_up(x, m):
    return ((x + m - 1) // m) * m


# ----------------------------------------------------------------------------
# im2col for the stem Conv2d(3, 40, kernel=3, stride=2, padding=1)
# (plain-JAX glue; k-index order = c*9 + ky*3 + kx, matching the weight fold)
# TODO(synk): at real resolutions move this gather into the kernel (grid axes
# over ky,kx with per-tap weight indexing) instead of materializing 9x patches.
# ----------------------------------------------------------------------------
def _im2col_stride2(x):
    N, C, H, W = x.shape
    Ho, Wo = H // 2, W // 2
    xp = jnp.pad(x, ((0, 0), (0, 0), (1, 1), (1, 1)))
    cols = []
    for ky in range(3):
        for kx in range(3):
            cols.append(xp[:, :, ky:ky + 2 * Ho - 1:2, kx:kx + 2 * Wo - 1:2])
    patches = jnp.stack(cols, axis=0)            # [9, N, C, Ho, Wo]
    patches = patches.transpose(1, 3, 4, 2, 0)   # [N, Ho, Wo, C, 9]
    return patches.reshape(N, Ho * Wo, C * 9)    # [N, HW, 27]


# ----------------------------------------------------------------------------
# Fused kernel:
#   stem(im2col matmul)+BN+SiLU -> head(1x1 matmul)+BN+SiLU -> masked GAP
#   -> (on last spatial tile) Linear -> BN1d -> ReLU -> Linear  (classifier)
# grid = (batch, spatial tiles); per-batch channel sums live in VMEM scratch.
# ----------------------------------------------------------------------------
def _fused_kernel(p_ref, w0_ref, s0_ref, t0_ref,
                  w1_ref, s1_ref, t1_ref,
                  fc1w_ref, fc1b_ref, bns_ref, bnt_ref,
                  fc2w_ref, fc2b_ref,
                  out_ref, acc_ref, *, hw, hw_pad, t_hw, bf16_epilogue):
    j = pl.program_id(1)
    n_sp = pl.num_programs(1)

    @pl.when(j == 0)
    def _init():
        acc_ref[...] = jnp.zeros_like(acc_ref)

    # stem 3x3 conv (im2col matmul, bf16 x bf16 -> f32) + folded BN + SiLU
    p = p_ref[0]                                               # [t_hw, 27]
    h = jnp.dot(p, w0_ref[...], preferred_element_type=jnp.float32)
    h = h * s0_ref[...] + t0_ref[...]
    h = h * jax.nn.sigmoid(h)                                  # SiLU

    # head 1x1 conv (channel matmul) + folded BN + SiLU
    y = jnp.dot(h.astype(w1_ref.dtype), w1_ref[...],
                preferred_element_type=jnp.float32)            # [t_hw, 1536]
    if bf16_epilogue:
        # bf16 epilogue: ~2x VPU/EUP throughput on v6e/v7x; GAP accum stays f32
        yb = y.astype(jnp.bfloat16)
        yb = yb * s1_ref[...].astype(jnp.bfloat16) + t1_ref[...].astype(jnp.bfloat16)
        y = (yb * jax.nn.sigmoid(yb)).astype(jnp.float32)
    else:
        y = y * s1_ref[...] + t1_ref[...]
        y = y * jax.nn.sigmoid(y)

    # mask spatially padded rows (traced only if padding exists; padded patch
    # rows are NOT inert through BN-shift + SiLU)
    if hw_pad != hw:
        row = jax.lax.broadcasted_iota(jnp.int32, (t_hw, 1), 0) + j * t_hw
        y = jnp.where(row < hw, y, 0.0)

    # GAP: per-sublane partial sums (vreg adds only; cross-sublane reduce and
    # the 1-row store are deferred to the finalize branch)
    acc_ref[...] += y.reshape(t_hw // 8, 8, -1).sum(axis=0)

    @pl.when(j == n_sp - 1)
    def _finalize():
        feat = jnp.sum(acc_ref[...], axis=0, keepdims=True) * (1.0 / hw)  # [1,1536]
        # classifier head (Dropout = identity in eval)
        hc = jnp.dot(feat.astype(fc1w_ref.dtype), fc1w_ref[...],
                     preferred_element_type=jnp.float32) + fc1b_ref[...]
        hc = hc * bns_ref[...] + bnt_ref[...]                  # BatchNorm1d (eval)
        hc = jnp.maximum(hc, 0.0)                              # ReLU
        logits = jnp.dot(hc.astype(fc2w_ref.dtype), fc2w_ref[...],
                         preferred_element_type=jnp.float32) + fc2b_ref[...]
        out_ref[0] = logits.astype(out_ref.dtype)


def fused_forward(patches, pp, *, t_hw=None, bf16_epilogue=True):
    N, HW, Kp = patches.shape
    Cs = pp["stem_w"].shape[1]      # 128 (padded stem channels)
    Ch = pp["head_w"].shape[1]      # 1536
    Fh = pp["fc1_w"].shape[1]       # 512
    Nc = pp["fc2_w"].shape[1]       # num_classes

    # spatial tile: cap 512 (fits scoped VMEM on every generation), multiple
    # of 16 (bf16 sublanes); the spatial axis is padded to a tile multiple.
    if t_hw is None:
        t_hw = min(512, _round_up(HW, 16))
    t_hw = max(16, _round_up(int(t_hw), 16))
    n_sp = -(-HW // t_hw)
    HW_pad = n_sp * t_hw
    if HW_pad != HW:
        patches = jnp.pad(patches, ((0, 0), (0, HW_pad - HW), (0, 0)))

    kernel = functools.partial(_fused_kernel, hw=HW, hw_pad=HW_pad, t_hw=t_hw,
                               bf16_epilogue=bf16_epilogue)
    const = lambda b, j: (0, 0)   # constant-index (weight) blocks
    # TODO(synk): mark the constant-index weight blocks single-buffered once
    # pl.Buffered(1) is confirmed on the target jax version (VMEM-only win).
    logits = pl.pallas_call(
        kernel,
        out_shape=jax.ShapeDtypeStruct((N, 1, Nc), jnp.float32),
        grid=(N, n_sp),
        in_specs=[
            pl.BlockSpec((1, t_hw, Kp), lambda b, j: (b, j, 0)),   # patches tile
            pl.BlockSpec((Kp, Cs), const),                         # stem W (padded)
            pl.BlockSpec((1, Cs), const),                          # stem BN scale
            pl.BlockSpec((1, Cs), const),                          # stem BN shift
            pl.BlockSpec((Cs, Ch), const),                         # head W (padded K)
            pl.BlockSpec((1, Ch), const),                          # head BN scale
            pl.BlockSpec((1, Ch), const),                          # head BN shift
            pl.BlockSpec((Ch, Fh), const),                         # fc1 W
            pl.BlockSpec((1, Fh), const),                          # fc1 b
            pl.BlockSpec((1, Fh), const),                          # BN1d scale
            pl.BlockSpec((1, Fh), const),                          # BN1d shift
            pl.BlockSpec((Fh, Nc), const),                         # fc2 W
            pl.BlockSpec((1, Nc), const),                          # fc2 b
        ],
        out_specs=pl.BlockSpec((1, 1, Nc), lambda b, j: (b, 0, 0)),
        scratch_shapes=[pltpu.VMEM((8, Ch), jnp.float32)],
        compiler_params=pltpu.CompilerParams(
            dimension_semantics=("parallel", "arbitrary"),
            vmem_limit_bytes=40 * 1024 * 1024),
    )(patches, pp["stem_w"], pp["stem_scale"], pp["stem_shift"],
      pp["head_w"], pp["head_scale"], pp["head_shift"],
      pp["fc1_w"], pp["fc1_b"], pp["bn_scale"], pp["bn_shift"],
      pp["fc2_w"], pp["fc2_b"])
    return logits.reshape(N, Nc)


# ----------------------------------------------------------------------------
# Model forward (glue: NCHW -> im2col; compute: the single fused Pallas kernel)
# ----------------------------------------------------------------------------
def chess_piece_model_forward(x, pp, *, t_hw=None, bf16_epilogue=True):
    # TODO(synk): the 26 MBConv blocks of EfficientNet-B3 (and the ImageNet
    # pretrained weights) are not reimplemented; the stem feeds the head 1x1
    # conv directly, preserving the stem(40ch) / head(1536ch) interfaces.
    patches = _im2col_stride2(x).astype(jnp.bfloat16)          # [N, HW, 27]
    return fused_forward(patches, pp, t_hw=t_hw, bf16_epilogue=bf16_epilogue)


# ----------------------------------------------------------------------------
# Deterministic synthetic parameters (shapes from the module definition)
# ----------------------------------------------------------------------------
def init_params(key, num_classes=14):
    eps = 1e-5
    ks = jax.random.split(key, 6)
    inv = 1.0 / jnp.sqrt(1.0 + eps)   # gamma=1, beta=0, mean=0, var=1 folded

    # stem conv weight: torch [40, 3, 3, 3] -> [27, 40]
    stem_w = (jax.random.normal(ks[0], (STEM_CH, 3, 3, 3), jnp.float32) * 0.05)
    stem_w = stem_w.reshape(STEM_CH, 27).T
    # head 1x1 conv weight: torch [1536, 40, 1, 1] -> [40, 1536]
    head_w = (jax.random.normal(ks[1], (HEAD_CH, STEM_CH), jnp.float32) * 0.05).T
    # classifier
    fc1_w = jax.random.normal(ks[2], (HEAD_CH, FC_HIDDEN), jnp.float32) * 0.02
    fc1_b = jax.random.normal(ks[3], (FC_HIDDEN,), jnp.float32) * 0.02
    fc2_w = jax.random.normal(ks[4], (FC_HIDDEN, num_classes), jnp.float32) * 0.02
    fc2_b = jax.random.normal(ks[5], (num_classes,), jnp.float32) * 0.02

    return dict(
        stem_w=stem_w,
        stem_scale=jnp.full((STEM_CH,), inv, jnp.float32),
        stem_shift=jnp.zeros((STEM_CH,), jnp.float32),
        head_w=head_w,
        head_scale=jnp.full((HEAD_CH,), inv, jnp.float32),
        head_shift=jnp.zeros((HEAD_CH,), jnp.float32),
        fc1_w=fc1_w, fc1_b=fc1_b,
        bn_scale=jnp.full((FC_HIDDEN,), inv, jnp.float32),
        bn_shift=jnp.zeros((FC_HIDDEN,), jnp.float32),
        fc2_w=fc2_w, fc2_b=fc2_b,
    )


def pack_params(p):
    """Pad stem channels 40->128 with ZERO scale/shift (lane-dense and inert:
    padded activations are exactly 0 and padded head_w rows are 0), cast the
    matmul operands to bf16; BN scale/shift and biases stay f32."""
    stem_w = jnp.zeros((27, STEM_CH_PAD), jnp.float32).at[:, :STEM_CH].set(p["stem_w"])
    stem_scale = jnp.zeros((STEM_CH_PAD,), jnp.float32).at[:STEM_CH].set(p["stem_scale"])
    stem_shift = jnp.zeros((STEM_CH_PAD,), jnp.float32).at[:STEM_CH].set(p["stem_shift"])
    head_w = jnp.zeros((STEM_CH_PAD, HEAD_CH), jnp.float32).at[:STEM_CH, :].set(p["head_w"])
    return dict(
        stem_w=stem_w.astype(jnp.bfloat16),
        stem_scale=stem_scale.reshape(1, -1),
        stem_shift=stem_shift.reshape(1, -1),
        head_w=head_w.astype(jnp.bfloat16),
        head_scale=p["head_scale"].reshape(1, -1),
        head_shift=p["head_shift"].reshape(1, -1),
        fc1_w=p["fc1_w"].astype(jnp.bfloat16),
        fc1_b=p["fc1_b"].reshape(1, -1),
        bn_scale=p["bn_scale"].reshape(1, -1),
        bn_shift=p["bn_shift"].reshape(1, -1),
        fc2_w=p["fc2_w"].astype(jnp.bfloat16),
        fc2_b=p["fc2_b"].reshape(1, -1),
    )


# ----------------------------------------------------------------------------
# Pure-JAX f32 reference (same math, no Pallas, no bf16) for validation
# ----------------------------------------------------------------------------
def reference_forward(x, params):
    N = x.shape[0]
    patches = _im2col_stride2(x)                              # [N, HW, 27]
    stem = patches.reshape(-1, patches.shape[-1]) @ params["stem_w"]
    stem = stem * params["stem_scale"] + params["stem_shift"]
    stem = stem * jax.nn.sigmoid(stem)
    head = stem @ params["head_w"]
    head = head * params["head_scale"] + params["head_shift"]
    head = head * jax.nn.sigmoid(head)
    feat = head.reshape(N, -1, head.shape[-1]).mean(axis=1)
    h = feat @ params["fc1_w"] + params["fc1_b"]
    h = h * params["bn_scale"] + params["bn_shift"]
    h = jnp.maximum(h, 0.0)
    return h @ params["fc2_w"] + params["fc2_b"]


if __name__ == "__main__":
    key = jax.random.PRNGKey(0)
    kx, kp = jax.random.split(key)
    x = jax.random.normal(kx, (2, 3, 16, 16), jnp.float32)    # NCHW like torch
    params = init_params(kp, num_classes=14)
    packed = pack_params(params)

    fwd = jax.jit(chess_piece_model_forward,
                  static_argnames=("t_hw", "bf16_epilogue"))
    ref = reference_forward(x, params)

    # (a) default tiling (single spatial tile), bf16 head epilogue (v6e/v7x)
    logits = jax.block_until_ready(fwd(x, packed))
    assert logits.shape == (2, 14) and logits.dtype == jnp.float32
    assert bool(jnp.all(jnp.isfinite(logits)))
    assert float(jnp.max(jnp.abs(logits - ref))) < 5e-2, "mismatch vs f32 reference"

    # (b) t_hw=48 -> 2 spatial tiles with a padded+masked last tile, f32
    #     epilogue (v5e configuration); exercises the cdiv grid + masking path
    logits_b = jax.block_until_ready(fwd(x, packed, t_hw=48, bf16_epilogue=False))
    assert bool(jnp.all(jnp.isfinite(logits_b)))
    assert float(jnp.max(jnp.abs(logits_b - ref))) < 5e-2, "mismatch (padded path)"

    print("KERNEL_OK")
</pallas_src>

<mosaic_0001>
module attributes {stable_mosaic.version = 11 : i64} {
  func.func @_fused_kernel(%arg0: i32, %arg1: i32, %arg2: memref<1x64x27xbf16, #tpu.memory_space<vmem>>, %arg3: memref<27x128xbf16, #tpu.memory_space<vmem>>, %arg4: memref<1x128xf32, #tpu.memory_space<vmem>>, %arg5: memref<1x128xf32, #tpu.memory_space<vmem>>, %arg6: memref<128x1536xbf16, #tpu.memory_space<vmem>>, %arg7: memref<1x1536xf32, #tpu.memory_space<vmem>>, %arg8: memref<1x1536xf32, #tpu.memory_space<vmem>>, %arg9: memref<1536x512xbf16, #tpu.memory_space<vmem>>, %arg10: memref<1x512xf32, #tpu.memory_space<vmem>>, %arg11: memref<1x512xf32, #tpu.memory_space<vmem>>, %arg12: memref<1x512xf32, #tpu.memory_space<vmem>>, %arg13: memref<512x14xbf16, #tpu.memory_space<vmem>>, %arg14: memref<1x14xf32, #tpu.memory_space<vmem>>, %arg15: memref<1x1x14xf32, #tpu.memory_space<vmem>>, %arg16: memref<8x1536xf32, #tpu.memory_space<vmem>>) attributes {dimension_semantics = [#tpu.dimension_semantics<parallel>, #tpu.dimension_semantics<arbitrary>], iteration_bounds = array<i64: 2, 1>, scalar_prefetch = 0 : i64, scratch_operands = 1 : i64, tpu.core_type = #tpu.core_type<tc>, window_params = [{transform_indices = @transform_0, window_bounds = array<i64: 1, 64, 27>}, {pipeline_mode = #tpu.pipeline_mode<synchronous>, transform_indices = @transform_1, window_bounds = array<i64: 27, 128>}, {pipeline_mode = #tpu.pipeline_mode<synchronous>, transform_indices = @transform_2, window_bounds = array<i64: 1, 128>}, {pipeline_mode = #tpu.pipeline_mode<synchronous>, transform_indices = @transform_3, window_bounds = array<i64: 1, 128>}, {pipeline_mode = #tpu.pipeline_mode<synchronous>, transform_indices = @transform_4, window_bounds = array<i64: 128, 1536>}, {pipeline_mode = #tpu.pipeline_mode<synchronous>, transform_indices = @transform_5, window_bounds = array<i64: 1, 1536>}, {pipeline_mode = #tpu.pipeline_mode<synchronous>, transform_indices = @transform_6, window_bounds = array<i64: 1, 1536>}, {pipeline_mode = #tpu.pipeline_mode<synchronous>, transform_indices = @transform_7, window_bounds = array<i64: 1536, 512>}, {pipeline_mode = #tpu.pipeline_mode<synchronous>, transform_indices = @transform_8, window_bounds = array<i64: 1, 512>}, {pipeline_mode = #tpu.pipeline_mode<synchronous>, transform_indices = @transform_9, window_bounds = array<i64: 1, 512>}, {pipeline_mode = #tpu.pipeline_mode<synchronous>, transform_indices = @transform_10, window_bounds = array<i64: 1, 512>}, {pipeline_mode = #tpu.pipeline_mode<synchronous>, transform_indices = @transform_11, window_bounds = array<i64: 512, 14>}, {pipeline_mode = #tpu.pipeline_mode<synchronous>, transform_indices = @transform_12, window_bounds = array<i64: 1, 14>}, {transform_indices = @transform_13, window_bounds = array<i64: 1, 1, 14>}]} {
    %c0_i32 = arith.constant 0 : i32
    %0 = arith.cmpi eq, %arg1, %c0_i32 : i32
    %1 = arith.extui %0 : i1 to i32
    %c0_i32_0 = arith.constant 0 : i32
    %2 = arith.cmpi ne, %1, %c0_i32_0 : i32
    scf.if %2 {
      %cst_25 = arith.constant 0.000000e+00 : f32
      %46 = vector.broadcast %cst_25 : f32 to vector<8x1536xf32>
      %c0_26 = arith.constant 0 : index
      %c0_27 = arith.constant 0 : index
      %47 = vector.load %arg16[%c0_26, %c0_27] : memref<8x1536xf32, #tpu.memory_space<vmem>>, vector<8x1536xf32>
      tpu.vector_store %arg16[%c0_26, %c0_27], %46 {strides = array<i32>} : memref<8x1536xf32, #tpu.memory_space<vmem>>, vector<8x1536xf32>,
    } else {
    }
    %c0 = arith.constant 0 : index
    %c0_1 = arith.constant 0 : index
    %c0_2 = arith.constant 0 : index
    %3 = vector.load %arg2[%c0, %c0_1, %c0_2] : memref<1x64x27xbf16, #tpu.memory_space<vmem>>, vector<1x64x27xbf16>
    %4 = vector.shape_cast %3 : vector<1x64x27xbf16> to vector<64x27xbf16>
    %c0_3 = arith.constant 0 : index
    %c0_4 = arith.constant 0 : index
    %5 = vector.load %arg3[%c0_3, %c0_4] : memref<27x128xbf16, #tpu.memory_space<vmem>>, vector<27x128xbf16>
    %cst = arith.constant dense<0.000000e+00> : vector<64x128xf32>
    %6 = tpu.matmul %4, %5, %cst {dimension_numbers = #tpu.dot_dimension_numbers<[1], [0], [0], [1], [0, 0, 1, 1], [], []>} : vector<64x27xbf16>, vector<27x128xbf16>, vector<64x128xf32> -> vector<64x128xf32>
    %c0_5 = arith.constant 0 : index
    %c0_6 = arith.constant 0 : index
    %7 = vector.load %arg4[%c0_5, %c0_6] : memref<1x128xf32, #tpu.memory_space<vmem>>, vector<1x128xf32>
    %8 = vector.broadcast %7 : vector<1x128xf32> to vector<64x128xf32>
    %9 = arith.mulf %6, %8 : vector<64x128xf32>
    %c0_7 = arith.constant 0 : index
    %c0_8 = arith.constant 0 : index
    %10 = vector.load %arg5[%c0_7, %c0_8] : memref<1x128xf32, #tpu.memory_space<vmem>>, vector<1x128xf32>
    %11 = vector.broadcast %10 : vector<1x128xf32> to vector<64x128xf32>
    %12 = arith.addf %9, %11 : vector<64x128xf32>
    %13 = arith.negf %12 : vector<64x128xf32>
    %14 = math.exp %13 : vector<64x128xf32>
    %cst_9 = arith.constant 1.000000e+00 : f32
    %15 = vector.broadcast %cst_9 : f32 to vector<64x128xf32>
    %16 = arith.addf %15, %14 : vector<64x128xf32>
    %17 = arith.divf %15, %16 : vector<64x128xf32>
    %18 = arith.mulf %12, %17 : vector<64x128xf32>
    %19 = arith.truncf %18 : vector<64x128xf32> to vector<64x128xbf16>
    %c0_10 = arith.constant 0 : index
    %c0_11 = arith.constant 0 : index
    %20 = vector.load %arg6[%c0_10, %c0_11] : memref<128x1536xbf16, #tpu.memory_space<vmem>>, vector<128x1536xbf16>
    %cst_12 = arith.constant dense<0.000000e+00> : vector<64x1536xf32>
    %21 = tpu.matmul %19, %20, %cst_12 {dimension_numbers = #tpu.dot_dimension_numbers<[1], [0], [0], [1], [0, 0, 1, 1], [], []>} : vector<64x128xbf16>, vector<128x1536xbf16>, vector<64x1536xf32> -> vector<64x1536xf32>
    %22 = arith.truncf %21 : vector<64x1536xf32> to vector<64x1536xbf16>
    %c0_13 = arith.constant 0 : index
    %c0_14 = arith.constant 0 : index
    %23 = vector.load %arg7[%c0_13, %c0_14] : memref<1x1536xf32, #tpu.memory_space<vmem>>, vector<1x1536xf32>
    %24 = arith.truncf %23 : vector<1x1536xf32> to vector<1x1536xbf16>
    %25 = vector.broadcast %24 : vector<1x1536xbf16> to vector<64x1536xbf16>
    %26 = arith.mulf %22, %25 : vector<64x1536xbf16>
    %c0_15 = arith.constant 0 : index
    %c0_16 = arith.constant 0 : index
    %27 = vector.load %arg8[%c0_15, %c0_16] : memref<1x1536xf32, #tpu.memory_space<vmem>>, vector<1x1536xf32>
    %28 = arith.truncf %27 : vector<1x1536xf32> to vector<1x1536xbf16>
    %29 = vector.broadcast %28 : vector<1x1536xbf16> to vector<64x1536xbf16>
    %30 = arith.addf %26, %29 : vector<64x1536xbf16>
    %31 = arith.negf %30 : vector<64x1536xbf16>
    %32 = math.exp %31 : vector<64x1536xbf16>
    %cst_17 = arith.constant 1.000000e+00 : bf16
    %33 = vector.broadcast %cst_17 : bf16 to vector<64x1536xbf16>
    %34 = arith.addf %33, %32 : vector<64x1536xbf16>
    %35 = arith.divf %33, %34 : vector<64x1536xbf16>
    %36 = arith.mulf %30, %35 : vector<64x1536xbf16>
    %37 = arith.extf %36 : vector<64x1536xbf16> to vector<64x1536xf32>
    %c0_18 = arith.constant 0 : index
    %c0_19 = arith.constant 0 : index
    %38 = vector.load %arg16[%c0_18, %c0_19] : memref<8x1536xf32, #tpu.memory_space<vmem>>, vector<8x1536xf32>
    %39 = vector.shape_cast %37 : vector<64x1536xf32> to vector<8x8x1536xf32>
    %cst_20 = arith.constant dense<0.000000e+00> : vector<8x1536xf32>
    %40 = vector.multi_reduction <add>, %39, %cst_20 [0] : vector<8x8x1536xf32> to vector<8x1536xf32>
    %41 = arith.addf %38, %40 : vector<8x1536xf32>
    %c0_21 = arith.constant 0 : index
    %c0_22 = arith.constant 0 : index
    %42 = vector.load %arg16[%c0_21, %c0_22] : memref<8x1536xf32, #tpu.memory_space<vmem>>, vector<8x1536xf32>
    tpu.vector_store %arg16[%c0_21, %c0_22], %41 {strides = array<i32>} : memref<8x1536xf32, #tpu.memory_space<vmem>>, vector<8x1536xf32>,
    %c0_i32_23 = arith.constant 0 : i32
    %43 = arith.cmpi eq, %arg1, %c0_i32_23 : i32
    %44 = arith.extui %43 : i1 to i32
    %c0_i32_24 = arith.constant 0 : i32
    %45 = arith.cmpi ne, %44, %c0_i32_24 : i32
    scf.if %45 {
      %c0_25 = arith.constant 0 : index
      %c0_26 = arith.constant 0 : index
      %46 = vector.load %arg16[%c0_25, %c0_26] : memref<8x1536xf32, #tpu.memory_space<vmem>>, vector<8x1536xf32>
      %cst_27 = arith.constant dense<0.000000e+00> : vector<1536xf32>
      %47 = vector.multi_reduction <add>, %46, %cst_27 [0] : vector<8x1536xf32> to vector<1536xf32>
      %48 = vector.shape_cast %47 : vector<1536xf32> to vector<1x1536xf32>
      %cst_28 = arith.constant 1.562500e-02 : f32
      %49 = vector.broadcast %cst_28 : f32 to vector<1x1536xf32>
      %50 = arith.mulf %48, %49 : vector<1x1536xf32>
      %51 = arith.truncf %50 : vector<1x1536xf32> to vector<1x1536xbf16>
      %c0_29 = arith.constant 0 : index
      %c0_30 = arith.constant 0 : index
      %52 = vector.load %arg9[%c0_29, %c0_30] : memref<1536x512xbf16, #tpu.memory_space<vmem>>, vector<1536x512xbf16>
      %cst_31 = arith.constant dense<0.000000e+00> : vector<1x512xf32>
      %53 = tpu.matmul %51, %52, %cst_31 {dimension_numbers = #tpu.dot_dimension_numbers<[1], [0], [0], [1], [0, 0, 1, 1], [], []>} : vector<1x1536xbf16>, vector<1536x512xbf16>, vector<1x512xf32> -> vector<1x512xf32>
      %c0_32 = arith.constant 0 : index
      %c0_33 = arith.constant 0 : index
      %54 = vector.load %arg10[%c0_32, %c0_33] : memref<1x512xf32, #tpu.memory_space<vmem>>, vector<1x512xf32>
      %55 = arith.addf %53, %54 : vector<1x512xf32>
      %c0_34 = arith.constant 0 : index
      %c0_35 = arith.constant 0 : index
      %56 = vector.load %arg11[%c0_34, %c0_35] : memref<1x512xf32, #tpu.memory_space<vmem>>, vector<1x512xf32>
      %57 = arith.mulf %55, %56 : vector<1x512xf32>
      %c0_36 = arith.constant 0 : index
      %c0_37 = arith.constant 0 : index
      %58 = vector.load %arg12[%c0_36, %c0_37] : memref<1x512xf32, #tpu.memory_space<vmem>>, vector<1x512xf32>
      %59 = arith.addf %57, %58 : vector<1x512xf32>
      %cst_38 = arith.constant 0.000000e+00 : f32
      %60 = vector.broadcast %cst_38 : f32 to vector<1x512xf32>
      %61 = arith.maximumf %59, %60 : vector<1x512xf32>
      %62 = arith.truncf %61 : vector<1x512xf32> to vector<1x512xbf16>
      %c0_39 = arith.constant 0 : index
      %c0_40 = arith.constant 0 : index
      %63 = vector.load %arg13[%c0_39, %c0_40] : memref<512x14xbf16, #tpu.memory_space<vmem>>, vector<512x14xbf16>
      %cst_41 = arith.constant dense<0.000000e+00> : vector<1x14xf32>
      %64 = tpu.matmul %62, %63, %cst_41 {dimension_numbers = #tpu.dot_dimension_numbers<[1], [0], [0], [1], [0, 0, 1, 1], [], []>} : vector<1x512xbf16>, vector<512x14xbf16>, vector<1x14xf32> -> vector<1x14xf32>
      %c0_42 = arith.constant 0 : index
      %c0_43 = arith.constant 0 : index
      %65 = vector.load %arg14[%c0_42, %c0_43] : memref<1x14xf32, #tpu.memory_space<vmem>>, vector<1x14xf32>
      %66 = arith.addf %64, %65 : vector<1x14xf32>
      %c0_44 = arith.constant 0 : index
      %c0_45 = arith.constant 0 : index
      %c0_46 = arith.constant 0 : index
      %67 = vector.load %arg15[%c0_44, %c0_45, %c0_46] : memref<1x1x14xf32, #tpu.memory_space<vmem>>, vector<1x1x14xf32>
      %68 = vector.shape_cast %67 : vector<1x1x14xf32> to vector<1x14xf32>
      %69 = vector.shape_cast %66 : vector<1x14xf32> to vector<1x1x14xf32>
      tpu.vector_store %arg15[%c0_44, %c0_45, %c0_46], %69 {strides = array<i32>} : memref<1x1x14xf32, #tpu.memory_space<vmem>>, vector<1x1x14xf32>,
    } else {
    }
    return
  }
  func.func @transform_0(%arg0: i32, %arg1: i32) -> (i32, i32, i32) {
    %c0_i32 = arith.constant 0 : i32
    %c0_i32_0 = arith.constant 0 : i32
    return %arg0, %arg1, %c0_i32 : i32, i32, i32
  }
  func.func @transform_1(%arg0: i32, %arg1: i32) -> (i32, i32) {
    %c0_i32 = arith.constant 0 : i32
    %c0_i32_0 = arith.constant 0 : i32
    %c0_i32_1 = arith.constant 0 : i32
    return %c0_i32, %c0_i32_0 : i32, i32
  }
  func.func @transform_2(%arg0: i32, %arg1: i32) -> (i32, i32) {
    %c0_i32 = arith.constant 0 : i32
    %c0_i32_0 = arith.constant 0 : i32
    %c0_i32_1 = arith.constant 0 : i32
    return %c0_i32, %c0_i32_0 : i32, i32
  }
  func.func @transform_3(%arg0: i32, %arg1: i32) -> (i32, i32) {
    %c0_i32 = arith.constant 0 : i32
    %c0_i32_0 = arith.constant 0 : i32
    %c0_i32_1 = arith.constant 0 : i32
    return %c0_i32, %c0_i32_0 : i32, i32
  }
  func.func @transform_4(%arg0: i32, %arg1: i32) -> (i32, i32) {
    %c0_i32 = arith.constant 0 : i32
    %c0_i32_0 = arith.constant 0 : i32
    %c0_i32_1 = arith.constant 0 : i32
    return %c0_i32, %c0_i32_0 : i32, i32
  }
  func.func @transform_5(%arg0: i32, %arg1: i32) -> (i32, i32) {
    %c0_i32 = arith.constant 0 : i32
    %c0_i32_0 = arith.constant 0 : i32
    %c0_i32_1 = arith.constant 0 : i32
    return %c0_i32, %c0_i32_0 : i32, i32
  }
  func.func @transform_6(%arg0: i32, %arg1: i32) -> (i32, i32) {
    %c0_i32 = arith.constant 0 : i32
    %c0_i32_0 = arith.constant 0 : i32
    %c0_i32_1 = arith.constant 0 : i32
    return %c0_i32, %c0_i32_0 : i32, i32
  }
  func.func @transform_7(%arg0: i32, %arg1: i32) -> (i32, i32) {
    %c0_i32 = arith.constant 0 : i32
    %c0_i32_0 = arith.constant 0 : i32
    %c0_i32_1 = arith.constant 0 : i32
    return %c0_i32, %c0_i32_0 : i32, i32
  }
  func.func @transform_8(%arg0: i32, %arg1: i32) -> (i32, i32) {
    %c0_i32 = arith.constant 0 : i32
    %c0_i32_0 = arith.constant 0 : i32
    %c0_i32_1 = arith.constant 0 : i32
    return %c0_i32, %c0_i32_0 : i32, i32
  }
  func.func @transform_9(%arg0: i32, %arg1: i32) -> (i32, i32) {
    %c0_i32 = arith.constant 0 : i32
    %c0_i32_0 = arith.constant 0 : i32
    %c0_i32_1 = arith.constant 0 : i32
    return %c0_i32, %c0_i32_0 : i32, i32
  }
  func.func @transform_10(%arg0: i32, %arg1: i32) -> (i32, i32) {
    %c0_i32 = arith.constant 0 : i32
    %c0_i32_0 = arith.constant 0 : i32
    %c0_i32_1 = arith.constant 0 : i32
    return %c0_i32, %c0_i32_0 : i32, i32
  }
  func.func @transform_11(%arg0: i32, %arg1: i32) -> (i32, i32) {
    %c0_i32 = arith.constant 0 : i32
    %c0_i32_0 = arith.constant 0 : i32
    %c0_i32_1 = arith.constant 0 : i32
    return %c0_i32, %c0_i32_0 : i32, i32
  }
  func.func @transform_12(%arg0: i32, %arg1: i32) -> (i32, i32) {
    %c0_i32 = arith.constant 0 : i32
    %c0_i32_0 = arith.constant 0 : i32
    %c0_i32_1 = arith.constant 0 : i32
    return %c0_i32, %c0_i32_0 : i32, i32
  }
  func.func @transform_13(%arg0: i32, %arg1: i32) -> (i32, i32, i32) {
    %c0_i32 = arith.constant 0 : i32
    %c0_i32_0 = arith.constant 0 : i32
    %c0_i32_1 = arith.constant 0 : i32
    return %arg0, %c0_i32, %c0_i32_0 : i32, i32, i32
  }
}

</mosaic_0001>

<llo_original>
// kernel: chess_piece_model_forward.1
$region0: #{chess_piece_model_forward.1}
  #allocation0 [shape = 'u32[]', space=smem, size = 0x4, offset = 0x4, fixed_abs, tag = 'smem constant byte address 0x4 - core index']
  #allocation1 [shape = 'u32[72,128]{1,0:T(1,128)}', space=vmem, size = 0x9000, scoped, tag = 'internal scratch']
  #allocation2 [shape = 'f32[8,1536]{1,0:T(8,128)}', space=vmem, size = 0xc000, scoped, tag = 'scratch operand']
  %s0 = inlined_call_operand.vmem [shape: bf16[2,64,27], index: 0, kind: input, shape index: {}]
  %s1 = inlined_call_operand.hbm [shape: bf16[27,128], index: 1, kind: input, shape index: {}]
  %s2 = inlined_call_operand.hbm [shape: f32[1,128], index: 2, kind: input, shape index: {}]
  %s3 = inlined_call_operand.hbm [shape: f32[1,128], index: 3, kind: input, shape index: {}]
  %s4 = inlined_call_operand.hbm [shape: bf16[128,1536], index: 4, kind: input, shape index: {}]
  %s5 = inlined_call_operand.hbm [shape: f32[1,1536], index: 5, kind: input, shape index: {}]
  %s6 = inlined_call_operand.hbm [shape: f32[1,1536], index: 6, kind: input, shape index: {}]
  %s7 = inlined_call_operand.hbm [shape: bf16[1536,512], index: 7, kind: input, shape index: {}]
  %s8 = inlined_call_operand.hbm [shape: f32[1,512], index: 8, kind: input, shape index: {}]
  %s9 = inlined_call_operand.hbm [shape: f32[1,512], index: 9, kind: input, shape index: {}]
  %s10 = inlined_call_operand.hbm [shape: f32[1,512], index: 10, kind: input, shape index: {}]
  %s11 = inlined_call_operand.vmem [shape: bf16[512,14], index: 11, kind: input, shape index: {}]
  %s12 = inlined_call_operand.hbm [shape: f32[1,14], index: 12, kind: input, shape index: {}]
  %s13 = inlined_call_operand.hbm [shape: f32[2,1,14], index: 13, kind: output, shape index: {}]
  %s14 = sld [smem:[#allocation0]]
  $region137: #{chess_piece_model_forward.1} parent=0
    _
  %s16 = ssub.s32 1, %s14
  %s17 = scalar_select 0, %s16, %s14
  $region1: #{chess_piece_model_forward.1} parent=0
    #allocation3 [shape = 'u8[8192]{0}', space=vmem, size = 0x2000, scoped, tag = 'input window, operand 1, single buffered']
    #allocation4 [shape = 's32[2]{0}', space=sflag, size = 0x8, scoped, tag = 'scoped memory for chess_piece_model_forward.1']
    #allocation5 [shape = 's32[2]{0}', space=sflag, size = 0x8, scoped, tag = 'scoped memory for chess_piece_model_forward.1']
    #allocation6 [shape = 'u8[512]{0}', space=vmem, size = 0x400, scoped, tag = 'input window, operand 2, single buffered']
    #allocation7 [shape = 's32[1]{0}', space=sflag, size = 0x4, scoped, tag = 'scoped memory for chess_piece_model_forward.1']
    #allocation8 [shape = 'u8[512]{0}', space=vmem, size = 0x400, scoped, tag = 'input window, operand 3, single buffered']
    #allocation9 [shape = 'u8[393216]{0}', space=vmem, size = 0x60000, scoped, tag = 'input window, operand 4, single buffered']
    #allocation10 [shape = 's32[1]{0}', space=sflag, size = 0x4, scoped, tag = 'scoped memory for chess_piece_model_forward.1']
    #allocation11 [shape = 'u8[6144]{0}', space=vmem, size = 0x1800, scoped, tag = 'input window, operand 5, single buffered']
    #allocation12 [shape = 'u8[6144]{0}', space=vmem, size = 0x1800, scoped, tag = 'input window, operand 6, single buffered']
    #allocation13 [shape = 's32[1]{0}', space=sflag, size = 0x4, scoped, tag = 'scoped memory for chess_piece_model_forward.1']
    #allocation14 [shape = 'u8[1572864]{0}', space=vmem, size = 0x180000, scoped, tag = 'input window, operand 7, single buffered']
    #allocation15 [shape = 'u8[2048]{0}', space=vmem, size = 0x800, scoped, tag = 'input window, operand 8, single buffered']
    #allocation16 [shape = 's32[1]{0}', space=sflag, size = 0x4, scoped, tag = 'scoped memory for chess_piece_model_forward.1']
    #allocation17 [shape = 'u8[2048]{0}', space=vmem, size = 0x800, scoped, tag = 'input window, operand 9, single buffered']
    #allocation18 [shape = 'u8[2048]{0}', space=vmem, size = 0x800, scoped, tag = 'input window, operand 10, single buffered']
    #allocation19 [shape = 's32[1]{0}', space=sflag, size = 0x4, scoped, tag = 'scoped memory for chess_piece_model_forward.1']
    #allocation20 [shape = 'u8[512]{0}', space=vmem, size = 0x400, scoped, tag = 'input window, operand 12, single buffered']
    #allocation21 [shape = 'u8[1024]{0}', space=vmem, size = 0x400, scoped, tag = 'output window, operand 0']
    %18 = vsyncpa [#allocation4], 0
    %19 = vsyncpa [#allocation7], 0
    %20 = vsyncpa [#allocation10], 0
    %21 = vsyncpa [#allocation13], 0
    %22 = vsyncpa [#allocation16], 0
    %23 = vsyncpa [#allocation19], 0
    %24 = vsyncpa [#allocation5], 0
    %s25 = scalar_lea.sflag [#allocation5], 1
    %26 = vsyncpa %s25, 0
    loop: start=0, step=1, limit=4
    $region2: #{chess_piece_model_forward.1} parent=1 // loop_pre_header
      _
    $region3: #{chess_piece_model_forward.1} parent=1 // loop_header
      %s28 = sphi 0, %s32
      %p29 = scmp.ge.s32.totalorder %s28, 4
      %s35 = sphi 0, %s47
      %s36 = sphi 0, %s43
      %s37 = sphi 0, %s35
      %s38 = sphi 0, %s36
      %s39 = sphi 0, %s37
      %s40 = sphi 0, %s38
      %s52 = sphi 0, %s54
      %s55 = sphi 0, %s52
      %s56 = sphi 0, %s55
      %s72 = sphi 0, %s56
      %s76 = sphi 0, %s76
      %s78 = sphi 0, %s76
      %s79 = sphi 0, %s78
      %s93 = sphi 0, %s79
      %s97 = sphi 0, %s97
      %s99 = sphi 0, %s97
      %s100 = sphi 0, %s99
      %s114 = sphi 0, %s100
      %s118 = sphi 0, %s118
      %s120 = sphi 0, %s118
      %s121 = sphi 0, %s120
      %s135 = sphi 0, %s121
      %s139 = sphi 0, %s139
      %s141 = sphi 0, %s139
      %s142 = sphi 0, %s141
      %s156 = sphi 0, %s142
      %s160 = sphi 0, %s160
      %s162 = sphi 0, %s160
      %s163 = sphi 0, %s162
      %s177 = sphi 0, %s163
      %s181 = sphi 0, %s181
      %s183 = sphi 0, %s181
      %s184 = sphi 0, %s183
      %s198 = sphi 0, %s184
      %s202 = sphi 0, %s202
      %s204 = sphi 0, %s202
      %s205 = sphi 0, %s204
      %s219 = sphi 0, %s205
      %s223 = sphi 0, %s223
      %s225 = sphi 0, %s223
      %s226 = sphi 0, %s225
      %s240 = sphi 0, %s226
      %s244 = sphi 0, %s244
      %s246 = sphi 0, %s244
      %s247 = sphi 0, %s246
      %s261 = sphi 0, %s247
      %s265 = sphi 0, %s265
      %s267 = sphi 0, %s265
      %s268 = sphi 0, %s267
      %s282 = sphi 0, %s268
      %s286 = sphi 0, %s286
      %s288 = sphi 0, %s286
      %s289 = sphi 0, %s288
      %s303 = sphi 0, %s289
      %s307 = sphi 0, %s307
      %s309 = sphi 0, %s307
      %s310 = sphi 0, %s309
      %s324 = sphi 0, %s310
      %s330 = sphi 0, %s332
      %s333 = sphi 0, %s330
      %s334 = sphi 0, %s333
      %s350 = sphi 0, %s334
    $region4: #{chess_piece_model_forward.1} parent=1 // loop_header_branch
      %31 = sbr.rel (%p29) target = $region8
    $region5: #{chess_piece_model_forward.1} parent=1 // loop_body
      %s33 = ssub.s32 %s28, 1
      %s34 = ssub.s32 %s28, 2
      %s41 = sadd.s32 1, %s36
      %p42 = scmp.ge.s32.totalorder %s41, 1
      %s43 = scalar_select %p42, 0, %s41
      %s44 = sadd.s32 1, %s35
      %s45 = scalar_select %p42, %s44, %s35
      %p46 = scmp.ge.s32.totalorder %s45, 2
      %s47 = scalar_select %p46, 0, %s45
      %s48 = ssub.s32 %s35, %s47
      %s49 = ssub.s32 %s36, %s43
      %s50 = sor.u32 %s48, %s49
      %p51 = scmp.eq.s32.totalorder %s50, 0
      %s53 = sadd.s32 %s52, 1
      %s54 = scalar_select %p51, %s52, %s53
      %p57 = pneg %p51
      %p58 = scmp.eq.s32.totalorder %s28, 1
      %p59 = por %p57, %p58
      %p60 = scmp.ne.s32.totalorder %s52, %s55
      %p61 = scmp.eq.s32.totalorder %s28, 0
      %p62 = por %p60, %p61
      %p63 = scmp.ne.s32.totalorder %s52, %s55
      %p64 = scmp.eq.s32.totalorder %s33, 1
      %p65 = por %p63, %p64
      %p66 = scmp.ne.s32.totalorder %s55, %s56
      %p67 = scmp.eq.s32.totalorder %s33, 0
      %p68 = por %p66, %p67
      %p69 = scmp.ne.s32.totalorder %s55, %s56
      %p70 = scmp.eq.s32.totalorder %s34, 1
      %p71 = por %p69, %p70
      %p73 = scmp.ne.s32.totalorder %s56, %s72
      %p74 = scmp.eq.s32.totalorder %s34, 0
      %p75 = por %p73, %p74
      %s77 = sadd.s32 %s76, 1
      %p80 = scmp.eq.s32.totalorder %s28, 1
      %p81 = scmp.ne.s32.totalorder %s76, %s78
      %p82 = scmp.eq.s32.totalorder %s28, 0
      %p83 = por %p81, %p82
      %p84 = scmp.ne.s32.totalorder %s76, %s78
      %p85 = scmp.eq.s32.totalorder %s33, 1
      %p86 = por %p84, %p85
      %p87 = scmp.ne.s32.totalorder %s78, %s79
      %p88 = scmp.eq.s32.totalorder %s33, 0
      %p89 = por %p87, %p88
      %p90 = scmp.ne.s32.totalorder %s78, %s79
      %p91 = scmp.eq.s32.totalorder %s34, 1
      %p92 = por %p90, %p91
      %p94 = scmp.ne.s32.totalorder %s79, %s93
      %p95 = scmp.eq.s32.totalorder %s34, 0
      %p96 = por %p94, %p95
      %s98 = sadd.s32 %s97, 1
      %p101 = scmp.eq.s32.totalorder %s28, 1
      %p102 = scmp.ne.s32.totalorder %s97, %s99
      %p103 = scmp.eq.s32.totalorder %s28, 0
      %p104 = por %p102, %p103
      %p105 = scmp.ne.s32.totalorder %s97, %s99
      %p106 = scmp.eq.s32.totalorder %s33, 1
      %p107 = por %p105, %p106
      %p108 = scmp.ne.s32.totalorder %s99, %s100
      %p109 = scmp.eq.s32.totalorder %s33, 0
      %p110 = por %p108, %p109
      %p111 = scmp.ne.s32.totalorder %s99, %s100
      %p112 = scmp.eq.s32.totalorder %s34, 1
      %p113 = por %p111, %p112
      %p115 = scmp.ne.s32.totalorder %s100, %s114
      %p116 = scmp.eq.s32.totalorder %s34, 0
      %p117 = por %p115, %p116
      %s119 = sadd.s32 %s118, 1
      %p122 = scmp.eq.s32.totalorder %s28, 1
      %p123 = scmp.ne.s32.totalorder %s118, %s120
      %p124 = scmp.eq.s32.totalorder %s28, 0
      %p125 = por %p123, %p124
      %p126 = scmp.ne.s32.totalorder %s118, %s120
      %p127 = scmp.eq.s32.totalorder %s33, 1
      %p128 = por %p126, %p127
      %p129 = scmp.ne.s32.totalorder %s120, %s121
      %p130 = scmp.eq.s32.totalorder %s33, 0
      %p131 = por %p129, %p130
      %p132 = scmp.ne.s32.totalorder %s120, %s121
      %p133 = scmp.eq.s32.totalorder %s34, 1
      %p134 = por %p132, %p133
      %p136 = scmp.ne.s32.totalorder %s121, %s135
      %p137 = scmp.eq.s32.totalorder %s34, 0
      %p138 = por %p136, %p137
      %s140 = sadd.s32 %s139, 1
      %p143 = scmp.eq.s32.totalorder %s28, 1
      %p144 = scmp.ne.s32.totalorder %s139, %s141
      %p145 = scmp.eq.s32.totalorder %s28, 0
      %p146 = por %p144, %p145
      %p147 = scmp.ne.s32.totalorder %s139, %s141
      %p148 = scmp.eq.s32.totalorder %s33, 1
      %p149 = por %p147, %p148
      %p150 = scmp.ne.s32.totalorder %s141, %s142
      %p151 = scmp.eq.s32.totalorder %s33, 0
      %p152 = por %p150, %p151
      %p153 = scmp.ne.s32.totalorder %s141, %s142
      %p154 = scmp.eq.s32.totalorder %s34, 1
      %p155 = por %p153, %p154
      %p157 = scmp.ne.s32.totalorder %s142, %s156
      %p158 = scmp.eq.s32.totalorder %s34, 0
      %p159 = por %p157, %p158
      %s161 = sadd.s32 %s160, 1
      %p164 = scmp.eq.s32.totalorder %s28, 1
      %p165 = scmp.ne.s32.totalorder %s160, %s162
      %p166 = scmp.eq.s32.totalorder %s28, 0
      %p167 = por %p165, %p166
      %p168 = scmp.ne.s32.totalorder %s160, %s162
      %p169 = scmp.eq.s32.totalorder %s33, 1
      %p170 = por %p168, %p169
      %p171 = scmp.ne.s32.totalorder %s162, %s163
      %p172 = scmp.eq.s32.totalorder %s33, 0
      %p173 = por %p171, %p172
      %p174 = scmp.ne.s32.totalorder %s162, %s163
      %p175 = scmp.eq.s32.totalorder %s34, 1
      %p176 = por %p174, %p175
      %p178 = scmp.ne.s32.totalorder %s163, %s177
      %p179 = scmp.eq.s32.totalorder %s34, 0
      %p180 = por %p178, %p179
      %s182 = sadd.s32 %s181, 1
      %p185 = scmp.eq.s32.totalorder %s28, 1
      %p186 = scmp.ne.s32.totalorder %s181, %s183
      %p187 = scmp.eq.s32.totalorder %s28, 0
      %p188 = por %p186, %p187
      %p189 = scmp.ne.s32.totalorder %s181, %s183
      %p190 = scmp.eq.s32.totalorder %s33, 1
      %p191 = por %p189, %p190
      %p192 = scmp.ne.s32.totalorder %s183, %s184
      %p193 = scmp.eq.s32.totalorder %s33, 0
      %p194 = por %p192, %p193
      %p195 = scmp.ne.s32.totalorder %s183, %s184
      %p196 = scmp.eq.s32.totalorder %s34, 1
      %p197 = por %p195, %p196
      %p199 = scmp.ne.s32.totalorder %s184, %s198
      %p200 = scmp.eq.s32.totalorder %s34, 0
      %p201 = por %p199, %p200
      %s203 = sadd.s32 %s202, 1
      %p206 = scmp.eq.s32.totalorder %s28, 1
      %p207 = scmp.ne.s32.totalorder %s202, %s204
      %p208 = scmp.eq.s32.totalorder %s28, 0
      %p209 = por %p207, %p208
      %p210 = scmp.ne.s32.totalorder %s202, %s204
      %p211 = scmp.eq.s32.totalorder %s33, 1
      %p212 = por %p210, %p211
      %p213 = scmp.ne.s32.totalorder %s204, %s205
      %p214 = scmp.eq.s32.totalorder %s33, 0
      %p215 = por %p213, %p214
      %p216 = scmp.ne.s32.totalorder %s204, %s205
      %p217 = scmp.eq.s32.totalorder %s34, 1
      %p218 = por %p216, %p217
      %p220 = scmp.ne.s32.totalorder %s205, %s219
      %p221 = scmp.eq.s32.totalorder %s34, 0
      %p222 = por %p220, %p221
      %s224 = sadd.s32 %s223, 1
      %p227 = scmp.eq.s32.totalorder %s28, 1
      %p228 = scmp.ne.s32.totalorder %s223, %s225
      %p229 = scmp.eq.s32.totalorder %s28, 0
      %p230 = por %p228, %p229
      %p231 = scmp.ne.s32.totalorder %s223, %s225
      %p232 = scmp.eq.s32.totalorder %s33, 1
      %p233 = por %p231, %p232
      %p234 = scmp.ne.s32.totalorder %s225, %s226
      %p235 = scmp.eq.s32.totalorder %s33, 0
      %p236 = por %p234, %p235
      %p237 = scmp.ne.s32.totalorder %s225, %s226
      %p238 = scmp.eq.s32.totalorder %s34, 1
      %p239 = por %p237, %p238
      %p241 = scmp.ne.s32.totalorder %s226, %s240
      %p242 = scmp.eq.s32.totalorder %s34, 0
      %p243 = por %p241, %p242
      %s245 = sadd.s32 %s244, 1
      %p248 = scmp.eq.s32.totalorder %s28, 1
      %p249 = scmp.ne.s32.totalorder %s244, %s246
      %p250 = scmp.eq.s32.totalorder %s28, 0
      %p251 = por %p249, %p250
      %p252 = scmp.ne.s32.totalorder %s244, %s246
      %p253 = scmp.eq.s32.totalorder %s33, 1
      %p254 = por %p252, %p253
      %p255 = scmp.ne.s32.totalorder %s246, %s247
      %p256 = scmp.eq.s32.totalorder %s33, 0
      %p257 = por %p255, %p256
      %p258 = scmp.ne.s32.totalorder %s246, %s247
      %p259 = scmp.eq.s32.totalorder %s34, 1
      %p260 = por %p258, %p259
      %p262 = scmp.ne.s32.totalorder %s247, %s261
      %p263 = scmp.eq.s32.totalorder %s34, 0
      %p264 = por %p262, %p263
      %s266 = sadd.s32 %s265, 1
      %p269 = scmp.eq.s32.totalorder %s28, 1
      %p270 = scmp.ne.s32.totalorder %s265, %s267
      %p271 = scmp.eq.s32.totalorder %s28, 0
      %p272 = por %p270, %p271
      %p273 = scmp.ne.s32.totalorder %s265, %s267
      %p274 = scmp.eq.s32.totalorder %s33, 1
      %p275 = por %p273, %p274
      %p276 = scmp.ne.s32.totalorder %s267, %s268
      %p277 = scmp.eq.s32.totalorder %s33, 0
      %p278 = por %p276, %p277
      %p279 = scmp.ne.s32.totalorder %s267, %s268
      %p280 = scmp.eq.s32.totalorder %s34, 1
      %p281 = por %p279, %p280
      %p283 = scmp.ne.s32.totalorder %s268, %s282
      %p284 = scmp.eq.s32.totalorder %s34, 0
      %p285 = por %p283, %p284
      %s287 = sadd.s32 %s286, 1
      %p290 = scmp.eq.s32.totalorder %s28, 1
      %p291 = scmp.ne.s32.totalorder %s286, %s288
      %p292 = scmp.eq.s32.totalorder %s28, 0
      %p293 = por %p291, %p292
      %p294 = scmp.ne.s32.totalorder %s286, %s288
      %p295 = scmp.eq.s32.totalorder %s33, 1
      %p296 = por %p294, %p295
      %p297 = scmp.ne.s32.totalorder %s288, %s289
      %p298 = scmp.eq.s32.totalorder %s33, 0
      %p299 = por %p297, %p298
      %p300 = scmp.ne.s32.totalorder %s288, %s289
      %p301 = scmp.eq.s32.totalorder %s34, 1
      %p302 = por %p300, %p301
      %p304 = scmp.ne.s32.totalorder %s289, %s303
      %p305 = scmp.eq.s32.totalorder %s34, 0
      %p306 = por %p304, %p305
      %s308 = sadd.s32 %s307, 1
      %p311 = scmp.eq.s32.totalorder %s28, 1
      %p312 = scmp.ne.s32.totalorder %s307, %s309
      %p313 = scmp.eq.s32.totalorder %s28, 0
      %p314 = por %p312, %p313
      %p315 = scmp.ne.s32.totalorder %s307, %s309
      %p316 = scmp.eq.s32.totalorder %s33, 1
      %p317 = por %p315, %p316
      %p318 = scmp.ne.s32.totalorder %s309, %s310
      %p319 = scmp.eq.s32.totalorder %s33, 0
      %p320 = por %p318, %p319
      %p321 = scmp.ne.s32.totalorder %s309, %s310
      %p322 = scmp.eq.s32.totalorder %s34, 1
      %p323 = por %p321, %p322
      %p325 = scmp.ne.s32.totalorder %s310, %s324
      %p326 = scmp.eq.s32.totalorder %s34, 0
      %p327 = por %p325, %p326
      %s328 = ssub.s32 %s35, %s47
      %p329 = scmp.eq.s32.totalorder %s328, 0
      %s331 = sadd.s32 %s330, 1
      %s332 = scalar_select %p329, %s330, %s331
      %p335 = pneg %p329
      %p336 = scmp.eq.s32.totalorder %s28, 1
      %p337 = por %p335, %p336
      %p338 = scmp.ne.s32.totalorder %s330, %s333
      %p339 = scmp.eq.s32.totalorder %s28, 0
      %p340 = por %p338, %p339
      %p341 = scmp.ne.s32.totalorder %s330, %s333
      %p342 = scmp.eq.s32.totalorder %s33, 1
      %p343 = por %p341, %p342
      %p344 = scmp.ne.s32.totalorder %s333, %s334
      %p345 = scmp.eq.s32.totalorder %s33, 0
      %p346 = por %p344, %p345
      %p347 = scmp.ne.s32.totalorder %s333, %s334
      %p348 = scmp.eq.s32.totalorder %s34, 1
      %p349 = por %p347, %p348
      %p351 = scmp.ne.s32.totalorder %s334, %s350
      %p352 = scmp.eq.s32.totalorder %s34, 0
      %p353 = por %p351, %p352
      %p354 = scmp.le.s32.totalorder 1, %s28
      %p355 = scmp.lt.s32.totalorder %s28, 3
      %p356 = pnand %p354, %p355
      %p357 = pneg %p356
      // Predicated region
      $region9: #{chess_piece_model_forward.1} parent=5 // pred_check
        _
      $region10: #{chess_piece_model_forward.1} parent=5 // pred_check_branch
        %359 = sbr.rel (%p356) target = $region12
      $region11: #{chess_piece_model_forward.1} parent=5 // pred_region
        %s360 = ssub.s32 %s28, 1
        // Predicated region
        $region13: #{chess_piece_model_forward.1} parent=11 // pred_check
          %p361 = pneg %p89
        $region14: #{chess_piece_model_forward.1} parent=11 // pred_check_branch
          %363 = sbr.rel (%p361) target = $region16
        $region15: #{chess_piece_model_forward.1} parent=11 // pred_region
          %365 = vsyncadd [#allocation4], 0
          %s366 = sshll.u32 %s1, 4
          %s367 = int_to_ptr.hbm [resolvable:$true] %s366
          %s368 = sshll.u32 [#allocation3], 4
          %s369 = int_to_ptr.vmem [resolvable:$true] %s368
          %374 = dma.hbm_to_vmem [thread:$0]  %s367, 256, %s369, [#allocation4], 64, 64, 4
        $region16: #{chess_piece_model_forward.1} parent=11 // pred_fallthru
          _
        // Predicated region
        $region17: #{chess_piece_model_forward.1} parent=11 // pred_check
          %p375 = pneg %p110
        $region18: #{chess_piece_model_forward.1} parent=11 // pred_check_branch
          %377 = sbr.rel (%p375) target = $region20
        $region19: #{chess_piece_model_forward.1} parent=11 // pred_region
          %379 = vsyncadd [#allocation7], 0
          %s381 = sshll.u32 %s2, 4
          %s382 = int_to_ptr.hbm [resolvable:$true] %s381
          %s383 = sshll.u32 [#allocation6], 4
          %s384 = int_to_ptr.vmem [resolvable:$true] %s383
          %386 = dma.hbm_to_vmem [thread:$0]  %s382, 16, %s384, [#allocation7]
        $region20: #{chess_piece_model_forward.1} parent=11 // pred_fallthru
          _
        // Predicated region
        $region21: #{chess_piece_model_forward.1} parent=11 // pred_check
          %p387 = pneg %p131
        $region22: #{chess_piece_model_forward.1} parent=11 // pred_check_branch
          %389 = sbr.rel (%p387) target = $region24
        $region23: #{chess_piece_model_forward.1} parent=11 // pred_region
          %391 = vsyncadd [#allocation7], 0
          %s393 = sshll.u32 %s3, 4
          %s394 = int_to_ptr.hbm [resolvable:$true] %s393
          %s395 = sshll.u32 [#allocation8], 4
          %s396 = int_to_ptr.vmem [resolvable:$true] %s395
          %398 = dma.hbm_to_vmem [thread:$0]  %s394, 16, %s396, [#allocation7]
        $region24: #{chess_piece_model_forward.1} parent=11 // pred_fallthru
          _
        // Predicated region
        $region25: #{chess_piece_model_forward.1} parent=11 // pred_check
          %p399 = pneg %p152
        $region26: #{chess_piece_model_forward.1} parent=11 // pred_check_branch
          %401 = sbr.rel (%p399) target = $region28
        $region27: #{chess_piece_model_forward.1} parent=11 // pred_region
          %403 = vsyncadd [#allocation10], 0
          %s404 = sshll.u32 %s4, 4
          %s405 = int_to_ptr.hbm [resolvable:$true] %s404
          %s406 = sshll.u32 [#allocation9], 4
          %s407 = int_to_ptr.vmem [resolvable:$true] %s406
          %412 = dma.hbm_to_vmem [thread:$0]  %s405, 12288, %s407, [#allocation10], 768, 768, 48
        $region28: #{chess_piece_model_forward.1} parent=11 // pred_fallthru
          _
        // Predicated region
        $region29: #{chess_piece_model_forward.1} parent=11 // pred_check
          %p413 = pneg %p173
        $region30: #{chess_piece_model_forward.1} parent=11 // pred_check_branch
          %415 = sbr.rel (%p413) target = $region32
        $region31: #{chess_piece_model_forward.1} parent=11 // pred_region
          %417 = vsyncadd [#allocation10], 0
          %s419 = sshll.u32 %s5, 4
          %s420 = int_to_ptr.hbm [resolvable:$true] %s419
          %s421 = sshll.u32 [#allocation11], 4
          %s422 = int_to_ptr.vmem [resolvable:$true] %s421
          %424 = dma.hbm_to_vmem [thread:$0]  %s420, 192, %s422, [#allocation10]
        $region32: #{chess_piece_model_forward.1} parent=11 // pred_fallthru
          _
        // Predicated region
        $region33: #{chess_piece_model_forward.1} parent=11 // pred_check
          %p425 = pneg %p194
        $region34: #{chess_piece_model_forward.1} parent=11 // pred_check_branch
          %427 = sbr.rel (%p425) target = $region36
        $region35: #{chess_piece_model_forward.1} parent=11 // pred_region
          %429 = vsyncadd [#allocation13], 0
          %s431 = sshll.u32 %s6, 4
          %s432 = int_to_ptr.hbm [resolvable:$true] %s431
          %s433 = sshll.u32 [#allocation12], 4
          %s434 = int_to_ptr.vmem [resolvable:$true] %s433
          %436 = dma.hbm_to_vmem [thread:$0]  %s432, 192, %s434, [#allocation13]
        $region36: #{chess_piece_model_forward.1} parent=11 // pred_fallthru
          _
        // Predicated region
        $region37: #{chess_piece_model_forward.1} parent=11 // pred_check
          %p437 = pneg %p215
        $region38: #{chess_piece_model_forward.1} parent=11 // pred_check_branch
          %439 = sbr.rel (%p437) target = $region40
        $region39: #{chess_piece_model_forward.1} parent=11 // pred_region
          %441 = vsyncadd [#allocation13], 0
          %s442 = sshll.u32 %s7, 4
          %s443 = int_to_ptr.hbm [resolvable:$true] %s442
          %s444 = sshll.u32 [#allocation14], 4
          %s445 = int_to_ptr.vmem [resolvable:$true] %s444
          %450 = dma.hbm_to_vmem [thread:$0]  %s443, 49152, %s445, [#allocation13], 256, 256, 16
        $region40: #{chess_piece_model_forward.1} parent=11 // pred_fallthru
          _
        // Predicated region
        $region41: #{chess_piece_model_forward.1} parent=11 // pred_check
          %p451 = pneg %p236
        $region42: #{chess_piece_model_forward.1} parent=11 // pred_check_branch
          %453 = sbr.rel (%p451) target = $region44
        $region43: #{chess_piece_model_forward.1} parent=11 // pred_region
          %455 = vsyncadd [#allocation16], 0
          %s457 = sshll.u32 %s8, 4
          %s458 = int_to_ptr.hbm [resolvable:$true] %s457
          %s459 = sshll.u32 [#allocation15], 4
          %s460 = int_to_ptr.vmem [resolvable:$true] %s459
          %462 = dma.hbm_to_vmem [thread:$0]  %s458, 64, %s460, [#allocation16]
        $region44: #{chess_piece_model_forward.1} parent=11 // pred_fallthru
          _
        // Predicated region
        $region45: #{chess_piece_model_forward.1} parent=11 // pred_check
          %p463 = pneg %p257
        $region46: #{chess_piece_model_forward.1} parent=11 // pred_check_branch
          %465 = sbr.rel (%p463) target = $region48
        $region47: #{chess_piece_model_forward.1} parent=11 // pred_region
          %467 = vsyncadd [#allocation16], 0
          %s469 = sshll.u32 %s9, 4
          %s470 = int_to_ptr.hbm [resolvable:$true] %s469
          %s471 = sshll.u32 [#allocation17], 4
          %s472 = int_to_ptr.vmem [resolvable:$true] %s471
          %474 = dma.hbm_to_vmem [thread:$0]  %s470, 64, %s472, [#allocation16]
        $region48: #{chess_piece_model_forward.1} parent=11 // pred_fallthru
          _
        // Predicated region
        $region49: #{chess_piece_model_forward.1} parent=11 // pred_check
          %p475 = pneg %p278
        $region50: #{chess_piece_model_forward.1} parent=11 // pred_check_branch
          %477 = sbr.rel (%p475) target = $region52
        $region51: #{chess_piece_model_forward.1} parent=11 // pred_region
          %479 = vsyncadd [#allocation19], 0
          %s481 = sshll.u32 %s10, 4
          %s482 = int_to_ptr.hbm [resolvable:$true] %s481
          %s483 = sshll.u32 [#allocation18], 4
          %s484 = int_to_ptr.vmem [resolvable:$true] %s483
          %486 = dma.hbm_to_vmem [thread:$0]  %s482, 64, %s484, [#allocation19]
        $region52: #{chess_piece_model_forward.1} parent=11 // pred_fallthru
          _
        // Predicated region
        $region53: #{chess_piece_model_forward.1} parent=11 // pred_check
          %p487 = pneg %p299
        $region54: #{chess_piece_model_forward.1} parent=11 // pred_check_branch
          %489 = sbr.rel (%p487) target = $region56
        $region55: #{chess_piece_model_forward.1} parent=11 // pred_region
          _
        $region56: #{chess_piece_model_forward.1} parent=11 // pred_fallthru
          _
        // Predicated region
        $region57: #{chess_piece_model_forward.1} parent=11 // pred_check
          %p490 = pneg %p320
        $region58: #{chess_piece_model_forward.1} parent=11 // pred_check_branch
          %492 = sbr.rel (%p490) target = $region60
        $region59: #{chess_piece_model_forward.1} parent=11 // pred_region
          %494 = vsyncadd [#allocation19], 0
          %s496 = sshll.u32 %s12, 4
          %s497 = int_to_ptr.hbm [resolvable:$true] %s496
          %s498 = sshll.u32 [#allocation20], 4
          %s499 = int_to_ptr.vmem [resolvable:$true] %s498
          %501 = dma.hbm_to_vmem [thread:$0]  %s497, 16, %s499, [#allocation19]
        $region60: #{chess_piece_model_forward.1} parent=11 // pred_fallthru
          _
      $region12: #{chess_piece_model_forward.1} parent=5 // pred_fallthru
        _
      %p502 = scmp.lt.s32.totalorder %s28, 2
      // Predicated region
      $region61: #{chess_piece_model_forward.1} parent=5 // pred_check
        %p503 = pneg %p502
      $region62: #{chess_piece_model_forward.1} parent=5 // pred_check_branch
        %505 = sbr.rel (%p503) target = $region64
      $region63: #{chess_piece_model_forward.1} parent=5 // pred_region
        // Predicated region
        $region65: #{chess_piece_model_forward.1} parent=63 // pred_check
          %p506 = pneg %p62
        $region66: #{chess_piece_model_forward.1} parent=63 // pred_check_branch
          %508 = sbr.rel (%p506) target = $region68
        $region67: #{chess_piece_model_forward.1} parent=63 // pred_region
          %s509 = smul.u32 8, %s36
          %p510 = scmp.lt.s32.totalorder %s35, 1
          %s511 = scalar_select %p510, %s35, 1
          %p512 = scmp.lt.s32.totalorder %s509, 7
          %s513 = scalar_select %p512, %s509, 7
          %s514 = smul.addr %s511, 8
          %s515 = sadd.s32 %s513, %s514
          %s516 = smul.addr %s515, 4
          %s517 = scalar_lea.vmem %s0, %s516
          %s518 = smul.u32 8, %s36
        $region68: #{chess_piece_model_forward.1} parent=63 // pred_fallthru
          _
      $region64: #{chess_piece_model_forward.1} parent=5 // pred_fallthru
        _
      %p519 = scmp.le.s32.totalorder 1, %s28
      %p520 = scmp.lt.s32.totalorder %s28, 3
      %p521 = pnand %p519, %p520
      %p522 = pneg %p521
      // Predicated region
      $region69: #{chess_piece_model_forward.1} parent=5 // pred_check
        _
      $region70: #{chess_piece_model_forward.1} parent=5 // pred_check_branch
        %524 = sbr.rel (%p521) target = $region72
      $region71: #{chess_piece_model_forward.1} parent=5 // pred_region
        %s525 = ssub.s32 %s28, 1
        // Predicated region
        $region73: #{chess_piece_model_forward.1} parent=71 // pred_check
          %p526 = pneg %p89
        $region74: #{chess_piece_model_forward.1} parent=71 // pred_check_branch
          %528 = sbr.rel (%p526) target = $region76
        $region75: #{chess_piece_model_forward.1} parent=71 // pred_region
          %530 = dma.done [#allocation4], 256
        $region76: #{chess_piece_model_forward.1} parent=71 // pred_fallthru
          _
        // Predicated region
        $region77: #{chess_piece_model_forward.1} parent=71 // pred_check
          %p531 = pneg %p110
        $region78: #{chess_piece_model_forward.1} parent=71 // pred_check_branch
          %533 = sbr.rel (%p531) target = $region80
        $region79: #{chess_piece_model_forward.1} parent=71 // pred_region
          %535 = dma.done [#allocation7], 16
        $region80: #{chess_piece_model_forward.1} parent=71 // pred_fallthru
          _
        // Predicated region
        $region81: #{chess_piece_model_forward.1} parent=71 // pred_check
          %p536 = pneg %p131
        $region82: #{chess_piece_model_forward.1} parent=71 // pred_check_branch
          %538 = sbr.rel (%p536) target = $region84
        $region83: #{chess_piece_model_forward.1} parent=71 // pred_region
          %540 = dma.done [#allocation7], 16
        $region84: #{chess_piece_model_forward.1} parent=71 // pred_fallthru
          _
        // Predicated region
        $region85: #{chess_piece_model_forward.1} parent=71 // pred_check
          %p541 = pneg %p152
        $region86: #{chess_piece_model_forward.1} parent=71 // pred_check_branch
          %543 = sbr.rel (%p541) target = $region88
        $region87: #{chess_piece_model_forward.1} parent=71 // pred_region
          %545 = dma.done [#allocation10], 12288
        $region88: #{chess_piece_model_forward.1} parent=71 // pred_fallthru
          _
        // Predicated region
        $region89: #{chess_piece_model_forward.1} parent=71 // pred_check
          %p546 = pneg %p173
        $region90: #{chess_piece_model_forward.1} parent=71 // pred_check_branch
          %548 = sbr.rel (%p546) target = $region92
        $region91: #{chess_piece_model_forward.1} parent=71 // pred_region
          %550 = dma.done [#allocation10], 192
        $region92: #{chess_piece_model_forward.1} parent=71 // pred_fallthru
          _
        // Predicated region
        $region93: #{chess_piece_model_forward.1} parent=71 // pred_check
          %p551 = pneg %p194
        $region94: #{chess_piece_model_forward.1} parent=71 // pred_check_branch
          %553 = sbr.rel (%p551) target = $region96
        $region95: #{chess_piece_model_forward.1} parent=71 // pred_region
          %555 = dma.done [#allocation13], 192
        $region96: #{chess_piece_model_forward.1} parent=71 // pred_fallthru
          _
        // Predicated region
        $region97: #{chess_piece_model_forward.1} parent=71 // pred_check
          %p556 = pneg %p215
        $region98: #{chess_piece_model_forward.1} parent=71 // pred_check_branch
          %558 = sbr.rel (%p556) target = $region100
        $region99: #{chess_piece_model_forward.1} parent=71 // pred_region
          %560 = dma.done [#allocation13], 49152
        $region100: #{chess_piece_model_forward.1} parent=71 // pred_fallthru
          _
        // Predicated region
        $region101: #{chess_piece_model_forward.1} parent=71 // pred_check
          %p561 = pneg %p236
        $region102: #{chess_piece_model_forward.1} parent=71 // pred_check_branch
          %563 = sbr.rel (%p561) target = $region104
        $region103: #{chess_piece_model_forward.1} parent=71 // pred_region
          %565 = dma.done [#allocation16], 64
        $region104: #{chess_piece_model_forward.1} parent=71 // pred_fallthru
          _
        // Predicated region
        $region105: #{chess_piece_model_forward.1} parent=71 // pred_check
          %p566 = pneg %p257
        $region106: #{chess_piece_model_forward.1} parent=71 // pred_check_branch
          %568 = sbr.rel (%p566) target = $region108
        $region107: #{chess_piece_model_forward.1} parent=71 // pred_region
          %570 = dma.done [#allocation16], 64
        $region108: #{chess_piece_model_forward.1} parent=71 // pred_fallthru
          _
        // Predicated region
        $region109: #{chess_piece_model_forward.1} parent=71 // pred_check
          %p571 = pneg %p278
        $region110: #{chess_piece_model_forward.1} parent=71 // pred_check_branch
          %573 = sbr.rel (%p571) target = $region112
        $region111: #{chess_piece_model_forward.1} parent=71 // pred_region
          %575 = dma.done [#allocation19], 64
        $region112: #{chess_piece_model_forward.1} parent=71 // pred_fallthru
          _
        // Predicated region
        $region113: #{chess_piece_model_forward.1} parent=71 // pred_check
          %p576 = pneg %p320
        $region114: #{chess_piece_model_forward.1} parent=71 // pred_check_branch
          %578 = sbr.rel (%p576) target = $region116
        $region115: #{chess_piece_model_forward.1} parent=71 // pred_region
          %580 = dma.done [#allocation19], 16
        $region116: #{chess_piece_model_forward.1} parent=71 // pred_fallthru
          _
        %s581 = smul.u32 8, %s38
        %p582 = scmp.lt.s32.totalorder %s37, 1
        %s583 = scalar_select %p582, %s37, 1
        %p584 = scmp.lt.s32.totalorder %s581, 7
        %s585 = scalar_select %p584, %s581, 7
        %s586 = smul.addr %s583, 8
        %s587 = sadd.s32 %s585, %s586
        %s588 = smul.addr %s587, 4
        %s589 = scalar_lea.vmem %s0, %s588
        %p590 = pneg %p68
        %p591 = pneg %p65
        %p592 = pneg %p89
        %p593 = pneg %p86
        %p594 = pneg %p110
        %p595 = pneg %p107
        %p596 = pneg %p131
        %p597 = pneg %p128
        %p598 = pneg %p152
        %p599 = pneg %p149
        %p600 = pneg %p173
        %p601 = pneg %p170
        %p602 = pneg %p194
        %p603 = pneg %p191
        %p604 = pneg %p215
        %p605 = pneg %p212
        %p606 = pneg %p236
        %p607 = pneg %p233
        %p608 = pneg %p257
        %p609 = pneg %p254
        %p610 = pneg %p278
        %p611 = pneg %p275
        %p612 = pneg %p299
        %p613 = pneg %p296
        %p614 = pneg %p320
        %p615 = pneg %p317
        %p616 = pneg %p346
        %p617 = pneg %p343
        %s618 = sand.u32 %s333, 1
        %s619 = scalar_lea.sflag [#allocation5], %s618
        %s620 = sand.u32 %s333, 1
        %s621 = scalar_lea.vmem [#allocation21], %s620
        %s622 = smul.u32 8, %s38
        %p623 = scmp.lt.s32.totalorder %s37, 1
        %s624 = scalar_select %p623, %s37, 1
        %p625 = scmp.lt.s32.totalorder %s622, 7
        %s626 = scalar_select %p625, %s622, 7
        %s627 = smul.addr %s624, 8
        %s628 = sadd.s32 %s626, %s627
        %s629 = smul.addr %s628, 4
        %s630 = scalar_lea.vmem %s0, %s629
        %s631 = smul.u32 8, %s38
        %p634 = scmp.eq.s32.totalorder %s38, 0
        // Predicated region
        $region117: #{chess_piece_model_forward.1} parent=71 // pred_check
          %p635 = pneg %p634
        $region118: #{chess_piece_model_forward.1} parent=71 // pred_check_branch
          %637 = sbr.rel (%p635) target = $region120
        $region119: #{chess_piece_model_forward.1} parent=71 // pred_region
          %638 = vst [vmem:[#allocation2] sm:$0xff] 0.0
          %639 = vst [vmem:[#allocation2 + $0x8] sm:$0xff] 0.0
          %640 = vst [vmem:[#allocation2 + $0x10] sm:$0xff] 0.0
          %641 = vst [vmem:[#allocation2 + $0x18] sm:$0xff] 0.0
          %642 = vst [vmem:[#allocation2 + $0x20] sm:$0xff] 0.0
          %643 = vst [vmem:[#allocation2 + $0x28] sm:$0xff] 0.0
          %644 = vst [vmem:[#allocation2 + $0x30] sm:$0xff] 0.0
          %645 = vst [vmem:[#allocation2 + $0x38] sm:$0xff] 0.0
          %646 = vst [vmem:[#allocation2 + $0x40] sm:$0xff] 0.0
          %647 = vst [vmem:[#allocation2 + $0x48] sm:$0xff] 0.0
          %648 = vst [vmem:[#allocation2 + $0x50] sm:$0xff] 0.0
          %649 = vst [vmem:[#allocation2 + $0x58] sm:$0xff] 0.0
        $region120: #{chess_piece_model_forward.1} parent=71 // pred_fallthru
          _
        %v650 = vld [vmem:[%s630] sm:$0xf]
        %v651 = vld [vmem:[%s630 + $0x4] sm:$0xf]
        %v652 = vld [vmem:[%s630 + $0x8] sm:$0xf]
        %v653 = vld [vmem:[%s630 + $0xc] sm:$0xf]
        %v654 = vld [vmem:[%s630 + $0x10] sm:$0xf]
        %v655 = vld [vmem:[%s630 + $0x14] sm:$0xf]
        %v656 = vld [vmem:[%s630 + $0x18] sm:$0xf]
        %v657 = vld [vmem:[%s630 + $0x1c] sm:$0xf]
        %v658 = vld [vmem:[#allocation3] sm:$0xf]
        %v659 = vld [vmem:[#allocation3 + $0x4] sm:$0xf]
        %v660 = vld [vmem:[#allocation3 + $0x8] sm:$0xf]
        %v661 = vld [vmem:[#allocation3 + $0xc] sm:$0x3]
        %v670 = vunpack.c.l.b16 %v650
        %v671 = vunpack.c.l.b16 %v651
        %v672 = vunpack.c.l.b16 %v652
        %v673 = vunpack.c.l.b16 %v653
        %v674 = vunpack.c.l.b16 %v654
        %v675 = vunpack.c.l.b16 %v655
        %v676 = vunpack.c.l.b16 %v656
        %v677 = vunpack.c.l.b16 %v657
        %v678 = vpack.c.b16 %v671, %v670
        %v679 = vpack.c.b16 %v673, %v672
        %v680 = vpack.c.b16 %v675, %v674
        %v681 = vpack.c.b16 %v677, %v676
        %v686 = vunpack.c.l.b16 %v658
        %v687 = vunpack.c.l.b16 %v659
        %v688 = vunpack.c.l.b16 %v660
        %v689 = vunpack.c.l.b16 %v661
        %v690 = vpack.c.b16 %v687, %v686
        %v691 = vpack.c.b16 %v689, %v688
        %vm693 = vcmask 220160
        %v695 = vsel %vm693, %v678, 0
        %v698 = vsel %vm693, %v679, 0
        %v701 = vsel %vm693, %v680, 0
        %v704 = vsel %vm693, %v681, 0
        %vm706 = vcmask 1044480
        %vm707 = vcmask 1045504
        %v708 = vsel %vm706, 4294967295, 65535
        %v709 = vsel %vm707, %v708, 0
        %v711 = vand.u32 %v691, %v709
        %713 = vmatpush.bf16.msra.mxu0 0
        %714 = vmatpush.bf16.msra.mxu0 0
        %715 = vmatpush.bf16.msra.mxu0 0
        %716 = vmatpush.bf16.msra.mxu0 0
        %717 = vmatpush.bf16.msra.mxu0 0
        %718 = vmatpush.bf16.msra.mxu0 0
        %719 = vmatpush.bf16.msra.mxu0 %v711
        %720 = vmatpush.bf16.msra.mxu0 %v690
        %721 = vmatmul.bf16.gmra.mxu0 %v695
        %v722 = vpop.f32.mrf.mxu0
        %v723 = vadd.f32 0.0, %v722
        %v724 = vpop.f32.mrf.mxu0
        %v725 = vadd.f32 0.0, %v724
        %726 = vmatmul.bf16.gmra.mxu0 %v698
        %v727 = vpop.f32.mrf.mxu0
        %v728 = vadd.f32 0.0, %v727
        %v729 = vpop.f32.mrf.mxu0
        %v730 = vadd.f32 0.0, %v729
        %731 = vmatmul.bf16.gmra.mxu0 %v701
        %v732 = vpop.f32.mrf.mxu0
        %v733 = vadd.f32 0.0, %v732
        %v734 = vpop.f32.mrf.mxu0
        %v735 = vadd.f32 0.0, %v734
        %736 = vmatmul.bf16.gmra.mxu0 %v704
        %v737 = vpop.f32.mrf.mxu0
        %v738 = vadd.f32 0.0, %v737
        %v739 = vpop.f32.mrf.mxu0
        %v740 = vadd.f32 0.0, %v739
        %741 = vdwg.mxu0
        %v742 = vld [vmem:[#allocation6] sm:$0x1]
        %v744 = vperm.slane %v742, 0
        %v746 = vmul.f32 %v723, %v744
        %v747 = vmul.f32 %v725, %v744
        %v748 = vmul.f32 %v728, %v744
        %v749 = vmul.f32 %v730, %v744
        %v750 = vmul.f32 %v733, %v744
        %v751 = vmul.f32 %v735, %v744
        %v752 = vmul.f32 %v738, %v744
        %v753 = vmul.f32 %v740, %v744
        %v754 = vld [vmem:[#allocation8] sm:$0x1]
        %v756 = vperm.slane %v754, 0
        %v758 = vadd.f32 %v746, %v756
        %v759 = vadd.f32 %v747, %v756
        %v760 = vadd.f32 %v748, %v756
        %v761 = vadd.f32 %v749, %v756
        %v762 = vadd.f32 %v750, %v756
        %v763 = vadd.f32 %v751, %v756
        %v764 = vadd.f32 %v752, %v756
        %v765 = vadd.f32 %v753, %v756
        %v766 = vxor.u32 %v758, 2147483648
        %v767 = vxor.u32 %v759, 2147483648
        %v768 = vxor.u32 %v760, 2147483648
        %v769 = vxor.u32 %v761, 2147483648
        %v770 = vxor.u32 %v762, 2147483648
        %v771 = vxor.u32 %v763, 2147483648
        %v772 = vxor.u32 %v764, 2147483648
        %v773 = vxor.u32 %v765, 2147483648
        %v774 = vmul.f32 %v766, 1.442695
        %v775 = vpow.pop %v774
        %v776 = vmul.f32 %v767, 1.442695
        %v777 = vpow.pop %v776
        %v778 = vmul.f32 %v768, 1.442695
        %v779 = vpow.pop %v778
        %v780 = vmul.f32 %v769, 1.442695
        %v781 = vpow.pop %v780
        %v782 = vmul.f32 %v770, 1.442695
        %v783 = vpow.pop %v782
        %v784 = vmul.f32 %v771, 1.442695
        %v785 = vpow.pop %v784
        %v786 = vmul.f32 %v772, 1.442695
        %v787 = vpow.pop %v786
        %v788 = vmul.f32 %v773, 1.442695
        %v789 = vpow.pop %v788
        %v790 = vadd.f32 %v775, 1.0
        %v791 = vadd.f32 %v777, 1.0
        %v792 = vadd.f32 %v779, 1.0
        %v793 = vadd.f32 %v781, 1.0
        %v794 = vadd.f32 %v783, 1.0
        %v795 = vadd.f32 %v785, 1.0
        %v796 = vadd.f32 %v787, 1.0
        %v797 = vadd.f32 %v789, 1.0
        %v798 = vrcp.pop %v790
        %v799 = vmul.f32 %v790, %v798
        %v800 = vsub.f32 1.0, %v799
        %v801 = vmul.f32 %v798, %v800
        %v802 = vadd.f32 %v798, %v801
        %vm803 = vweird.f32 %v790
        %vm804 = vweird.f32 %v798
        %vm805 = vmor %vm803, %vm804
        %v806 = vsel %vm805, %v798, %v802
        %v807 = vand.u32 2147483647, %v790
        %vm808 = vcmp.eq.f32.partialorder %v807, 8.507059e+37
        %v809 = vand.u32 %v790, 2147483648
        %v810 = vor.u32 1.1754944e-38, %v809
        %v811 = vsel %vm808, %v810, %v806
        %v812 = vmul.f32 1.0, %v811
        %v813 = vrcp.pop %v791
        %v814 = vmul.f32 %v791, %v813
        %v815 = vsub.f32 1.0, %v814
        %v816 = vmul.f32 %v813, %v815
        %v817 = vadd.f32 %v813, %v816
        %vm818 = vweird.f32 %v791
        %vm819 = vweird.f32 %v813
        %vm820 = vmor %vm818, %vm819
        %v821 = vsel %vm820, %v813, %v817
        %v822 = vand.u32 2147483647, %v791
        %vm823 = vcmp.eq.f32.partialorder %v822, 8.507059e+37
        %v824 = vand.u32 %v791, 2147483648
        %v825 = vor.u32 1.1754944e-38, %v824
        %v826 = vsel %vm823, %v825, %v821
        %v827 = vmul.f32 1.0, %v826
        %v828 = vrcp.pop %v792
        %v829 = vmul.f32 %v792, %v828
        %v830 = vsub.f32 1.0, %v829
        %v831 = vmul.f32 %v828, %v830
        %v832 = vadd.f32 %v828, %v831
        %vm833 = vweird.f32 %v792
        %vm834 = vweird.f32 %v828
        %vm835 = vmor %vm833, %vm834
        %v836 = vsel %vm835, %v828, %v832
        %v837 = vand.u32 2147483647, %v792
        %vm838 = vcmp.eq.f32.partialorder %v837, 8.507059e+37
        %v839 = vand.u32 %v792, 2147483648
        %v840 = vor.u32 1.1754944e-38, %v839
        %v841 = vsel %vm838, %v840, %v836
        %v842 = vmul.f32 1.0, %v841
        %v843 = vrcp.pop %v793
        %v844 = vmul.f32 %v793, %v843
        %v845 = vsub.f32 1.0, %v844
        %v846 = vmul.f32 %v843, %v845
        %v847 = vadd.f32 %v843, %v846
        %vm848 = vweird.f32 %v793
        %vm849 = vweird.f32 %v843
        %vm850 = vmor %vm848, %vm849
        %v851 = vsel %vm850, %v843, %v847
        %v852 = vand.u32 2147483647, %v793
        %vm853 = vcmp.eq.f32.partialorder %v852, 8.507059e+37
        %v854 = vand.u32 %v793, 2147483648
        %v855 = vor.u32 1.1754944e-38, %v854
        %v856 = vsel %vm853, %v855, %v851
        %v857 = vmul.f32 1.0, %v856
        %v858 = vrcp.pop %v794
        %v859 = vmul.f32 %v794, %v858
        %v860 = vsub.f32 1.0, %v859
        %v861 = vmul.f32 %v858, %v860
        %v862 = vadd.f32 %v858, %v861
        %vm863 = vweird.f32 %v794
        %vm864 = vweird.f32 %v858
        %vm865 = vmor %vm863, %vm864
        %v866 = vsel %vm865, %v858, %v862
        %v867 = vand.u32 2147483647, %v794
        %vm868 = vcmp.eq.f32.partialorder %v867, 8.507059e+37
        %v869 = vand.u32 %v794, 2147483648
        %v870 = vor.u32 1.1754944e-38, %v869
        %v871 = vsel %vm868, %v870, %v866
        %v872 = vmul.f32 1.0, %v871
        %v873 = vrcp.pop %v795
        %v874 = vmul.f32 %v795, %v873
        %v875 = vsub.f32 1.0, %v874
        %v876 = vmul.f32 %v873, %v875
        %v877 = vadd.f32 %v873, %v876
        %vm878 = vweird.f32 %v795
        %vm879 = vweird.f32 %v873
        %vm880 = vmor %vm878, %vm879
        %v881 = vsel %vm880, %v873, %v877
        %v882 = vand.u32 2147483647, %v795
        %vm883 = vcmp.eq.f32.partialorder %v882, 8.507059e+37
        %v884 = vand.u32 %v795, 2147483648
        %v885 = vor.u32 1.1754944e-38, %v884
        %v886 = vsel %vm883, %v885, %v881
        %v887 = vmul.f32 1.0, %v886
        %v888 = vrcp.pop %v796
        %v889 = vmul.f32 %v796, %v888
        %v890 = vsub.f32 1.0, %v889
        %v891 = vmul.f32 %v888, %v890
        %v892 = vadd.f32 %v888, %v891
        %vm893 = vweird.f32 %v796
        %vm894 = vweird.f32 %v888
        %vm895 = vmor %vm893, %vm894
        %v896 = vsel %vm895, %v888, %v892
        %v897 = vand.u32 2147483647, %v796
        %vm898 = vcmp.eq.f32.partialorder %v897, 8.507059e+37
        %v899 = vand.u32 %v796, 2147483648
        %v900 = vor.u32 1.1754944e-38, %v899
        %v901 = vsel %vm898, %v900, %v896
        %v902 = vmul.f32 1.0, %v901
        %v903 = vrcp.pop %v797
        %v904 = vmul.f32 %v797, %v903
        %v905 = vsub.f32 1.0, %v904
        %v906 = vmul.f32 %v903, %v905
        %v907 = vadd.f32 %v903, %v906
        %vm908 = vweird.f32 %v797
        %vm909 = vweird.f32 %v903
        %vm910 = vmor %vm908, %vm909
        %v911 = vsel %vm910, %v903, %v907
        %v912 = vand.u32 2147483647, %v797
        %vm913 = vcmp.eq.f32.partialorder %v912, 8.507059e+37
        %v914 = vand.u32 %v797, 2147483648
        %v915 = vor.u32 1.1754944e-38, %v914
        %v916 = vsel %vm913, %v915, %v911
        %v917 = vmul.f32 1.0, %v916
        %v918 = vmul.f32 %v758, %v812
        %v919 = vmul.f32 %v759, %v827
        %v920 = vmul.f32 %v760, %v842
        %v921 = vmul.f32 %v761, %v857
        %v922 = vmul.f32 %v762, %v872
        %v923 = vmul.f32 %v763, %v887
        %v924 = vmul.f32 %v764, %v902
        %v925 = vmul.f32 %v765, %v917
        %v926 = vpack.c.bf16 %v919, %v918
        %v927 = vpack.c.bf16 %v921, %v920
        %v928 = vpack.c.bf16 %v923, %v922
        %v929 = vpack.c.bf16 %v925, %v924
        %v930 = vld [vmem:[#allocation9] sm:$0xff]
        %v931 = vld [vmem:[#allocation9 + $0x8] sm:$0xff]
        %v932 = vld [vmem:[#allocation9 + $0x10] sm:$0xff]
        %v933 = vld [vmem:[#allocation9 + $0x18] sm:$0xff]
        %v934 = vld [vmem:[#allocation9 + $0x20] sm:$0xff]
        %v935 = vld [vmem:[#allocation9 + $0x28] sm:$0xff]
        %v936 = vld [vmem:[#allocation9 + $0x30] sm:$0xff]
        %v937 = vld [vmem:[#allocation9 + $0x38] sm:$0xff]
        %v938 = vld [vmem:[#allocation9 + $0x40] sm:$0xff]
        %v939 = vld [vmem:[#allocation9 + $0x48] sm:$0xff]
        %v940 = vld [vmem:[#allocation9 + $0x50] sm:$0xff]
        %v941 = vld [vmem:[#allocation9 + $0x58] sm:$0xff]
        %v942 = vld [vmem:[#allocation9 + $0x60] sm:$0xff]
        %v943 = vld [vmem:[#allocation9 + $0x68] sm:$0xff]
        %v944 = vld [vmem:[#allocation9 + $0x70] sm:$0xff]
        %v945 = vld [vmem:[#allocation9 + $0x78] sm:$0xff]
        %v946 = vld [vmem:[#allocation9 + $0x80] sm:$0xff]
        %v947 = vld [vmem:[#allocation9 + $0x88] sm:$0xff]
        %v948 = vld [vmem:[#allocation9 + $0x90] sm:$0xff]
        %v949 = vld [vmem:[#allocation9 + $0x98] sm:$0xff]
        %v950 = vld [vmem:[#allocation9 + $0xa0] sm:$0xff]
        %v951 = vld [vmem:[#allocation9 + $0xa8] sm:$0xff]
        %v952 = vld [vmem:[#allocation9 + $0xb0] sm:$0xff]
        %v953 = vld [vmem:[#allocation9 + $0xb8] sm:$0xff]
        %v954 = vld [vmem:[#allocation9 + $0xc0] sm:$0xff]
        %v955 = vld [vmem:[#allocation9 + $0xc8] sm:$0xff]
        %v956 = vld [vmem:[#allocation9 + $0xd0] sm:$0xff]
        %v957 = vld [vmem:[#allocation9 + $0xd8] sm:$0xff]
        %v958 = vld [vmem:[#allocation9 + $0xe0] sm:$0xff]
        %v959 = vld [vmem:[#allocation9 + $0xe8] sm:$0xff]
        %v960 = vld [vmem:[#allocation9 + $0xf0] sm:$0xff]
        %v961 = vld [vmem:[#allocation9 + $0xf8] sm:$0xff]
        %v962 = vld [vmem:[#allocation9 + $0x100] sm:$0xff]
        %v963 = vld [vmem:[#allocation9 + $0x108] sm:$0xff]
        %v964 = vld [vmem:[#allocation9 + $0x110] sm:$0xff]
        %v965 = vld [vmem:[#allocation9 + $0x118] sm:$0xff]
        %v966 = vld [vmem:[#allocation9 + $0x120] sm:$0xff]
        %v967 = vld [vmem:[#allocation9 + $0x128] sm:$0xff]
        %v968 = vld [vmem:[#allocation9 + $0x130] sm:$0xff]
        %v969 = vld [vmem:[#allocation9 + $0x138] sm:$0xff]
        %v970 = vld [vmem:[#allocation9 + $0x140] sm:$0xff]
        %v971 = vld [vmem:[#allocation9 + $0x148] sm:$0xff]
        %v972 = vld [vmem:[#allocation9 + $0x150] sm:$0xff]
        %v973 = vld [vmem:[#allocation9 + $0x158] sm:$0xff]
        %v974 = vld [vmem:[#allocation9 + $0x160] sm:$0xff]
        %v975 = vld [vmem:[#allocation9 + $0x168] sm:$0xff]
        %v976 = vld [vmem:[#allocation9 + $0x170] sm:$0xff]
        %v977 = vld [vmem:[#allocation9 + $0x178] sm:$0xff]
        %v978 = vld [vmem:[#allocation9 + $0x180] sm:$0xff]
        %v979 = vld [vmem:[#allocation9 + $0x188] sm:$0xff]
        %v980 = vld [vmem:[#allocation9 + $0x190] sm:$0xff]
        %v981 = vld [vmem:[#allocation9 + $0x198] sm:$0xff]
        %v982 = vld [vmem:[#allocation9 + $0x1a0] sm:$0xff]
        %v983 = vld [vmem:[#allocation9 + $0x1a8] sm:$0xff]
        %v984 = vld [vmem:[#allocation9 + $0x1b0] sm:$0xff]
        %v985 = vld [vmem:[#allocation9 + $0x1b8] sm:$0xff]
        %v986 = vld [vmem:[#allocation9 + $0x1c0] sm:$0xff]
        %v987 = vld [vmem:[#allocation9 + $0x1c8] sm:$0xff]
        %v988 = vld [vmem:[#allocation9 + $0x1d0] sm:$0xff]
        %v989 = vld [vmem:[#allocation9 + $0x1d8] sm:$0xff]
        %v990 = vld [vmem:[#allocation9 + $0x1e0] sm:$0xff]
        %v991 = vld [vmem:[#allocation9 + $0x1e8] sm:$0xff]
        %v992 = vld [vmem:[#allocation9 + $0x1f0] sm:$0xff]
        %v993 = vld [vmem:[#allocation9 + $0x1f8] sm:$0xff]
        %v994 = vld [vmem:[#allocation9 + $0x200] sm:$0xff]
        %v995 = vld [vmem:[#allocation9 + $0x208] sm:$0xff]
        %v996 = vld [vmem:[#allocation9 + $0x210] sm:$0xff]
        %v997 = vld [vmem:[#allocation9 + $0x218] sm:$0xff]
        %v998 = vld [vmem:[#allocation9 + $0x220] sm:$0xff]
        %v999 = vld [vmem:[#allocation9 + $0x228] sm:$0xff]
        %v1000 = vld [vmem:[#allocation9 + $0x230] sm:$0xff]
        %v1001 = vld [vmem:[#allocation9 + $0x238] sm:$0xff]
        %v1002 = vld [vmem:[#allocation9 + $0x240] sm:$0xff]
        %v1003 = vld [vmem:[#allocation9 + $0x248] sm:$0xff]
        %v1004 = vld [vmem:[#allocation9 + $0x250] sm:$0xff]
        %v1005 = vld [vmem:[#allocation9 + $0x258] sm:$0xff]
        %v1006 = vld [vmem:[#allocation9 + $0x260] sm:$0xff]
        %v1007 = vld [vmem:[#allocation9 + $0x268] sm:$0xff]
        %v1008 = vld [vmem:[#allocation9 + $0x270] sm:$0xff]
        %v1009 = vld [vmem:[#allocation9 + $0x278] sm:$0xff]
        %v1010 = vld [vmem:[#allocation9 + $0x280] sm:$0xff]
        %v1011 = vld [vmem:[#allocation9 + $0x288] sm:$0xff]
        %v1012 = vld [vmem:[#allocation9 + $0x290] sm:$0xff]
        %v1013 = vld [vmem:[#allocation9 + $0x298] sm:$0xff]
        %v1014 = vld [vmem:[#allocation9 + $0x2a0] sm:$0xff]
        %v1015 = vld [vmem:[#allocation9 + $0x2a8] sm:$0xff]
        %v1016 = vld [vmem:[#allocation9 + $0x2b0] sm:$0xff]
        %v1017 = vld [vmem:[#allocation9 + $0x2b8] sm:$0xff]
        %v1018 = vld [vmem:[#allocation9 + $0x2c0] sm:$0xff]
        %v1019 = vld [vmem:[#allocation9 + $0x2c8] sm:$0xff]
        %v1020 = vld [vmem:[#allocation9 + $0x2d0] sm:$0xff]
        %v1021 = vld [vmem:[#allocation9 + $0x2d8] sm:$0xff]
        %v1022 = vld [vmem:[#allocation9 + $0x2e0] sm:$0xff]
        %v1023 = vld [vmem:[#allocation9 + $0x2e8] sm:$0xff]
        %v1024 = vld [vmem:[#allocation9 + $0x2f0] sm:$0xff]
        %v1025 = vld [vmem:[#allocation9 + $0x2f8] sm:$0xff]
        %v1122 = vunpack.c.l.b16 %v930
        %v1123 = vunpack.c.h.b16 %v930
        %v1124 = vunpack.c.l.b16 %v931
        %v1125 = vunpack.c.h.b16 %v931
        %v1126 = vunpack.c.l.b16 %v932
        %v1127 = vunpack.c.h.b16 %v932
        %v1128 = vunpack.c.l.b16 %v933
        %v1129 = vunpack.c.h.b16 %v933
        %v1130 = vunpack.c.l.b16 %v934
        %v1131 = vunpack.c.h.b16 %v934
        %v1132 = vunpack.c.l.b16 %v935
        %v1133 = vunpack.c.h.b16 %v935
        %v1134 = vunpack.c.l.b16 %v936
        %v1135 = vunpack.c.h.b16 %v936
        %v1136 = vunpack.c.l.b16 %v937
        %v1137 = vunpack.c.h.b16 %v937
        %v1138 = vunpack.c.l.b16 %v938
        %v1139 = vunpack.c.h.b16 %v938
        %v1140 = vunpack.c.l.b16 %v939
        %v1141 = vunpack.c.h.b16 %v939
        %v1142 = vunpack.c.l.b16 %v940
        %v1143 = vunpack.c.h.b16 %v940
        %v1144 = vunpack.c.l.b16 %v941
        %v1145 = vunpack.c.h.b16 %v941
        %v1146 = vunpack.c.l.b16 %v942
        %v1147 = vunpack.c.h.b16 %v942
        %v1148 = vunpack.c.l.b16 %v943
        %v1149 = vunpack.c.h.b16 %v943
        %v1150 = vunpack.c.l.b16 %v944
        %v1151 = vunpack.c.h.b16 %v944
        %v1152 = vunpack.c.l.b16 %v945
        %v1153 = vunpack.c.h.b16 %v945
        %v1154 = vunpack.c.l.b16 %v946
        %v1155 = vunpack.c.h.b16 %v946
        %v1156 = vunpack.c.l.b16 %v947
        %v1157 = vunpack.c.h.b16 %v947
        %v1158 = vunpack.c.l.b16 %v948
        %v1159 = vunpack.c.h.b16 %v948
        %v1160 = vunpack.c.l.b16 %v949
        %v1161 = vunpack.c.h.b16 %v949
        %v1162 = vunpack.c.l.b16 %v950
        %v1163 = vunpack.c.h.b16 %v950
        %v1164 = vunpack.c.l.b16 %v951
        %v1165 = vunpack.c.h.b16 %v951
        %v1166 = vunpack.c.l.b16 %v952
        %v1167 = vunpack.c.h.b16 %v952
        %v1168 = vunpack.c.l.b16 %v953
        %v1169 = vunpack.c.h.b16 %v953
        %v1170 = vunpack.c.l.b16 %v954
        %v1171 = vunpack.c.h.b16 %v954
        %v1172 = vunpack.c.l.b16 %v955
        %v1173 = vunpack.c.h.b16 %v955
        %v1174 = vunpack.c.l.b16 %v956
        %v1175 = vunpack.c.h.b16 %v956
        %v1176 = vunpack.c.l.b16 %v957
        %v1177 = vunpack.c.h.b16 %v957
        %v1178 = vunpack.c.l.b16 %v958
        %v1179 = vunpack.c.h.b16 %v958
        %v1180 = vunpack.c.l.b16 %v959
        %v1181 = vunpack.c.h.b16 %v959
        %v1182 = vunpack.c.l.b16 %v960
        %v1183 = vunpack.c.h.b16 %v960
        %v1184 = vunpack.c.l.b16 %v961
        %v1185 = vunpack.c.h.b16 %v961
        %v1186 = vunpack.c.l.b16 %v962
        %v1187 = vunpack.c.h.b16 %v962
        %v1188 = vunpack.c.l.b16 %v963
        %v1189 = vunpack.c.h.b16 %v963
        %v1190 = vunpack.c.l.b16 %v964
        %v1191 = vunpack.c.h.b16 %v964
        %v1192 = vunpack.c.l.b16 %v965
        %v1193 = vunpack.c.h.b16 %v965
        %v1194 = vunpack.c.l.b16 %v966
        %v1195 = vunpack.c.h.b16 %v966
        %v1196 = vunpack.c.l.b16 %v967
        %v1197 = vunpack.c.h.b16 %v967
        %v1198 = vunpack.c.l.b16 %v968
        %v1199 = vunpack.c.h.b16 %v968
        %v1200 = vunpack.c.l.b16 %v969
        %v1201 = vunpack.c.h.b16 %v969
        %v1202 = vunpack.c.l.b16 %v970
        %v1203 = vunpack.c.h.b16 %v970
        %v1204 = vunpack.c.l.b16 %v971
        %v1205 = vunpack.c.h.b16 %v971
        %v1206 = vunpack.c.l.b16 %v972
        %v1207 = vunpack.c.h.b16 %v972
        %v1208 = vunpack.c.l.b16 %v973
        %v1209 = vunpack.c.h.b16 %v973
        %v1210 = vunpack.c.l.b16 %v974
        %v1211 = vunpack.c.h.b16 %v974
        %v1212 = vunpack.c.l.b16 %v975
        %v1213 = vunpack.c.h.b16 %v975
        %v1214 = vunpack.c.l.b16 %v976
        %v1215 = vunpack.c.h.b16 %v976
        %v1216 = vunpack.c.l.b16 %v977
        %v1217 = vunpack.c.h.b16 %v977
        %v1218 = vunpack.c.l.b16 %v978
        %v1219 = vunpack.c.h.b16 %v978
        %v1220 = vunpack.c.l.b16 %v979
        %v1221 = vunpack.c.h.b16 %v979
        %v1222 = vunpack.c.l.b16 %v980
        %v1223 = vunpack.c.h.b16 %v980
        %v1224 = vunpack.c.l.b16 %v981
        %v1225 = vunpack.c.h.b16 %v981
        %v1226 = vunpack.c.l.b16 %v982
        %v1227 = vunpack.c.h.b16 %v982
        %v1228 = vunpack.c.l.b16 %v983
        %v1229 = vunpack.c.h.b16 %v983
        %v1230 = vunpack.c.l.b16 %v984
        %v1231 = vunpack.c.h.b16 %v984
        %v1232 = vunpack.c.l.b16 %v985
        %v1233 = vunpack.c.h.b16 %v985
        %v1234 = vunpack.c.l.b16 %v986
        %v1235 = vunpack.c.h.b16 %v986
        %v1236 = vunpack.c.l.b16 %v987
        %v1237 = vunpack.c.h.b16 %v987
        %v1238 = vunpack.c.l.b16 %v988
        %v1239 = vunpack.c.h.b16 %v988
        %v1240 = vunpack.c.l.b16 %v989
        %v1241 = vunpack.c.h.b16 %v989
        %v1242 = vunpack.c.l.b16 %v990
        %v1243 = vunpack.c.h.b16 %v990
        %v1244 = vunpack.c.l.b16 %v991
        %v1245 = vunpack.c.h.b16 %v991
        %v1246 = vunpack.c.l.b16 %v992
        %v1247 = vunpack.c.h.b16 %v992
        %v1248 = vunpack.c.l.b16 %v993
        %v1249 = vunpack.c.h.b16 %v993
        %v1250 = vunpack.c.l.b16 %v994
        %v1251 = vunpack.c.h.b16 %v994
        %v1252 = vunpack.c.l.b16 %v995
        %v1253 = vunpack.c.h.b16 %v995
        %v1254 = vunpack.c.l.b16 %v996
        %v1255 = vunpack.c.h.b16 %v996
        %v1256 = vunpack.c.l.b16 %v997
        %v1257 = vunpack.c.h.b16 %v997
        %v1258 = vunpack.c.l.b16 %v998
        %v1259 = vunpack.c.h.b16 %v998
        %v1260 = vunpack.c.l.b16 %v999
        %v1261 = vunpack.c.h.b16 %v999
        %v1262 = vunpack.c.l.b16 %v1000
        %v1263 = vunpack.c.h.b16 %v1000
        %v1264 = vunpack.c.l.b16 %v1001
        %v1265 = vunpack.c.h.b16 %v1001
        %v1266 = vunpack.c.l.b16 %v1002
        %v1267 = vunpack.c.h.b16 %v1002
        %v1268 = vunpack.c.l.b16 %v1003
        %v1269 = vunpack.c.h.b16 %v1003
        %v1270 = vunpack.c.l.b16 %v1004
        %v1271 = vunpack.c.h.b16 %v1004
        %v1272 = vunpack.c.l.b16 %v1005
        %v1273 = vunpack.c.h.b16 %v1005
        %v1274 = vunpack.c.l.b16 %v1006
        %v1275 = vunpack.c.h.b16 %v1006
        %v1276 = vunpack.c.l.b16 %v1007
        %v1277 = vunpack.c.h.b16 %v1007
        %v1278 = vunpack.c.l.b16 %v1008
        %v1279 = vunpack.c.h.b16 %v1008
        %v1280 = vunpack.c.l.b16 %v1009
        %v1281 = vunpack.c.h.b16 %v1009
        %v1282 = vunpack.c.l.b16 %v1010
        %v1283 = vunpack.c.h.b16 %v1010
        %v1284 = vunpack.c.l.b16 %v1011
        %v1285 = vunpack.c.h.b16 %v1011
        %v1286 = vunpack.c.l.b16 %v1012
        %v1287 = vunpack.c.h.b16 %v1012
        %v1288 = vunpack.c.l.b16 %v1013
        %v1289 = vunpack.c.h.b16 %v1013
        %v1290 = vunpack.c.l.b16 %v1014
        %v1291 = vunpack.c.h.b16 %v1014
        %v1292 = vunpack.c.l.b16 %v1015
        %v1293 = vunpack.c.h.b16 %v1015
        %v1294 = vunpack.c.l.b16 %v1016
        %v1295 = vunpack.c.h.b16 %v1016
        %v1296 = vunpack.c.l.b16 %v1017
        %v1297 = vunpack.c.h.b16 %v1017
        %v1298 = vunpack.c.l.b16 %v1018
        %v1299 = vunpack.c.h.b16 %v1018
        %v1300 = vunpack.c.l.b16 %v1019
        %v1301 = vunpack.c.h.b16 %v1019
        %v1302 = vunpack.c.l.b16 %v1020
        %v1303 = vunpack.c.h.b16 %v1020
        %v1304 = vunpack.c.l.b16 %v1021
        %v1305 = vunpack.c.h.b16 %v1021
        %v1306 = vunpack.c.l.b16 %v1022
        %v1307 = vunpack.c.h.b16 %v1022
        %v1308 = vunpack.c.l.b16 %v1023
        %v1309 = vunpack.c.h.b16 %v1023
        %v1310 = vunpack.c.l.b16 %v1024
        %v1311 = vunpack.c.h.b16 %v1024
        %v1312 = vunpack.c.l.b16 %v1025
        %v1313 = vunpack.c.h.b16 %v1025
        %v1314 = vpack.c.b16 %v1134, %v1122
        %v1315 = vpack.c.b16 %v1135, %v1123
        %v1316 = vpack.c.b16 %v1136, %v1124
        %v1317 = vpack.c.b16 %v1137, %v1125
        %v1318 = vpack.c.b16 %v1138, %v1126
        %v1319 = vpack.c.b16 %v1139, %v1127
        %v1320 = vpack.c.b16 %v1140, %v1128
        %v1321 = vpack.c.b16 %v1141, %v1129
        %v1322 = vpack.c.b16 %v1142, %v1130
        %v1323 = vpack.c.b16 %v1143, %v1131
        %v1324 = vpack.c.b16 %v1144, %v1132
        %v1325 = vpack.c.b16 %v1145, %v1133
        %v1326 = vpack.c.b16 %v1158, %v1146
        %v1327 = vpack.c.b16 %v1159, %v1147
        %v1328 = vpack.c.b16 %v1160, %v1148
        %v1329 = vpack.c.b16 %v1161, %v1149
        %v1330 = vpack.c.b16 %v1162, %v1150
        %v1331 = vpack.c.b16 %v1163, %v1151
        %v1332 = vpack.c.b16 %v1164, %v1152
        %v1333 = vpack.c.b16 %v1165, %v1153
        %v1334 = vpack.c.b16 %v1166, %v1154
        %v1335 = vpack.c.b16 %v1167, %v1155
        %v1336 = vpack.c.b16 %v1168, %v1156
        %v1337 = vpack.c.b16 %v1169, %v1157
        %v1338 = vpack.c.b16 %v1182, %v1170
        %v1339 = vpack.c.b16 %v1183, %v1171
        %v1340 = vpack.c.b16 %v1184, %v1172
        %v1341 = vpack.c.b16 %v1185, %v1173
        %v1342 = vpack.c.b16 %v1186, %v1174
        %v1343 = vpack.c.b16 %v1187, %v1175
        %v1344 = vpack.c.b16 %v1188, %v1176
        %v1345 = vpack.c.b16 %v1189, %v1177
        %v1346 = vpack.c.b16 %v1190, %v1178
        %v1347 = vpack.c.b16 %v1191, %v1179
        %v1348 = vpack.c.b16 %v1192, %v1180
        %v1349 = vpack.c.b16 %v1193, %v1181
        %v1350 = vpack.c.b16 %v1206, %v1194
        %v1351 = vpack.c.b16 %v1207, %v1195
        %v1352 = vpack.c.b16 %v1208, %v1196
        %v1353 = vpack.c.b16 %v1209, %v1197
        %v1354 = vpack.c.b16 %v1210, %v1198
        %v1355 = vpack.c.b16 %v1211, %v1199
        %v1356 = vpack.c.b16 %v1212, %v1200
        %v1357 = vpack.c.b16 %v1213, %v1201
        %v1358 = vpack.c.b16 %v1214, %v1202
        %v1359 = vpack.c.b16 %v1215, %v1203
        %v1360 = vpack.c.b16 %v1216, %v1204
        %v1361 = vpack.c.b16 %v1217, %v1205
        %v1362 = vpack.c.b16 %v1230, %v1218
        %v1363 = vpack.c.b16 %v1231, %v1219
        %v1364 = vpack.c.b16 %v1232, %v1220
        %v1365 = vpack.c.b16 %v1233, %v1221
        %v1366 = vpack.c.b16 %v1234, %v1222
        %v1367 = vpack.c.b16 %v1235, %v1223
        %v1368 = vpack.c.b16 %v1236, %v1224
        %v1369 = vpack.c.b16 %v1237, %v1225
        %v1370 = vpack.c.b16 %v1238, %v1226
        %v1371 = vpack.c.b16 %v1239, %v1227
        %v1372 = vpack.c.b16 %v1240, %v1228
        %v1373 = vpack.c.b16 %v1241, %v1229
        %v1374 = vpack.c.b16 %v1254, %v1242
        %v1375 = vpack.c.b16 %v1255, %v1243
        %v1376 = vpack.c.b16 %v1256, %v1244
        %v1377 = vpack.c.b16 %v1257, %v1245
        %v1378 = vpack.c.b16 %v1258, %v1246
        %v1379 = vpack.c.b16 %v1259, %v1247
        %v1380 = vpack.c.b16 %v1260, %v1248
        %v1381 = vpack.c.b16 %v1261, %v1249
        %v1382 = vpack.c.b16 %v1262, %v1250
        %v1383 = vpack.c.b16 %v1263, %v1251
        %v1384 = vpack.c.b16 %v1264, %v1252
        %v1385 = vpack.c.b16 %v1265, %v1253
        %v1386 = vpack.c.b16 %v1278, %v1266
        %v1387 = vpack.c.b16 %v1279, %v1267
        %v1388 = vpack.c.b16 %v1280, %v1268
        %v1389 = vpack.c.b16 %v1281, %v1269
        %v1390 = vpack.c.b16 %v1282, %v1270
        %v1391 = vpack.c.b16 %v1283, %v1271
        %v1392 = vpack.c.b16 %v1284, %v1272
        %v1393 = vpack.c.b16 %v1285, %v1273
        %v1394 = vpack.c.b16 %v1286, %v1274
        %v1395 = vpack.c.b16 %v1287, %v1275
        %v1396 = vpack.c.b16 %v1288, %v1276
        %v1397 = vpack.c.b16 %v1289, %v1277
        %v1398 = vpack.c.b16 %v1302, %v1290
        %v1399 = vpack.c.b16 %v1303, %v1291
        %v1400 = vpack.c.b16 %v1304, %v1292
        %v1401 = vpack.c.b16 %v1305, %v1293
        %v1402 = vpack.c.b16 %v1306, %v1294
        %v1403 = vpack.c.b16 %v1307, %v1295
        %v1404 = vpack.c.b16 %v1308, %v1296
        %v1405 = vpack.c.b16 %v1309, %v1297
        %v1406 = vpack.c.b16 %v1310, %v1298
        %v1407 = vpack.c.b16 %v1311, %v1299
        %v1408 = vpack.c.b16 %v1312, %v1300
        %v1409 = vpack.c.b16 %v1313, %v1301
        %1506 = vmatpush.bf16.msra.mxu0 %v1398
        %1507 = vmatpush.bf16.msra.mxu0 %v1386
        %1508 = vmatpush.bf16.msra.mxu0 %v1374
        %1509 = vmatpush.bf16.msra.mxu0 %v1362
        %1510 = vmatpush.bf16.msra.mxu0 %v1350
        %1511 = vmatpush.bf16.msra.mxu0 %v1338
        %1512 = vmatpush.bf16.msra.mxu0 %v1326
        %1513 = vmatpush.bf16.msra.mxu0 %v1314
        %1514 = vmatmul.bf16.gmra.mxu0 %v926
        %v1515 = vpop.f32.mrf.mxu0
        %v1516 = vadd.f32 0.0, %v1515
        %v1517 = vpop.f32.mrf.mxu0
        %v1518 = vadd.f32 0.0, %v1517
        %1519 = vmatmul.bf16.gmra.mxu0 %v927
        %v1520 = vpop.f32.mrf.mxu0
        %v1521 = vadd.f32 0.0, %v1520
        %v1522 = vpop.f32.mrf.mxu0
        %v1523 = vadd.f32 0.0, %v1522
        %1524 = vmatmul.bf16.gmra.mxu0 %v928
        %v1525 = vpop.f32.mrf.mxu0
        %v1526 = vadd.f32 0.0, %v1525
        %v1527 = vpop.f32.mrf.mxu0
        %v1528 = vadd.f32 0.0, %v1527
        %1529 = vmatmul.bf16.gmra.mxu0 %v929
        %v1530 = vpop.f32.mrf.mxu0
        %v1531 = vadd.f32 0.0, %v1530
        %v1532 = vpop.f32.mrf.mxu0
        %v1533 = vadd.f32 0.0, %v1532
        %1534 = vdwg.mxu0
        %1535 = vmatpush.bf16.msra.mxu0 %v1399
        %1536 = vmatpush.bf16.msra.mxu0 %v1387
        %1537 = vmatpush.bf16.msra.mxu0 %v1375
        %1538 = vmatpush.bf16.msra.mxu0 %v1363
        %1539 = vmatpush.bf16.msra.mxu0 %v1351
        %1540 = vmatpush.bf16.msra.mxu0 %v1339
        %1541 = vmatpush.bf16.msra.mxu0 %v1327
        %1542 = vmatpush.bf16.msra.mxu0 %v1315
        %1543 = vmatmul.bf16.gmra.mxu0 %v926
        %v1544 = vpop.f32.mrf.mxu0
        %v1545 = vadd.f32 0.0, %v1544
        %v1546 = vpop.f32.mrf.mxu0
        %v1547 = vadd.f32 0.0, %v1546
        %1548 = vmatmul.bf16.gmra.mxu0 %v927
        %v1549 = vpop.f32.mrf.mxu0
        %v1550 = vadd.f32 0.0, %v1549
        %v1551 = vpop.f32.mrf.mxu0
        %v1552 = vadd.f32 0.0, %v1551
        %1553 = vmatmul.bf16.gmra.mxu0 %v928
        %v1554 = vpop.f32.mrf.mxu0
        %v1555 = vadd.f32 0.0, %v1554
        %v1556 = vpop.f32.mrf.mxu0
        %v1557 = vadd.f32 0.0, %v1556
        %1558 = vmatmul.bf16.gmra.mxu0 %v929
        %v1559 = vpop.f32.mrf.mxu0
        %v1560 = vadd.f32 0.0, %v1559
        %v1561 = vpop.f32.mrf.mxu0
        %v1562 = vadd.f32 0.0, %v1561
        %1563 = vdwg.mxu0
        %1564 = vmatpush.bf16.msra.mxu0 %v1400
        %1565 = vmatpush.bf16.msra.mxu0 %v1388
        %1566 = vmatpush.bf16.msra.mxu0 %v1376
        %1567 = vmatpush.bf16.msra.mxu0 %v1364
        %1568 = vmatpush.bf16.msra.mxu0 %v1352
        %1569 = vmatpush.bf16.msra.mxu0 %v1340
        %1570 = vmatpush.bf16.msra.mxu0 %v1328
        %1571 = vmatpush.bf16.msra.mxu0 %v1316
        %1572 = vmatmul.bf16.gmra.mxu0 %v926
        %v1573 = vpop.f32.mrf.mxu0
        %v1574 = vadd.f32 0.0, %v1573
        %v1575 = vpop.f32.mrf.mxu0
        %v1576 = vadd.f32 0.0, %v1575
        %1577 = vmatmul.bf16.gmra.mxu0 %v927
        %v1578 = vpop.f32.mrf.mxu0
        %v1579 = vadd.f32 0.0, %v1578
        %v1580 = vpop.f32.mrf.mxu0
        %v1581 = vadd.f32 0.0, %v1580
        %1582 = vmatmul.bf16.gmra.mxu0 %v928
        %v1583 = vpop.f32.mrf.mxu0
        %v1584 = vadd.f32 0.0, %v1583
        %v1585 = vpop.f32.mrf.mxu0
        %v1586 = vadd.f32 0.0, %v1585
        %1587 = vmatmul.bf16.gmra.mxu0 %v929
        %v1588 = vpop.f32.mrf.mxu0
        %v1589 = vadd.f32 0.0, %v1588
        %v1590 = vpop.f32.mrf.mxu0
        %v1591 = vadd.f32 0.0, %v1590
        %1592 = vdwg.mxu0
        %1593 = vmatpush.bf16.msra.mxu0 %v1401
        %1594 = vmatpush.bf16.msra.mxu0 %v1389
        %1595 = vmatpush.bf16.msra.mxu0 %v1377
        %1596 = vmatpush.bf16.msra.mxu0 %v1365
        %1597 = vmatpush.bf16.msra.mxu0 %v1353
        %1598 = vmatpush.bf16.msra.mxu0 %v1341
        %1599 = vmatpush.bf16.msra.mxu0 %v1329
        %1600 = vmatpush.bf16.msra.mxu0 %v1317
        %1601 = vmatmul.bf16.gmra.mxu0 %v926
        %v1602 = vpop.f32.mrf.mxu0
        %v1603 = vadd.f32 0.0, %v1602
        %v1604 = vpop.f32.mrf.mxu0
        %v1605 = vadd.f32 0.0, %v1604
        %1606 = vmatmul.bf16.gmra.mxu0 %v927
        %v1607 = vpop.f32.mrf.mxu0
        %v1608 = vadd.f32 0.0, %v1607
        %v1609 = vpop.f32.mrf.mxu0
        %v1610 = vadd.f32 0.0, %v1609
        %1611 = vmatmul.bf16.gmra.mxu0 %v928
        %v1612 = vpop.f32.mrf.mxu0
        %v1613 = vadd.f32 0.0, %v1612
        %v1614 = vpop.f32.mrf.mxu0
        %v1615 = vadd.f32 0.0, %v1614
        %1616 = vmatmul.bf16.gmra.mxu0 %v929
        %v1617 = vpop.f32.mrf.mxu0
        %v1618 = vadd.f32 0.0, %v1617
        %v1619 = vpop.f32.mrf.mxu0
        %v1620 = vadd.f32 0.0, %v1619
        %1621 = vdwg.mxu0
        %1622 = vmatpush.bf16.msra.mxu0 %v1402
        %1623 = vmatpush.bf16.msra.mxu0 %v1390
        %1624 = vmatpush.bf16.msra.mxu0 %v1378
        %1625 = vmatpush.bf16.msra.mxu0 %v1366
        %1626 = vmatpush.bf16.msra.mxu0 %v1354
        %1627 = vmatpush.bf16.msra.mxu0 %v1342
        %1628 = vmatpush.bf16.msra.mxu0 %v1330
        %1629 = vmatpush.bf16.msra.mxu0 %v1318
        %1630 = vmatmul.bf16.gmra.mxu0 %v926
        %v1631 = vpop.f32.mrf.mxu0
        %v1632 = vadd.f32 0.0, %v1631
        %v1633 = vpop.f32.mrf.mxu0
        %v1634 = vadd.f32 0.0, %v1633
        %1635 = vmatmul.bf16.gmra.mxu0 %v927
        %v1636 = vpop.f32.mrf.mxu0
        %v1637 = vadd.f32 0.0, %v1636
        %v1638 = vpop.f32.mrf.mxu0
        %v1639 = vadd.f32 0.0, %v1638
        %1640 = vmatmul.bf16.gmra.mxu0 %v928
        %v1641 = vpop.f32.mrf.mxu0
        %v1642 = vadd.f32 0.0, %v1641
        %v1643 = vpop.f32.mrf.mxu0
        %v1644 = vadd.f32 0.0, %v1643
        %1645 = vmatmul.bf16.gmra.mxu0 %v929
        %v1646 = vpop.f32.mrf.mxu0
        %v1647 = vadd.f32 0.0, %v1646
        %v1648 = vpop.f32.mrf.mxu0
        %v1649 = vadd.f32 0.0, %v1648
        %1650 = vdwg.mxu0
        %1651 = vmatpush.bf16.msra.mxu0 %v1403
        %1652 = vmatpush.bf16.msra.mxu0 %v1391
        %1653 = vmatpush.bf16.msra.mxu0 %v1379
        %1654 = vmatpush.bf16.msra.mxu0 %v1367
        %1655 = vmatpush.bf16.msra.mxu0 %v1355
        %1656 = vmatpush.bf16.msra.mxu0 %v1343
        %1657 = vmatpush.bf16.msra.mxu0 %v1331
        %1658 = vmatpush.bf16.msra.mxu0 %v1319
        %1659 = vmatmul.bf16.gmra.mxu0 %v926
        %v1660 = vpop.f32.mrf.mxu0
        %v1661 = vadd.f32 0.0, %v1660
        %v1662 = vpop.f32.mrf.mxu0
        %v1663 = vadd.f32 0.0, %v1662
        %1664 = vmatmul.bf16.gmra.mxu0 %v927
        %v1665 = vpop.f32.mrf.mxu0
        %v1666 = vadd.f32 0.0, %v1665
        %v1667 = vpop.f32.mrf.mxu0
        %v1668 = vadd.f32 0.0, %v1667
        %1669 = vmatmul.bf16.gmra.mxu0 %v928
        %v1670 = vpop.f32.mrf.mxu0
        %v1671 = vadd.f32 0.0, %v1670
        %v1672 = vpop.f32.mrf.mxu0
        %v1673 = vadd.f32 0.0, %v1672
        %1674 = vmatmul.bf16.gmra.mxu0 %v929
        %v1675 = vpop.f32.mrf.mxu0
        %v1676 = vadd.f32 0.0, %v1675
        %v1677 = vpop.f32.mrf.mxu0
        %v1678 = vadd.f32 0.0, %v1677
        %1679 = vdwg.mxu0
        %1680 = vmatpush.bf16.msra.mxu0 %v1404
        %1681 = vmatpush.bf16.msra.mxu0 %v1392
        %1682 = vmatpush.bf16.msra.mxu0 %v1380
        %1683 = vmatpush.bf16.msra.mxu0 %v1368
        %1684 = vmatpush.bf16.msra.mxu0 %v1356
        %1685 = vmatpush.bf16.msra.mxu0 %v1344
        %1686 = vmatpush.bf16.msra.mxu0 %v1332
        %1687 = vmatpush.bf16.msra.mxu0 %v1320
        %1688 = vmatmul.bf16.gmra.mxu0 %v926
        %v1689 = vpop.f32.mrf.mxu0
        %v1690 = vadd.f32 0.0, %v1689
        %v1691 = vpop.f32.mrf.mxu0
        %v1692 = vadd.f32 0.0, %v1691
        %1693 = vmatmul.bf16.gmra.mxu0 %v927
        %v1694 = vpop.f32.mrf.mxu0
        %v1695 = vadd.f32 0.0, %v1694
        %v1696 = vpop.f32.mrf.mxu0
        %v1697 = vadd.f32 0.0, %v1696
        %1698 = vmatmul.bf16.gmra.mxu0 %v928
        %v1699 = vpop.f32.mrf.mxu0
        %v1700 = vadd.f32 0.0, %v1699
        %v1701 = vpop.f32.mrf.mxu0
        %v1702 = vadd.f32 0.0, %v1701
        %1703 = vmatmul.bf16.gmra.mxu0 %v929
        %v1704 = vpop.f32.mrf.mxu0
        %v1705 = vadd.f32 0.0, %v1704
        %v1706 = vpop.f32.mrf.mxu0
        %v1707 = vadd.f32 0.0, %v1706
        %1708 = vdwg.mxu0
        %1709 = vmatpush.bf16.msra.mxu0 %v1405
        %1710 = vmatpush.bf16.msra.mxu0 %v1393
        %1711 = vmatpush.bf16.msra.mxu0 %v1381
        %1712 = vmatpush.bf16.msra.mxu0 %v1369
        %1713 = vmatpush.bf16.msra.mxu0 %v1357
        %1714 = vmatpush.bf16.msra.mxu0 %v1345
        %1715 = vmatpush.bf16.msra.mxu0 %v1333
        %1716 = vmatpush.bf16.msra.mxu0 %v1321
        %1717 = vmatmul.bf16.gmra.mxu0 %v926
        %v1718 = vpop.f32.mrf.mxu0
        %v1719 = vadd.f32 0.0, %v1718
        %v1720 = vpop.f32.mrf.mxu0
        %v1721 = vadd.f32 0.0, %v1720
        %1722 = vmatmul.bf16.gmra.mxu0 %v927
        %v1723 = vpop.f32.mrf.mxu0
        %v1724 = vadd.f32 0.0, %v1723
        %v1725 = vpop.f32.mrf.mxu0
        %v1726 = vadd.f32 0.0, %v1725
        %1727 = vmatmul.bf16.gmra.mxu0 %v928
        %v1728 = vpop.f32.mrf.mxu0
        %v1729 = vadd.f32 0.0, %v1728
        %v1730 = vpop.f32.mrf.mxu0
        %v1731 = vadd.f32 0.0, %v1730
        %1732 = vmatmul.bf16.gmra.mxu0 %v929
        %v1733 = vpop.f32.mrf.mxu0
        %v1734 = vadd.f32 0.0, %v1733
        %v1735 = vpop.f32.mrf.mxu0
        %v1736 = vadd.f32 0.0, %v1735
        %1737 = vdwg.mxu0
        %1738 = vmatpush.bf16.msra.mxu0 %v1406
        %1739 = vmatpush.bf16.msra.mxu0 %v1394
        %1740 = vmatpush.bf16.msra.mxu0 %v1382
        %1741 = vmatpush.bf16.msra.mxu0 %v1370
        %1742 = vmatpush.bf16.msra.mxu0 %v1358
        %1743 = vmatpush.bf16.msra.mxu0 %v1346
        %1744 = vmatpush.bf16.msra.mxu0 %v1334
        %1745 = vmatpush.bf16.msra.mxu0 %v1322
        %1746 = vmatmul.bf16.gmra.mxu0 %v926
        %v1747 = vpop.f32.mrf.mxu0
        %v1748 = vadd.f32 0.0, %v1747
        %v1749 = vpop.f32.mrf.mxu0
        %v1750 = vadd.f32 0.0, %v1749
        %1751 = vmatmul.bf16.gmra.mxu0 %v927
        %v1752 = vpop.f32.mrf.mxu0
        %v1753 = vadd.f32 0.0, %v1752
        %v1754 = vpop.f32.mrf.mxu0
        %v1755 = vadd.f32 0.0, %v1754
        %1756 = vmatmul.bf16.gmra.mxu0 %v928
        %v1757 = vpop.f32.mrf.mxu0
        %v1758 = vadd.f32 0.0, %v1757
        %v1759 = vpop.f32.mrf.mxu0
        %v1760 = vadd.f32 0.0, %v1759
        %1761 = vmatmul.bf16.gmra.mxu0 %v929
        %v1762 = vpop.f32.mrf.mxu0
        %v1763 = vadd.f32 0.0, %v1762
        %v1764 = vpop.f32.mrf.mxu0
        %v1765 = vadd.f32 0.0, %v1764
        %1766 = vdwg.mxu0
        %1767 = vmatpush.bf16.msra.mxu0 %v1407
        %1768 = vmatpush.bf16.msra.mxu0 %v1395
        %1769 = vmatpush.bf16.msra.mxu0 %v1383
        %1770 = vmatpush.bf16.msra.mxu0 %v1371
        %1771 = vmatpush.bf16.msra.mxu0 %v1359
        %1772 = vmatpush.bf16.msra.mxu0 %v1347
        %1773 = vmatpush.bf16.msra.mxu0 %v1335
        %1774 = vmatpush.bf16.msra.mxu0 %v1323
        %1775 = vmatmul.bf16.gmra.mxu0 %v926
        %v1776 = vpop.f32.mrf.mxu0
        %v1777 = vadd.f32 0.0, %v1776
        %v1778 = vpop.f32.mrf.mxu0
        %v1779 = vadd.f32 0.0, %v1778
        %1780 = vmatmul.bf16.gmra.mxu0 %v927
        %v1781 = vpop.f32.mrf.mxu0
        %v1782 = vadd.f32 0.0, %v1781
        %v1783 = vpop.f32.mrf.mxu0
        %v1784 = vadd.f32 0.0, %v1783
        %1785 = vmatmul.bf16.gmra.mxu0 %v928
        %v1786 = vpop.f32.mrf.mxu0
        %v1787 = vadd.f32 0.0, %v1786
        %v1788 = vpop.f32.mrf.mxu0
        %v1789 = vadd.f32 0.0, %v1788
        %1790 = vmatmul.bf16.gmra.mxu0 %v929
        %v1791 = vpop.f32.mrf.mxu0
        %v1792 = vadd.f32 0.0, %v1791
        %v1793 = vpop.f32.mrf.mxu0
        %v1794 = vadd.f32 0.0, %v1793
        %1795 = vdwg.mxu0
        %1796 = vmatpush.bf16.msra.mxu0 %v1408
        %1797 = vmatpush.bf16.msra.mxu0 %v1396
        %1798 = vmatpush.bf16.msra.mxu0 %v1384
        %1799 = vmatpush.bf16.msra.mxu0 %v1372
        %1800 = vmatpush.bf16.msra.mxu0 %v1360
        %1801 = vmatpush.bf16.msra.mxu0 %v1348
        %1802 = vmatpush.bf16.msra.mxu0 %v1336
        %1803 = vmatpush.bf16.msra.mxu0 %v1324
        %1804 = vmatmul.bf16.gmra.mxu0 %v926
        %v1805 = vpop.f32.mrf.mxu0
        %v1806 = vadd.f32 0.0, %v1805
        %v1807 = vpop.f32.mrf.mxu0
        %v1808 = vadd.f32 0.0, %v1807
        %1809 = vmatmul.bf16.gmra.mxu0 %v927
        %v1810 = vpop.f32.mrf.mxu0
        %v1811 = vadd.f32 0.0, %v1810
        %v1812 = vpop.f32.mrf.mxu0
        %v1813 = vadd.f32 0.0, %v1812
        %1814 = vmatmul.bf16.gmra.mxu0 %v928
        %v1815 = vpop.f32.mrf.mxu0
        %v1816 = vadd.f32 0.0, %v1815
        %v1817 = vpop.f32.mrf.mxu0
        %v1818 = vadd.f32 0.0, %v1817
        %1819 = vmatmul.bf16.gmra.mxu0 %v929
        %v1820 = vpop.f32.mrf.mxu0
        %v1821 = vadd.f32 0.0, %v1820
        %v1822 = vpop.f32.mrf.mxu0
        %v1823 = vadd.f32 0.0, %v1822
        %1824 = vdwg.mxu0
        %1825 = vmatpush.bf16.msra.mxu0 %v1409
        %1826 = vmatpush.bf16.msra.mxu0 %v1397
        %1827 = vmatpush.bf16.msra.mxu0 %v1385
        %1828 = vmatpush.bf16.msra.mxu0 %v1373
        %1829 = vmatpush.bf16.msra.mxu0 %v1361
        %1830 = vmatpush.bf16.msra.mxu0 %v1349
        %1831 = vmatpush.bf16.msra.mxu0 %v1337
        %1832 = vmatpush.bf16.msra.mxu0 %v1325
        %1833 = vmatmul.bf16.gmra.mxu0 %v926
        %v1834 = vpop.f32.mrf.mxu0
        %v1835 = vadd.f32 0.0, %v1834
        %v1836 = vpop.f32.mrf.mxu0
        %v1837 = vadd.f32 0.0, %v1836
        %1838 = vmatmul.bf16.gmra.mxu0 %v927
        %v1839 = vpop.f32.mrf.mxu0
        %v1840 = vadd.f32 0.0, %v1839
        %v1841 = vpop.f32.mrf.mxu0
        %v1842 = vadd.f32 0.0, %v1841
        %1843 = vmatmul.bf16.gmra.mxu0 %v928
        %v1844 = vpop.f32.mrf.mxu0
        %v1845 = vadd.f32 0.0, %v1844
        %v1846 = vpop.f32.mrf.mxu0
        %v1847 = vadd.f32 0.0, %v1846
        %1848 = vmatmul.bf16.gmra.mxu0 %v929
        %v1849 = vpop.f32.mrf.mxu0
        %v1850 = vadd.f32 0.0, %v1849
        %v1851 = vpop.f32.mrf.mxu0
        %v1852 = vadd.f32 0.0, %v1851
        %1853 = vdwg.mxu0
        %v1854 = vpack.c.bf16 %v1545, %v1516
        %v1855 = vpack.c.bf16 %v1603, %v1574
        %v1856 = vpack.c.bf16 %v1661, %v1632
        %v1857 = vpack.c.bf16 %v1719, %v1690
        %v1858 = vpack.c.bf16 %v1777, %v1748
        %v1859 = vpack.c.bf16 %v1835, %v1806
        %v1860 = vpack.c.bf16 %v1547, %v1518
        %v1861 = vpack.c.bf16 %v1605, %v1576
        %v1862 = vpack.c.bf16 %v1663, %v1634
        %v1863 = vpack.c.bf16 %v1721, %v1692
        %v1864 = vpack.c.bf16 %v1779, %v1750
        %v1865 = vpack.c.bf16 %v1837, %v1808
        %v1866 = vpack.c.bf16 %v1550, %v1521
        %v1867 = vpack.c.bf16 %v1608, %v1579
        %v1868 = vpack.c.bf16 %v1666, %v1637
        %v1869 = vpack.c.bf16 %v1724, %v1695
        %v1870 = vpack.c.bf16 %v1782, %v1753
        %v1871 = vpack.c.bf16 %v1840, %v1811
        %v1872 = vpack.c.bf16 %v1552, %v1523
        %v1873 = vpack.c.bf16 %v1610, %v1581
        %v1874 = vpack.c.bf16 %v1668, %v1639
        %v1875 = vpack.c.bf16 %v1726, %v1697
        %v1876 = vpack.c.bf16 %v1784, %v1755
        %v1877 = vpack.c.bf16 %v1842, %v1813
        %v1878 = vpack.c.bf16 %v1555, %v1526
        %v1879 = vpack.c.bf16 %v1613, %v1584
        %v1880 = vpack.c.bf16 %v1671, %v1642
        %v1881 = vpack.c.bf16 %v1729, %v1700
        %v1882 = vpack.c.bf16 %v1787, %v1758
        %v1883 = vpack.c.bf16 %v1845, %v1816
        %v1884 = vpack.c.bf16 %v1557, %v1528
        %v1885 = vpack.c.bf16 %v1615, %v1586
        %v1886 = vpack.c.bf16 %v1673, %v1644
        %v1887 = vpack.c.bf16 %v1731, %v1702
        %v1888 = vpack.c.bf16 %v1789, %v1760
        %v1889 = vpack.c.bf16 %v1847, %v1818
        %v1890 = vpack.c.bf16 %v1560, %v1531
        %v1891 = vpack.c.bf16 %v1618, %v1589
        %v1892 = vpack.c.bf16 %v1676, %v1647
        %v1893 = vpack.c.bf16 %v1734, %v1705
        %v1894 = vpack.c.bf16 %v1792, %v1763
        %v1895 = vpack.c.bf16 %v1850, %v1821
        %v1896 = vpack.c.bf16 %v1562, %v1533
        %v1897 = vpack.c.bf16 %v1620, %v1591
        %v1898 = vpack.c.bf16 %v1678, %v1649
        %v1899 = vpack.c.bf16 %v1736, %v1707
        %v1900 = vpack.c.bf16 %v1794, %v1765
        %v1901 = vpack.c.bf16 %v1852, %v1823
        %v1902 = vld [vmem:[#allocation11] sm:$0xff]
        %v1903 = vld [vmem:[#allocation11 + $0x8] sm:$0xf]
        %v1906 = vperm.slane %v1902, 0
        %v1907 = vperm.slane %v1902, 1
        %v1908 = vperm.slane %v1902, 2
        %v1909 = vperm.slane %v1902, 3
        %v1910 = vperm.slane %v1902, 4
        %v1911 = vperm.slane %v1902, 5
        %v1912 = vperm.slane %v1902, 6
        %v1913 = vperm.slane %v1902, 7
        %v1914 = vperm.slane %v1903, 0
        %v1915 = vperm.slane %v1903, 1
        %v1916 = vperm.slane %v1903, 2
        %v1917 = vperm.slane %v1903, 3
        %v1930 = vpack.c.bf16 %v1907, %v1906
        %v1931 = vpack.c.bf16 %v1909, %v1908
        %v1932 = vpack.c.bf16 %v1911, %v1910
        %v1933 = vpack.c.bf16 %v1913, %v1912
        %v1934 = vpack.c.bf16 %v1915, %v1914
        %v1935 = vpack.c.bf16 %v1917, %v1916
        %v1942 = vunpack.c.l.b16 %v1930
        %v1943 = vunpack.c.h.b16 %v1930
        %v1944 = vunpack.c.l.b16 %v1931
        %v1945 = vunpack.c.h.b16 %v1931
        %v1946 = vunpack.c.l.b16 %v1932
        %v1947 = vunpack.c.h.b16 %v1932
        %v1948 = vunpack.c.l.b16 %v1933
        %v1949 = vunpack.c.h.b16 %v1933
        %v1950 = vunpack.c.l.b16 %v1934
        %v1951 = vunpack.c.h.b16 %v1934
        %v1952 = vunpack.c.l.b16 %v1935
        %v1953 = vunpack.c.h.b16 %v1935
        %v1954 = vpack.c.b16 %v1942, %v1942
        %v1955 = vpack.c.b16 %v1943, %v1943
        %v1956 = vpack.c.b16 %v1944, %v1944
        %v1957 = vpack.c.b16 %v1945, %v1945
        %v1958 = vpack.c.b16 %v1946, %v1946
        %v1959 = vpack.c.b16 %v1947, %v1947
        %v1960 = vpack.c.b16 %v1948, %v1948
        %v1961 = vpack.c.b16 %v1949, %v1949
        %v1962 = vpack.c.b16 %v1950, %v1950
        %v1963 = vpack.c.b16 %v1951, %v1951
        %v1964 = vpack.c.b16 %v1952, %v1952
        %v1965 = vpack.c.b16 %v1953, %v1953
        %v1967 = vpack.i.b16 %v1954, %v1954
        %v1969 = vperm.slane %v1967, 0
        %v1971 = vpack.i.b16 %v1955, %v1955
        %v1973 = vperm.slane %v1971, 0
        %v1975 = vpack.i.b16 %v1956, %v1956
        %v1977 = vperm.slane %v1975, 0
        %v1979 = vpack.i.b16 %v1957, %v1957
        %v1981 = vperm.slane %v1979, 0
        %v1983 = vpack.i.b16 %v1958, %v1958
        %v1985 = vperm.slane %v1983, 0
        %v1987 = vpack.i.b16 %v1959, %v1959
        %v1989 = vperm.slane %v1987, 0
        %v1991 = vpack.i.b16 %v1960, %v1960
        %v1993 = vperm.slane %v1991, 0
        %v1995 = vpack.i.b16 %v1961, %v1961
        %v1997 = vperm.slane %v1995, 0
        %v1999 = vpack.i.b16 %v1962, %v1962
        %v2001 = vperm.slane %v1999, 0
        %v2003 = vpack.i.b16 %v1963, %v1963
        %v2005 = vperm.slane %v2003, 0
        %v2007 = vpack.i.b16 %v1964, %v1964
        %v2009 = vperm.slane %v2007, 0
        %v2011 = vpack.i.b16 %v1965, %v1965
        %v2013 = vperm.slane %v2011, 0
        %v2014 = vunpack.c.l.bf16 %v1854
        %v2015 = vunpack.c.h.bf16 %v1854
        %v2016 = vunpack.c.l.bf16 %v1855
        %v2017 = vunpack.c.h.bf16 %v1855
        %v2018 = vunpack.c.l.bf16 %v1856
        %v2019 = vunpack.c.h.bf16 %v1856
        %v2020 = vunpack.c.l.bf16 %v1857
        %v2021 = vunpack.c.h.bf16 %v1857
        %v2022 = vunpack.c.l.bf16 %v1858
        %v2023 = vunpack.c.h.bf16 %v1858
        %v2024 = vunpack.c.l.bf16 %v1859
        %v2025 = vunpack.c.h.bf16 %v1859
        %v2026 = vunpack.c.l.bf16 %v1860
        %v2027 = vunpack.c.h.bf16 %v1860
        %v2028 = vunpack.c.l.bf16 %v1861
        %v2029 = vunpack.c.h.bf16 %v1861
        %v2030 = vunpack.c.l.bf16 %v1862
        %v2031 = vunpack.c.h.bf16 %v1862
        %v2032 = vunpack.c.l.bf16 %v1863
        %v2033 = vunpack.c.h.bf16 %v1863
        %v2034 = vunpack.c.l.bf16 %v1864
        %v2035 = vunpack.c.h.bf16 %v1864
        %v2036 = vunpack.c.l.bf16 %v1865
        %v2037 = vunpack.c.h.bf16 %v1865
        %v2038 = vunpack.c.l.bf16 %v1866
        %v2039 = vunpack.c.h.bf16 %v1866
        %v2040 = vunpack.c.l.bf16 %v1867
        %v2041 = vunpack.c.h.bf16 %v1867
        %v2042 = vunpack.c.l.bf16 %v1868
        %v2043 = vunpack.c.h.bf16 %v1868
        %v2044 = vunpack.c.l.bf16 %v1869
        %v2045 = vunpack.c.h.bf16 %v1869
        %v2046 = vunpack.c.l.bf16 %v1870
        %v2047 = vunpack.c.h.bf16 %v1870
        %v2048 = vunpack.c.l.bf16 %v1871
        %v2049 = vunpack.c.h.bf16 %v1871
        %v2050 = vunpack.c.l.bf16 %v1872
        %v2051 = vunpack.c.h.bf16 %v1872
        %v2052 = vunpack.c.l.bf16 %v1873
        %v2053 = vunpack.c.h.bf16 %v1873
        %v2054 = vunpack.c.l.bf16 %v1874
        %v2055 = vunpack.c.h.bf16 %v1874
        %v2056 = vunpack.c.l.bf16 %v1875
        %v2057 = vunpack.c.h.bf16 %v1875
        %v2058 = vunpack.c.l.bf16 %v1876
        %v2059 = vunpack.c.h.bf16 %v1876
        %v2060 = vunpack.c.l.bf16 %v1877
        %v2061 = vunpack.c.h.bf16 %v1877
        %v2062 = vunpack.c.l.bf16 %v1878
        %v2063 = vunpack.c.h.bf16 %v1878
        %v2064 = vunpack.c.l.bf16 %v1879
        %v2065 = vunpack.c.h.bf16 %v1879
        %v2066 = vunpack.c.l.bf16 %v1880
        %v2067 = vunpack.c.h.bf16 %v1880
        %v2068 = vunpack.c.l.bf16 %v1881
        %v2069 = vunpack.c.h.bf16 %v1881
        %v2070 = vunpack.c.l.bf16 %v1882
        %v2071 = vunpack.c.h.bf16 %v1882
        %v2072 = vunpack.c.l.bf16 %v1883
        %v2073 = vunpack.c.h.bf16 %v1883
        %v2074 = vunpack.c.l.bf16 %v1884
        %v2075 = vunpack.c.h.bf16 %v1884
        %v2076 = vunpack.c.l.bf16 %v1885
        %v2077 = vunpack.c.h.bf16 %v1885
        %v2078 = vunpack.c.l.bf16 %v1886
        %v2079 = vunpack.c.h.bf16 %v1886
        %v2080 = vunpack.c.l.bf16 %v1887
        %v2081 = vunpack.c.h.bf16 %v1887
        %v2082 = vunpack.c.l.bf16 %v1888
        %v2083 = vunpack.c.h.bf16 %v1888
        %v2084 = vunpack.c.l.bf16 %v1889
        %v2085 = vunpack.c.h.bf16 %v1889
        %v2086 = vunpack.c.l.bf16 %v1890
        %v2087 = vunpack.c.h.bf16 %v1890
        %v2088 = vunpack.c.l.bf16 %v1891
        %v2089 = vunpack.c.h.bf16 %v1891
        %v2090 = vunpack.c.l.bf16 %v1892
        %v2091 = vunpack.c.h.bf16 %v1892
        %v2092 = vunpack.c.l.bf16 %v1893
        %v2093 = vunpack.c.h.bf16 %v1893
        %v2094 = vunpack.c.l.bf16 %v1894
        %v2095 = vunpack.c.h.bf16 %v1894
        %v2096 = vunpack.c.l.bf16 %v1895
        %v2097 = vunpack.c.h.bf16 %v1895
        %v2098 = vunpack.c.l.bf16 %v1896
        %v2099 = vunpack.c.h.bf16 %v1896
        %v2100 = vunpack.c.l.bf16 %v1897
        %v2101 = vunpack.c.h.bf16 %v1897
        %v2102 = vunpack.c.l.bf16 %v1898
        %v2103 = vunpack.c.h.bf16 %v1898
        %v2104 = vunpack.c.l.bf16 %v1899
        %v2105 = vunpack.c.h.bf16 %v1899
        %v2106 = vunpack.c.l.bf16 %v1900
        %v2107 = vunpack.c.h.bf16 %v1900
        %v2108 = vunpack.c.l.bf16 %v1901
        %v2109 = vunpack.c.h.bf16 %v1901
        %v2110 = vunpack.c.l.bf16 %v1969
        %v2111 = vunpack.c.l.bf16 %v1973
        %v2112 = vunpack.c.l.bf16 %v1977
        %v2113 = vunpack.c.l.bf16 %v1981
        %v2114 = vunpack.c.l.bf16 %v1985
        %v2115 = vunpack.c.l.bf16 %v1989
        %v2116 = vunpack.c.l.bf16 %v1993
        %v2117 = vunpack.c.l.bf16 %v1997
        %v2118 = vunpack.c.l.bf16 %v2001
        %v2119 = vunpack.c.l.bf16 %v2005
        %v2120 = vunpack.c.l.bf16 %v2009
        %v2121 = vunpack.c.l.bf16 %v2013
        %v2122 = vmul.f32 %v2014, %v2110
        %v2123 = vmul.f32 %v2015, %v2111
        %v2124 = vmul.f32 %v2016, %v2112
        %v2125 = vmul.f32 %v2017, %v2113
        %v2126 = vmul.f32 %v2018, %v2114
        %v2127 = vmul.f32 %v2019, %v2115
        %v2128 = vmul.f32 %v2020, %v2116
        %v2129 = vmul.f32 %v2021, %v2117
        %v2130 = vmul.f32 %v2022, %v2118
        %v2131 = vmul.f32 %v2023, %v2119
        %v2132 = vmul.f32 %v2024, %v2120
        %v2133 = vmul.f32 %v2025, %v2121
        %v2134 = vmul.f32 %v2026, %v2110
        %v2135 = vmul.f32 %v2027, %v2111
        %v2136 = vmul.f32 %v2028, %v2112
        %v2137 = vmul.f32 %v2029, %v2113
        %v2138 = vmul.f32 %v2030, %v2114
        %v2139 = vmul.f32 %v2031, %v2115
        %v2140 = vmul.f32 %v2032, %v2116
        %v2141 = vmul.f32 %v2033, %v2117
        %v2142 = vmul.f32 %v2034, %v2118
        %v2143 = vmul.f32 %v2035, %v2119
        %v2144 = vmul.f32 %v2036, %v2120
        %v2145 = vmul.f32 %v2037, %v2121
        %v2146 = vmul.f32 %v2038, %v2110
        %v2147 = vmul.f32 %v2039, %v2111
        %v2148 = vmul.f32 %v2040, %v2112
        %v2149 = vmul.f32 %v2041, %v2113
        %v2150 = vmul.f32 %v2042, %v2114
        %v2151 = vmul.f32 %v2043, %v2115
        %v2152 = vmul.f32 %v2044, %v2116
        %v2153 = vmul.f32 %v2045, %v2117
        %v2154 = vmul.f32 %v2046, %v2118
        %v2155 = vmul.f32 %v2047, %v2119
        %v2156 = vmul.f32 %v2048, %v2120
        %v2157 = vmul.f32 %v2049, %v2121
        %v2158 = vmul.f32 %v2050, %v2110
        %v2159 = vmul.f32 %v2051, %v2111
        %v2160 = vmul.f32 %v2052, %v2112
        %v2161 = vmul.f32 %v2053, %v2113
        %v2162 = vmul.f32 %v2054, %v2114
        %v2163 = vmul.f32 %v2055, %v2115
        %v2164 = vmul.f32 %v2056, %v2116
        %v2165 = vmul.f32 %v2057, %v2117
        %v2166 = vmul.f32 %v2058, %v2118
        %v2167 = vmul.f32 %v2059, %v2119
        %v2168 = vmul.f32 %v2060, %v2120
        %v2169 = vmul.f32 %v2061, %v2121
        %v2170 = vmul.f32 %v2062, %v2110
        %v2171 = vmul.f32 %v2063, %v2111
        %v2172 = vmul.f32 %v2064, %v2112
        %v2173 = vmul.f32 %v2065, %v2113
        %v2174 = vmul.f32 %v2066, %v2114
        %v2175 = vmul.f32 %v2067, %v2115
        %v2176 = vmul.f32 %v2068, %v2116
        %v2177 = vmul.f32 %v2069, %v2117
        %v2178 = vmul.f32 %v2070, %v2118
        %v2179 = vmul.f32 %v2071, %v2119
        %v2180 = vmul.f32 %v2072, %v2120
        %v2181 = vmul.f32 %v2073, %v2121
        %v2182 = vmul.f32 %v2074, %v2110
        %v2183 = vmul.f32 %v2075, %v2111
        %v2184 = vmul.f32 %v2076, %v2112
        %v2185 = vmul.f32 %v2077, %v2113
        %v2186 = vmul.f32 %v2078, %v2114
        %v2187 = vmul.f32 %v2079, %v2115
        %v2188 = vmul.f32 %v2080, %v2116
        %v2189 = vmul.f32 %v2081, %v2117
        %v2190 = vmul.f32 %v2082, %v2118
        %v2191 = vmul.f32 %v2083, %v2119
        %v2192 = vmul.f32 %v2084, %v2120
        %v2193 = vmul.f32 %v2085, %v2121
        %v2194 = vmul.f32 %v2086, %v2110
        %v2195 = vmul.f32 %v2087, %v2111
        %v2196 = vmul.f32 %v2088, %v2112
        %v2197 = vmul.f32 %v2089, %v2113
        %v2198 = vmul.f32 %v2090, %v2114
        %v2199 = vmul.f32 %v2091, %v2115
        %v2200 = vmul.f32 %v2092, %v2116
        %v2201 = vmul.f32 %v2093, %v2117
        %v2202 = vmul.f32 %v2094, %v2118
        %v2203 = vmul.f32 %v2095, %v2119
        %v2204 = vmul.f32 %v2096, %v2120
        %v2205 = vmul.f32 %v2097, %v2121
        %v2206 = vmul.f32 %v2098, %v2110
        %v2207 = vmul.f32 %v2099, %v2111
        %v2208 = vmul.f32 %v2100, %v2112
        %v2209 = vmul.f32 %v2101, %v2113
        %v2210 = vmul.f32 %v2102, %v2114
        %v2211 = vmul.f32 %v2103, %v2115
        %v2212 = vmul.f32 %v2104, %v2116
        %v2213 = vmul.f32 %v2105, %v2117
        %v2214 = vmul.f32 %v2106, %v2118
        %v2215 = vmul.f32 %v2107, %v2119
        %v2216 = vmul.f32 %v2108, %v2120
        %v2217 = vmul.f32 %v2109, %v2121
        %v2218 = vpack.c.bf16 %v2123, %v2122
        %v2219 = vpack.c.bf16 %v2125, %v2124
        %v2220 = vpack.c.bf16 %v2127, %v2126
        %v2221 = vpack.c.bf16 %v2129, %v2128
        %v2222 = vpack.c.bf16 %v2131, %v2130
        %v2223 = vpack.c.bf16 %v2133, %v2132
        %v2224 = vpack.c.bf16 %v2135, %v2134
        %v2225 = vpack.c.bf16 %v2137, %v2136
        %v2226 = vpack.c.bf16 %v2139, %v2138
        %v2227 = vpack.c.bf16 %v2141, %v2140
        %v2228 = vpack.c.bf16 %v2143, %v2142
        %v2229 = vpack.c.bf16 %v2145, %v2144
        %v2230 = vpack.c.bf16 %v2147, %v2146
        %v2231 = vpack.c.bf16 %v2149, %v2148
        %v2232 = vpack.c.bf16 %v2151, %v2150
        %v2233 = vpack.c.bf16 %v2153, %v2152
        %v2234 = vpack.c.bf16 %v2155, %v2154
        %v2235 = vpack.c.bf16 %v2157, %v2156
        %v2236 = vpack.c.bf16 %v2159, %v2158
        %v2237 = vpack.c.bf16 %v2161, %v2160
        %v2238 = vpack.c.bf16 %v2163, %v2162
        %v2239 = vpack.c.bf16 %v2165, %v2164
        %v2240 = vpack.c.bf16 %v2167, %v2166
        %v2241 = vpack.c.bf16 %v2169, %v2168
        %v2242 = vpack.c.bf16 %v2171, %v2170
        %v2243 = vpack.c.bf16 %v2173, %v2172
        %v2244 = vpack.c.bf16 %v2175, %v2174
        %v2245 = vpack.c.bf16 %v2177, %v2176
        %v2246 = vpack.c.bf16 %v2179, %v2178
        %v2247 = vpack.c.bf16 %v2181, %v2180
        %v2248 = vpack.c.bf16 %v2183, %v2182
        %v2249 = vpack.c.bf16 %v2185, %v2184
        %v2250 = vpack.c.bf16 %v2187, %v2186
        %v2251 = vpack.c.bf16 %v2189, %v2188
        %v2252 = vpack.c.bf16 %v2191, %v2190
        %v2253 = vpack.c.bf16 %v2193, %v2192
        %v2254 = vpack.c.bf16 %v2195, %v2194
        %v2255 = vpack.c.bf16 %v2197, %v2196
        %v2256 = vpack.c.bf16 %v2199, %v2198
        %v2257 = vpack.c.bf16 %v2201, %v2200
        %v2258 = vpack.c.bf16 %v2203, %v2202
        %v2259 = vpack.c.bf16 %v2205, %v2204
        %v2260 = vpack.c.bf16 %v2207, %v2206
        %v2261 = vpack.c.bf16 %v2209, %v2208
        %v2262 = vpack.c.bf16 %v2211, %v2210
        %v2263 = vpack.c.bf16 %v2213, %v2212
        %v2264 = vpack.c.bf16 %v2215, %v2214
        %v2265 = vpack.c.bf16 %v2217, %v2216
        %v2266 = vld [vmem:[#allocation12] sm:$0xff]
        %v2267 = vld [vmem:[#allocation12 + $0x8] sm:$0xf]
        %v2270 = vperm.slane %v2266, 0
        %v2271 = vperm.slane %v2266, 1
        %v2272 = vperm.slane %v2266, 2
        %v2273 = vperm.slane %v2266, 3
        %v2274 = vperm.slane %v2266, 4
        %v2275 = vperm.slane %v2266, 5
        %v2276 = vperm.slane %v2266, 6
        %v2277 = vperm.slane %v2266, 7
        %v2278 = vperm.slane %v2267, 0
        %v2279 = vperm.slane %v2267, 1
        %v2280 = vperm.slane %v2267, 2
        %v2281 = vperm.slane %v2267, 3
        %v2294 = vpack.c.bf16 %v2271, %v2270
        %v2295 = vpack.c.bf16 %v2273, %v2272
        %v2296 = vpack.c.bf16 %v2275, %v2274
        %v2297 = vpack.c.bf16 %v2277, %v2276
        %v2298 = vpack.c.bf16 %v2279, %v2278
        %v2299 = vpack.c.bf16 %v2281, %v2280
        %v2306 = vunpack.c.l.b16 %v2294
        %v2307 = vunpack.c.h.b16 %v2294
        %v2308 = vunpack.c.l.b16 %v2295
        %v2309 = vunpack.c.h.b16 %v2295
        %v2310 = vunpack.c.l.b16 %v2296
        %v2311 = vunpack.c.h.b16 %v2296
        %v2312 = vunpack.c.l.b16 %v2297
        %v2313 = vunpack.c.h.b16 %v2297
        %v2314 = vunpack.c.l.b16 %v2298
        %v2315 = vunpack.c.h.b16 %v2298
        %v2316 = vunpack.c.l.b16 %v2299
        %v2317 = vunpack.c.h.b16 %v2299
        %v2318 = vpack.c.b16 %v2306, %v2306
        %v2319 = vpack.c.b16 %v2307, %v2307
        %v2320 = vpack.c.b16 %v2308, %v2308
        %v2321 = vpack.c.b16 %v2309, %v2309
        %v2322 = vpack.c.b16 %v2310, %v2310
        %v2323 = vpack.c.b16 %v2311, %v2311
        %v2324 = vpack.c.b16 %v2312, %v2312
        %v2325 = vpack.c.b16 %v2313, %v2313
        %v2326 = vpack.c.b16 %v2314, %v2314
        %v2327 = vpack.c.b16 %v2315, %v2315
        %v2328 = vpack.c.b16 %v2316, %v2316
        %v2329 = vpack.c.b16 %v2317, %v2317
        %v2331 = vpack.i.b16 %v2318, %v2318
        %v2333 = vperm.slane %v2331, 0
        %v2335 = vpack.i.b16 %v2319, %v2319
        %v2337 = vperm.slane %v2335, 0
        %v2339 = vpack.i.b16 %v2320, %v2320
        %v2341 = vperm.slane %v2339, 0
        %v2343 = vpack.i.b16 %v2321, %v2321
        %v2345 = vperm.slane %v2343, 0
        %v2347 = vpack.i.b16 %v2322, %v2322
        %v2349 = vperm.slane %v2347, 0
        %v2351 = vpack.i.b16 %v2323, %v2323
        %v2353 = vperm.slane %v2351, 0
        %v2355 = vpack.i.b16 %v2324, %v2324
        %v2357 = vperm.slane %v2355, 0
        %v2359 = vpack.i.b16 %v2325, %v2325
        %v2361 = vperm.slane %v2359, 0
        %v2363 = vpack.i.b16 %v2326, %v2326
        %v2365 = vperm.slane %v2363, 0
        %v2367 = vpack.i.b16 %v2327, %v2327
        %v2369 = vperm.slane %v2367, 0
        %v2371 = vpack.i.b16 %v2328, %v2328
        %v2373 = vperm.slane %v2371, 0
        %v2375 = vpack.i.b16 %v2329, %v2329
        %v2377 = vperm.slane %v2375, 0
        %v2378 = vunpack.c.l.bf16 %v2218
        %v2379 = vunpack.c.h.bf16 %v2218
        %v2380 = vunpack.c.l.bf16 %v2219
        %v2381 = vunpack.c.h.bf16 %v2219
        %v2382 = vunpack.c.l.bf16 %v2220
        %v2383 = vunpack.c.h.bf16 %v2220
        %v2384 = vunpack.c.l.bf16 %v2221
        %v2385 = vunpack.c.h.bf16 %v2221
        %v2386 = vunpack.c.l.bf16 %v2222
        %v2387 = vunpack.c.h.bf16 %v2222
        %v2388 = vunpack.c.l.bf16 %v2223
        %v2389 = vunpack.c.h.bf16 %v2223
        %v2390 = vunpack.c.l.bf16 %v2224
        %v2391 = vunpack.c.h.bf16 %v2224
        %v2392 = vunpack.c.l.bf16 %v2225
        %v2393 = vunpack.c.h.bf16 %v2225
        %v2394 = vunpack.c.l.bf16 %v2226
        %v2395 = vunpack.c.h.bf16 %v2226
        %v2396 = vunpack.c.l.bf16 %v2227
        %v2397 = vunpack.c.h.bf16 %v2227
        %v2398 = vunpack.c.l.bf16 %v2228
        %v2399 = vunpack.c.h.bf16 %v2228
        %v2400 = vunpack.c.l.bf16 %v2229
        %v2401 = vunpack.c.h.bf16 %v2229
        %v2402 = vunpack.c.l.bf16 %v2230
        %v2403 = vunpack.c.h.bf16 %v2230
        %v2404 = vunpack.c.l.bf16 %v2231
        %v2405 = vunpack.c.h.bf16 %v2231
        %v2406 = vunpack.c.l.bf16 %v2232
        %v2407 = vunpack.c.h.bf16 %v2232
        %v2408 = vunpack.c.l.bf16 %v2233
        %v2409 = vunpack.c.h.bf16 %v2233
        %v2410 = vunpack.c.l.bf16 %v2234
        %v2411 = vunpack.c.h.bf16 %v2234
        %v2412 = vunpack.c.l.bf16 %v2235
        %v2413 = vunpack.c.h.bf16 %v2235
        %v2414 = vunpack.c.l.bf16 %v2236
        %v2415 = vunpack.c.h.bf16 %v2236
        %v2416 = vunpack.c.l.bf16 %v2237
        %v2417 = vunpack.c.h.bf16 %v2237
        %v2418 = vunpack.c.l.bf16 %v2238
        %v2419 = vunpack.c.h.bf16 %v2238
        %v2420 = vunpack.c.l.bf16 %v2239
        %v2421 = vunpack.c.h.bf16 %v2239
        %v2422 = vunpack.c.l.bf16 %v2240
        %v2423 = vunpack.c.h.bf16 %v2240
        %v2424 = vunpack.c.l.bf16 %v2241
        %v2425 = vunpack.c.h.bf16 %v2241
        %v2426 = vunpack.c.l.bf16 %v2242
        %v2427 = vunpack.c.h.bf16 %v2242
        %v2428 = vunpack.c.l.bf16 %v2243
        %v2429 = vunpack.c.h.bf16 %v2243
        %v2430 = vunpack.c.l.bf16 %v2244
        %v2431 = vunpack.c.h.bf16 %v2244
        %v2432 = vunpack.c.l.bf16 %v2245
        %v2433 = vunpack.c.h.bf16 %v2245
        %v2434 = vunpack.c.l.bf16 %v2246
        %v2435 = vunpack.c.h.bf16 %v2246
        %v2436 = vunpack.c.l.bf16 %v2247
        %v2437 = vunpack.c.h.bf16 %v2247
        %v2438 = vunpack.c.l.bf16 %v2248
        %v2439 = vunpack.c.h.bf16 %v2248
        %v2440 = vunpack.c.l.bf16 %v2249
        %v2441 = vunpack.c.h.bf16 %v2249
        %v2442 = vunpack.c.l.bf16 %v2250
        %v2443 = vunpack.c.h.bf16 %v2250
        %v2444 = vunpack.c.l.bf16 %v2251
        %v2445 = vunpack.c.h.bf16 %v2251
        %v2446 = vunpack.c.l.bf16 %v2252
        %v2447 = vunpack.c.h.bf16 %v2252
        %v2448 = vunpack.c.l.bf16 %v2253
        %v2449 = vunpack.c.h.bf16 %v2253
        %v2450 = vunpack.c.l.bf16 %v2254
        %v2451 = vunpack.c.h.bf16 %v2254
        %v2452 = vunpack.c.l.bf16 %v2255
        %v2453 = vunpack.c.h.bf16 %v2255
        %v2454 = vunpack.c.l.bf16 %v2256
        %v2455 = vunpack.c.h.bf16 %v2256
        %v2456 = vunpack.c.l.bf16 %v2257
        %v2457 = vunpack.c.h.bf16 %v2257
        %v2458 = vunpack.c.l.bf16 %v2258
        %v2459 = vunpack.c.h.bf16 %v2258
        %v2460 = vunpack.c.l.bf16 %v2259
        %v2461 = vunpack.c.h.bf16 %v2259
        %v2462 = vunpack.c.l.bf16 %v2260
        %v2463 = vunpack.c.h.bf16 %v2260
        %v2464 = vunpack.c.l.bf16 %v2261
        %v2465 = vunpack.c.h.bf16 %v2261
        %v2466 = vunpack.c.l.bf16 %v2262
        %v2467 = vunpack.c.h.bf16 %v2262
        %v2468 = vunpack.c.l.bf16 %v2263
        %v2469 = vunpack.c.h.bf16 %v2263
        %v2470 = vunpack.c.l.bf16 %v2264
        %v2471 = vunpack.c.h.bf16 %v2264
        %v2472 = vunpack.c.l.bf16 %v2265
        %v2473 = vunpack.c.h.bf16 %v2265
        %v2474 = vunpack.c.l.bf16 %v2333
        %v2475 = vunpack.c.l.bf16 %v2337
        %v2476 = vunpack.c.l.bf16 %v2341
        %v2477 = vunpack.c.l.bf16 %v2345
        %v2478 = vunpack.c.l.bf16 %v2349
        %v2479 = vunpack.c.l.bf16 %v2353
        %v2480 = vunpack.c.l.bf16 %v2357
        %v2481 = vunpack.c.l.bf16 %v2361
        %v2482 = vunpack.c.l.bf16 %v2365
        %v2483 = vunpack.c.l.bf16 %v2369
        %v2484 = vunpack.c.l.bf16 %v2373
        %v2485 = vunpack.c.l.bf16 %v2377
        %v2486 = vadd.f32 %v2378, %v2474
        %v2487 = vadd.f32 %v2379, %v2475
        %v2488 = vadd.f32 %v2380, %v2476
        %v2489 = vadd.f32 %v2381, %v2477
        %v2490 = vadd.f32 %v2382, %v2478
        %v2491 = vadd.f32 %v2383, %v2479
        %v2492 = vadd.f32 %v2384, %v2480
        %v2493 = vadd.f32 %v2385, %v2481
        %v2494 = vadd.f32 %v2386, %v2482
        %v2495 = vadd.f32 %v2387, %v2483
        %v2496 = vadd.f32 %v2388, %v2484
        %v2497 = vadd.f32 %v2389, %v2485
        %v2498 = vadd.f32 %v2390, %v2474
        %v2499 = vadd.f32 %v2391, %v2475
        %v2500 = vadd.f32 %v2392, %v2476
        %v2501 = vadd.f32 %v2393, %v2477
        %v2502 = vadd.f32 %v2394, %v2478
        %v2503 = vadd.f32 %v2395, %v2479
        %v2504 = vadd.f32 %v2396, %v2480
        %v2505 = vadd.f32 %v2397, %v2481
        %v2506 = vadd.f32 %v2398, %v2482
        %v2507 = vadd.f32 %v2399, %v2483
        %v2508 = vadd.f32 %v2400, %v2484
        %v2509 = vadd.f32 %v2401, %v2485
        %v2510 = vadd.f32 %v2402, %v2474
        %v2511 = vadd.f32 %v2403, %v2475
        %v2512 = vadd.f32 %v2404, %v2476
        %v2513 = vadd.f32 %v2405, %v2477
        %v2514 = vadd.f32 %v2406, %v2478
        %v2515 = vadd.f32 %v2407, %v2479
        %v2516 = vadd.f32 %v2408, %v2480
        %v2517 = vadd.f32 %v2409, %v2481
        %v2518 = vadd.f32 %v2410, %v2482
        %v2519 = vadd.f32 %v2411, %v2483
        %v2520 = vadd.f32 %v2412, %v2484
        %v2521 = vadd.f32 %v2413, %v2485
        %v2522 = vadd.f32 %v2414, %v2474
        %v2523 = vadd.f32 %v2415, %v2475
        %v2524 = vadd.f32 %v2416, %v2476
        %v2525 = vadd.f32 %v2417, %v2477
        %v2526 = vadd.f32 %v2418, %v2478
        %v2527 = vadd.f32 %v2419, %v2479
        %v2528 = vadd.f32 %v2420, %v2480
        %v2529 = vadd.f32 %v2421, %v2481
        %v2530 = vadd.f32 %v2422, %v2482
        %v2531 = vadd.f32 %v2423, %v2483
        %v2532 = vadd.f32 %v2424, %v2484
        %v2533 = vadd.f32 %v2425, %v2485
        %v2534 = vadd.f32 %v2426, %v2474
        %v2535 = vadd.f32 %v2427, %v2475
        %v2536 = vadd.f32 %v2428, %v2476
        %v2537 = vadd.f32 %v2429, %v2477
        %v2538 = vadd.f32 %v2430, %v2478
        %v2539 = vadd.f32 %v2431, %v2479
        %v2540 = vadd.f32 %v2432, %v2480
        %v2541 = vadd.f32 %v2433, %v2481
        %v2542 = vadd.f32 %v2434, %v2482
        %v2543 = vadd.f32 %v2435, %v2483
        %v2544 = vadd.f32 %v2436, %v2484
        %v2545 = vadd.f32 %v2437, %v2485
        %v2546 = vadd.f32 %v2438, %v2474
        %v2547 = vadd.f32 %v2439, %v2475
        %v2548 = vadd.f32 %v2440, %v2476
        %v2549 = vadd.f32 %v2441, %v2477
        %v2550 = vadd.f32 %v2442, %v2478
        %v2551 = vadd.f32 %v2443, %v2479
        %v2552 = vadd.f32 %v2444, %v2480
        %v2553 = vadd.f32 %v2445, %v2481
        %v2554 = vadd.f32 %v2446, %v2482
        %v2555 = vadd.f32 %v2447, %v2483
        %v2556 = vadd.f32 %v2448, %v2484
        %v2557 = vadd.f32 %v2449, %v2485
        %v2558 = vadd.f32 %v2450, %v2474
        %v2559 = vadd.f32 %v2451, %v2475
        %v2560 = vadd.f32 %v2452, %v2476
        %v2561 = vadd.f32 %v2453, %v2477
        %v2562 = vadd.f32 %v2454, %v2478
        %v2563 = vadd.f32 %v2455, %v2479
        %v2564 = vadd.f32 %v2456, %v2480
        %v2565 = vadd.f32 %v2457, %v2481
        %v2566 = vadd.f32 %v2458, %v2482
        %v2567 = vadd.f32 %v2459, %v2483
        %v2568 = vadd.f32 %v2460, %v2484
        %v2569 = vadd.f32 %v2461, %v2485
        %v2570 = vadd.f32 %v2462, %v2474
        %v2571 = vadd.f32 %v2463, %v2475
        %v2572 = vadd.f32 %v2464, %v2476
        %v2573 = vadd.f32 %v2465, %v2477
        %v2574 = vadd.f32 %v2466, %v2478
        %v2575 = vadd.f32 %v2467, %v2479
        %v2576 = vadd.f32 %v2468, %v2480
        %v2577 = vadd.f32 %v2469, %v2481
        %v2578 = vadd.f32 %v2470, %v2482
        %v2579 = vadd.f32 %v2471, %v2483
        %v2580 = vadd.f32 %v2472, %v2484
        %v2581 = vadd.f32 %v2473, %v2485
        %v2582 = vpack.c.bf16 %v2487, %v2486
        %v2583 = vpack.c.bf16 %v2489, %v2488
        %v2584 = vpack.c.bf16 %v2491, %v2490
        %v2585 = vpack.c.bf16 %v2493, %v2492
        %v2586 = vpack.c.bf16 %v2495, %v2494
        %v2587 = vpack.c.bf16 %v2497, %v2496
        %v2588 = vpack.c.bf16 %v2499, %v2498
        %v2589 = vpack.c.bf16 %v2501, %v2500
        %v2590 = vpack.c.bf16 %v2503, %v2502
        %v2591 = vpack.c.bf16 %v2505, %v2504
        %v2592 = vpack.c.bf16 %v2507, %v2506
        %v2593 = vpack.c.bf16 %v2509, %v2508
        %v2594 = vpack.c.bf16 %v2511, %v2510
        %v2595 = vpack.c.bf16 %v2513, %v2512
        %v2596 = vpack.c.bf16 %v2515, %v2514
        %v2597 = vpack.c.bf16 %v2517, %v2516
        %v2598 = vpack.c.bf16 %v2519, %v2518
        %v2599 = vpack.c.bf16 %v2521, %v2520
        %v2600 = vpack.c.bf16 %v2523, %v2522
        %v2601 = vpack.c.bf16 %v2525, %v2524
        %v2602 = vpack.c.bf16 %v2527, %v2526
        %v2603 = vpack.c.bf16 %v2529, %v2528
        %v2604 = vpack.c.bf16 %v2531, %v2530
        %v2605 = vpack.c.bf16 %v2533, %v2532
        %v2606 = vpack.c.bf16 %v2535, %v2534
        %v2607 = vpack.c.bf16 %v2537, %v2536
        %v2608 = vpack.c.bf16 %v2539, %v2538
        %v2609 = vpack.c.bf16 %v2541, %v2540
        %v2610 = vpack.c.bf16 %v2543, %v2542
        %v2611 = vpack.c.bf16 %v2545, %v2544
        %v2612 = vpack.c.bf16 %v2547, %v2546
        %v2613 = vpack.c.bf16 %v2549, %v2548
        %v2614 = vpack.c.bf16 %v2551, %v2550
        %v2615 = vpack.c.bf16 %v2553, %v2552
        %v2616 = vpack.c.bf16 %v2555, %v2554
        %v2617 = vpack.c.bf16 %v2557, %v2556
        %v2618 = vpack.c.bf16 %v2559, %v2558
        %v2619 = vpack.c.bf16 %v2561, %v2560
        %v2620 = vpack.c.bf16 %v2563, %v2562
        %v2621 = vpack.c.bf16 %v2565, %v2564
        %v2622 = vpack.c.bf16 %v2567, %v2566
        %v2623 = vpack.c.bf16 %v2569, %v2568
        %v2624 = vpack.c.bf16 %v2571, %v2570
        %v2625 = vpack.c.bf16 %v2573, %v2572
        %v2626 = vpack.c.bf16 %v2575, %v2574
        %v2627 = vpack.c.bf16 %v2577, %v2576
        %v2628 = vpack.c.bf16 %v2579, %v2578
        %v2629 = vpack.c.bf16 %v2581, %v2580
        %v2630 = vxor.u32 %v2582, 2147516416
        %v2631 = vxor.u32 %v2583, 2147516416
        %v2632 = vxor.u32 %v2584, 2147516416
        %v2633 = vxor.u32 %v2585, 2147516416
        %v2634 = vxor.u32 %v2586, 2147516416
        %v2635 = vxor.u32 %v2587, 2147516416
        %v2636 = vxor.u32 %v2588, 2147516416
        %v2637 = vxor.u32 %v2589, 2147516416
        %v2638 = vxor.u32 %v2590, 2147516416
        %v2639 = vxor.u32 %v2591, 2147516416
        %v2640 = vxor.u32 %v2592, 2147516416
        %v2641 = vxor.u32 %v2593, 2147516416
        %v2642 = vxor.u32 %v2594, 2147516416
        %v2643 = vxor.u32 %v2595, 2147516416
        %v2644 = vxor.u32 %v2596, 2147516416
        %v2645 = vxor.u32 %v2597, 2147516416
        %v2646 = vxor.u32 %v2598, 2147516416
        %v2647 = vxor.u32 %v2599, 2147516416
        %v2648 = vxor.u32 %v2600, 2147516416
        %v2649 = vxor.u32 %v2601, 2147516416
        %v2650 = vxor.u32 %v2602, 2147516416
        %v2651 = vxor.u32 %v2603, 2147516416
        %v2652 = vxor.u32 %v2604, 2147516416
        %v2653 = vxor.u32 %v2605, 2147516416
        %v2654 = vxor.u32 %v2606, 2147516416
        %v2655 = vxor.u32 %v2607, 2147516416
        %v2656 = vxor.u32 %v2608, 2147516416
        %v2657 = vxor.u32 %v2609, 2147516416
        %v2658 = vxor.u32 %v2610, 2147516416
        %v2659 = vxor.u32 %v2611, 2147516416
        %v2660 = vxor.u32 %v2612, 2147516416
        %v2661 = vxor.u32 %v2613, 2147516416
        %v2662 = vxor.u32 %v2614, 2147516416
        %v2663 = vxor.u32 %v2615, 2147516416
        %v2664 = vxor.u32 %v2616, 2147516416
        %v2665 = vxor.u32 %v2617, 2147516416
        %v2666 = vxor.u32 %v2618, 2147516416
        %v2667 = vxor.u32 %v2619, 2147516416
        %v2668 = vxor.u32 %v2620, 2147516416
        %v2669 = vxor.u32 %v2621, 2147516416
        %v2670 = vxor.u32 %v2622, 2147516416
        %v2671 = vxor.u32 %v2623, 2147516416
        %v2672 = vxor.u32 %v2624, 2147516416
        %v2673 = vxor.u32 %v2625, 2147516416
        %v2674 = vxor.u32 %v2626, 2147516416
        %v2675 = vxor.u32 %v2627, 2147516416
        %v2676 = vxor.u32 %v2628, 2147516416
        %v2677 = vxor.u32 %v2629, 2147516416
        %v2678 = vunpack.c.l.bf16 %v2630
        %v2679 = vunpack.c.h.bf16 %v2630
        %v2680 = vunpack.c.l.bf16 %v2631
        %v2681 = vunpack.c.h.bf16 %v2631
        %v2682 = vunpack.c.l.bf16 %v2632
        %v2683 = vunpack.c.h.bf16 %v2632
        %v2684 = vunpack.c.l.bf16 %v2633
        %v2685 = vunpack.c.h.bf16 %v2633
        %v2686 = vunpack.c.l.bf16 %v2634
        %v2687 = vunpack.c.h.bf16 %v2634
        %v2688 = vunpack.c.l.bf16 %v2635
        %v2689 = vunpack.c.h.bf16 %v2635
        %v2690 = vunpack.c.l.bf16 %v2636
        %v2691 = vunpack.c.h.bf16 %v2636
        %v2692 = vunpack.c.l.bf16 %v2637
        %v2693 = vunpack.c.h.bf16 %v2637
        %v2694 = vunpack.c.l.bf16 %v2638
        %v2695 = vunpack.c.h.bf16 %v2638
        %v2696 = vunpack.c.l.bf16 %v2639
        %v2697 = vunpack.c.h.bf16 %v2639
        %v2698 = vunpack.c.l.bf16 %v2640
        %v2699 = vunpack.c.h.bf16 %v2640
        %v2700 = vunpack.c.l.bf16 %v2641
        %v2701 = vunpack.c.h.bf16 %v2641
        %v2702 = vunpack.c.l.bf16 %v2642
        %v2703 = vunpack.c.h.bf16 %v2642
        %v2704 = vunpack.c.l.bf16 %v2643
        %v2705 = vunpack.c.h.bf16 %v2643
        %v2706 = vunpack.c.l.bf16 %v2644
        %v2707 = vunpack.c.h.bf16 %v2644
        %v2708 = vunpack.c.l.bf16 %v2645
        %v2709 = vunpack.c.h.bf16 %v2645
        %v2710 = vunpack.c.l.bf16 %v2646
        %v2711 = vunpack.c.h.bf16 %v2646
        %v2712 = vunpack.c.l.bf16 %v2647
        %v2713 = vunpack.c.h.bf16 %v2647
        %v2714 = vunpack.c.l.bf16 %v2648
        %v2715 = vunpack.c.h.bf16 %v2648
        %v2716 = vunpack.c.l.bf16 %v2649
        %v2717 = vunpack.c.h.bf16 %v2649
        %v2718 = vunpack.c.l.bf16 %v2650
        %v2719 = vunpack.c.h.bf16 %v2650
        %v2720 = vunpack.c.l.bf16 %v2651
        %v2721 = vunpack.c.h.bf16 %v2651
        %v2722 = vunpack.c.l.bf16 %v2652
        %v2723 = vunpack.c.h.bf16 %v2652
        %v2724 = vunpack.c.l.bf16 %v2653
        %v2725 = vunpack.c.h.bf16 %v2653
        %v2726 = vunpack.c.l.bf16 %v2654
        %v2727 = vunpack.c.h.bf16 %v2654
        %v2728 = vunpack.c.l.bf16 %v2655
        %v2729 = vunpack.c.h.bf16 %v2655
        %v2730 = vunpack.c.l.bf16 %v2656
        %v2731 = vunpack.c.h.bf16 %v2656
        %v2732 = vunpack.c.l.bf16 %v2657
        %v2733 = vunpack.c.h.bf16 %v2657
        %v2734 = vunpack.c.l.bf16 %v2658
        %v2735 = vunpack.c.h.bf16 %v2658
        %v2736 = vunpack.c.l.bf16 %v2659
        %v2737 = vunpack.c.h.bf16 %v2659
        %v2738 = vunpack.c.l.bf16 %v2660
        %v2739 = vunpack.c.h.bf16 %v2660
        %v2740 = vunpack.c.l.bf16 %v2661
        %v2741 = vunpack.c.h.bf16 %v2661
        %v2742 = vunpack.c.l.bf16 %v2662
        %v2743 = vunpack.c.h.bf16 %v2662
        %v2744 = vunpack.c.l.bf16 %v2663
        %v2745 = vunpack.c.h.bf16 %v2663
        %v2746 = vunpack.c.l.bf16 %v2664
        %v2747 = vunpack.c.h.bf16 %v2664
        %v2748 = vunpack.c.l.bf16 %v2665
        %v2749 = vunpack.c.h.bf16 %v2665
        %v2750 = vunpack.c.l.bf16 %v2666
        %v2751 = vunpack.c.h.bf16 %v2666
        %v2752 = vunpack.c.l.bf16 %v2667
        %v2753 = vunpack.c.h.bf16 %v2667
        %v2754 = vunpack.c.l.bf16 %v2668
        %v2755 = vunpack.c.h.bf16 %v2668
        %v2756 = vunpack.c.l.bf16 %v2669
        %v2757 = vunpack.c.h.bf16 %v2669
        %v2758 = vunpack.c.l.bf16 %v2670
        %v2759 = vunpack.c.h.bf16 %v2670
        %v2760 = vunpack.c.l.bf16 %v2671
        %v2761 = vunpack.c.h.bf16 %v2671
        %v2762 = vunpack.c.l.bf16 %v2672
        %v2763 = vunpack.c.h.bf16 %v2672
        %v2764 = vunpack.c.l.bf16 %v2673
        %v2765 = vunpack.c.h.bf16 %v2673
        %v2766 = vunpack.c.l.bf16 %v2674
        %v2767 = vunpack.c.h.bf16 %v2674
        %v2768 = vunpack.c.l.bf16 %v2675
        %v2769 = vunpack.c.h.bf16 %v2675
        %v2770 = vunpack.c.l.bf16 %v2676
        %v2771 = vunpack.c.h.bf16 %v2676
        %v2772 = vunpack.c.l.bf16 %v2677
        %v2773 = vunpack.c.h.bf16 %v2677
        %v2774 = vmul.f32 %v2678, 1.442695
        %v2775 = vpow.pop %v2774
        %v2776 = vmul.f32 %v2679, 1.442695
        %v2777 = vpow.pop %v2776
        %v2778 = vmul.f32 %v2680, 1.442695
        %v2779 = vpow.pop %v2778
        %v2780 = vmul.f32 %v2681, 1.442695
        %v2781 = vpow.pop %v2780
        %v2782 = vmul.f32 %v2682, 1.442695
        %v2783 = vpow.pop %v2782
        %v2784 = vmul.f32 %v2683, 1.442695
        %v2785 = vpow.pop %v2784
        %v2786 = vmul.f32 %v2684, 1.442695
        %v2787 = vpow.pop %v2786
        %v2788 = vmul.f32 %v2685, 1.442695
        %v2789 = vpow.pop %v2788
        %v2790 = vmul.f32 %v2686, 1.442695
        %v2791 = vpow.pop %v2790
        %v2792 = vmul.f32 %v2687, 1.442695
        %v2793 = vpow.pop %v2792
        %v2794 = vmul.f32 %v2688, 1.442695
        %v2795 = vpow.pop %v2794
        %v2796 = vmul.f32 %v2689, 1.442695
        %v2797 = vpow.pop %v2796
        %v2798 = vmul.f32 %v2690, 1.442695
        %v2799 = vpow.pop %v2798
        %v2800 = vmul.f32 %v2691, 1.442695
        %v2801 = vpow.pop %v2800
        %v2802 = vmul.f32 %v2692, 1.442695
        %v2803 = vpow.pop %v2802
        %v2804 = vmul.f32 %v2693, 1.442695
        %v2805 = vpow.pop %v2804
        %v2806 = vmul.f32 %v2694, 1.442695
        %v2807 = vpow.pop %v2806
        %v2808 = vmul.f32 %v2695, 1.442695
        %v2809 = vpow.pop %v2808
        %v2810 = vmul.f32 %v2696, 1.442695
        %v2811 = vpow.pop %v2810
        %v2812 = vmul.f32 %v2697, 1.442695
        %v2813 = vpow.pop %v2812
        %v2814 = vmul.f32 %v2698, 1.442695
        %v2815 = vpow.pop %v2814
        %v2816 = vmul.f32 %v2699, 1.442695
        %v2817 = vpow.pop %v2816
        %v2818 = vmul.f32 %v2700, 1.442695
        %v2819 = vpow.pop %v2818
        %v2820 = vmul.f32 %v2701, 1.442695
        %v2821 = vpow.pop %v2820
        %v2822 = vmul.f32 %v2702, 1.442695
        %v2823 = vpow.pop %v2822
        %v2824 = vmul.f32 %v2703, 1.442695
        %v2825 = vpow.pop %v2824
        %v2826 = vmul.f32 %v2704, 1.442695
        %v2827 = vpow.pop %v2826
        %v2828 = vmul.f32 %v2705, 1.442695
        %v2829 = vpow.pop %v2828
        %v2830 = vmul.f32 %v2706, 1.442695
        %v2831 = vpow.pop %v2830
        %v2832 = vmul.f32 %v2707, 1.442695
        %v2833 = vpow.pop %v2832
        %v2834 = vmul.f32 %v2708, 1.442695
        %v2835 = vpow.pop %v2834
        %v2836 = vmul.f32 %v2709, 1.442695
        %v2837 = vpow.pop %v2836
        %v2838 = vmul.f32 %v2710, 1.442695
        %v2839 = vpow.pop %v2838
        %v2840 = vmul.f32 %v2711, 1.442695
        %v2841 = vpow.pop %v2840
        %v2842 = vmul.f32 %v2712, 1.442695
        %v2843 = vpow.pop %v2842
        %v2844 = vmul.f32 %v2713, 1.442695
        %v2845 = vpow.pop %v2844
        %v2846 = vmul.f32 %v2714, 1.442695
        %v2847 = vpow.pop %v2846
        %v2848 = vmul.f32 %v2715, 1.442695
        %v2849 = vpow.pop %v2848
        %v2850 = vmul.f32 %v2716, 1.442695
        %v2851 = vpow.pop %v2850
        %v2852 = vmul.f32 %v2717, 1.442695
        %v2853 = vpow.pop %v2852
        %v2854 = vmul.f32 %v2718, 1.442695
        %v2855 = vpow.pop %v2854
        %v2856 = vmul.f32 %v2719, 1.442695
        %v2857 = vpow.pop %v2856
        %v2858 = vmul.f32 %v2720, 1.442695
        %v2859 = vpow.pop %v2858
        %v2860 = vmul.f32 %v2721, 1.442695
        %v2861 = vpow.pop %v2860
        %v2862 = vmul.f32 %v2722, 1.442695
        %v2863 = vpow.pop %v2862
        %v2864 = vmul.f32 %v2723, 1.442695
        %v2865 = vpow.pop %v2864
        %v2866 = vmul.f32 %v2724, 1.442695
        %v2867 = vpow.pop %v2866
        %v2868 = vmul.f32 %v2725, 1.442695
        %v2869 = vpow.pop %v2868
        %v2870 = vmul.f32 %v2726, 1.442695
        %v2871 = vpow.pop %v2870
        %v2872 = vmul.f32 %v2727, 1.442695
        %v2873 = vpow.pop %v2872
        %v2874 = vmul.f32 %v2728, 1.442695
        %v2875 = vpow.pop %v2874
        %v2876 = vmul.f32 %v2729, 1.442695
        %v2877 = vpow.pop %v2876
        %v2878 = vmul.f32 %v2730, 1.442695
        %v2879 = vpow.pop %v2878
        %v2880 = vmul.f32 %v2731, 1.442695
        %v2881 = vpow.pop %v2880
        %v2882 = vmul.f32 %v2732, 1.442695
        %v2883 = vpow.pop %v2882
        %v2884 = vmul.f32 %v2733, 1.442695
        %v2885 = vpow.pop %v2884
        %v2886 = vmul.f32 %v2734, 1.442695
        %v2887 = vpow.pop %v2886
        %v2888 = vmul.f32 %v2735, 1.442695
        %v2889 = vpow.pop %v2888
        %v2890 = vmul.f32 %v2736, 1.442695
        %v2891 = vpow.pop %v2890
        %v2892 = vmul.f32 %v2737, 1.442695
        %v2893 = vpow.pop %v2892
        %v2894 = vmul.f32 %v2738, 1.442695
        %v2895 = vpow.pop %v2894
        %v2896 = vmul.f32 %v2739, 1.442695
        %v2897 = vpow.pop %v2896
        %v2898 = vmul.f32 %v2740, 1.442695
        %v2899 = vpow.pop %v2898
        %v2900 = vmul.f32 %v2741, 1.442695
        %v2901 = vpow.pop %v2900
        %v2902 = vmul.f32 %v2742, 1.442695
        %v2903 = vpow.pop %v2902
        %v2904 = vmul.f32 %v2743, 1.442695
        %v2905 = vpow.pop %v2904
        %v2906 = vmul.f32 %v2744, 1.442695
        %v2907 = vpow.pop %v2906
        %v2908 = vmul.f32 %v2745, 1.442695
        %v2909 = vpow.pop %v2908
        %v2910 = vmul.f32 %v2746, 1.442695
        %v2911 = vpow.pop %v2910
        %v2912 = vmul.f32 %v2747, 1.442695
        %v2913 = vpow.pop %v2912
        %v2914 = vmul.f32 %v2748, 1.442695
        %v2915 = vpow.pop %v2914
        %v2916 = vmul.f32 %v2749, 1.442695
        %v2917 = vpow.pop %v2916
        %v2918 = vmul.f32 %v2750, 1.442695
        %v2919 = vpow.pop %v2918
        %v2920 = vmul.f32 %v2751, 1.442695
        %v2921 = vpow.pop %v2920
        %v2922 = vmul.f32 %v2752, 1.442695
        %v2923 = vpow.pop %v2922
        %v2924 = vmul.f32 %v2753, 1.442695
        %v2925 = vpow.pop %v2924
        %v2926 = vmul.f32 %v2754, 1.442695
        %v2927 = vpow.pop %v2926
        %v2928 = vmul.f32 %v2755, 1.442695
        %v2929 = vpow.pop %v2928
        %v2930 = vmul.f32 %v2756, 1.442695
        %v2931 = vpow.pop %v2930
        %v2932 = vmul.f32 %v2757, 1.442695
        %v2933 = vpow.pop %v2932
        %v2934 = vmul.f32 %v2758, 1.442695
        %v2935 = vpow.pop %v2934
        %v2936 = vmul.f32 %v2759, 1.442695
        %v2937 = vpow.pop %v2936
        %v2938 = vmul.f32 %v2760, 1.442695
        %v2939 = vpow.pop %v2938
        %v2940 = vmul.f32 %v2761, 1.442695
        %v2941 = vpow.pop %v2940
        %v2942 = vmul.f32 %v2762, 1.442695
        %v2943 = vpow.pop %v2942
        %v2944 = vmul.f32 %v2763, 1.442695
        %v2945 = vpow.pop %v2944
        %v2946 = vmul.f32 %v2764, 1.442695
        %v2947 = vpow.pop %v2946
        %v2948 = vmul.f32 %v2765, 1.442695
        %v2949 = vpow.pop %v2948
        %v2950 = vmul.f32 %v2766, 1.442695
        %v2951 = vpow.pop %v2950
        %v2952 = vmul.f32 %v2767, 1.442695
        %v2953 = vpow.pop %v2952
        %v2954 = vmul.f32 %v2768, 1.442695
        %v2955 = vpow.pop %v2954
        %v2956 = vmul.f32 %v2769, 1.442695
        %v2957 = vpow.pop %v2956
        %v2958 = vmul.f32 %v2770, 1.442695
        %v2959 = vpow.pop %v2958
        %v2960 = vmul.f32 %v2771, 1.442695
        %v2961 = vpow.pop %v2960
        %v2962 = vmul.f32 %v2772, 1.442695
        %v2963 = vpow.pop %v2962
        %v2964 = vmul.f32 %v2773, 1.442695
        %v2965 = vpow.pop %v2964
        %v2966 = vpack.c.bf16 %v2777, %v2775
        %v2967 = vpack.c.bf16 %v2781, %v2779
        %v2968 = vpack.c.bf16 %v2785, %v2783
        %v2969 = vpack.c.bf16 %v2789, %v2787
        %v2970 = vpack.c.bf16 %v2793, %v2791
        %v2971 = vpack.c.bf16 %v2797, %v2795
        %v2972 = vpack.c.bf16 %v2801, %v2799
        %v2973 = vpack.c.bf16 %v2805, %v2803
        %v2974 = vpack.c.bf16 %v2809, %v2807
        %v2975 = vpack.c.bf16 %v2813, %v2811
        %v2976 = vpack.c.bf16 %v2817, %v2815
        %v2977 = vpack.c.bf16 %v2821, %v2819
        %v2978 = vpack.c.bf16 %v2825, %v2823
        %v2979 = vpack.c.bf16 %v2829, %v2827
        %v2980 = vpack.c.bf16 %v2833, %v2831
        %v2981 = vpack.c.bf16 %v2837, %v2835
        %v2982 = vpack.c.bf16 %v2841, %v2839
        %v2983 = vpack.c.bf16 %v2845, %v2843
        %v2984 = vpack.c.bf16 %v2849, %v2847
        %v2985 = vpack.c.bf16 %v2853, %v2851
        %v2986 = vpack.c.bf16 %v2857, %v2855
        %v2987 = vpack.c.bf16 %v2861, %v2859
        %v2988 = vpack.c.bf16 %v2865, %v2863
        %v2989 = vpack.c.bf16 %v2869, %v2867
        %v2990 = vpack.c.bf16 %v2873, %v2871
        %v2991 = vpack.c.bf16 %v2877, %v2875
        %v2992 = vpack.c.bf16 %v2881, %v2879
        %v2993 = vpack.c.bf16 %v2885, %v2883
        %v2994 = vpack.c.bf16 %v2889, %v2887
        %v2995 = vpack.c.bf16 %v2893, %v2891
        %v2996 = vpack.c.bf16 %v2897, %v2895
        %v2997 = vpack.c.bf16 %v2901, %v2899
        %v2998 = vpack.c.bf16 %v2905, %v2903
        %v2999 = vpack.c.bf16 %v2909, %v2907
        %v3000 = vpack.c.bf16 %v2913, %v2911
        %v3001 = vpack.c.bf16 %v2917, %v2915
        %v3002 = vpack.c.bf16 %v2921, %v2919
        %v3003 = vpack.c.bf16 %v2925, %v2923
        %v3004 = vpack.c.bf16 %v2929, %v2927
        %v3005 = vpack.c.bf16 %v2933, %v2931
        %v3006 = vpack.c.bf16 %v2937, %v2935
        %v3007 = vpack.c.bf16 %v2941, %v2939
        %v3008 = vpack.c.bf16 %v2945, %v2943
        %v3009 = vpack.c.bf16 %v2949, %v2947
        %v3010 = vpack.c.bf16 %v2953, %v2951
        %v3011 = vpack.c.bf16 %v2957, %v2955
        %v3012 = vpack.c.bf16 %v2961, %v2959
        %v3013 = vpack.c.bf16 %v2965, %v2963
        %v3014 = vunpack.c.l.bf16 %v2966
        %v3015 = vunpack.c.h.bf16 %v2966
        %v3016 = vunpack.c.l.bf16 %v2967
        %v3017 = vunpack.c.h.bf16 %v2967
        %v3018 = vunpack.c.l.bf16 %v2968
        %v3019 = vunpack.c.h.bf16 %v2968
        %v3020 = vunpack.c.l.bf16 %v2969
        %v3021 = vunpack.c.h.bf16 %v2969
        %v3022 = vunpack.c.l.bf16 %v2970
        %v3023 = vunpack.c.h.bf16 %v2970
        %v3024 = vunpack.c.l.bf16 %v2971
        %v3025 = vunpack.c.h.bf16 %v2971
        %v3026 = vunpack.c.l.bf16 %v2972
        %v3027 = vunpack.c.h.bf16 %v2972
        %v3028 = vunpack.c.l.bf16 %v2973
        %v3029 = vunpack.c.h.bf16 %v2973
        %v3030 = vunpack.c.l.bf16 %v2974
        %v3031 = vunpack.c.h.bf16 %v2974
        %v3032 = vunpack.c.l.bf16 %v2975
        %v3033 = vunpack.c.h.bf16 %v2975
        %v3034 = vunpack.c.l.bf16 %v2976
        %v3035 = vunpack.c.h.bf16 %v2976
        %v3036 = vunpack.c.l.bf16 %v2977
        %v3037 = vunpack.c.h.bf16 %v2977
        %v3038 = vunpack.c.l.bf16 %v2978
        %v3039 = vunpack.c.h.bf16 %v2978
        %v3040 = vunpack.c.l.bf16 %v2979
        %v3041 = vunpack.c.h.bf16 %v2979
        %v3042 = vunpack.c.l.bf16 %v2980
        %v3043 = vunpack.c.h.bf16 %v2980
        %v3044 = vunpack.c.l.bf16 %v2981
        %v3045 = vunpack.c.h.bf16 %v2981
        %v3046 = vunpack.c.l.bf16 %v2982
        %v3047 = vunpack.c.h.bf16 %v2982
        %v3048 = vunpack.c.l.bf16 %v2983
        %v3049 = vunpack.c.h.bf16 %v2983
        %v3050 = vunpack.c.l.bf16 %v2984
        %v3051 = vunpack.c.h.bf16 %v2984
        %v3052 = vunpack.c.l.bf16 %v2985
        %v3053 = vunpack.c.h.bf16 %v2985
        %v3054 = vunpack.c.l.bf16 %v2986
        %v3055 = vunpack.c.h.bf16 %v2986
        %v3056 = vunpack.c.l.bf16 %v2987
        %v3057 = vunpack.c.h.bf16 %v2987
        %v3058 = vunpack.c.l.bf16 %v2988
        %v3059 = vunpack.c.h.bf16 %v2988
        %v3060 = vunpack.c.l.bf16 %v2989
        %v3061 = vunpack.c.h.bf16 %v2989
        %v3062 = vunpack.c.l.bf16 %v2990
        %v3063 = vunpack.c.h.bf16 %v2990
        %v3064 = vunpack.c.l.bf16 %v2991
        %v3065 = vunpack.c.h.bf16 %v2991
        %v3066 = vunpack.c.l.bf16 %v2992
        %v3067 = vunpack.c.h.bf16 %v2992
        %v3068 = vunpack.c.l.bf16 %v2993
        %v3069 = vunpack.c.h.bf16 %v2993
        %v3070 = vunpack.c.l.bf16 %v2994
        %v3071 = vunpack.c.h.bf16 %v2994
        %v3072 = vunpack.c.l.bf16 %v2995
        %v3073 = vunpack.c.h.bf16 %v2995
        %v3074 = vunpack.c.l.bf16 %v2996
        %v3075 = vunpack.c.h.bf16 %v2996
        %v3076 = vunpack.c.l.bf16 %v2997
        %v3077 = vunpack.c.h.bf16 %v2997
        %v3078 = vunpack.c.l.bf16 %v2998
        %v3079 = vunpack.c.h.bf16 %v2998
        %v3080 = vunpack.c.l.bf16 %v2999
        %v3081 = vunpack.c.h.bf16 %v2999
        %v3082 = vunpack.c.l.bf16 %v3000
        %v3083 = vunpack.c.h.bf16 %v3000
        %v3084 = vunpack.c.l.bf16 %v3001
        %v3085 = vunpack.c.h.bf16 %v3001
        %v3086 = vunpack.c.l.bf16 %v3002
        %v3087 = vunpack.c.h.bf16 %v3002
        %v3088 = vunpack.c.l.bf16 %v3003
        %v3089 = vunpack.c.h.bf16 %v3003
        %v3090 = vunpack.c.l.bf16 %v3004
        %v3091 = vunpack.c.h.bf16 %v3004
        %v3092 = vunpack.c.l.bf16 %v3005
        %v3093 = vunpack.c.h.bf16 %v3005
        %v3094 = vunpack.c.l.bf16 %v3006
        %v3095 = vunpack.c.h.bf16 %v3006
        %v3096 = vunpack.c.l.bf16 %v3007
        %v3097 = vunpack.c.h.bf16 %v3007
        %v3098 = vunpack.c.l.bf16 %v3008
        %v3099 = vunpack.c.h.bf16 %v3008
        %v3100 = vunpack.c.l.bf16 %v3009
        %v3101 = vunpack.c.h.bf16 %v3009
        %v3102 = vunpack.c.l.bf16 %v3010
        %v3103 = vunpack.c.h.bf16 %v3010
        %v3104 = vunpack.c.l.bf16 %v3011
        %v3105 = vunpack.c.h.bf16 %v3011
        %v3106 = vunpack.c.l.bf16 %v3012
        %v3107 = vunpack.c.h.bf16 %v3012
        %v3108 = vunpack.c.l.bf16 %v3013
        %v3109 = vunpack.c.h.bf16 %v3013
        %v3110 = vadd.f32 %v3014, 1.0
        %v3111 = vadd.f32 %v3015, 1.0
        %v3112 = vadd.f32 %v3016, 1.0
        %v3113 = vadd.f32 %v3017, 1.0
        %v3114 = vadd.f32 %v3018, 1.0
        %v3115 = vadd.f32 %v3019, 1.0
        %v3116 = vadd.f32 %v3020, 1.0
        %v3117 = vadd.f32 %v3021, 1.0
        %v3118 = vadd.f32 %v3022, 1.0
        %v3119 = vadd.f32 %v3023, 1.0
        %v3120 = vadd.f32 %v3024, 1.0
        %v3121 = vadd.f32 %v3025, 1.0
        %v3122 = vadd.f32 %v3026, 1.0
        %v3123 = vadd.f32 %v3027, 1.0
        %v3124 = vadd.f32 %v3028, 1.0
        %v3125 = vadd.f32 %v3029, 1.0
        %v3126 = vadd.f32 %v3030, 1.0
        %v3127 = vadd.f32 %v3031, 1.0
        %v3128 = vadd.f32 %v3032, 1.0
        %v3129 = vadd.f32 %v3033, 1.0
        %v3130 = vadd.f32 %v3034, 1.0
        %v3131 = vadd.f32 %v3035, 1.0
        %v3132 = vadd.f32 %v3036, 1.0
        %v3133 = vadd.f32 %v3037, 1.0
        %v3134 = vadd.f32 %v3038, 1.0
        %v3135 = vadd.f32 %v3039, 1.0
        %v3136 = vadd.f32 %v3040, 1.0
        %v3137 = vadd.f32 %v3041, 1.0
        %v3138 = vadd.f32 %v3042, 1.0
        %v3139 = vadd.f32 %v3043, 1.0
        %v3140 = vadd.f32 %v3044, 1.0
        %v3141 = vadd.f32 %v3045, 1.0
        %v3142 = vadd.f32 %v3046, 1.0
        %v3143 = vadd.f32 %v3047, 1.0
        %v3144 = vadd.f32 %v3048, 1.0
        %v3145 = vadd.f32 %v3049, 1.0
        %v3146 = vadd.f32 %v3050, 1.0
        %v3147 = vadd.f32 %v3051, 1.0
        %v3148 = vadd.f32 %v3052, 1.0
        %v3149 = vadd.f32 %v3053, 1.0
        %v3150 = vadd.f32 %v3054, 1.0
        %v3151 = vadd.f32 %v3055, 1.0
        %v3152 = vadd.f32 %v3056, 1.0
        %v3153 = vadd.f32 %v3057, 1.0
        %v3154 = vadd.f32 %v3058, 1.0
        %v3155 = vadd.f32 %v3059, 1.0
        %v3156 = vadd.f32 %v3060, 1.0
        %v3157 = vadd.f32 %v3061, 1.0
        %v3158 = vadd.f32 %v3062, 1.0
        %v3159 = vadd.f32 %v3063, 1.0
        %v3160 = vadd.f32 %v3064, 1.0
        %v3161 = vadd.f32 %v3065, 1.0
        %v3162 = vadd.f32 %v3066, 1.0
        %v3163 = vadd.f32 %v3067, 1.0
        %v3164 = vadd.f32 %v3068, 1.0
        %v3165 = vadd.f32 %v3069, 1.0
        %v3166 = vadd.f32 %v3070, 1.0
        %v3167 = vadd.f32 %v3071, 1.0
        %v3168 = vadd.f32 %v3072, 1.0
        %v3169 = vadd.f32 %v3073, 1.0
        %v3170 = vadd.f32 %v3074, 1.0
        %v3171 = vadd.f32 %v3075, 1.0
        %v3172 = vadd.f32 %v3076, 1.0
        %v3173 = vadd.f32 %v3077, 1.0
        %v3174 = vadd.f32 %v3078, 1.0
        %v3175 = vadd.f32 %v3079, 1.0
        %v3176 = vadd.f32 %v3080, 1.0
        %v3177 = vadd.f32 %v3081, 1.0
        %v3178 = vadd.f32 %v3082, 1.0
        %v3179 = vadd.f32 %v3083, 1.0
        %v3180 = vadd.f32 %v3084, 1.0
        %v3181 = vadd.f32 %v3085, 1.0
        %v3182 = vadd.f32 %v3086, 1.0
        %v3183 = vadd.f32 %v3087, 1.0
        %v3184 = vadd.f32 %v3088, 1.0
        %v3185 = vadd.f32 %v3089, 1.0
        %v3186 = vadd.f32 %v3090, 1.0
        %v3187 = vadd.f32 %v3091, 1.0
        %v3188 = vadd.f32 %v3092, 1.0
        %v3189 = vadd.f32 %v3093, 1.0
        %v3190 = vadd.f32 %v3094, 1.0
        %v3191 = vadd.f32 %v3095, 1.0
        %v3192 = vadd.f32 %v3096, 1.0
        %v3193 = vadd.f32 %v3097, 1.0
        %v3194 = vadd.f32 %v3098, 1.0
        %v3195 = vadd.f32 %v3099, 1.0
        %v3196 = vadd.f32 %v3100, 1.0
        %v3197 = vadd.f32 %v3101, 1.0
        %v3198 = vadd.f32 %v3102, 1.0
        %v3199 = vadd.f32 %v3103, 1.0
        %v3200 = vadd.f32 %v3104, 1.0
        %v3201 = vadd.f32 %v3105, 1.0
        %v3202 = vadd.f32 %v3106, 1.0
        %v3203 = vadd.f32 %v3107, 1.0
        %v3204 = vadd.f32 %v3108, 1.0
        %v3205 = vadd.f32 %v3109, 1.0
        %v3206 = vpack.c.bf16 %v3111, %v3110
        %v3207 = vpack.c.bf16 %v3113, %v3112
        %v3208 = vpack.c.bf16 %v3115, %v3114
        %v3209 = vpack.c.bf16 %v3117, %v3116
        %v3210 = vpack.c.bf16 %v3119, %v3118
        %v3211 = vpack.c.bf16 %v3121, %v3120
        %v3212 = vpack.c.bf16 %v3123, %v3122
        %v3213 = vpack.c.bf16 %v3125, %v3124
        %v3214 = vpack.c.bf16 %v3127, %v3126
        %v3215 = vpack.c.bf16 %v3129, %v3128
        %v3216 = vpack.c.bf16 %v3131, %v3130
        %v3217 = vpack.c.bf16 %v3133, %v3132
        %v3218 = vpack.c.bf16 %v3135, %v3134
        %v3219 = vpack.c.bf16 %v3137, %v3136
        %v3220 = vpack.c.bf16 %v3139, %v3138
        %v3221 = vpack.c.bf16 %v3141, %v3140
        %v3222 = vpack.c.bf16 %v3143, %v3142
        %v3223 = vpack.c.bf16 %v3145, %v3144
        %v3224 = vpack.c.bf16 %v3147, %v3146
        %v3225 = vpack.c.bf16 %v3149, %v3148
        %v3226 = vpack.c.bf16 %v3151, %v3150
        %v3227 = vpack.c.bf16 %v3153, %v3152
        %v3228 = vpack.c.bf16 %v3155, %v3154
        %v3229 = vpack.c.bf16 %v3157, %v3156
        %v3230 = vpack.c.bf16 %v3159, %v3158
        %v3231 = vpack.c.bf16 %v3161, %v3160
        %v3232 = vpack.c.bf16 %v3163, %v3162
        %v3233 = vpack.c.bf16 %v3165, %v3164
        %v3234 = vpack.c.bf16 %v3167, %v3166
        %v3235 = vpack.c.bf16 %v3169, %v3168
        %v3236 = vpack.c.bf16 %v3171, %v3170
        %v3237 = vpack.c.bf16 %v3173, %v3172
        %v3238 = vpack.c.bf16 %v3175, %v3174
        %v3239 = vpack.c.bf16 %v3177, %v3176
        %v3240 = vpack.c.bf16 %v3179, %v3178
        %v3241 = vpack.c.bf16 %v3181, %v3180
        %v3242 = vpack.c.bf16 %v3183, %v3182
        %v3243 = vpack.c.bf16 %v3185, %v3184
        %v3244 = vpack.c.bf16 %v3187, %v3186
        %v3245 = vpack.c.bf16 %v3189, %v3188
        %v3246 = vpack.c.bf16 %v3191, %v3190
        %v3247 = vpack.c.bf16 %v3193, %v3192
        %v3248 = vpack.c.bf16 %v3195, %v3194
        %v3249 = vpack.c.bf16 %v3197, %v3196
        %v3250 = vpack.c.bf16 %v3199, %v3198
        %v3251 = vpack.c.bf16 %v3201, %v3200
        %v3252 = vpack.c.bf16 %v3203, %v3202
        %v3253 = vpack.c.bf16 %v3205, %v3204
        %v3254 = vunpack.c.h.bf16 1065369472
        %v3255 = vunpack.c.l.bf16 1065369472
        %v3256 = vunpack.c.h.bf16 %v3206
        %v3257 = vunpack.c.l.bf16 %v3206
        %v3258 = vrcp.pop %v3256
        %v3259 = vmul.f32 %v3254, %v3258
        %v3260 = vrcp.pop %v3257
        %v3261 = vmul.f32 %v3255, %v3260
        %v3262 = vpack.c.bf16 %v3259, %v3261
        %v3263 = vunpack.c.h.bf16 %v3207
        %v3264 = vunpack.c.l.bf16 %v3207
        %v3265 = vrcp.pop %v3263
        %v3266 = vmul.f32 %v3254, %v3265
        %v3267 = vrcp.pop %v3264
        %v3268 = vmul.f32 %v3255, %v3267
        %v3269 = vpack.c.bf16 %v3266, %v3268
        %v3270 = vunpack.c.h.bf16 %v3208
        %v3271 = vunpack.c.l.bf16 %v3208
        %v3272 = vrcp.pop %v3270
        %v3273 = vmul.f32 %v3254, %v3272
        %v3274 = vrcp.pop %v3271
        %v3275 = vmul.f32 %v3255, %v3274
        %v3276 = vpack.c.bf16 %v3273, %v3275
        %v3277 = vunpack.c.h.bf16 %v3209
        %v3278 = vunpack.c.l.bf16 %v3209
        %v3279 = vrcp.pop %v3277
        %v3280 = vmul.f32 %v3254, %v3279
        %v3281 = vrcp.pop %v3278
        %v3282 = vmul.f32 %v3255, %v3281
        %v3283 = vpack.c.bf16 %v3280, %v3282
        %v3284 = vunpack.c.h.bf16 %v3210
        %v3285 = vunpack.c.l.bf16 %v3210
        %v3286 = vrcp.pop %v3284
        %v3287 = vmul.f32 %v3254, %v3286
        %v3288 = vrcp.pop %v3285
        %v3289 = vmul.f32 %v3255, %v3288
        %v3290 = vpack.c.bf16 %v3287, %v3289
        %v3291 = vunpack.c.h.bf16 %v3211
        %v3292 = vunpack.c.l.bf16 %v3211
        %v3293 = vrcp.pop %v3291
        %v3294 = vmul.f32 %v3254, %v3293
        %v3295 = vrcp.pop %v3292
        %v3296 = vmul.f32 %v3255, %v3295
        %v3297 = vpack.c.bf16 %v3294, %v3296
        %v3298 = vunpack.c.h.bf16 %v3212
        %v3299 = vunpack.c.l.bf16 %v3212
        %v3300 = vrcp.pop %v3298
        %v3301 = vmul.f32 %v3254, %v3300
        %v3302 = vrcp.pop %v3299
        %v3303 = vmul.f32 %v3255, %v3302
        %v3304 = vpack.c.bf16 %v3301, %v3303
        %v3305 = vunpack.c.h.bf16 %v3213
        %v3306 = vunpack.c.l.bf16 %v3213
        %v3307 = vrcp.pop %v3305
        %v3308 = vmul.f32 %v3254, %v3307
        %v3309 = vrcp.pop %v3306
        %v3310 = vmul.f32 %v3255, %v3309
        %v3311 = vpack.c.bf16 %v3308, %v3310
        %v3312 = vunpack.c.h.bf16 %v3214
        %v3313 = vunpack.c.l.bf16 %v3214
        %v3314 = vrcp.pop %v3312
        %v3315 = vmul.f32 %v3254, %v3314
        %v3316 = vrcp.pop %v3313
        %v3317 = vmul.f32 %v3255, %v3316
        %v3318 = vpack.c.bf16 %v3315, %v3317
        %v3319 = vunpack.c.h.bf16 %v3215
        %v3320 = vunpack.c.l.bf16 %v3215
        %v3321 = vrcp.pop %v3319
        %v3322 = vmul.f32 %v3254, %v3321
        %v3323 = vrcp.pop %v3320
        %v3324 = vmul.f32 %v3255, %v3323
        %v3325 = vpack.c.bf16 %v3322, %v3324
        %v3326 = vunpack.c.h.bf16 %v3216
        %v3327 = vunpack.c.l.bf16 %v3216
        %v3328 = vrcp.pop %v3326
        %v3329 = vmul.f32 %v3254, %v3328
        %v3330 = vrcp.pop %v3327
        %v3331 = vmul.f32 %v3255, %v3330
        %v3332 = vpack.c.bf16 %v3329, %v3331
        %v3333 = vunpack.c.h.bf16 %v3217
        %v3334 = vunpack.c.l.bf16 %v3217
        %v3335 = vrcp.pop %v3333
        %v3336 = vmul.f32 %v3254, %v3335
        %v3337 = vrcp.pop %v3334
        %v3338 = vmul.f32 %v3255, %v3337
        %v3339 = vpack.c.bf16 %v3336, %v3338
        %v3340 = vunpack.c.h.bf16 %v3218
        %v3341 = vunpack.c.l.bf16 %v3218
        %v3342 = vrcp.pop %v3340
        %v3343 = vmul.f32 %v3254, %v3342
        %v3344 = vrcp.pop %v3341
        %v3345 = vmul.f32 %v3255, %v3344
        %v3346 = vpack.c.bf16 %v3343, %v3345
        %v3347 = vunpack.c.h.bf16 %v3219
        %v3348 = vunpack.c.l.bf16 %v3219
        %v3349 = vrcp.pop %v3347
        %v3350 = vmul.f32 %v3254, %v3349
        %v3351 = vrcp.pop %v3348
        %v3352 = vmul.f32 %v3255, %v3351
        %v3353 = vpack.c.bf16 %v3350, %v3352
        %v3354 = vunpack.c.h.bf16 %v3220
        %v3355 = vunpack.c.l.bf16 %v3220
        %v3356 = vrcp.pop %v3354
        %v3357 = vmul.f32 %v3254, %v3356
        %v3358 = vrcp.pop %v3355
        %v3359 = vmul.f32 %v3255, %v3358
        %v3360 = vpack.c.bf16 %v3357, %v3359
        %v3361 = vunpack.c.h.bf16 %v3221
        %v3362 = vunpack.c.l.bf16 %v3221
        %v3363 = vrcp.pop %v3361
        %v3364 = vmul.f32 %v3254, %v3363
        %v3365 = vrcp.pop %v3362
        %v3366 = vmul.f32 %v3255, %v3365
        %v3367 = vpack.c.bf16 %v3364, %v3366
        %v3368 = vunpack.c.h.bf16 %v3222
        %v3369 = vunpack.c.l.bf16 %v3222
        %v3370 = vrcp.pop %v3368
        %v3371 = vmul.f32 %v3254, %v3370
        %v3372 = vrcp.pop %v3369
        %v3373 = vmul.f32 %v3255, %v3372
        %v3374 = vpack.c.bf16 %v3371, %v3373
        %v3375 = vunpack.c.h.bf16 %v3223
        %v3376 = vunpack.c.l.bf16 %v3223
        %v3377 = vrcp.pop %v3375
        %v3378 = vmul.f32 %v3254, %v3377
        %v3379 = vrcp.pop %v3376
        %v3380 = vmul.f32 %v3255, %v3379
        %v3381 = vpack.c.bf16 %v3378, %v3380
        %v3382 = vunpack.c.h.bf16 %v3224
        %v3383 = vunpack.c.l.bf16 %v3224
        %v3384 = vrcp.pop %v3382
        %v3385 = vmul.f32 %v3254, %v3384
        %v3386 = vrcp.pop %v3383
        %v3387 = vmul.f32 %v3255, %v3386
        %v3388 = vpack.c.bf16 %v3385, %v3387
        %v3389 = vunpack.c.h.bf16 %v3225
        %v3390 = vunpack.c.l.bf16 %v3225
        %v3391 = vrcp.pop %v3389
        %v3392 = vmul.f32 %v3254, %v3391
        %v3393 = vrcp.pop %v3390
        %v3394 = vmul.f32 %v3255, %v3393
        %v3395 = vpack.c.bf16 %v3392, %v3394
        %v3396 = vunpack.c.h.bf16 %v3226
        %v3397 = vunpack.c.l.bf16 %v3226
        %v3398 = vrcp.pop %v3396
        %v3399 = vmul.f32 %v3254, %v3398
        %v3400 = vrcp.pop %v3397
        %v3401 = vmul.f32 %v3255, %v3400
        %v3402 = vpack.c.bf16 %v3399, %v3401
        %v3403 = vunpack.c.h.bf16 %v3227
        %v3404 = vunpack.c.l.bf16 %v3227
        %v3405 = vrcp.pop %v3403
        %v3406 = vmul.f32 %v3254, %v3405
        %v3407 = vrcp.pop %v3404
        %v3408 = vmul.f32 %v3255, %v3407
        %v3409 = vpack.c.bf16 %v3406, %v3408
        %v3410 = vunpack.c.h.bf16 %v3228
        %v3411 = vunpack.c.l.bf16 %v3228
        %v3412 = vrcp.pop %v3410
        %v3413 = vmul.f32 %v3254, %v3412
        %v3414 = vrcp.pop %v3411
        %v3415 = vmul.f32 %v3255, %v3414
        %v3416 = vpack.c.bf16 %v3413, %v3415
        %v3417 = vunpack.c.h.bf16 %v3229
        %v3418 = vunpack.c.l.bf16 %v3229
        %v3419 = vrcp.pop %v3417
        %v3420 = vmul.f32 %v3254, %v3419
        %v3421 = vrcp.pop %v3418
        %v3422 = vmul.f32 %v3255, %v3421
        %v3423 = vpack.c.bf16 %v3420, %v3422
        %v3424 = vunpack.c.h.bf16 %v3230
        %v3425 = vunpack.c.l.bf16 %v3230
        %v3426 = vrcp.pop %v3424
        %v3427 = vmul.f32 %v3254, %v3426
        %v3428 = vrcp.pop %v3425
        %v3429 = vmul.f32 %v3255, %v3428
        %v3430 = vpack.c.bf16 %v3427, %v3429
        %v3431 = vunpack.c.h.bf16 %v3231
        %v3432 = vunpack.c.l.bf16 %v3231
        %v3433 = vrcp.pop %v3431
        %v3434 = vmul.f32 %v3254, %v3433
        %v3435 = vrcp.pop %v3432
        %v3436 = vmul.f32 %v3255, %v3435
        %v3437 = vpack.c.bf16 %v3434, %v3436
        %v3438 = vunpack.c.h.bf16 %v3232
        %v3439 = vunpack.c.l.bf16 %v3232
        %v3440 = vrcp.pop %v3438
        %v3441 = vmul.f32 %v3254, %v3440
        %v3442 = vrcp.pop %v3439
        %v3443 = vmul.f32 %v3255, %v3442
        %v3444 = vpack.c.bf16 %v3441, %v3443
        %v3445 = vunpack.c.h.bf16 %v3233
        %v3446 = vunpack.c.l.bf16 %v3233
        %v3447 = vrcp.pop %v3445
        %v3448 = vmul.f32 %v3254, %v3447
        %v3449 = vrcp.pop %v3446
        %v3450 = vmul.f32 %v3255, %v3449
        %v3451 = vpack.c.bf16 %v3448, %v3450
        %v3452 = vunpack.c.h.bf16 %v3234
        %v3453 = vunpack.c.l.bf16 %v3234
        %v3454 = vrcp.pop %v3452
        %v3455 = vmul.f32 %v3254, %v3454
        %v3456 = vrcp.pop %v3453
        %v3457 = vmul.f32 %v3255, %v3456
        %v3458 = vpack.c.bf16 %v3455, %v3457
        %v3459 = vunpack.c.h.bf16 %v3235
        %v3460 = vunpack.c.l.bf16 %v3235
        %v3461 = vrcp.pop %v3459
        %v3462 = vmul.f32 %v3254, %v3461
        %v3463 = vrcp.pop %v3460
        %v3464 = vmul.f32 %v3255, %v3463
        %v3465 = vpack.c.bf16 %v3462, %v3464
        %v3466 = vunpack.c.h.bf16 %v3236
        %v3467 = vunpack.c.l.bf16 %v3236
        %v3468 = vrcp.pop %v3466
        %v3469 = vmul.f32 %v3254, %v3468
        %v3470 = vrcp.pop %v3467
        %v3471 = vmul.f32 %v3255, %v3470
        %v3472 = vpack.c.bf16 %v3469, %v3471
        %v3473 = vunpack.c.h.bf16 %v3237
        %v3474 = vunpack.c.l.bf16 %v3237
        %v3475 = vrcp.pop %v3473
        %v3476 = vmul.f32 %v3254, %v3475
        %v3477 = vrcp.pop %v3474
        %v3478 = vmul.f32 %v3255, %v3477
        %v3479 = vpack.c.bf16 %v3476, %v3478
        %v3480 = vunpack.c.h.bf16 %v3238
        %v3481 = vunpack.c.l.bf16 %v3238
        %v3482 = vrcp.pop %v3480
        %v3483 = vmul.f32 %v3254, %v3482
        %v3484 = vrcp.pop %v3481
        %v3485 = vmul.f32 %v3255, %v3484
        %v3486 = vpack.c.bf16 %v3483, %v3485
        %v3487 = vunpack.c.h.bf16 %v3239
        %v3488 = vunpack.c.l.bf16 %v3239
        %v3489 = vrcp.pop %v3487
        %v3490 = vmul.f32 %v3254, %v3489
        %v3491 = vrcp.pop %v3488
        %v3492 = vmul.f32 %v3255, %v3491
        %v3493 = vpack.c.bf16 %v3490, %v3492
        %v3494 = vunpack.c.h.bf16 %v3240
        %v3495 = vunpack.c.l.bf16 %v3240
        %v3496 = vrcp.pop %v3494
        %v3497 = vmul.f32 %v3254, %v3496
        %v3498 = vrcp.pop %v3495
        %v3499 = vmul.f32 %v3255, %v3498
        %v3500 = vpack.c.bf16 %v3497, %v3499
        %v3501 = vunpack.c.h.bf16 %v3241
        %v3502 = vunpack.c.l.bf16 %v3241
        %v3503 = vrcp.pop %v3501
        %v3504 = vmul.f32 %v3254, %v3503
        %v3505 = vrcp.pop %v3502
        %v3506 = vmul.f32 %v3255, %v3505
        %v3507 = vpack.c.bf16 %v3504, %v3506
        %v3508 = vunpack.c.h.bf16 %v3242
        %v3509 = vunpack.c.l.bf16 %v3242
        %v3510 = vrcp.pop %v3508
        %v3511 = vmul.f32 %v3254, %v3510
        %v3512 = vrcp.pop %v3509
        %v3513 = vmul.f32 %v3255, %v3512
        %v3514 = vpack.c.bf16 %v3511, %v3513
        %v3515 = vunpack.c.h.bf16 %v3243
        %v3516 = vunpack.c.l.bf16 %v3243
        %v3517 = vrcp.pop %v3515
        %v3518 = vmul.f32 %v3254, %v3517
        %v3519 = vrcp.pop %v3516
        %v3520 = vmul.f32 %v3255, %v3519
        %v3521 = vpack.c.bf16 %v3518, %v3520
        %v3522 = vunpack.c.h.bf16 %v3244
        %v3523 = vunpack.c.l.bf16 %v3244
        %v3524 = vrcp.pop %v3522
        %v3525 = vmul.f32 %v3254, %v3524
        %v3526 = vrcp.pop %v3523
        %v3527 = vmul.f32 %v3255, %v3526
        %v3528 = vpack.c.bf16 %v3525, %v3527
        %v3529 = vunpack.c.h.bf16 %v3245
        %v3530 = vunpack.c.l.bf16 %v3245
        %v3531 = vrcp.pop %v3529
        %v3532 = vmul.f32 %v3254, %v3531
        %v3533 = vrcp.pop %v3530
        %v3534 = vmul.f32 %v3255, %v3533
        %v3535 = vpack.c.bf16 %v3532, %v3534
        %v3536 = vunpack.c.h.bf16 %v3246
        %v3537 = vunpack.c.l.bf16 %v3246
        %v3538 = vrcp.pop %v3536
        %v3539 = vmul.f32 %v3254, %v3538
        %v3540 = vrcp.pop %v3537
        %v3541 = vmul.f32 %v3255, %v3540
        %v3542 = vpack.c.bf16 %v3539, %v3541
        %v3543 = vunpack.c.h.bf16 %v3247
        %v3544 = vunpack.c.l.bf16 %v3247
        %v3545 = vrcp.pop %v3543
        %v3546 = vmul.f32 %v3254, %v3545
        %v3547 = vrcp.pop %v3544
        %v3548 = vmul.f32 %v3255, %v3547
        %v3549 = vpack.c.bf16 %v3546, %v3548
        %v3550 = vunpack.c.h.bf16 %v3248
        %v3551 = vunpack.c.l.bf16 %v3248
        %v3552 = vrcp.pop %v3550
        %v3553 = vmul.f32 %v3254, %v3552
        %v3554 = vrcp.pop %v3551
        %v3555 = vmul.f32 %v3255, %v3554
        %v3556 = vpack.c.bf16 %v3553, %v3555
        %v3557 = vunpack.c.h.bf16 %v3249
        %v3558 = vunpack.c.l.bf16 %v3249
        %v3559 = vrcp.pop %v3557
        %v3560 = vmul.f32 %v3254, %v3559
        %v3561 = vrcp.pop %v3558
        %v3562 = vmul.f32 %v3255, %v3561
        %v3563 = vpack.c.bf16 %v3560, %v3562
        %v3564 = vunpack.c.h.bf16 %v3250
        %v3565 = vunpack.c.l.bf16 %v3250
        %v3566 = vrcp.pop %v3564
        %v3567 = vmul.f32 %v3254, %v3566
        %v3568 = vrcp.pop %v3565
        %v3569 = vmul.f32 %v3255, %v3568
        %v3570 = vpack.c.bf16 %v3567, %v3569
        %v3571 = vunpack.c.h.bf16 %v3251
        %v3572 = vunpack.c.l.bf16 %v3251
        %v3573 = vrcp.pop %v3571
        %v3574 = vmul.f32 %v3254, %v3573
        %v3575 = vrcp.pop %v3572
        %v3576 = vmul.f32 %v3255, %v3575
        %v3577 = vpack.c.bf16 %v3574, %v3576
        %v3578 = vunpack.c.h.bf16 %v3252
        %v3579 = vunpack.c.l.bf16 %v3252
        %v3580 = vrcp.pop %v3578
        %v3581 = vmul.f32 %v3254, %v3580
        %v3582 = vrcp.pop %v3579
        %v3583 = vmul.f32 %v3255, %v3582
        %v3584 = vpack.c.bf16 %v3581, %v3583
        %v3585 = vunpack.c.h.bf16 %v3253
        %v3586 = vunpack.c.l.bf16 %v3253
        %v3587 = vrcp.pop %v3585
        %v3588 = vmul.f32 %v3254, %v3587
        %v3589 = vrcp.pop %v3586
        %v3590 = vmul.f32 %v3255, %v3589
        %v3591 = vpack.c.bf16 %v3588, %v3590
        %v3592 = vunpack.c.l.bf16 %v2582
        %v3593 = vunpack.c.h.bf16 %v2582
        %v3594 = vunpack.c.l.bf16 %v2583
        %v3595 = vunpack.c.h.bf16 %v2583
        %v3596 = vunpack.c.l.bf16 %v2584
        %v3597 = vunpack.c.h.bf16 %v2584
        %v3598 = vunpack.c.l.bf16 %v2585
        %v3599 = vunpack.c.h.bf16 %v2585
        %v3600 = vunpack.c.l.bf16 %v2586
        %v3601 = vunpack.c.h.bf16 %v2586
        %v3602 = vunpack.c.l.bf16 %v2587
        %v3603 = vunpack.c.h.bf16 %v2587
        %v3604 = vunpack.c.l.bf16 %v2588
        %v3605 = vunpack.c.h.bf16 %v2588
        %v3606 = vunpack.c.l.bf16 %v2589
        %v3607 = vunpack.c.h.bf16 %v2589
        %v3608 = vunpack.c.l.bf16 %v2590
        %v3609 = vunpack.c.h.bf16 %v2590
        %v3610 = vunpack.c.l.bf16 %v2591
        %v3611 = vunpack.c.h.bf16 %v2591
        %v3612 = vunpack.c.l.bf16 %v2592
        %v3613 = vunpack.c.h.bf16 %v2592
        %v3614 = vunpack.c.l.bf16 %v2593
        %v3615 = vunpack.c.h.bf16 %v2593
        %v3616 = vunpack.c.l.bf16 %v2594
        %v3617 = vunpack.c.h.bf16 %v2594
        %v3618 = vunpack.c.l.bf16 %v2595
        %v3619 = vunpack.c.h.bf16 %v2595
        %v3620 = vunpack.c.l.bf16 %v2596
        %v3621 = vunpack.c.h.bf16 %v2596
        %v3622 = vunpack.c.l.bf16 %v2597
        %v3623 = vunpack.c.h.bf16 %v2597
        %v3624 = vunpack.c.l.bf16 %v2598
        %v3625 = vunpack.c.h.bf16 %v2598
        %v3626 = vunpack.c.l.bf16 %v2599
        %v3627 = vunpack.c.h.bf16 %v2599
        %v3628 = vunpack.c.l.bf16 %v2600
        %v3629 = vunpack.c.h.bf16 %v2600
        %v3630 = vunpack.c.l.bf16 %v2601
        %v3631 = vunpack.c.h.bf16 %v2601
        %v3632 = vunpack.c.l.bf16 %v2602
        %v3633 = vunpack.c.h.bf16 %v2602
        %v3634 = vunpack.c.l.bf16 %v2603
        %v3635 = vunpack.c.h.bf16 %v2603
        %v3636 = vunpack.c.l.bf16 %v2604
        %v3637 = vunpack.c.h.bf16 %v2604
        %v3638 = vunpack.c.l.bf16 %v2605
        %v3639 = vunpack.c.h.bf16 %v2605
        %v3640 = vunpack.c.l.bf16 %v2606
        %v3641 = vunpack.c.h.bf16 %v2606
        %v3642 = vunpack.c.l.bf16 %v2607
        %v3643 = vunpack.c.h.bf16 %v2607
        %v3644 = vunpack.c.l.bf16 %v2608
        %v3645 = vunpack.c.h.bf16 %v2608
        %v3646 = vunpack.c.l.bf16 %v2609
        %v3647 = vunpack.c.h.bf16 %v2609
        %v3648 = vunpack.c.l.bf16 %v2610
        %v3649 = vunpack.c.h.bf16 %v2610
        %v3650 = vunpack.c.l.bf16 %v2611
        %v3651 = vunpack.c.h.bf16 %v2611
        %v3652 = vunpack.c.l.bf16 %v2612
        %v3653 = vunpack.c.h.bf16 %v2612
        %v3654 = vunpack.c.l.bf16 %v2613
        %v3655 = vunpack.c.h.bf16 %v2613
        %v3656 = vunpack.c.l.bf16 %v2614
        %v3657 = vunpack.c.h.bf16 %v2614
        %v3658 = vunpack.c.l.bf16 %v2615
        %v3659 = vunpack.c.h.bf16 %v2615
        %v3660 = vunpack.c.l.bf16 %v2616
        %v3661 = vunpack.c.h.bf16 %v2616
        %v3662 = vunpack.c.l.bf16 %v2617
        %v3663 = vunpack.c.h.bf16 %v2617
        %v3664 = vunpack.c.l.bf16 %v2618
        %v3665 = vunpack.c.h.bf16 %v2618
        %v3666 = vunpack.c.l.bf16 %v2619
        %v3667 = vunpack.c.h.bf16 %v2619
        %v3668 = vunpack.c.l.bf16 %v2620
        %v3669 = vunpack.c.h.bf16 %v2620
        %v3670 = vunpack.c.l.bf16 %v2621
        %v3671 = vunpack.c.h.bf16 %v2621
        %v3672 = vunpack.c.l.bf16 %v2622
        %v3673 = vunpack.c.h.bf16 %v2622
        %v3674 = vunpack.c.l.bf16 %v2623
        %v3675 = vunpack.c.h.bf16 %v2623
        %v3676 = vunpack.c.l.bf16 %v2624
        %v3677 = vunpack.c.h.bf16 %v2624
        %v3678 = vunpack.c.l.bf16 %v2625
        %v3679 = vunpack.c.h.bf16 %v2625
        %v3680 = vunpack.c.l.bf16 %v2626
        %v3681 = vunpack.c.h.bf16 %v2626
        %v3682 = vunpack.c.l.bf16 %v2627
        %v3683 = vunpack.c.h.bf16 %v2627
        %v3684 = vunpack.c.l.bf16 %v2628
        %v3685 = vunpack.c.h.bf16 %v2628
        %v3686 = vunpack.c.l.bf16 %v2629
        %v3687 = vunpack.c.h.bf16 %v2629
        %v3688 = vunpack.c.l.bf16 %v3262
        %v3689 = vunpack.c.h.bf16 %v3262
        %v3690 = vunpack.c.l.bf16 %v3269
        %v3691 = vunpack.c.h.bf16 %v3269
        %v3692 = vunpack.c.l.bf16 %v3276
        %v3693 = vunpack.c.h.bf16 %v3276
        %v3694 = vunpack.c.l.bf16 %v3283
        %v3695 = vunpack.c.h.bf16 %v3283
        %v3696 = vunpack.c.l.bf16 %v3290
        %v3697 = vunpack.c.h.bf16 %v3290
        %v3698 = vunpack.c.l.bf16 %v3297
        %v3699 = vunpack.c.h.bf16 %v3297
        %v3700 = vunpack.c.l.bf16 %v3304
        %v3701 = vunpack.c.h.bf16 %v3304
        %v3702 = vunpack.c.l.bf16 %v3311
        %v3703 = vunpack.c.h.bf16 %v3311
        %v3704 = vunpack.c.l.bf16 %v3318
        %v3705 = vunpack.c.h.bf16 %v3318
        %v3706 = vunpack.c.l.bf16 %v3325
        %v3707 = vunpack.c.h.bf16 %v3325
        %v3708 = vunpack.c.l.bf16 %v3332
        %v3709 = vunpack.c.h.bf16 %v3332
        %v3710 = vunpack.c.l.bf16 %v3339
        %v3711 = vunpack.c.h.bf16 %v3339
        %v3712 = vunpack.c.l.bf16 %v3346
        %v3713 = vunpack.c.h.bf16 %v3346
        %v3714 = vunpack.c.l.bf16 %v3353
        %v3715 = vunpack.c.h.bf16 %v3353
        %v3716 = vunpack.c.l.bf16 %v3360
        %v3717 = vunpack.c.h.bf16 %v3360
        %v3718 = vunpack.c.l.bf16 %v3367
        %v3719 = vunpack.c.h.bf16 %v3367
        %v3720 = vunpack.c.l.bf16 %v3374
        %v3721 = vunpack.c.h.bf16 %v3374
        %v3722 = vunpack.c.l.bf16 %v3381
        %v3723 = vunpack.c.h.bf16 %v3381
        %v3724 = vunpack.c.l.bf16 %v3388
        %v3725 = vunpack.c.h.bf16 %v3388
        %v3726 = vunpack.c.l.bf16 %v3395
        %v3727 = vunpack.c.h.bf16 %v3395
        %v3728 = vunpack.c.l.bf16 %v3402
        %v3729 = vunpack.c.h.bf16 %v3402
        %v3730 = vunpack.c.l.bf16 %v3409
        %v3731 = vunpack.c.h.bf16 %v3409
        %v3732 = vunpack.c.l.bf16 %v3416
        %v3733 = vunpack.c.h.bf16 %v3416
        %v3734 = vunpack.c.l.bf16 %v3423
        %v3735 = vunpack.c.h.bf16 %v3423
        %v3736 = vunpack.c.l.bf16 %v3430
        %v3737 = vunpack.c.h.bf16 %v3430
        %v3738 = vunpack.c.l.bf16 %v3437
        %v3739 = vunpack.c.h.bf16 %v3437
        %v3740 = vunpack.c.l.bf16 %v3444
        %v3741 = vunpack.c.h.bf16 %v3444
        %v3742 = vunpack.c.l.bf16 %v3451
        %v3743 = vunpack.c.h.bf16 %v3451
        %v3744 = vunpack.c.l.bf16 %v3458
        %v3745 = vunpack.c.h.bf16 %v3458
        %v3746 = vunpack.c.l.bf16 %v3465
        %v3747 = vunpack.c.h.bf16 %v3465
        %v3748 = vunpack.c.l.bf16 %v3472
        %v3749 = vunpack.c.h.bf16 %v3472
        %v3750 = vunpack.c.l.bf16 %v3479
        %v3751 = vunpack.c.h.bf16 %v3479
        %v3752 = vunpack.c.l.bf16 %v3486
        %v3753 = vunpack.c.h.bf16 %v3486
        %v3754 = vunpack.c.l.bf16 %v3493
        %v3755 = vunpack.c.h.bf16 %v3493
        %v3756 = vunpack.c.l.bf16 %v3500
        %v3757 = vunpack.c.h.bf16 %v3500
        %v3758 = vunpack.c.l.bf16 %v3507
        %v3759 = vunpack.c.h.bf16 %v3507
        %v3760 = vunpack.c.l.bf16 %v3514
        %v3761 = vunpack.c.h.bf16 %v3514
        %v3762 = vunpack.c.l.bf16 %v3521
        %v3763 = vunpack.c.h.bf16 %v3521
        %v3764 = vunpack.c.l.bf16 %v3528
        %v3765 = vunpack.c.h.bf16 %v3528
        %v3766 = vunpack.c.l.bf16 %v3535
        %v3767 = vunpack.c.h.bf16 %v3535
        %v3768 = vunpack.c.l.bf16 %v3542
        %v3769 = vunpack.c.h.bf16 %v3542
        %v3770 = vunpack.c.l.bf16 %v3549
        %v3771 = vunpack.c.h.bf16 %v3549
        %v3772 = vunpack.c.l.bf16 %v3556
        %v3773 = vunpack.c.h.bf16 %v3556
        %v3774 = vunpack.c.l.bf16 %v3563
        %v3775 = vunpack.c.h.bf16 %v3563
        %v3776 = vunpack.c.l.bf16 %v3570
        %v3777 = vunpack.c.h.bf16 %v3570
        %v3778 = vunpack.c.l.bf16 %v3577
        %v3779 = vunpack.c.h.bf16 %v3577
        %v3780 = vunpack.c.l.bf16 %v3584
        %v3781 = vunpack.c.h.bf16 %v3584
        %v3782 = vunpack.c.l.bf16 %v3591
        %v3783 = vunpack.c.h.bf16 %v3591
        %v3784 = vmul.f32 %v3592, %v3688
        %v3785 = vmul.f32 %v3593, %v3689
        %v3786 = vmul.f32 %v3594, %v3690
        %v3787 = vmul.f32 %v3595, %v3691
        %v3788 = vmul.f32 %v3596, %v3692
        %v3789 = vmul.f32 %v3597, %v3693
        %v3790 = vmul.f32 %v3598, %v3694
        %v3791 = vmul.f32 %v3599, %v3695
        %v3792 = vmul.f32 %v3600, %v3696
        %v3793 = vmul.f32 %v3601, %v3697
        %v3794 = vmul.f32 %v3602, %v3698
        %v3795 = vmul.f32 %v3603, %v3699
        %v3796 = vmul.f32 %v3604, %v3700
        %v3797 = vmul.f32 %v3605, %v3701
        %v3798 = vmul.f32 %v3606, %v3702
        %v3799 = vmul.f32 %v3607, %v3703
        %v3800 = vmul.f32 %v3608, %v3704
        %v3801 = vmul.f32 %v3609, %v3705
        %v3802 = vmul.f32 %v3610, %v3706
        %v3803 = vmul.f32 %v3611, %v3707
        %v3804 = vmul.f32 %v3612, %v3708
        %v3805 = vmul.f32 %v3613, %v3709
        %v3806 = vmul.f32 %v3614, %v3710
        %v3807 = vmul.f32 %v3615, %v3711
        %v3808 = vmul.f32 %v3616, %v3712
        %v3809 = vmul.f32 %v3617, %v3713
        %v3810 = vmul.f32 %v3618, %v3714
        %v3811 = vmul.f32 %v3619, %v3715
        %v3812 = vmul.f32 %v3620, %v3716
        %v3813 = vmul.f32 %v3621, %v3717
        %v3814 = vmul.f32 %v3622, %v3718
        %v3815 = vmul.f32 %v3623, %v3719
        %v3816 = vmul.f32 %v3624, %v3720
        %v3817 = vmul.f32 %v3625, %v3721
        %v3818 = vmul.f32 %v3626, %v3722
        %v3819 = vmul.f32 %v3627, %v3723
        %v3820 = vmul.f32 %v3628, %v3724
        %v3821 = vmul.f32 %v3629, %v3725
        %v3822 = vmul.f32 %v3630, %v3726
        %v3823 = vmul.f32 %v3631, %v3727
        %v3824 = vmul.f32 %v3632, %v3728
        %v3825 = vmul.f32 %v3633, %v3729
        %v3826 = vmul.f32 %v3634, %v3730
        %v3827 = vmul.f32 %v3635, %v3731
        %v3828 = vmul.f32 %v3636, %v3732
        %v3829 = vmul.f32 %v3637, %v3733
        %v3830 = vmul.f32 %v3638, %v3734
        %v3831 = vmul.f32 %v3639, %v3735
        %v3832 = vmul.f32 %v3640, %v3736
        %v3833 = vmul.f32 %v3641, %v3737
        %v3834 = vmul.f32 %v3642, %v3738
        %v3835 = vmul.f32 %v3643, %v3739
        %v3836 = vmul.f32 %v3644, %v3740
        %v3837 = vmul.f32 %v3645, %v3741
        %v3838 = vmul.f32 %v3646, %v3742
        %v3839 = vmul.f32 %v3647, %v3743
        %v3840 = vmul.f32 %v3648, %v3744
        %v3841 = vmul.f32 %v3649, %v3745
        %v3842 = vmul.f32 %v3650, %v3746
        %v3843 = vmul.f32 %v3651, %v3747
        %v3844 = vmul.f32 %v3652, %v3748
        %v3845 = vmul.f32 %v3653, %v3749
        %v3846 = vmul.f32 %v3654, %v3750
        %v3847 = vmul.f32 %v3655, %v3751
        %v3848 = vmul.f32 %v3656, %v3752
        %v3849 = vmul.f32 %v3657, %v3753
        %v3850 = vmul.f32 %v3658, %v3754
        %v3851 = vmul.f32 %v3659, %v3755
        %v3852 = vmul.f32 %v3660, %v3756
        %v3853 = vmul.f32 %v3661, %v3757
        %v3854 = vmul.f32 %v3662, %v3758
        %v3855 = vmul.f32 %v3663, %v3759
        %v3856 = vmul.f32 %v3664, %v3760
        %v3857 = vmul.f32 %v3665, %v3761
        %v3858 = vmul.f32 %v3666, %v3762
        %v3859 = vmul.f32 %v3667, %v3763
        %v3860 = vmul.f32 %v3668, %v3764
        %v3861 = vmul.f32 %v3669, %v3765
        %v3862 = vmul.f32 %v3670, %v3766
        %v3863 = vmul.f32 %v3671, %v3767
        %v3864 = vmul.f32 %v3672, %v3768
        %v3865 = vmul.f32 %v3673, %v3769
        %v3866 = vmul.f32 %v3674, %v3770
        %v3867 = vmul.f32 %v3675, %v3771
        %v3868 = vmul.f32 %v3676, %v3772
        %v3869 = vmul.f32 %v3677, %v3773
        %v3870 = vmul.f32 %v3678, %v3774
        %v3871 = vmul.f32 %v3679, %v3775
        %v3872 = vmul.f32 %v3680, %v3776
        %v3873 = vmul.f32 %v3681, %v3777
        %v3874 = vmul.f32 %v3682, %v3778
        %v3875 = vmul.f32 %v3683, %v3779
        %v3876 = vmul.f32 %v3684, %v3780
        %v3877 = vmul.f32 %v3685, %v3781
        %v3878 = vmul.f32 %v3686, %v3782
        %v3879 = vmul.f32 %v3687, %v3783
        %v3880 = vpack.c.bf16 %v3785, %v3784
        %v3881 = vpack.c.bf16 %v3787, %v3786
        %v3882 = vpack.c.bf16 %v3789, %v3788
        %v3883 = vpack.c.bf16 %v3791, %v3790
        %v3884 = vpack.c.bf16 %v3793, %v3792
        %v3885 = vpack.c.bf16 %v3795, %v3794
        %v3886 = vpack.c.bf16 %v3797, %v3796
        %v3887 = vpack.c.bf16 %v3799, %v3798
        %v3888 = vpack.c.bf16 %v3801, %v3800
        %v3889 = vpack.c.bf16 %v3803, %v3802
        %v3890 = vpack.c.bf16 %v3805, %v3804
        %v3891 = vpack.c.bf16 %v3807, %v3806
        %v3892 = vpack.c.bf16 %v3809, %v3808
        %v3893 = vpack.c.bf16 %v3811, %v3810
        %v3894 = vpack.c.bf16 %v3813, %v3812
        %v3895 = vpack.c.bf16 %v3815, %v3814
        %v3896 = vpack.c.bf16 %v3817, %v3816
        %v3897 = vpack.c.bf16 %v3819, %v3818
        %v3898 = vpack.c.bf16 %v3821, %v3820
        %v3899 = vpack.c.bf16 %v3823, %v3822
        %v3900 = vpack.c.bf16 %v3825, %v3824
        %v3901 = vpack.c.bf16 %v3827, %v3826
        %v3902 = vpack.c.bf16 %v3829, %v3828
        %v3903 = vpack.c.bf16 %v3831, %v3830
        %v3904 = vpack.c.bf16 %v3833, %v3832
        %v3905 = vpack.c.bf16 %v3835, %v3834
        %v3906 = vpack.c.bf16 %v3837, %v3836
        %v3907 = vpack.c.bf16 %v3839, %v3838
        %v3908 = vpack.c.bf16 %v3841, %v3840
        %v3909 = vpack.c.bf16 %v3843, %v3842
        %v3910 = vpack.c.bf16 %v3845, %v3844
        %v3911 = vpack.c.bf16 %v3847, %v3846
        %v3912 = vpack.c.bf16 %v3849, %v3848
        %v3913 = vpack.c.bf16 %v3851, %v3850
        %v3914 = vpack.c.bf16 %v3853, %v3852
        %v3915 = vpack.c.bf16 %v3855, %v3854
        %v3916 = vpack.c.bf16 %v3857, %v3856
        %v3917 = vpack.c.bf16 %v3859, %v3858
        %v3918 = vpack.c.bf16 %v3861, %v3860
        %v3919 = vpack.c.bf16 %v3863, %v3862
        %v3920 = vpack.c.bf16 %v3865, %v3864
        %v3921 = vpack.c.bf16 %v3867, %v3866
        %v3922 = vpack.c.bf16 %v3869, %v3868
        %v3923 = vpack.c.bf16 %v3871, %v3870
        %v3924 = vpack.c.bf16 %v3873, %v3872
        %v3925 = vpack.c.bf16 %v3875, %v3874
        %v3926 = vpack.c.bf16 %v3877, %v3876
        %v3927 = vpack.c.bf16 %v3879, %v3878
        %v3928 = vunpack.c.l.bf16 %v3880
        %v3929 = vunpack.c.h.bf16 %v3880
        %v3930 = vunpack.c.l.bf16 %v3881
        %v3931 = vunpack.c.h.bf16 %v3881
        %v3932 = vunpack.c.l.bf16 %v3882
        %v3933 = vunpack.c.h.bf16 %v3882
        %v3934 = vunpack.c.l.bf16 %v3883
        %v3935 = vunpack.c.h.bf16 %v3883
        %v3936 = vunpack.c.l.bf16 %v3884
        %v3937 = vunpack.c.h.bf16 %v3884
        %v3938 = vunpack.c.l.bf16 %v3885
        %v3939 = vunpack.c.h.bf16 %v3885
        %v3940 = vunpack.c.l.bf16 %v3886
        %v3941 = vunpack.c.h.bf16 %v3886
        %v3942 = vunpack.c.l.bf16 %v3887
        %v3943 = vunpack.c.h.bf16 %v3887
        %v3944 = vunpack.c.l.bf16 %v3888
        %v3945 = vunpack.c.h.bf16 %v3888
        %v3946 = vunpack.c.l.bf16 %v3889
        %v3947 = vunpack.c.h.bf16 %v3889
        %v3948 = vunpack.c.l.bf16 %v3890
        %v3949 = vunpack.c.h.bf16 %v3890
        %v3950 = vunpack.c.l.bf16 %v3891
        %v3951 = vunpack.c.h.bf16 %v3891
        %v3952 = vunpack.c.l.bf16 %v3892
        %v3953 = vunpack.c.h.bf16 %v3892
        %v3954 = vunpack.c.l.bf16 %v3893
        %v3955 = vunpack.c.h.bf16 %v3893
        %v3956 = vunpack.c.l.bf16 %v3894
        %v3957 = vunpack.c.h.bf16 %v3894
        %v3958 = vunpack.c.l.bf16 %v3895
        %v3959 = vunpack.c.h.bf16 %v3895
        %v3960 = vunpack.c.l.bf16 %v3896
        %v3961 = vunpack.c.h.bf16 %v3896
        %v3962 = vunpack.c.l.bf16 %v3897
        %v3963 = vunpack.c.h.bf16 %v3897
        %v3964 = vunpack.c.l.bf16 %v3898
        %v3965 = vunpack.c.h.bf16 %v3898
        %v3966 = vunpack.c.l.bf16 %v3899
        %v3967 = vunpack.c.h.bf16 %v3899
        %v3968 = vunpack.c.l.bf16 %v3900
        %v3969 = vunpack.c.h.bf16 %v3900
        %v3970 = vunpack.c.l.bf16 %v3901
        %v3971 = vunpack.c.h.bf16 %v3901
        %v3972 = vunpack.c.l.bf16 %v3902
        %v3973 = vunpack.c.h.bf16 %v3902
        %v3974 = vunpack.c.l.bf16 %v3903
        %v3975 = vunpack.c.h.bf16 %v3903
        %v3976 = vunpack.c.l.bf16 %v3904
        %v3977 = vunpack.c.h.bf16 %v3904
        %v3978 = vunpack.c.l.bf16 %v3905
        %v3979 = vunpack.c.h.bf16 %v3905
        %v3980 = vunpack.c.l.bf16 %v3906
        %v3981 = vunpack.c.h.bf16 %v3906
        %v3982 = vunpack.c.l.bf16 %v3907
        %v3983 = vunpack.c.h.bf16 %v3907
        %v3984 = vunpack.c.l.bf16 %v3908
        %v3985 = vunpack.c.h.bf16 %v3908
        %v3986 = vunpack.c.l.bf16 %v3909
        %v3987 = vunpack.c.h.bf16 %v3909
        %v3988 = vunpack.c.l.bf16 %v3910
        %v3989 = vunpack.c.h.bf16 %v3910
        %v3990 = vunpack.c.l.bf16 %v3911
        %v3991 = vunpack.c.h.bf16 %v3911
        %v3992 = vunpack.c.l.bf16 %v3912
        %v3993 = vunpack.c.h.bf16 %v3912
        %v3994 = vunpack.c.l.bf16 %v3913
        %v3995 = vunpack.c.h.bf16 %v3913
        %v3996 = vunpack.c.l.bf16 %v3914
        %v3997 = vunpack.c.h.bf16 %v3914
        %v3998 = vunpack.c.l.bf16 %v3915
        %v3999 = vunpack.c.h.bf16 %v3915
        %v4000 = vunpack.c.l.bf16 %v3916
        %v4001 = vunpack.c.h.bf16 %v3916
        %v4002 = vunpack.c.l.bf16 %v3917
        %v4003 = vunpack.c.h.bf16 %v3917
        %v4004 = vunpack.c.l.bf16 %v3918
        %v4005 = vunpack.c.h.bf16 %v3918
        %v4006 = vunpack.c.l.bf16 %v3919
        %v4007 = vunpack.c.h.bf16 %v3919
        %v4008 = vunpack.c.l.bf16 %v3920
        %v4009 = vunpack.c.h.bf16 %v3920
        %v4010 = vunpack.c.l.bf16 %v3921
        %v4011 = vunpack.c.h.bf16 %v3921
        %v4012 = vunpack.c.l.bf16 %v3922
        %v4013 = vunpack.c.h.bf16 %v3922
        %v4014 = vunpack.c.l.bf16 %v3923
        %v4015 = vunpack.c.h.bf16 %v3923
        %v4016 = vunpack.c.l.bf16 %v3924
        %v4017 = vunpack.c.h.bf16 %v3924
        %v4018 = vunpack.c.l.bf16 %v3925
        %v4019 = vunpack.c.h.bf16 %v3925
        %v4020 = vunpack.c.l.bf16 %v3926
        %v4021 = vunpack.c.h.bf16 %v3926
        %v4022 = vunpack.c.l.bf16 %v3927
        %v4023 = vunpack.c.h.bf16 %v3927
        %v4024 = vld [vmem:[#allocation2] sm:$0xff]
        %v4025 = vld [vmem:[#allocation2 + $0x8] sm:$0xff]
        %v4026 = vld [vmem:[#allocation2 + $0x10] sm:$0xff]
        %v4027 = vld [vmem:[#allocation2 + $0x18] sm:$0xff]
        %v4028 = vld [vmem:[#allocation2 + $0x20] sm:$0xff]
        %v4029 = vld [vmem:[#allocation2 + $0x28] sm:$0xff]
        %v4030 = vld [vmem:[#allocation2 + $0x30] sm:$0xff]
        %v4031 = vld [vmem:[#allocation2 + $0x38] sm:$0xff]
        %v4032 = vld [vmem:[#allocation2 + $0x40] sm:$0xff]
        %v4033 = vld [vmem:[#allocation2 + $0x48] sm:$0xff]
        %v4034 = vld [vmem:[#allocation2 + $0x50] sm:$0xff]
        %v4035 = vld [vmem:[#allocation2 + $0x58] sm:$0xff]
        %v4036 = vadd.f32 %v3928, %v3940
        %v4037 = vadd.f32 %v4036, %v3952
        %v4038 = vadd.f32 %v4037, %v3964
        %v4039 = vadd.f32 %v4038, %v3976
        %v4040 = vadd.f32 %v4039, %v3988
        %v4041 = vadd.f32 %v4040, %v4000
        %v4042 = vadd.f32 %v4041, %v4012
        %v4043 = vadd.f32 %v3929, %v3941
        %v4044 = vadd.f32 %v4043, %v3953
        %v4045 = vadd.f32 %v4044, %v3965
        %v4046 = vadd.f32 %v4045, %v3977
        %v4047 = vadd.f32 %v4046, %v3989
        %v4048 = vadd.f32 %v4047, %v4001
        %v4049 = vadd.f32 %v4048, %v4013
        %v4050 = vadd.f32 %v3930, %v3942
        %v4051 = vadd.f32 %v4050, %v3954
        %v4052 = vadd.f32 %v4051, %v3966
        %v4053 = vadd.f32 %v4052, %v3978
        %v4054 = vadd.f32 %v4053, %v3990
        %v4055 = vadd.f32 %v4054, %v4002
        %v4056 = vadd.f32 %v4055, %v4014
        %v4057 = vadd.f32 %v3931, %v3943
        %v4058 = vadd.f32 %v4057, %v3955
        %v4059 = vadd.f32 %v4058, %v3967
        %v4060 = vadd.f32 %v4059, %v3979
        %v4061 = vadd.f32 %v4060, %v3991
        %v4062 = vadd.f32 %v4061, %v4003
        %v4063 = vadd.f32 %v4062, %v4015
        %v4064 = vadd.f32 %v3932, %v3944
        %v4065 = vadd.f32 %v4064, %v3956
        %v4066 = vadd.f32 %v4065, %v3968
        %v4067 = vadd.f32 %v4066, %v3980
        %v4068 = vadd.f32 %v4067, %v3992
        %v4069 = vadd.f32 %v4068, %v4004
        %v4070 = vadd.f32 %v4069, %v4016
        %v4071 = vadd.f32 %v3933, %v3945
        %v4072 = vadd.f32 %v4071, %v3957
        %v4073 = vadd.f32 %v4072, %v3969
        %v4074 = vadd.f32 %v4073, %v3981
        %v4075 = vadd.f32 %v4074, %v3993
        %v4076 = vadd.f32 %v4075, %v4005
        %v4077 = vadd.f32 %v4076, %v4017
        %v4078 = vadd.f32 %v3934, %v3946
        %v4079 = vadd.f32 %v4078, %v3958
        %v4080 = vadd.f32 %v4079, %v3970
        %v4081 = vadd.f32 %v4080, %v3982
        %v4082 = vadd.f32 %v4081, %v3994
        %v4083 = vadd.f32 %v4082, %v4006
        %v4084 = vadd.f32 %v4083, %v4018
        %v4085 = vadd.f32 %v3935, %v3947
        %v4086 = vadd.f32 %v4085, %v3959
        %v4087 = vadd.f32 %v4086, %v3971
        %v4088 = vadd.f32 %v4087, %v3983
        %v4089 = vadd.f32 %v4088, %v3995
        %v4090 = vadd.f32 %v4089, %v4007
        %v4091 = vadd.f32 %v4090, %v4019
        %v4092 = vadd.f32 %v3936, %v3948
        %v4093 = vadd.f32 %v4092, %v3960
        %v4094 = vadd.f32 %v4093, %v3972
        %v4095 = vadd.f32 %v4094, %v3984
        %v4096 = vadd.f32 %v4095, %v3996
        %v4097 = vadd.f32 %v4096, %v4008
        %v4098 = vadd.f32 %v4097, %v4020
        %v4099 = vadd.f32 %v3937, %v3949
        %v4100 = vadd.f32 %v4099, %v3961
        %v4101 = vadd.f32 %v4100, %v3973
        %v4102 = vadd.f32 %v4101, %v3985
        %v4103 = vadd.f32 %v4102, %v3997
        %v4104 = vadd.f32 %v4103, %v4009
        %v4105 = vadd.f32 %v4104, %v4021
        %v4106 = vadd.f32 %v3938, %v3950
        %v4107 = vadd.f32 %v4106, %v3962
        %v4108 = vadd.f32 %v4107, %v3974
        %v4109 = vadd.f32 %v4108, %v3986
        %v4110 = vadd.f32 %v4109, %v3998
        %v4111 = vadd.f32 %v4110, %v4010
        %v4112 = vadd.f32 %v4111, %v4022
        %v4113 = vadd.f32 %v3939, %v3951
        %v4114 = vadd.f32 %v4113, %v3963
        %v4115 = vadd.f32 %v4114, %v3975
        %v4116 = vadd.f32 %v4115, %v3987
        %v4117 = vadd.f32 %v4116, %v3999
        %v4118 = vadd.f32 %v4117, %v4011
        %v4119 = vadd.f32 %v4118, %v4023
        %v4120 = vadd.f32 %v4024, %v4042
        %v4121 = vadd.f32 %v4025, %v4049
        %v4122 = vadd.f32 %v4026, %v4056
        %v4123 = vadd.f32 %v4027, %v4063
        %v4124 = vadd.f32 %v4028, %v4070
        %v4125 = vadd.f32 %v4029, %v4077
        %v4126 = vadd.f32 %v4030, %v4084
        %v4127 = vadd.f32 %v4031, %v4091
        %v4128 = vadd.f32 %v4032, %v4098
        %v4129 = vadd.f32 %v4033, %v4105
        %v4130 = vadd.f32 %v4034, %v4112
        %v4131 = vadd.f32 %v4035, %v4119
        %4132 = vst [vmem:[#allocation2] sm:$0xff] %v4120
        %4133 = vst [vmem:[#allocation2 + $0x8] sm:$0xff] %v4121
        %4134 = vst [vmem:[#allocation2 + $0x10] sm:$0xff] %v4122
        %4135 = vst [vmem:[#allocation2 + $0x18] sm:$0xff] %v4123
        %4136 = vst [vmem:[#allocation2 + $0x20] sm:$0xff] %v4124
        %4137 = vst [vmem:[#allocation2 + $0x28] sm:$0xff] %v4125
        %4138 = vst [vmem:[#allocation2 + $0x30] sm:$0xff] %v4126
        %4139 = vst [vmem:[#allocation2 + $0x38] sm:$0xff] %v4127
        %4140 = vst [vmem:[#allocation2 + $0x40] sm:$0xff] %v4128
        %4141 = vst [vmem:[#allocation2 + $0x48] sm:$0xff] %v4129
        %4142 = vst [vmem:[#allocation2 + $0x50] sm:$0xff] %v4130
        %4143 = vst [vmem:[#allocation2 + $0x58] sm:$0xff] %v4131
        // Predicated region
        $region121: #{chess_piece_model_forward.1} parent=71 // pred_check
          %p4144 = pneg %p634
        $region122: #{chess_piece_model_forward.1} parent=71 // pred_check_branch
          %4146 = sbr.rel (%p4144) target = $region124
        $region123: #{chess_piece_model_forward.1} parent=71 // pred_region
          %v4147 = vld [vmem:[#allocation2] sm:$0xff]
          %v4148 = vld [vmem:[#allocation2 + $0x8] sm:$0xff]
          %v4149 = vld [vmem:[#allocation2 + $0x10] sm:$0xff]
          %v4150 = vld [vmem:[#allocation2 + $0x18] sm:$0xff]
          %v4151 = vld [vmem:[#allocation2 + $0x20] sm:$0xff]
          %v4152 = vld [vmem:[#allocation2 + $0x28] sm:$0xff]
          %v4153 = vld [vmem:[#allocation2 + $0x30] sm:$0xff]
          %v4154 = vld [vmem:[#allocation2 + $0x38] sm:$0xff]
          %v4155 = vld [vmem:[#allocation2 + $0x40] sm:$0xff]
          %v4156 = vld [vmem:[#allocation2 + $0x48] sm:$0xff]
          %v4157 = vld [vmem:[#allocation2 + $0x50] sm:$0xff]
          %v4158 = vld [vmem:[#allocation2 + $0x58] sm:$0xff]
          %v4159 = vrot.slane %v4147, 4
          %v4160 = vadd.f32 %v4147, %v4159
          %v4161 = vrot.slane %v4160, 2
          %v4162 = vadd.f32 %v4160, %v4161
          %v4163 = vrot.slane %v4162, 1
          %v4164 = vadd.f32 %v4162, %v4163
          %v4165 = vrot.slane %v4148, 4
          %v4166 = vadd.f32 %v4148, %v4165
          %v4167 = vrot.slane %v4166, 2
          %v4168 = vadd.f32 %v4166, %v4167
          %v4169 = vrot.slane %v4168, 1
          %v4170 = vadd.f32 %v4168, %v4169
          %v4171 = vrot.slane %v4149, 4
          %v4172 = vadd.f32 %v4149, %v4171
          %v4173 = vrot.slane %v4172, 2
          %v4174 = vadd.f32 %v4172, %v4173
          %v4175 = vrot.slane %v4174, 1
          %v4176 = vadd.f32 %v4174, %v4175
          %v4177 = vrot.slane %v4150, 4
          %v4178 = vadd.f32 %v4150, %v4177
          %v4179 = vrot.slane %v4178, 2
          %v4180 = vadd.f32 %v4178, %v4179
          %v4181 = vrot.slane %v4180, 1
          %v4182 = vadd.f32 %v4180, %v4181
          %v4183 = vrot.slane %v4151, 4
          %v4184 = vadd.f32 %v4151, %v4183
          %v4185 = vrot.slane %v4184, 2
          %v4186 = vadd.f32 %v4184, %v4185
          %v4187 = vrot.slane %v4186, 1
          %v4188 = vadd.f32 %v4186, %v4187
          %v4189 = vrot.slane %v4152, 4
          %v4190 = vadd.f32 %v4152, %v4189
          %v4191 = vrot.slane %v4190, 2
          %v4192 = vadd.f32 %v4190, %v4191
          %v4193 = vrot.slane %v4192, 1
          %v4194 = vadd.f32 %v4192, %v4193
          %v4195 = vrot.slane %v4153, 4
          %v4196 = vadd.f32 %v4153, %v4195
          %v4197 = vrot.slane %v4196, 2
          %v4198 = vadd.f32 %v4196, %v4197
          %v4199 = vrot.slane %v4198, 1
          %v4200 = vadd.f32 %v4198, %v4199
          %v4201 = vrot.slane %v4154, 4
          %v4202 = vadd.f32 %v4154, %v4201
          %v4203 = vrot.slane %v4202, 2
          %v4204 = vadd.f32 %v4202, %v4203
          %v4205 = vrot.slane %v4204, 1
          %v4206 = vadd.f32 %v4204, %v4205
          %v4207 = vrot.slane %v4155, 4
          %v4208 = vadd.f32 %v4155, %v4207
          %v4209 = vrot.slane %v4208, 2
          %v4210 = vadd.f32 %v4208, %v4209
          %v4211 = vrot.slane %v4210, 1
          %v4212 = vadd.f32 %v4210, %v4211
          %v4213 = vrot.slane %v4156, 4
          %v4214 = vadd.f32 %v4156, %v4213
          %v4215 = vrot.slane %v4214, 2
          %v4216 = vadd.f32 %v4214, %v4215
          %v4217 = vrot.slane %v4216, 1
          %v4218 = vadd.f32 %v4216, %v4217
          %v4219 = vrot.slane %v4157, 4
          %v4220 = vadd.f32 %v4157, %v4219
          %v4221 = vrot.slane %v4220, 2
          %v4222 = vadd.f32 %v4220, %v4221
          %v4223 = vrot.slane %v4222, 1
          %v4224 = vadd.f32 %v4222, %v4223
          %v4225 = vrot.slane %v4158, 4
          %v4226 = vadd.f32 %v4158, %v4225
          %v4227 = vrot.slane %v4226, 2
          %v4228 = vadd.f32 %v4226, %v4227
          %v4229 = vrot.slane %v4228, 1
          %v4230 = vadd.f32 %v4228, %v4229
          %v4231 = vmul.f32 %v4164, 0.015625
          %v4232 = vmul.f32 %v4170, 0.015625
          %v4233 = vmul.f32 %v4176, 0.015625
          %v4234 = vmul.f32 %v4182, 0.015625
          %v4235 = vmul.f32 %v4188, 0.015625
          %v4236 = vmul.f32 %v4194, 0.015625
          %v4237 = vmul.f32 %v4200, 0.015625
          %v4238 = vmul.f32 %v4206, 0.015625
          %v4239 = vmul.f32 %v4212, 0.015625
          %v4240 = vmul.f32 %v4218, 0.015625
          %v4241 = vmul.f32 %v4224, 0.015625
          %v4242 = vmul.f32 %v4230, 0.015625
          %v4243 = vpack.c.bf16 %v4231, %v4231
          %v4244 = vpack.c.bf16 %v4232, %v4232
          %v4245 = vpack.c.bf16 %v4233, %v4233
          %v4246 = vpack.c.bf16 %v4234, %v4234
          %v4247 = vpack.c.bf16 %v4235, %v4235
          %v4248 = vpack.c.bf16 %v4236, %v4236
          %v4249 = vpack.c.bf16 %v4237, %v4237
          %v4250 = vpack.c.bf16 %v4238, %v4238
          %v4251 = vpack.c.bf16 %v4239, %v4239
          %v4252 = vpack.c.bf16 %v4240, %v4240
          %v4253 = vpack.c.bf16 %v4241, %v4241
          %v4254 = vpack.c.bf16 %v4242, %v4242
          %v4255 = vld [vmem:[#allocation14] sm:$0xff]
          %v4256 = vld [vmem:[#allocation14 + $0x8] sm:$0xff]
          %v4257 = vld [vmem:[#allocation14 + $0x10] sm:$0xff]
          %v4258 = vld [vmem:[#allocation14 + $0x18] sm:$0xff]
          %v4259 = vld [vmem:[#allocation14 + $0x20] sm:$0xff]
          %v4260 = vld [vmem:[#allocation14 + $0x28] sm:$0xff]
          %v4261 = vld [vmem:[#allocation14 + $0x30] sm:$0xff]
          %v4262 = vld [vmem:[#allocation14 + $0x38] sm:$0xff]
          %v4263 = vld [vmem:[#allocation14 + $0x40] sm:$0xff]
          %v4264 = vld [vmem:[#allocation14 + $0x48] sm:$0xff]
          %v4265 = vld [vmem:[#allocation14 + $0x50] sm:$0xff]
          %v4266 = vld [vmem:[#allocation14 + $0x58] sm:$0xff]
          %v4267 = vld [vmem:[#allocation14 + $0x60] sm:$0xff]
          %v4268 = vld [vmem:[#allocation14 + $0x68] sm:$0xff]
          %v4269 = vld [vmem:[#allocation14 + $0x70] sm:$0xff]
          %v4270 = vld [vmem:[#allocation14 + $0x78] sm:$0xff]
          %v4271 = vld [vmem:[#allocation14 + $0x80] sm:$0xff]
          %v4272 = vld [vmem:[#allocation14 + $0x88] sm:$0xff]
          %v4273 = vld [vmem:[#allocation14 + $0x90] sm:$0xff]
          %v4274 = vld [vmem:[#allocation14 + $0x98] sm:$0xff]
          %v4275 = vld [vmem:[#allocation14 + $0xa0] sm:$0xff]
          %v4276 = vld [vmem:[#allocation14 + $0xa8] sm:$0xff]
          %v4277 = vld [vmem:[#allocation14 + $0xb0] sm:$0xff]
          %v4278 = vld [vmem:[#allocation14 + $0xb8] sm:$0xff]
          %v4279 = vld [vmem:[#allocation14 + $0xc0] sm:$0xff]
          %v4280 = vld [vmem:[#allocation14 + $0xc8] sm:$0xff]
          %v4281 = vld [vmem:[#allocation14 + $0xd0] sm:$0xff]
          %v4282 = vld [vmem:[#allocation14 + $0xd8] sm:$0xff]
          %v4283 = vld [vmem:[#allocation14 + $0xe0] sm:$0xff]
          %v4284 = vld [vmem:[#allocation14 + $0xe8] sm:$0xff]
          %v4285 = vld [vmem:[#allocation14 + $0xf0] sm:$0xff]
          %v4286 = vld [vmem:[#allocation14 + $0xf8] sm:$0xff]
          %v4287 = vld [vmem:[#allocation14 + $0x100] sm:$0xff]
          %v4288 = vld [vmem:[#allocation14 + $0x108] sm:$0xff]
          %v4289 = vld [vmem:[#allocation14 + $0x110] sm:$0xff]
          %v4290 = vld [vmem:[#allocation14 + $0x118] sm:$0xff]
          %v4291 = vld [vmem:[#allocation14 + $0x120] sm:$0xff]
          %v4292 = vld [vmem:[#allocation14 + $0x128] sm:$0xff]
          %v4293 = vld [vmem:[#allocation14 + $0x130] sm:$0xff]
          %v4294 = vld [vmem:[#allocation14 + $0x138] sm:$0xff]
          %v4295 = vld [vmem:[#allocation14 + $0x140] sm:$0xff]
          %v4296 = vld [vmem:[#allocation14 + $0x148] sm:$0xff]
          %v4297 = vld [vmem:[#allocation14 + $0x150] sm:$0xff]
          %v4298 = vld [vmem:[#allocation14 + $0x158] sm:$0xff]
          %v4299 = vld [vmem:[#allocation14 + $0x160] sm:$0xff]
          %v4300 = vld [vmem:[#allocation14 + $0x168] sm:$0xff]
          %v4301 = vld [vmem:[#allocation14 + $0x170] sm:$0xff]
          %v4302 = vld [vmem:[#allocation14 + $0x178] sm:$0xff]
          %v4303 = vld [vmem:[#allocation14 + $0x180] sm:$0xff]
          %v4304 = vld [vmem:[#allocation14 + $0x188] sm:$0xff]
          %v4305 = vld [vmem:[#allocation14 + $0x190] sm:$0xff]
          %v4306 = vld [vmem:[#allocation14 + $0x198] sm:$0xff]
          %v4307 = vld [vmem:[#allocation14 + $0x1a0] sm:$0xff]
          %v4308 = vld [vmem:[#allocation14 + $0x1a8] sm:$0xff]
          %v4309 = vld [vmem:[#allocation14 + $0x1b0] sm:$0xff]
          %v4310 = vld [vmem:[#allocation14 + $0x1b8] sm:$0xff]
          %v4311 = vld [vmem:[#allocation14 + $0x1c0] sm:$0xff]
          %v4312 = vld [vmem:[#allocation14 + $0x1c8] sm:$0xff]
          %v4313 = vld [vmem:[#allocation14 + $0x1d0] sm:$0xff]
          %v4314 = vld [vmem:[#allocation14 + $0x1d8] sm:$0xff]
          %v4315 = vld [vmem:[#allocation14 + $0x1e0] sm:$0xff]
          %v4316 = vld [vmem:[#allocation14 + $0x1e8] sm:$0xff]
          %v4317 = vld [vmem:[#allocation14 + $0x1f0] sm:$0xff]
          %v4318 = vld [vmem:[#allocation14 + $0x1f8] sm:$0xff]
          %v4319 = vld [vmem:[#allocation14 + $0x200] sm:$0xff]
          %v4320 = vld [vmem:[#allocation14 + $0x208] sm:$0xff]
          %v4321 = vld [vmem:[#allocation14 + $0x210] sm:$0xff]
          %v4322 = vld [vmem:[#allocation14 + $0x218] sm:$0xff]
          %v4323 = vld [vmem:[#allocation14 + $0x220] sm:$0xff]
          %v4324 = vld [vmem:[#allocation14 + $0x228] sm:$0xff]
          %v4325 = vld [vmem:[#allocation14 + $0x230] sm:$0xff]
          %v4326 = vld [vmem:[#allocation14 + $0x238] sm:$0xff]
          %v4327 = vld [vmem:[#allocation14 + $0x240] sm:$0xff]
          %v4328 = vld [vmem:[#allocation14 + $0x248] sm:$0xff]
          %v4329 = vld [vmem:[#allocation14 + $0x250] sm:$0xff]
          %v4330 = vld [vmem:[#allocation14 + $0x258] sm:$0xff]
          %v4331 = vld [vmem:[#allocation14 + $0x260] sm:$0xff]
          %v4332 = vld [vmem:[#allocation14 + $0x268] sm:$0xff]
          %v4333 = vld [vmem:[#allocation14 + $0x270] sm:$0xff]
          %v4334 = vld [vmem:[#allocation14 + $0x278] sm:$0xff]
          %v4335 = vld [vmem:[#allocation14 + $0x280] sm:$0xff]
          %v4336 = vld [vmem:[#allocation14 + $0x288] sm:$0xff]
          %v4337 = vld [vmem:[#allocation14 + $0x290] sm:$0xff]
          %v4338 = vld [vmem:[#allocation14 + $0x298] sm:$0xff]
          %v4339 = vld [vmem:[#allocation14 + $0x2a0] sm:$0xff]
          %v4340 = vld [vmem:[#allocation14 + $0x2a8] sm:$0xff]
          %v4341 = vld [vmem:[#allocation14 + $0x2b0] sm:$0xff]
          %v4342 = vld [vmem:[#allocation14 + $0x2b8] sm:$0xff]
          %v4343 = vld [vmem:[#allocation14 + $0x2c0] sm:$0xff]
          %v4344 = vld [vmem:[#allocation14 + $0x2c8] sm:$0xff]
          %v4345 = vld [vmem:[#allocation14 + $0x2d0] sm:$0xff]
          %v4346 = vld [vmem:[#allocation14 + $0x2d8] sm:$0xff]
          %v4347 = vld [vmem:[#allocation14 + $0x2e0] sm:$0xff]
          %v4348 = vld [vmem:[#allocation14 + $0x2e8] sm:$0xff]
          %v4349 = vld [vmem:[#allocation14 + $0x2f0] sm:$0xff]
          %v4350 = vld [vmem:[#allocation14 + $0x2f8] sm:$0xff]
          %v4351 = vld [vmem:[#allocation14 + $0x300] sm:$0xff]
          %v4352 = vld [vmem:[#allocation14 + $0x308] sm:$0xff]
          %v4353 = vld [vmem:[#allocation14 + $0x310] sm:$0xff]
          %v4354 = vld [vmem:[#allocation14 + $0x318] sm:$0xff]
          %v4355 = vld [vmem:[#allocation14 + $0x320] sm:$0xff]
          %v4356 = vld [vmem:[#allocation14 + $0x328] sm:$0xff]
          %v4357 = vld [vmem:[#allocation14 + $0x330] sm:$0xff]
          %v4358 = vld [vmem:[#allocation14 + $0x338] sm:$0xff]
          %v4359 = vld [vmem:[#allocation14 + $0x340] sm:$0xff]
          %v4360 = vld [vmem:[#allocation14 + $0x348] sm:$0xff]
          %v4361 = vld [vmem:[#allocation14 + $0x350] sm:$0xff]
          %v4362 = vld [vmem:[#allocation14 + $0x358] sm:$0xff]
          %v4363 = vld [vmem:[#allocation14 + $0x360] sm:$0xff]
          %v4364 = vld [vmem:[#allocation14 + $0x368] sm:$0xff]
          %v4365 = vld [vmem:[#allocation14 + $0x370] sm:$0xff]
          %v4366 = vld [vmem:[#allocation14 + $0x378] sm:$0xff]
          %v4367 = vld [vmem:[#allocation14 + $0x380] sm:$0xff]
          %v4368 = vld [vmem:[#allocation14 + $0x388] sm:$0xff]
          %v4369 = vld [vmem:[#allocation14 + $0x390] sm:$0xff]
          %v4370 = vld [vmem:[#allocation14 + $0x398] sm:$0xff]
          %v4371 = vld [vmem:[#allocation14 + $0x3a0] sm:$0xff]
          %v4372 = vld [vmem:[#allocation14 + $0x3a8] sm:$0xff]
          %v4373 = vld [vmem:[#allocation14 + $0x3b0] sm:$0xff]
          %v4374 = vld [vmem:[#allocation14 + $0x3b8] sm:$0xff]
          %v4375 = vld [vmem:[#allocation14 + $0x3c0] sm:$0xff]
          %v4376 = vld [vmem:[#allocation14 + $0x3c8] sm:$0xff]
          %v4377 = vld [vmem:[#allocation14 + $0x3d0] sm:$0xff]
          %v4378 = vld [vmem:[#allocation14 + $0x3d8] sm:$0xff]
          %v4379 = vld [vmem:[#allocation14 + $0x3e0] sm:$0xff]
          %v4380 = vld [vmem:[#allocation14 + $0x3e8] sm:$0xff]
          %v4381 = vld [vmem:[#allocation14 + $0x3f0] sm:$0xff]
          %v4382 = vld [vmem:[#allocation14 + $0x3f8] sm:$0xff]
          %v4383 = vld [vmem:[#allocation14 + $0x400] sm:$0xff]
          %v4384 = vld [vmem:[#allocation14 + $0x408] sm:$0xff]
          %v4385 = vld [vmem:[#allocation14 + $0x410] sm:$0xff]
          %v4386 = vld [vmem:[#allocation14 + $0x418] sm:$0xff]
          %v4387 = vld [vmem:[#allocation14 + $0x420] sm:$0xff]
          %v4388 = vld [vmem:[#allocation14 + $0x428] sm:$0xff]
          %v4389 = vld [vmem:[#allocation14 + $0x430] sm:$0xff]
          %v4390 = vld [vmem:[#allocation14 + $0x438] sm:$0xff]
          %v4391 = vld [vmem:[#allocation14 + $0x440] sm:$0xff]
          %v4392 = vld [vmem:[#allocation14 + $0x448] sm:$0xff]
          %v4393 = vld [vmem:[#allocation14 + $0x450] sm:$0xff]
          %v4394 = vld [vmem:[#allocation14 + $0x458] sm:$0xff]
          %v4395 = vld [vmem:[#allocation14 + $0x460] sm:$0xff]
          %v4396 = vld [vmem:[#allocation14 + $0x468] sm:$0xff]
          %v4397 = vld [vmem:[#allocation14 + $0x470] sm:$0xff]
          %v4398 = vld [vmem:[#allocation14 + $0x478] sm:$0xff]
          %v4399 = vld [vmem:[#allocation14 + $0x480] sm:$0xff]
          %v4400 = vld [vmem:[#allocation14 + $0x488] sm:$0xff]
          %v4401 = vld [vmem:[#allocation14 + $0x490] sm:$0xff]
          %v4402 = vld [vmem:[#allocation14 + $0x498] sm:$0xff]
          %v4403 = vld [vmem:[#allocation14 + $0x4a0] sm:$0xff]
          %v4404 = vld [vmem:[#allocation14 + $0x4a8] sm:$0xff]
          %v4405 = vld [vmem:[#allocation14 + $0x4b0] sm:$0xff]
          %v4406 = vld [vmem:[#allocation14 + $0x4b8] sm:$0xff]
          %v4407 = vld [vmem:[#allocation14 + $0x4c0] sm:$0xff]
          %v4408 = vld [vmem:[#allocation14 + $0x4c8] sm:$0xff]
          %v4409 = vld [vmem:[#allocation14 + $0x4d0] sm:$0xff]
          %v4410 = vld [vmem:[#allocation14 + $0x4d8] sm:$0xff]
          %v4411 = vld [vmem:[#allocation14 + $0x4e0] sm:$0xff]
          %v4412 = vld [vmem:[#allocation14 + $0x4e8] sm:$0xff]
          %v4413 = vld [vmem:[#allocation14 + $0x4f0] sm:$0xff]
          %v4414 = vld [vmem:[#allocation14 + $0x4f8] sm:$0xff]
          %v4415 = vld [vmem:[#allocation14 + $0x500] sm:$0xff]
          %v4416 = vld [vmem:[#allocation14 + $0x508] sm:$0xff]
          %v4417 = vld [vmem:[#allocation14 + $0x510] sm:$0xff]
          %v4418 = vld [vmem:[#allocation14 + $0x518] sm:$0xff]
          %v4419 = vld [vmem:[#allocation14 + $0x520] sm:$0xff]
          %v4420 = vld [vmem:[#allocation14 + $0x528] sm:$0xff]
          %v4421 = vld [vmem:[#allocation14 + $0x530] sm:$0xff]
          %v4422 = vld [vmem:[#allocation14 + $0x538] sm:$0xff]
          %v4423 = vld [vmem:[#allocation14 + $0x540] sm:$0xff]
          %v4424 = vld [vmem:[#allocation14 + $0x548] sm:$0xff]
          %v4425 = vld [vmem:[#allocation14 + $0x550] sm:$0xff]
          %v4426 = vld [vmem:[#allocation14 + $0x558] sm:$0xff]
          %v4427 = vld [vmem:[#allocation14 + $0x560] sm:$0xff]
          %v4428 = vld [vmem:[#allocation14 + $0x568] sm:$0xff]
          %v4429 = vld [vmem:[#allocation14 + $0x570] sm:$0xff]
          %v4430 = vld [vmem:[#allocation14 + $0x578] sm:$0xff]
          %v4431 = vld [vmem:[#allocation14 + $0x580] sm:$0xff]
          %v4432 = vld [vmem:[#allocation14 + $0x588] sm:$0xff]
          %v4433 = vld [vmem:[#allocation14 + $0x590] sm:$0xff]
          %v4434 = vld [vmem:[#allocation14 + $0x598] sm:$0xff]
          %v4435 = vld [vmem:[#allocation14 + $0x5a0] sm:$0xff]
          %v4436 = vld [vmem:[#allocation14 + $0x5a8] sm:$0xff]
          %v4437 = vld [vmem:[#allocation14 + $0x5b0] sm:$0xff]
          %v4438 = vld [vmem:[#allocation14 + $0x5b8] sm:$0xff]
          %v4439 = vld [vmem:[#allocation14 + $0x5c0] sm:$0xff]
          %v4440 = vld [vmem:[#allocation14 + $0x5c8] sm:$0xff]
          %v4441 = vld [vmem:[#allocation14 + $0x5d0] sm:$0xff]
          %v4442 = vld [vmem:[#allocation14 + $0x5d8] sm:$0xff]
          %v4443 = vld [vmem:[#allocation14 + $0x5e0] sm:$0xff]
          %v4444 = vld [vmem:[#allocation14 + $0x5e8] sm:$0xff]
          %v4445 = vld [vmem:[#allocation14 + $0x5f0] sm:$0xff]
          %v4446 = vld [vmem:[#allocation14 + $0x5f8] sm:$0xff]
          %v4447 = vld [vmem:[#allocation14 + $0x600] sm:$0xff]
          %v4448 = vld [vmem:[#allocation14 + $0x608] sm:$0xff]
          %v4449 = vld [vmem:[#allocation14 + $0x610] sm:$0xff]
          %v4450 = vld [vmem:[#allocation14 + $0x618] sm:$0xff]
          %v4451 = vld [vmem:[#allocation14 + $0x620] sm:$0xff]
          %v4452 = vld [vmem:[#allocation14 + $0x628] sm:$0xff]
          %v4453 = vld [vmem:[#allocation14 + $0x630] sm:$0xff]
          %v4454 = vld [vmem:[#allocation14 + $0x638] sm:$0xff]
          %v4455 = vld [vmem:[#allocation14 + $0x640] sm:$0xff]
          %v4456 = vld [vmem:[#allocation14 + $0x648] sm:$0xff]
          %v4457 = vld [vmem:[#allocation14 + $0x650] sm:$0xff]
          %v4458 = vld [vmem:[#allocation14 + $0x658] sm:$0xff]
          %v4459 = vld [vmem:[#allocation14 + $0x660] sm:$0xff]
          %v4460 = vld [vmem:[#allocation14 + $0x668] sm:$0xff]
          %v4461 = vld [vmem:[#allocation14 + $0x670] sm:$0xff]
          %v4462 = vld [vmem:[#allocation14 + $0x678] sm:$0xff]
          %v4463 = vld [vmem:[#allocation14 + $0x680] sm:$0xff]
          %v4464 = vld [vmem:[#allocation14 + $0x688] sm:$0xff]
          %v4465 = vld [vmem:[#allocation14 + $0x690] sm:$0xff]
          %v4466 = vld [vmem:[#allocation14 + $0x698] sm:$0xff]
          %v4467 = vld [vmem:[#allocation14 + $0x6a0] sm:$0xff]
          %v4468 = vld [vmem:[#allocation14 + $0x6a8] sm:$0xff]
          %v4469 = vld [vmem:[#allocation14 + $0x6b0] sm:$0xff]
          %v4470 = vld [vmem:[#allocation14 + $0x6b8] sm:$0xff]
          %v4471 = vld [vmem:[#allocation14 + $0x6c0] sm:$0xff]
          %v4472 = vld [vmem:[#allocation14 + $0x6c8] sm:$0xff]
          %v4473 = vld [vmem:[#allocation14 + $0x6d0] sm:$0xff]
          %v4474 = vld [vmem:[#allocation14 + $0x6d8] sm:$0xff]
          %v4475 = vld [vmem:[#allocation14 + $0x6e0] sm:$0xff]
          %v4476 = vld [vmem:[#allocation14 + $0x6e8] sm:$0xff]
          %v4477 = vld [vmem:[#allocation14 + $0x6f0] sm:$0xff]
          %v4478 = vld [vmem:[#allocation14 + $0x6f8] sm:$0xff]
          %v4479 = vld [vmem:[#allocation14 + $0x700] sm:$0xff]
          %v4480 = vld [vmem:[#allocation14 + $0x708] sm:$0xff]
          %v4481 = vld [vmem:[#allocation14 + $0x710] sm:$0xff]
          %v4482 = vld [vmem:[#allocation14 + $0x718] sm:$0xff]
          %v4483 = vld [vmem:[#allocation14 + $0x720] sm:$0xff]
          %v4484 = vld [vmem:[#allocation14 + $0x728] sm:$0xff]
          %v4485 = vld [vmem:[#allocation14 + $0x730] sm:$0xff]
          %v4486 = vld [vmem:[#allocation14 + $0x738] sm:$0xff]
          %v4487 = vld [vmem:[#allocation14 + $0x740] sm:$0xff]
          %v4488 = vld [vmem:[#allocation14 + $0x748] sm:$0xff]
          %v4489 = vld [vmem:[#allocation14 + $0x750] sm:$0xff]
          %v4490 = vld [vmem:[#allocation14 + $0x758] sm:$0xff]
          %v4491 = vld [vmem:[#allocation14 + $0x760] sm:$0xff]
          %v4492 = vld [vmem:[#allocation14 + $0x768] sm:$0xff]
          %v4493 = vld [vmem:[#allocation14 + $0x770] sm:$0xff]
          %v4494 = vld [vmem:[#allocation14 + $0x778] sm:$0xff]
          %v4495 = vld [vmem:[#allocation14 + $0x780] sm:$0xff]
          %v4496 = vld [vmem:[#allocation14 + $0x788] sm:$0xff]
          %v4497 = vld [vmem:[#allocation14 + $0x790] sm:$0xff]
          %v4498 = vld [vmem:[#allocation14 + $0x798] sm:$0xff]
          %v4499 = vld [vmem:[#allocation14 + $0x7a0] sm:$0xff]
          %v4500 = vld [vmem:[#allocation14 + $0x7a8] sm:$0xff]
          %v4501 = vld [vmem:[#allocation14 + $0x7b0] sm:$0xff]
          %v4502 = vld [vmem:[#allocation14 + $0x7b8] sm:$0xff]
          %v4503 = vld [vmem:[#allocation14 + $0x7c0] sm:$0xff]
          %v4504 = vld [vmem:[#allocation14 + $0x7c8] sm:$0xff]
          %v4505 = vld [vmem:[#allocation14 + $0x7d0] sm:$0xff]
          %v4506 = vld [vmem:[#allocation14 + $0x7d8] sm:$0xff]
          %v4507 = vld [vmem:[#allocation14 + $0x7e0] sm:$0xff]
          %v4508 = vld [vmem:[#allocation14 + $0x7e8] sm:$0xff]
          %v4509 = vld [vmem:[#allocation14 + $0x7f0] sm:$0xff]
          %v4510 = vld [vmem:[#allocation14 + $0x7f8] sm:$0xff]
          %v4511 = vld [vmem:[#allocation14 + $0x800] sm:$0xff]
          %v4512 = vld [vmem:[#allocation14 + $0x808] sm:$0xff]
          %v4513 = vld [vmem:[#allocation14 + $0x810] sm:$0xff]
          %v4514 = vld [vmem:[#allocation14 + $0x818] sm:$0xff]
          %v4515 = vld [vmem:[#allocation14 + $0x820] sm:$0xff]
          %v4516 = vld [vmem:[#allocation14 + $0x828] sm:$0xff]
          %v4517 = vld [vmem:[#allocation14 + $0x830] sm:$0xff]
          %v4518 = vld [vmem:[#allocation14 + $0x838] sm:$0xff]
          %v4519 = vld [vmem:[#allocation14 + $0x840] sm:$0xff]
          %v4520 = vld [vmem:[#allocation14 + $0x848] sm:$0xff]
          %v4521 = vld [vmem:[#allocation14 + $0x850] sm:$0xff]
          %v4522 = vld [vmem:[#allocation14 + $0x858] sm:$0xff]
          %v4523 = vld [vmem:[#allocation14 + $0x860] sm:$0xff]
          %v4524 = vld [vmem:[#allocation14 + $0x868] sm:$0xff]
          %v4525 = vld [vmem:[#allocation14 + $0x870] sm:$0xff]
          %v4526 = vld [vmem:[#allocation14 + $0x878] sm:$0xff]
          %v4527 = vld [vmem:[#allocation14 + $0x880] sm:$0xff]
          %v4528 = vld [vmem:[#allocation14 + $0x888] sm:$0xff]
          %v4529 = vld [vmem:[#allocation14 + $0x890] sm:$0xff]
          %v4530 = vld [vmem:[#allocation14 + $0x898] sm:$0xff]
          %v4531 = vld [vmem:[#allocation14 + $0x8a0] sm:$0xff]
          %v4532 = vld [vmem:[#allocation14 + $0x8a8] sm:$0xff]
          %v4533 = vld [vmem:[#allocation14 + $0x8b0] sm:$0xff]
          %v4534 = vld [vmem:[#allocation14 + $0x8b8] sm:$0xff]
          %v4535 = vld [vmem:[#allocation14 + $0x8c0] sm:$0xff]
          %v4536 = vld [vmem:[#allocation14 + $0x8c8] sm:$0xff]
          %v4537 = vld [vmem:[#allocation14 + $0x8d0] sm:$0xff]
          %v4538 = vld [vmem:[#allocation14 + $0x8d8] sm:$0xff]
          %v4539 = vld [vmem:[#allocation14 + $0x8e0] sm:$0xff]
          %v4540 = vld [vmem:[#allocation14 + $0x8e8] sm:$0xff]
          %v4541 = vld [vmem:[#allocation14 + $0x8f0] sm:$0xff]
          %v4542 = vld [vmem:[#allocation14 + $0x8f8] sm:$0xff]
          %v4543 = vld [vmem:[#allocation14 + $0x900] sm:$0xff]
          %v4544 = vld [vmem:[#allocation14 + $0x908] sm:$0xff]
          %v4545 = vld [vmem:[#allocation14 + $0x910] sm:$0xff]
          %v4546 = vld [vmem:[#allocation14 + $0x918] sm:$0xff]
          %v4547 = vld [vmem:[#allocation14 + $0x920] sm:$0xff]
          %v4548 = vld [vmem:[#allocation14 + $0x928] sm:$0xff]
          %v4549 = vld [vmem:[#allocation14 + $0x930] sm:$0xff]
          %v4550 = vld [vmem:[#allocation14 + $0x938] sm:$0xff]
          %v4551 = vld [vmem:[#allocation14 + $0x940] sm:$0xff]
          %v4552 = vld [vmem:[#allocation14 + $0x948] sm:$0xff]
          %v4553 = vld [vmem:[#allocation14 + $0x950] sm:$0xff]
          %v4554 = vld [vmem:[#allocation14 + $0x958] sm:$0xff]
          %v4555 = vld [vmem:[#allocation14 + $0x960] sm:$0xff]
          %v4556 = vld [vmem:[#allocation14 + $0x968] sm:$0xff]
          %v4557 = vld [vmem:[#allocation14 + $0x970] sm:$0xff]
          %v4558 = vld [vmem:[#allocation14 + $0x978] sm:$0xff]
          %v4559 = vld [vmem:[#allocation14 + $0x980] sm:$0xff]
          %v4560 = vld [vmem:[#allocation14 + $0x988] sm:$0xff]
          %v4561 = vld [vmem:[#allocation14 + $0x990] sm:$0xff]
          %v4562 = vld [vmem:[#allocation14 + $0x998] sm:$0xff]
          %v4563 = vld [vmem:[#allocation14 + $0x9a0] sm:$0xff]
          %v4564 = vld [vmem:[#allocation14 + $0x9a8] sm:$0xff]
          %v4565 = vld [vmem:[#allocation14 + $0x9b0] sm:$0xff]
          %v4566 = vld [vmem:[#allocation14 + $0x9b8] sm:$0xff]
          %v4567 = vld [vmem:[#allocation14 + $0x9c0] sm:$0xff]
          %v4568 = vld [vmem:[#allocation14 + $0x9c8] sm:$0xff]
          %v4569 = vld [vmem:[#allocation14 + $0x9d0] sm:$0xff]
          %v4570 = vld [vmem:[#allocation14 + $0x9d8] sm:$0xff]
          %v4571 = vld [vmem:[#allocation14 + $0x9e0] sm:$0xff]
          %v4572 = vld [vmem:[#allocation14 + $0x9e8] sm:$0xff]
          %v4573 = vld [vmem:[#allocation14 + $0x9f0] sm:$0xff]
          %v4574 = vld [vmem:[#allocation14 + $0x9f8] sm:$0xff]
          %v4575 = vld [vmem:[#allocation14 + $0xa00] sm:$0xff]
          %v4576 = vld [vmem:[#allocation14 + $0xa08] sm:$0xff]
          %v4577 = vld [vmem:[#allocation14 + $0xa10] sm:$0xff]
          %v4578 = vld [vmem:[#allocation14 + $0xa18] sm:$0xff]
          %v4579 = vld [vmem:[#allocation14 + $0xa20] sm:$0xff]
          %v4580 = vld [vmem:[#allocation14 + $0xa28] sm:$0xff]
          %v4581 = vld [vmem:[#allocation14 + $0xa30] sm:$0xff]
          %v4582 = vld [vmem:[#allocation14 + $0xa38] sm:$0xff]
          %v4583 = vld [vmem:[#allocation14 + $0xa40] sm:$0xff]
          %v4584 = vld [vmem:[#allocation14 + $0xa48] sm:$0xff]
          %v4585 = vld [vmem:[#allocation14 + $0xa50] sm:$0xff]
          %v4586 = vld [vmem:[#allocation14 + $0xa58] sm:$0xff]
          %v4587 = vld [vmem:[#allocation14 + $0xa60] sm:$0xff]
          %v4588 = vld [vmem:[#allocation14 + $0xa68] sm:$0xff]
          %v4589 = vld [vmem:[#allocation14 + $0xa70] sm:$0xff]
          %v4590 = vld [vmem:[#allocation14 + $0xa78] sm:$0xff]
          %v4591 = vld [vmem:[#allocation14 + $0xa80] sm:$0xff]
          %v4592 = vld [vmem:[#allocation14 + $0xa88] sm:$0xff]
          %v4593 = vld [vmem:[#allocation14 + $0xa90] sm:$0xff]
          %v4594 = vld [vmem:[#allocation14 + $0xa98] sm:$0xff]
          %v4595 = vld [vmem:[#allocation14 + $0xaa0] sm:$0xff]
          %v4596 = vld [vmem:[#allocation14 + $0xaa8] sm:$0xff]
          %v4597 = vld [vmem:[#allocation14 + $0xab0] sm:$0xff]
          %v4598 = vld [vmem:[#allocation14 + $0xab8] sm:$0xff]
          %v4599 = vld [vmem:[#allocation14 + $0xac0] sm:$0xff]
          %v4600 = vld [vmem:[#allocation14 + $0xac8] sm:$0xff]
          %v4601 = vld [vmem:[#allocation14 + $0xad0] sm:$0xff]
          %v4602 = vld [vmem:[#allocation14 + $0xad8] sm:$0xff]
          %v4603 = vld [vmem:[#allocation14 + $0xae0] sm:$0xff]
          %v4604 = vld [vmem:[#allocation14 + $0xae8] sm:$0xff]
          %v4605 = vld [vmem:[#allocation14 + $0xaf0] sm:$0xff]
          %v4606 = vld [vmem:[#allocation14 + $0xaf8] sm:$0xff]
          %v4607 = vld [vmem:[#allocation14 + $0xb00] sm:$0xff]
          %v4608 = vld [vmem:[#allocation14 + $0xb08] sm:$0xff]
          %v4609 = vld [vmem:[#allocation14 + $0xb10] sm:$0xff]
          %v4610 = vld [vmem:[#allocation14 + $0xb18] sm:$0xff]
          %v4611 = vld [vmem:[#allocation14 + $0xb20] sm:$0xff]
          %v4612 = vld [vmem:[#allocation14 + $0xb28] sm:$0xff]
          %v4613 = vld [vmem:[#allocation14 + $0xb30] sm:$0xff]
          %v4614 = vld [vmem:[#allocation14 + $0xb38] sm:$0xff]
          %v4615 = vld [vmem:[#allocation14 + $0xb40] sm:$0xff]
          %v4616 = vld [vmem:[#allocation14 + $0xb48] sm:$0xff]
          %v4617 = vld [vmem:[#allocation14 + $0xb50] sm:$0xff]
          %v4618 = vld [vmem:[#allocation14 + $0xb58] sm:$0xff]
          %v4619 = vld [vmem:[#allocation14 + $0xb60] sm:$0xff]
          %v4620 = vld [vmem:[#allocation14 + $0xb68] sm:$0xff]
          %v4621 = vld [vmem:[#allocation14 + $0xb70] sm:$0xff]
          %v4622 = vld [vmem:[#allocation14 + $0xb78] sm:$0xff]
          %v4623 = vld [vmem:[#allocation14 + $0xb80] sm:$0xff]
          %v4624 = vld [vmem:[#allocation14 + $0xb88] sm:$0xff]
          %v4625 = vld [vmem:[#allocation14 + $0xb90] sm:$0xff]
          %v4626 = vld [vmem:[#allocation14 + $0xb98] sm:$0xff]
          %v4627 = vld [vmem:[#allocation14 + $0xba0] sm:$0xff]
          %v4628 = vld [vmem:[#allocation14 + $0xba8] sm:$0xff]
          %v4629 = vld [vmem:[#allocation14 + $0xbb0] sm:$0xff]
          %v4630 = vld [vmem:[#allocation14 + $0xbb8] sm:$0xff]
          %v4631 = vld [vmem:[#allocation14 + $0xbc0] sm:$0xff]
          %v4632 = vld [vmem:[#allocation14 + $0xbc8] sm:$0xff]
          %v4633 = vld [vmem:[#allocation14 + $0xbd0] sm:$0xff]
          %v4634 = vld [vmem:[#allocation14 + $0xbd8] sm:$0xff]
          %v4635 = vld [vmem:[#allocation14 + $0xbe0] sm:$0xff]
          %v4636 = vld [vmem:[#allocation14 + $0xbe8] sm:$0xff]
          %v4637 = vld [vmem:[#allocation14 + $0xbf0] sm:$0xff]
          %v4638 = vld [vmem:[#allocation14 + $0xbf8] sm:$0xff]
          %v4639 = vld [vmem:[#allocation15] sm:$0xf]
          %v5024 = vunpack.c.l.b16 %v4255
          %v5025 = vunpack.c.h.b16 %v4255
          %v5026 = vunpack.c.l.b16 %v4256
          %v5027 = vunpack.c.h.b16 %v4256
          %v5028 = vunpack.c.l.b16 %v4257
          %v5029 = vunpack.c.h.b16 %v4257
          %v5030 = vunpack.c.l.b16 %v4258
          %v5031 = vunpack.c.h.b16 %v4258
          %v5032 = vunpack.c.l.b16 %v4259
          %v5033 = vunpack.c.h.b16 %v4259
          %v5034 = vunpack.c.l.b16 %v4260
          %v5035 = vunpack.c.h.b16 %v4260
          %v5036 = vunpack.c.l.b16 %v4261
          %v5037 = vunpack.c.h.b16 %v4261
          %v5038 = vunpack.c.l.b16 %v4262
          %v5039 = vunpack.c.h.b16 %v4262
          %v5040 = vunpack.c.l.b16 %v4263
          %v5041 = vunpack.c.h.b16 %v4263
          %v5042 = vunpack.c.l.b16 %v4264
          %v5043 = vunpack.c.h.b16 %v4264
          %v5044 = vunpack.c.l.b16 %v4265
          %v5045 = vunpack.c.h.b16 %v4265
          %v5046 = vunpack.c.l.b16 %v4266
          %v5047 = vunpack.c.h.b16 %v4266
          %v5048 = vunpack.c.l.b16 %v4267
          %v5049 = vunpack.c.h.b16 %v4267
          %v5050 = vunpack.c.l.b16 %v4268
          %v5051 = vunpack.c.h.b16 %v4268
          %v5052 = vunpack.c.l.b16 %v4269
          %v5053 = vunpack.c.h.b16 %v4269
          %v5054 = vunpack.c.l.b16 %v4270
          %v5055 = vunpack.c.h.b16 %v4270
          %v5056 = vunpack.c.l.b16 %v4271
          %v5057 = vunpack.c.h.b16 %v4271
          %v5058 = vunpack.c.l.b16 %v4272
          %v5059 = vunpack.c.h.b16 %v4272
          %v5060 = vunpack.c.l.b16 %v4273
          %v5061 = vunpack.c.h.b16 %v4273
          %v5062 = vunpack.c.l.b16 %v4274
          %v5063 = vunpack.c.h.b16 %v4274
          %v5064 = vunpack.c.l.b16 %v4275
          %v5065 = vunpack.c.h.b16 %v4275
          %v5066 = vunpack.c.l.b16 %v4276
          %v5067 = vunpack.c.h.b16 %v4276
          %v5068 = vunpack.c.l.b16 %v4277
          %v5069 = vunpack.c.h.b16 %v4277
          %v5070 = vunpack.c.l.b16 %v4278
          %v5071 = vunpack.c.h.b16 %v4278
          %v5072 = vunpack.c.l.b16 %v4279
          %v5073 = vunpack.c.h.b16 %v4279
          %v5074 = vunpack.c.l.b16 %v4280
          %v5075 = vunpack.c.h.b16 %v4280
          %v5076 = vunpack.c.l.b16 %v4281
          %v5077 = vunpack.c.h.b16 %v4281
          %v5078 = vunpack.c.l.b16 %v4282
          %v5079 = vunpack.c.h.b16 %v4282
          %v5080 = vunpack.c.l.b16 %v4283
          %v5081 = vunpack.c.h.b16 %v4283
          %v5082 = vunpack.c.l.b16 %v4284
          %v5083 = vunpack.c.h.b16 %v4284
          %v5084 = vunpack.c.l.b16 %v4285
          %v5085 = vunpack.c.h.b16 %v4285
          %v5086 = vunpack.c.l.b16 %v4286
          %v5087 = vunpack.c.h.b16 %v4286
          %v5088 = vunpack.c.l.b16 %v4287
          %v5089 = vunpack.c.h.b16 %v4287
          %v5090 = vunpack.c.l.b16 %v4288
          %v5091 = vunpack.c.h.b16 %v4288
          %v5092 = vunpack.c.l.b16 %v4289
          %v5093 = vunpack.c.h.b16 %v4289
          %v5094 = vunpack.c.l.b16 %v4290
          %v5095 = vunpack.c.h.b16 %v4290
          %v5096 = vunpack.c.l.b16 %v4291
          %v5097 = vunpack.c.h.b16 %v4291
          %v5098 = vunpack.c.l.b16 %v4292
          %v5099 = vunpack.c.h.b16 %v4292
          %v5100 = vunpack.c.l.b16 %v4293
          %v5101 = vunpack.c.h.b16 %v4293
          %v5102 = vunpack.c.l.b16 %v4294
          %v5103 = vunpack.c.h.b16 %v4294
          %v5104 = vunpack.c.l.b16 %v4295
          %v5105 = vunpack.c.h.b16 %v4295
          %v5106 = vunpack.c.l.b16 %v4296
          %v5107 = vunpack.c.h.b16 %v4296
          %v5108 = vunpack.c.l.b16 %v4297
          %v5109 = vunpack.c.h.b16 %v4297
          %v5110 = vunpack.c.l.b16 %v4298
          %v5111 = vunpack.c.h.b16 %v4298
          %v5112 = vunpack.c.l.b16 %v4299
          %v5113 = vunpack.c.h.b16 %v4299
          %v5114 = vunpack.c.l.b16 %v4300
          %v5115 = vunpack.c.h.b16 %v4300
          %v5116 = vunpack.c.l.b16 %v4301
          %v5117 = vunpack.c.h.b16 %v4301
          %v5118 = vunpack.c.l.b16 %v4302
          %v5119 = vunpack.c.h.b16 %v4302
          %v5120 = vunpack.c.l.b16 %v4303
          %v5121 = vunpack.c.h.b16 %v4303
          %v5122 = vunpack.c.l.b16 %v4304
          %v5123 = vunpack.c.h.b16 %v4304
          %v5124 = vunpack.c.l.b16 %v4305
          %v5125 = vunpack.c.h.b16 %v4305
          %v5126 = vunpack.c.l.b16 %v4306
          %v5127 = vunpack.c.h.b16 %v4306
          %v5128 = vunpack.c.l.b16 %v4307
          %v5129 = vunpack.c.h.b16 %v4307
          %v5130 = vunpack.c.l.b16 %v4308
          %v5131 = vunpack.c.h.b16 %v4308
          %v5132 = vunpack.c.l.b16 %v4309
          %v5133 = vunpack.c.h.b16 %v4309
          %v5134 = vunpack.c.l.b16 %v4310
          %v5135 = vunpack.c.h.b16 %v4310
          %v5136 = vunpack.c.l.b16 %v4311
          %v5137 = vunpack.c.h.b16 %v4311
          %v5138 = vunpack.c.l.b16 %v4312
          %v5139 = vunpack.c.h.b16 %v4312
          %v5140 = vunpack.c.l.b16 %v4313
          %v5141 = vunpack.c.h.b16 %v4313
          %v5142 = vunpack.c.l.b16 %v4314
          %v5143 = vunpack.c.h.b16 %v4314
          %v5144 = vunpack.c.l.b16 %v4315
          %v5145 = vunpack.c.h.b16 %v4315
          %v5146 = vunpack.c.l.b16 %v4316
          %v5147 = vunpack.c.h.b16 %v4316
          %v5148 = vunpack.c.l.b16 %v4317
          %v5149 = vunpack.c.h.b16 %v4317
          %v5150 = vunpack.c.l.b16 %v4318
          %v5151 = vunpack.c.h.b16 %v4318
          %v5152 = vunpack.c.l.b16 %v4319
          %v5153 = vunpack.c.h.b16 %v4319
          %v5154 = vunpack.c.l.b16 %v4320
          %v5155 = vunpack.c.h.b16 %v4320
          %v5156 = vunpack.c.l.b16 %v4321
          %v5157 = vunpack.c.h.b16 %v4321
          %v5158 = vunpack.c.l.b16 %v4322
          %v5159 = vunpack.c.h.b16 %v4322
          %v5160 = vunpack.c.l.b16 %v4323
          %v5161 = vunpack.c.h.b16 %v4323
          %v5162 = vunpack.c.l.b16 %v4324
          %v5163 = vunpack.c.h.b16 %v4324
          %v5164 = vunpack.c.l.b16 %v4325
          %v5165 = vunpack.c.h.b16 %v4325
          %v5166 = vunpack.c.l.b16 %v4326
          %v5167 = vunpack.c.h.b16 %v4326
          %v5168 = vunpack.c.l.b16 %v4327
          %v5169 = vunpack.c.h.b16 %v4327
          %v5170 = vunpack.c.l.b16 %v4328
          %v5171 = vunpack.c.h.b16 %v4328
          %v5172 = vunpack.c.l.b16 %v4329
          %v5173 = vunpack.c.h.b16 %v4329
          %v5174 = vunpack.c.l.b16 %v4330
          %v5175 = vunpack.c.h.b16 %v4330
          %v5176 = vunpack.c.l.b16 %v4331
          %v5177 = vunpack.c.h.b16 %v4331
          %v5178 = vunpack.c.l.b16 %v4332
          %v5179 = vunpack.c.h.b16 %v4332
          %v5180 = vunpack.c.l.b16 %v4333
          %v5181 = vunpack.c.h.b16 %v4333
          %v5182 = vunpack.c.l.b16 %v4334
          %v5183 = vunpack.c.h.b16 %v4334
          %v5184 = vunpack.c.l.b16 %v4335
          %v5185 = vunpack.c.h.b16 %v4335
          %v5186 = vunpack.c.l.b16 %v4336
          %v5187 = vunpack.c.h.b16 %v4336
          %v5188 = vunpack.c.l.b16 %v4337
          %v5189 = vunpack.c.h.b16 %v4337
          %v5190 = vunpack.c.l.b16 %v4338
          %v5191 = vunpack.c.h.b16 %v4338
          %v5192 = vunpack.c.l.b16 %v4339
          %v5193 = vunpack.c.h.b16 %v4339
          %v5194 = vunpack.c.l.b16 %v4340
          %v5195 = vunpack.c.h.b16 %v4340
          %v5196 = vunpack.c.l.b16 %v4341
          %v5197 = vunpack.c.h.b16 %v4341
          %v5198 = vunpack.c.l.b16 %v4342
          %v5199 = vunpack.c.h.b16 %v4342
          %v5200 = vunpack.c.l.b16 %v4343
          %v5201 = vunpack.c.h.b16 %v4343
          %v5202 = vunpack.c.l.b16 %v4344
          %v5203 = vunpack.c.h.b16 %v4344
          %v5204 = vunpack.c.l.b16 %v4345
          %v5205 = vunpack.c.h.b16 %v4345
          %v5206 = vunpack.c.l.b16 %v4346
          %v5207 = vunpack.c.h.b16 %v4346
          %v5208 = vunpack.c.l.b16 %v4347
          %v5209 = vunpack.c.h.b16 %v4347
          %v5210 = vunpack.c.l.b16 %v4348
          %v5211 = vunpack.c.h.b16 %v4348
          %v5212 = vunpack.c.l.b16 %v4349
          %v5213 = vunpack.c.h.b16 %v4349
          %v5214 = vunpack.c.l.b16 %v4350
          %v5215 = vunpack.c.h.b16 %v4350
          %v5216 = vunpack.c.l.b16 %v4351
          %v5217 = vunpack.c.h.b16 %v4351
          %v5218 = vunpack.c.l.b16 %v4352
          %v5219 = vunpack.c.h.b16 %v4352
          %v5220 = vunpack.c.l.b16 %v4353
          %v5221 = vunpack.c.h.b16 %v4353
          %v5222 = vunpack.c.l.b16 %v4354
          %v5223 = vunpack.c.h.b16 %v4354
          %v5224 = vunpack.c.l.b16 %v4355
          %v5225 = vunpack.c.h.b16 %v4355
          %v5226 = vunpack.c.l.b16 %v4356
          %v5227 = vunpack.c.h.b16 %v4356
          %v5228 = vunpack.c.l.b16 %v4357
          %v5229 = vunpack.c.h.b16 %v4357
          %v5230 = vunpack.c.l.b16 %v4358
          %v5231 = vunpack.c.h.b16 %v4358
          %v5232 = vunpack.c.l.b16 %v4359
          %v5233 = vunpack.c.h.b16 %v4359
          %v5234 = vunpack.c.l.b16 %v4360
          %v5235 = vunpack.c.h.b16 %v4360
          %v5236 = vunpack.c.l.b16 %v4361
          %v5237 = vunpack.c.h.b16 %v4361
          %v5238 = vunpack.c.l.b16 %v4362
          %v5239 = vunpack.c.h.b16 %v4362
          %v5240 = vunpack.c.l.b16 %v4363
          %v5241 = vunpack.c.h.b16 %v4363
          %v5242 = vunpack.c.l.b16 %v4364
          %v5243 = vunpack.c.h.b16 %v4364
          %v5244 = vunpack.c.l.b16 %v4365
          %v5245 = vunpack.c.h.b16 %v4365
          %v5246 = vunpack.c.l.b16 %v4366
          %v5247 = vunpack.c.h.b16 %v4366
          %v5248 = vunpack.c.l.b16 %v4367
          %v5249 = vunpack.c.h.b16 %v4367
          %v5250 = vunpack.c.l.b16 %v4368
          %v5251 = vunpack.c.h.b16 %v4368
          %v5252 = vunpack.c.l.b16 %v4369
          %v5253 = vunpack.c.h.b16 %v4369
          %v5254 = vunpack.c.l.b16 %v4370
          %v5255 = vunpack.c.h.b16 %v4370
          %v5256 = vunpack.c.l.b16 %v4371
          %v5257 = vunpack.c.h.b16 %v4371
          %v5258 = vunpack.c.l.b16 %v4372
          %v5259 = vunpack.c.h.b16 %v4372
          %v5260 = vunpack.c.l.b16 %v4373
          %v5261 = vunpack.c.h.b16 %v4373
          %v5262 = vunpack.c.l.b16 %v4374
          %v5263 = vunpack.c.h.b16 %v4374
          %v5264 = vunpack.c.l.b16 %v4375
          %v5265 = vunpack.c.h.b16 %v4375
          %v5266 = vunpack.c.l.b16 %v4376
          %v5267 = vunpack.c.h.b16 %v4376
          %v5268 = vunpack.c.l.b16 %v4377
          %v5269 = vunpack.c.h.b16 %v4377
          %v5270 = vunpack.c.l.b16 %v4378
          %v5271 = vunpack.c.h.b16 %v4378
          %v5272 = vunpack.c.l.b16 %v4379
          %v5273 = vunpack.c.h.b16 %v4379
          %v5274 = vunpack.c.l.b16 %v4380
          %v5275 = vunpack.c.h.b16 %v4380
          %v5276 = vunpack.c.l.b16 %v4381
          %v5277 = vunpack.c.h.b16 %v4381
          %v5278 = vunpack.c.l.b16 %v4382
          %v5279 = vunpack.c.h.b16 %v4382
          %v5280 = vunpack.c.l.b16 %v4383
          %v5281 = vunpack.c.h.b16 %v4383
          %v5282 = vunpack.c.l.b16 %v4384
          %v5283 = vunpack.c.h.b16 %v4384
          %v5284 = vunpack.c.l.b16 %v4385
          %v5285 = vunpack.c.h.b16 %v4385
          %v5286 = vunpack.c.l.b16 %v4386
          %v5287 = vunpack.c.h.b16 %v4386
          %v5288 = vunpack.c.l.b16 %v4387
          %v5289 = vunpack.c.h.b16 %v4387
          %v5290 = vunpack.c.l.b16 %v4388
          %v5291 = vunpack.c.h.b16 %v4388
          %v5292 = vunpack.c.l.b16 %v4389
          %v5293 = vunpack.c.h.b16 %v4389
          %v5294 = vunpack.c.l.b16 %v4390
          %v5295 = vunpack.c.h.b16 %v4390
          %v5296 = vunpack.c.l.b16 %v4391
          %v5297 = vunpack.c.h.b16 %v4391
          %v5298 = vunpack.c.l.b16 %v4392
          %v5299 = vunpack.c.h.b16 %v4392
          %v5300 = vunpack.c.l.b16 %v4393
          %v5301 = vunpack.c.h.b16 %v4393
          %v5302 = vunpack.c.l.b16 %v4394
          %v5303 = vunpack.c.h.b16 %v4394
          %v5304 = vunpack.c.l.b16 %v4395
          %v5305 = vunpack.c.h.b16 %v4395
          %v5306 = vunpack.c.l.b16 %v4396
          %v5307 = vunpack.c.h.b16 %v4396
          %v5308 = vunpack.c.l.b16 %v4397
          %v5309 = vunpack.c.h.b16 %v4397
          %v5310 = vunpack.c.l.b16 %v4398
          %v5311 = vunpack.c.h.b16 %v4398
          %v5312 = vunpack.c.l.b16 %v4399
          %v5313 = vunpack.c.h.b16 %v4399
          %v5314 = vunpack.c.l.b16 %v4400
          %v5315 = vunpack.c.h.b16 %v4400
          %v5316 = vunpack.c.l.b16 %v4401
          %v5317 = vunpack.c.h.b16 %v4401
          %v5318 = vunpack.c.l.b16 %v4402
          %v5319 = vunpack.c.h.b16 %v4402
          %v5320 = vunpack.c.l.b16 %v4403
          %v5321 = vunpack.c.h.b16 %v4403
          %v5322 = vunpack.c.l.b16 %v4404
          %v5323 = vunpack.c.h.b16 %v4404
          %v5324 = vunpack.c.l.b16 %v4405
          %v5325 = vunpack.c.h.b16 %v4405
          %v5326 = vunpack.c.l.b16 %v4406
          %v5327 = vunpack.c.h.b16 %v4406
          %v5328 = vunpack.c.l.b16 %v4407
          %v5329 = vunpack.c.h.b16 %v4407
          %v5330 = vunpack.c.l.b16 %v4408
          %v5331 = vunpack.c.h.b16 %v4408
          %v5332 = vunpack.c.l.b16 %v4409
          %v5333 = vunpack.c.h.b16 %v4409
          %v5334 = vunpack.c.l.b16 %v4410
          %v5335 = vunpack.c.h.b16 %v4410
          %v5336 = vunpack.c.l.b16 %v4411
          %v5337 = vunpack.c.h.b16 %v4411
          %v5338 = vunpack.c.l.b16 %v4412
          %v5339 = vunpack.c.h.b16 %v4412
          %v5340 = vunpack.c.l.b16 %v4413
          %v5341 = vunpack.c.h.b16 %v4413
          %v5342 = vunpack.c.l.b16 %v4414
          %v5343 = vunpack.c.h.b16 %v4414
          %v5344 = vunpack.c.l.b16 %v4415
          %v5345 = vunpack.c.h.b16 %v4415
          %v5346 = vunpack.c.l.b16 %v4416
          %v5347 = vunpack.c.h.b16 %v4416
          %v5348 = vunpack.c.l.b16 %v4417
          %v5349 = vunpack.c.h.b16 %v4417
          %v5350 = vunpack.c.l.b16 %v4418
          %v5351 = vunpack.c.h.b16 %v4418
          %v5352 = vunpack.c.l.b16 %v4419
          %v5353 = vunpack.c.h.b16 %v4419
          %v5354 = vunpack.c.l.b16 %v4420
          %v5355 = vunpack.c.h.b16 %v4420
          %v5356 = vunpack.c.l.b16 %v4421
          %v5357 = vunpack.c.h.b16 %v4421
          %v5358 = vunpack.c.l.b16 %v4422
          %v5359 = vunpack.c.h.b16 %v4422
          %v5360 = vunpack.c.l.b16 %v4423
          %v5361 = vunpack.c.h.b16 %v4423
          %v5362 = vunpack.c.l.b16 %v4424
          %v5363 = vunpack.c.h.b16 %v4424
          %v5364 = vunpack.c.l.b16 %v4425
          %v5365 = vunpack.c.h.b16 %v4425
          %v5366 = vunpack.c.l.b16 %v4426
          %v5367 = vunpack.c.h.b16 %v4426
          %v5368 = vunpack.c.l.b16 %v4427
          %v5369 = vunpack.c.h.b16 %v4427
          %v5370 = vunpack.c.l.b16 %v4428
          %v5371 = vunpack.c.h.b16 %v4428
          %v5372 = vunpack.c.l.b16 %v4429
          %v5373 = vunpack.c.h.b16 %v4429
          %v5374 = vunpack.c.l.b16 %v4430
          %v5375 = vunpack.c.h.b16 %v4430
          %v5376 = vunpack.c.l.b16 %v4431
          %v5377 = vunpack.c.h.b16 %v4431
          %v5378 = vunpack.c.l.b16 %v4432
          %v5379 = vunpack.c.h.b16 %v4432
          %v5380 = vunpack.c.l.b16 %v4433
          %v5381 = vunpack.c.h.b16 %v4433
          %v5382 = vunpack.c.l.b16 %v4434
          %v5383 = vunpack.c.h.b16 %v4434
          %v5384 = vunpack.c.l.b16 %v4435
          %v5385 = vunpack.c.h.b16 %v4435
          %v5386 = vunpack.c.l.b16 %v4436
          %v5387 = vunpack.c.h.b16 %v4436
          %v5388 = vunpack.c.l.b16 %v4437
          %v5389 = vunpack.c.h.b16 %v4437
          %v5390 = vunpack.c.l.b16 %v4438
          %v5391 = vunpack.c.h.b16 %v4438
          %v5392 = vunpack.c.l.b16 %v4439
          %v5393 = vunpack.c.h.b16 %v4439
          %v5394 = vunpack.c.l.b16 %v4440
          %v5395 = vunpack.c.h.b16 %v4440
          %v5396 = vunpack.c.l.b16 %v4441
          %v5397 = vunpack.c.h.b16 %v4441
          %v5398 = vunpack.c.l.b16 %v4442
          %v5399 = vunpack.c.h.b16 %v4442
          %v5400 = vunpack.c.l.b16 %v4443
          %v5401 = vunpack.c.h.b16 %v4443
          %v5402 = vunpack.c.l.b16 %v4444
          %v5403 = vunpack.c.h.b16 %v4444
          %v5404 = vunpack.c.l.b16 %v4445
          %v5405 = vunpack.c.h.b16 %v4445
          %v5406 = vunpack.c.l.b16 %v4446
          %v5407 = vunpack.c.h.b16 %v4446
          %v5408 = vunpack.c.l.b16 %v4447
          %v5409 = vunpack.c.h.b16 %v4447
          %v5410 = vunpack.c.l.b16 %v4448
          %v5411 = vunpack.c.h.b16 %v4448
          %v5412 = vunpack.c.l.b16 %v4449
          %v5413 = vunpack.c.h.b16 %v4449
          %v5414 = vunpack.c.l.b16 %v4450
          %v5415 = vunpack.c.h.b16 %v4450
          %v5416 = vunpack.c.l.b16 %v4451
          %v5417 = vunpack.c.h.b16 %v4451
          %v5418 = vunpack.c.l.b16 %v4452
          %v5419 = vunpack.c.h.b16 %v4452
          %v5420 = vunpack.c.l.b16 %v4453
          %v5421 = vunpack.c.h.b16 %v4453
          %v5422 = vunpack.c.l.b16 %v4454
          %v5423 = vunpack.c.h.b16 %v4454
          %v5424 = vunpack.c.l.b16 %v4455
          %v5425 = vunpack.c.h.b16 %v4455
          %v5426 = vunpack.c.l.b16 %v4456
          %v5427 = vunpack.c.h.b16 %v4456
          %v5428 = vunpack.c.l.b16 %v4457
          %v5429 = vunpack.c.h.b16 %v4457
          %v5430 = vunpack.c.l.b16 %v4458
          %v5431 = vunpack.c.h.b16 %v4458
          %v5432 = vunpack.c.l.b16 %v4459
          %v5433 = vunpack.c.h.b16 %v4459
          %v5434 = vunpack.c.l.b16 %v4460
          %v5435 = vunpack.c.h.b16 %v4460
          %v5436 = vunpack.c.l.b16 %v4461
          %v5437 = vunpack.c.h.b16 %v4461
          %v5438 = vunpack.c.l.b16 %v4462
          %v5439 = vunpack.c.h.b16 %v4462
          %v5440 = vunpack.c.l.b16 %v4463
          %v5441 = vunpack.c.h.b16 %v4463
          %v5442 = vunpack.c.l.b16 %v4464
          %v5443 = vunpack.c.h.b16 %v4464
          %v5444 = vunpack.c.l.b16 %v4465
          %v5445 = vunpack.c.h.b16 %v4465
          %v5446 = vunpack.c.l.b16 %v4466
          %v5447 = vunpack.c.h.b16 %v4466
          %v5448 = vunpack.c.l.b16 %v4467
          %v5449 = vunpack.c.h.b16 %v4467
          %v5450 = vunpack.c.l.b16 %v4468
          %v5451 = vunpack.c.h.b16 %v4468
          %v5452 = vunpack.c.l.b16 %v4469
          %v5453 = vunpack.c.h.b16 %v4469
          %v5454 = vunpack.c.l.b16 %v4470
          %v5455 = vunpack.c.h.b16 %v4470
          %v5456 = vunpack.c.l.b16 %v4471
          %v5457 = vunpack.c.h.b16 %v4471
          %v5458 = vunpack.c.l.b16 %v4472
          %v5459 = vunpack.c.h.b16 %v4472
          %v5460 = vunpack.c.l.b16 %v4473
          %v5461 = vunpack.c.h.b16 %v4473
          %v5462 = vunpack.c.l.b16 %v4474
          %v5463 = vunpack.c.h.b16 %v4474
          %v5464 = vunpack.c.l.b16 %v4475
          %v5465 = vunpack.c.h.b16 %v4475
          %v5466 = vunpack.c.l.b16 %v4476
          %v5467 = vunpack.c.h.b16 %v4476
          %v5468 = vunpack.c.l.b16 %v4477
          %v5469 = vunpack.c.h.b16 %v4477
          %v5470 = vunpack.c.l.b16 %v4478
          %v5471 = vunpack.c.h.b16 %v4478
          %v5472 = vunpack.c.l.b16 %v4479
          %v5473 = vunpack.c.h.b16 %v4479
          %v5474 = vunpack.c.l.b16 %v4480
          %v5475 = vunpack.c.h.b16 %v4480
          %v5476 = vunpack.c.l.b16 %v4481
          %v5477 = vunpack.c.h.b16 %v4481
          %v5478 = vunpack.c.l.b16 %v4482
          %v5479 = vunpack.c.h.b16 %v4482
          %v5480 = vunpack.c.l.b16 %v4483
          %v5481 = vunpack.c.h.b16 %v4483
          %v5482 = vunpack.c.l.b16 %v4484
          %v5483 = vunpack.c.h.b16 %v4484
          %v5484 = vunpack.c.l.b16 %v4485
          %v5485 = vunpack.c.h.b16 %v4485
          %v5486 = vunpack.c.l.b16 %v4486
          %v5487 = vunpack.c.h.b16 %v4486
          %v5488 = vunpack.c.l.b16 %v4487
          %v5489 = vunpack.c.h.b16 %v4487
          %v5490 = vunpack.c.l.b16 %v4488
          %v5491 = vunpack.c.h.b16 %v4488
          %v5492 = vunpack.c.l.b16 %v4489
          %v5493 = vunpack.c.h.b16 %v4489
          %v5494 = vunpack.c.l.b16 %v4490
          %v5495 = vunpack.c.h.b16 %v4490
          %v5496 = vunpack.c.l.b16 %v4491
          %v5497 = vunpack.c.h.b16 %v4491
          %v5498 = vunpack.c.l.b16 %v4492
          %v5499 = vunpack.c.h.b16 %v4492
          %v5500 = vunpack.c.l.b16 %v4493
          %v5501 = vunpack.c.h.b16 %v4493
          %v5502 = vunpack.c.l.b16 %v4494
          %v5503 = vunpack.c.h.b16 %v4494
          %v5504 = vunpack.c.l.b16 %v4495
          %v5505 = vunpack.c.h.b16 %v4495
          %v5506 = vunpack.c.l.b16 %v4496
          %v5507 = vunpack.c.h.b16 %v4496
          %v5508 = vunpack.c.l.b16 %v4497
          %v5509 = vunpack.c.h.b16 %v4497
          %v5510 = vunpack.c.l.b16 %v4498
          %v5511 = vunpack.c.h.b16 %v4498
          %v5512 = vunpack.c.l.b16 %v4499
          %v5513 = vunpack.c.h.b16 %v4499
          %v5514 = vunpack.c.l.b16 %v4500
          %v5515 = vunpack.c.h.b16 %v4500
          %v5516 = vunpack.c.l.b16 %v4501
          %v5517 = vunpack.c.h.b16 %v4501
          %v5518 = vunpack.c.l.b16 %v4502
          %v5519 = vunpack.c.h.b16 %v4502
          %v5520 = vunpack.c.l.b16 %v4503
          %v5521 = vunpack.c.h.b16 %v4503
          %v5522 = vunpack.c.l.b16 %v4504
          %v5523 = vunpack.c.h.b16 %v4504
          %v5524 = vunpack.c.l.b16 %v4505
          %v5525 = vunpack.c.h.b16 %v4505
          %v5526 = vunpack.c.l.b16 %v4506
          %v5527 = vunpack.c.h.b16 %v4506
          %v5528 = vunpack.c.l.b16 %v4507
          %v5529 = vunpack.c.h.b16 %v4507
          %v5530 = vunpack.c.l.b16 %v4508
          %v5531 = vunpack.c.h.b16 %v4508
          %v5532 = vunpack.c.l.b16 %v4509
          %v5533 = vunpack.c.h.b16 %v4509
          %v5534 = vunpack.c.l.b16 %v4510
          %v5535 = vunpack.c.h.b16 %v4510
          %v5536 = vunpack.c.l.b16 %v4511
          %v5537 = vunpack.c.h.b16 %v4511
          %v5538 = vunpack.c.l.b16 %v4512
          %v5539 = vunpack.c.h.b16 %v4512
          %v5540 = vunpack.c.l.b16 %v4513
          %v5541 = vunpack.c.h.b16 %v4513
          %v5542 = vunpack.c.l.b16 %v4514
          %v5543 = vunpack.c.h.b16 %v4514
          %v5544 = vunpack.c.l.b16 %v4515
          %v5545 = vunpack.c.h.b16 %v4515
          %v5546 = vunpack.c.l.b16 %v4516
          %v5547 = vunpack.c.h.b16 %v4516
          %v5548 = vunpack.c.l.b16 %v4517
          %v5549 = vunpack.c.h.b16 %v4517
          %v5550 = vunpack.c.l.b16 %v4518
          %v5551 = vunpack.c.h.b16 %v4518
          %v5552 = vunpack.c.l.b16 %v4519
          %v5553 = vunpack.c.h.b16 %v4519
          %v5554 = vunpack.c.l.b16 %v4520
          %v5555 = vunpack.c.h.b16 %v4520
          %v5556 = vunpack.c.l.b16 %v4521
          %v5557 = vunpack.c.h.b16 %v4521
          %v5558 = vunpack.c.l.b16 %v4522
          %v5559 = vunpack.c.h.b16 %v4522
          %v5560 = vunpack.c.l.b16 %v4523
          %v5561 = vunpack.c.h.b16 %v4523
          %v5562 = vunpack.c.l.b16 %v4524
          %v5563 = vunpack.c.h.b16 %v4524
          %v5564 = vunpack.c.l.b16 %v4525
          %v5565 = vunpack.c.h.b16 %v4525
          %v5566 = vunpack.c.l.b16 %v4526
          %v5567 = vunpack.c.h.b16 %v4526
          %v5568 = vunpack.c.l.b16 %v4527
          %v5569 = vunpack.c.h.b16 %v4527
          %v5570 = vunpack.c.l.b16 %v4528
          %v5571 = vunpack.c.h.b16 %v4528
          %v5572 = vunpack.c.l.b16 %v4529
          %v5573 = vunpack.c.h.b16 %v4529
          %v5574 = vunpack.c.l.b16 %v4530
          %v5575 = vunpack.c.h.b16 %v4530
          %v5576 = vunpack.c.l.b16 %v4531
          %v5577 = vunpack.c.h.b16 %v4531
          %v5578 = vunpack.c.l.b16 %v4532
          %v5579 = vunpack.c.h.b16 %v4532
          %v5580 = vunpack.c.l.b16 %v4533
          %v5581 = vunpack.c.h.b16 %v4533
          %v5582 = vunpack.c.l.b16 %v4534
          %v5583 = vunpack.c.h.b16 %v4534
          %v5584 = vunpack.c.l.b16 %v4535
          %v5585 = vunpack.c.h.b16 %v4535
          %v5586 = vunpack.c.l.b16 %v4536
          %v5587 = vunpack.c.h.b16 %v4536
          %v5588 = vunpack.c.l.b16 %v4537
          %v5589 = vunpack.c.h.b16 %v4537
          %v5590 = vunpack.c.l.b16 %v4538
          %v5591 = vunpack.c.h.b16 %v4538
          %v5592 = vunpack.c.l.b16 %v4539
          %v5593 = vunpack.c.h.b16 %v4539
          %v5594 = vunpack.c.l.b16 %v4540
          %v5595 = vunpack.c.h.b16 %v4540
          %v5596 = vunpack.c.l.b16 %v4541
          %v5597 = vunpack.c.h.b16 %v4541
          %v5598 = vunpack.c.l.b16 %v4542
          %v5599 = vunpack.c.h.b16 %v4542
          %v5600 = vunpack.c.l.b16 %v4543
          %v5601 = vunpack.c.h.b16 %v4543
          %v5602 = vunpack.c.l.b16 %v4544
          %v5603 = vunpack.c.h.b16 %v4544
          %v5604 = vunpack.c.l.b16 %v4545
          %v5605 = vunpack.c.h.b16 %v4545
          %v5606 = vunpack.c.l.b16 %v4546
          %v5607 = vunpack.c.h.b16 %v4546
          %v5608 = vunpack.c.l.b16 %v4547
          %v5609 = vunpack.c.h.b16 %v4547
          %v5610 = vunpack.c.l.b16 %v4548
          %v5611 = vunpack.c.h.b16 %v4548
          %v5612 = vunpack.c.l.b16 %v4549
          %v5613 = vunpack.c.h.b16 %v4549
          %v5614 = vunpack.c.l.b16 %v4550
          %v5615 = vunpack.c.h.b16 %v4550
          %v5616 = vunpack.c.l.b16 %v4551
          %v5617 = vunpack.c.h.b16 %v4551
          %v5618 = vunpack.c.l.b16 %v4552
          %v5619 = vunpack.c.h.b16 %v4552
          %v5620 = vunpack.c.l.b16 %v4553
          %v5621 = vunpack.c.h.b16 %v4553
          %v5622 = vunpack.c.l.b16 %v4554
          %v5623 = vunpack.c.h.b16 %v4554
          %v5624 = vunpack.c.l.b16 %v4555
          %v5625 = vunpack.c.h.b16 %v4555
          %v5626 = vunpack.c.l.b16 %v4556
          %v5627 = vunpack.c.h.b16 %v4556
          %v5628 = vunpack.c.l.b16 %v4557
          %v5629 = vunpack.c.h.b16 %v4557
          %v5630 = vunpack.c.l.b16 %v4558
          %v5631 = vunpack.c.h.b16 %v4558
          %v5632 = vunpack.c.l.b16 %v4559
          %v5633 = vunpack.c.h.b16 %v4559
          %v5634 = vunpack.c.l.b16 %v4560
          %v5635 = vunpack.c.h.b16 %v4560
          %v5636 = vunpack.c.l.b16 %v4561
          %v5637 = vunpack.c.h.b16 %v4561
          %v5638 = vunpack.c.l.b16 %v4562
          %v5639 = vunpack.c.h.b16 %v4562
          %v5640 = vunpack.c.l.b16 %v4563
          %v5641 = vunpack.c.h.b16 %v4563
          %v5642 = vunpack.c.l.b16 %v4564
          %v5643 = vunpack.c.h.b16 %v4564
          %v5644 = vunpack.c.l.b16 %v4565
          %v5645 = vunpack.c.h.b16 %v4565
          %v5646 = vunpack.c.l.b16 %v4566
          %v5647 = vunpack.c.h.b16 %v4566
          %v5648 = vunpack.c.l.b16 %v4567
          %v5649 = vunpack.c.h.b16 %v4567
          %v5650 = vunpack.c.l.b16 %v4568
          %v5651 = vunpack.c.h.b16 %v4568
          %v5652 = vunpack.c.l.b16 %v4569
          %v5653 = vunpack.c.h.b16 %v4569
          %v5654 = vunpack.c.l.b16 %v4570
          %v5655 = vunpack.c.h.b16 %v4570
          %v5656 = vunpack.c.l.b16 %v4571
          %v5657 = vunpack.c.h.b16 %v4571
          %v5658 = vunpack.c.l.b16 %v4572
          %v5659 = vunpack.c.h.b16 %v4572
          %v5660 = vunpack.c.l.b16 %v4573
          %v5661 = vunpack.c.h.b16 %v4573
          %v5662 = vunpack.c.l.b16 %v4574
          %v5663 = vunpack.c.h.b16 %v4574
          %v5664 = vunpack.c.l.b16 %v4575
          %v5665 = vunpack.c.h.b16 %v4575
          %v5666 = vunpack.c.l.b16 %v4576
          %v5667 = vunpack.c.h.b16 %v4576
          %v5668 = vunpack.c.l.b16 %v4577
          %v5669 = vunpack.c.h.b16 %v4577
          %v5670 = vunpack.c.l.b16 %v4578
          %v5671 = vunpack.c.h.b16 %v4578
          %v5672 = vunpack.c.l.b16 %v4579
          %v5673 = vunpack.c.h.b16 %v4579
          %v5674 = vunpack.c.l.b16 %v4580
          %v5675 = vunpack.c.h.b16 %v4580
          %v5676 = vunpack.c.l.b16 %v4581
          %v5677 = vunpack.c.h.b16 %v4581
          %v5678 = vunpack.c.l.b16 %v4582
          %v5679 = vunpack.c.h.b16 %v4582
          %v5680 = vunpack.c.l.b16 %v4583
          %v5681 = vunpack.c.h.b16 %v4583
          %v5682 = vunpack.c.l.b16 %v4584
          %v5683 = vunpack.c.h.b16 %v4584
          %v5684 = vunpack.c.l.b16 %v4585
          %v5685 = vunpack.c.h.b16 %v4585
          %v5686 = vunpack.c.l.b16 %v4586
          %v5687 = vunpack.c.h.b16 %v4586
          %v5688 = vunpack.c.l.b16 %v4587
          %v5689 = vunpack.c.h.b16 %v4587
          %v5690 = vunpack.c.l.b16 %v4588
          %v5691 = vunpack.c.h.b16 %v4588
          %v5692 = vunpack.c.l.b16 %v4589
          %v5693 = vunpack.c.h.b16 %v4589
          %v5694 = vunpack.c.l.b16 %v4590
          %v5695 = vunpack.c.h.b16 %v4590
          %v5696 = vunpack.c.l.b16 %v4591
          %v5697 = vunpack.c.h.b16 %v4591
          %v5698 = vunpack.c.l.b16 %v4592
          %v5699 = vunpack.c.h.b16 %v4592
          %v5700 = vunpack.c.l.b16 %v4593
          %v5701 = vunpack.c.h.b16 %v4593
          %v5702 = vunpack.c.l.b16 %v4594
          %v5703 = vunpack.c.h.b16 %v4594
          %v5704 = vunpack.c.l.b16 %v4595
          %v5705 = vunpack.c.h.b16 %v4595
          %v5706 = vunpack.c.l.b16 %v4596
          %v5707 = vunpack.c.h.b16 %v4596
          %v5708 = vunpack.c.l.b16 %v4597
          %v5709 = vunpack.c.h.b16 %v4597
          %v5710 = vunpack.c.l.b16 %v4598
          %v5711 = vunpack.c.h.b16 %v4598
          %v5712 = vunpack.c.l.b16 %v4599
          %v5713 = vunpack.c.h.b16 %v4599
          %v5714 = vunpack.c.l.b16 %v4600
          %v5715 = vunpack.c.h.b16 %v4600
          %v5716 = vunpack.c.l.b16 %v4601
          %v5717 = vunpack.c.h.b16 %v4601
          %v5718 = vunpack.c.l.b16 %v4602
          %v5719 = vunpack.c.h.b16 %v4602
          %v5720 = vunpack.c.l.b16 %v4603
          %v5721 = vunpack.c.h.b16 %v4603
          %v5722 = vunpack.c.l.b16 %v4604
          %v5723 = vunpack.c.h.b16 %v4604
          %v5724 = vunpack.c.l.b16 %v4605
          %v5725 = vunpack.c.h.b16 %v4605
          %v5726 = vunpack.c.l.b16 %v4606
          %v5727 = vunpack.c.h.b16 %v4606
          %v5728 = vunpack.c.l.b16 %v4607
          %v5729 = vunpack.c.h.b16 %v4607
          %v5730 = vunpack.c.l.b16 %v4608
          %v5731 = vunpack.c.h.b16 %v4608
          %v5732 = vunpack.c.l.b16 %v4609
          %v5733 = vunpack.c.h.b16 %v4609
          %v5734 = vunpack.c.l.b16 %v4610
          %v5735 = vunpack.c.h.b16 %v4610
          %v5736 = vunpack.c.l.b16 %v4611
          %v5737 = vunpack.c.h.b16 %v4611
          %v5738 = vunpack.c.l.b16 %v4612
          %v5739 = vunpack.c.h.b16 %v4612
          %v5740 = vunpack.c.l.b16 %v4613
          %v5741 = vunpack.c.h.b16 %v4613
          %v5742 = vunpack.c.l.b16 %v4614
          %v5743 = vunpack.c.h.b16 %v4614
          %v5744 = vunpack.c.l.b16 %v4615
          %v5745 = vunpack.c.h.b16 %v4615
          %v5746 = vunpack.c.l.b16 %v4616
          %v5747 = vunpack.c.h.b16 %v4616
          %v5748 = vunpack.c.l.b16 %v4617
          %v5749 = vunpack.c.h.b16 %v4617
          %v5750 = vunpack.c.l.b16 %v4618
          %v5751 = vunpack.c.h.b16 %v4618
          %v5752 = vunpack.c.l.b16 %v4619
          %v5753 = vunpack.c.h.b16 %v4619
          %v5754 = vunpack.c.l.b16 %v4620
          %v5755 = vunpack.c.h.b16 %v4620
          %v5756 = vunpack.c.l.b16 %v4621
          %v5757 = vunpack.c.h.b16 %v4621
          %v5758 = vunpack.c.l.b16 %v4622
          %v5759 = vunpack.c.h.b16 %v4622
          %v5760 = vunpack.c.l.b16 %v4623
          %v5761 = vunpack.c.h.b16 %v4623
          %v5762 = vunpack.c.l.b16 %v4624
          %v5763 = vunpack.c.h.b16 %v4624
          %v5764 = vunpack.c.l.b16 %v4625
          %v5765 = vunpack.c.h.b16 %v4625
          %v5766 = vunpack.c.l.b16 %v4626
          %v5767 = vunpack.c.h.b16 %v4626
          %v5768 = vunpack.c.l.b16 %v4627
          %v5769 = vunpack.c.h.b16 %v4627
          %v5770 = vunpack.c.l.b16 %v4628
          %v5771 = vunpack.c.h.b16 %v4628
          %v5772 = vunpack.c.l.b16 %v4629
          %v5773 = vunpack.c.h.b16 %v4629
          %v5774 = vunpack.c.l.b16 %v4630
          %v5775 = vunpack.c.h.b16 %v4630
          %v5776 = vunpack.c.l.b16 %v4631
          %v5777 = vunpack.c.h.b16 %v4631
          %v5778 = vunpack.c.l.b16 %v4632
          %v5779 = vunpack.c.h.b16 %v4632
          %v5780 = vunpack.c.l.b16 %v4633
          %v5781 = vunpack.c.h.b16 %v4633
          %v5782 = vunpack.c.l.b16 %v4634
          %v5783 = vunpack.c.h.b16 %v4634
          %v5784 = vunpack.c.l.b16 %v4635
          %v5785 = vunpack.c.h.b16 %v4635
          %v5786 = vunpack.c.l.b16 %v4636
          %v5787 = vunpack.c.h.b16 %v4636
          %v5788 = vunpack.c.l.b16 %v4637
          %v5789 = vunpack.c.h.b16 %v4637
          %v5790 = vunpack.c.l.b16 %v4638
          %v5791 = vunpack.c.h.b16 %v4638
          %v5792 = vpack.c.b16 %v5028, %v5024
          %v5793 = vpack.c.b16 %v5029, %v5025
          %v5794 = vpack.c.b16 %v5030, %v5026
          %v5795 = vpack.c.b16 %v5031, %v5027
          %v5796 = vpack.c.b16 %v5036, %v5032
          %v5797 = vpack.c.b16 %v5037, %v5033
          %v5798 = vpack.c.b16 %v5038, %v5034
          %v5799 = vpack.c.b16 %v5039, %v5035
          %v5800 = vpack.c.b16 %v5044, %v5040
          %v5801 = vpack.c.b16 %v5045, %v5041
          %v5802 = vpack.c.b16 %v5046, %v5042
          %v5803 = vpack.c.b16 %v5047, %v5043
          %v5804 = vpack.c.b16 %v5052, %v5048
          %v5805 = vpack.c.b16 %v5053, %v5049
          %v5806 = vpack.c.b16 %v5054, %v5050
          %v5807 = vpack.c.b16 %v5055, %v5051
          %v5808 = vpack.c.b16 %v5060, %v5056
          %v5809 = vpack.c.b16 %v5061, %v5057
          %v5810 = vpack.c.b16 %v5062, %v5058
          %v5811 = vpack.c.b16 %v5063, %v5059
          %v5812 = vpack.c.b16 %v5068, %v5064
          %v5813 = vpack.c.b16 %v5069, %v5065
          %v5814 = vpack.c.b16 %v5070, %v5066
          %v5815 = vpack.c.b16 %v5071, %v5067
          %v5816 = vpack.c.b16 %v5076, %v5072
          %v5817 = vpack.c.b16 %v5077, %v5073
          %v5818 = vpack.c.b16 %v5078, %v5074
          %v5819 = vpack.c.b16 %v5079, %v5075
          %v5820 = vpack.c.b16 %v5084, %v5080
          %v5821 = vpack.c.b16 %v5085, %v5081
          %v5822 = vpack.c.b16 %v5086, %v5082
          %v5823 = vpack.c.b16 %v5087, %v5083
          %v5824 = vpack.c.b16 %v5092, %v5088
          %v5825 = vpack.c.b16 %v5093, %v5089
          %v5826 = vpack.c.b16 %v5094, %v5090
          %v5827 = vpack.c.b16 %v5095, %v5091
          %v5828 = vpack.c.b16 %v5100, %v5096
          %v5829 = vpack.c.b16 %v5101, %v5097
          %v5830 = vpack.c.b16 %v5102, %v5098
          %v5831 = vpack.c.b16 %v5103, %v5099
          %v5832 = vpack.c.b16 %v5108, %v5104
          %v5833 = vpack.c.b16 %v5109, %v5105
          %v5834 = vpack.c.b16 %v5110, %v5106
          %v5835 = vpack.c.b16 %v5111, %v5107
          %v5836 = vpack.c.b16 %v5116, %v5112
          %v5837 = vpack.c.b16 %v5117, %v5113
          %v5838 = vpack.c.b16 %v5118, %v5114
          %v5839 = vpack.c.b16 %v5119, %v5115
          %v5840 = vpack.c.b16 %v5124, %v5120
          %v5841 = vpack.c.b16 %v5125, %v5121
          %v5842 = vpack.c.b16 %v5126, %v5122
          %v5843 = vpack.c.b16 %v5127, %v5123
          %v5844 = vpack.c.b16 %v5132, %v5128
          %v5845 = vpack.c.b16 %v5133, %v5129
          %v5846 = vpack.c.b16 %v5134, %v5130
          %v5847 = vpack.c.b16 %v5135, %v5131
          %v5848 = vpack.c.b16 %v5140, %v5136
          %v5849 = vpack.c.b16 %v5141, %v5137
          %v5850 = vpack.c.b16 %v5142, %v5138
          %v5851 = vpack.c.b16 %v5143, %v5139
          %v5852 = vpack.c.b16 %v5148, %v5144
          %v5853 = vpack.c.b16 %v5149, %v5145
          %v5854 = vpack.c.b16 %v5150, %v5146
          %v5855 = vpack.c.b16 %v5151, %v5147
          %v5856 = vpack.c.b16 %v5156, %v5152
          %v5857 = vpack.c.b16 %v5157, %v5153
          %v5858 = vpack.c.b16 %v5158, %v5154
          %v5859 = vpack.c.b16 %v5159, %v5155
          %v5860 = vpack.c.b16 %v5164, %v5160
          %v5861 = vpack.c.b16 %v5165, %v5161
          %v5862 = vpack.c.b16 %v5166, %v5162
          %v5863 = vpack.c.b16 %v5167, %v5163
          %v5864 = vpack.c.b16 %v5172, %v5168
          %v5865 = vpack.c.b16 %v5173, %v5169
          %v5866 = vpack.c.b16 %v5174, %v5170
          %v5867 = vpack.c.b16 %v5175, %v5171
          %v5868 = vpack.c.b16 %v5180, %v5176
          %v5869 = vpack.c.b16 %v5181, %v5177
          %v5870 = vpack.c.b16 %v5182, %v5178
          %v5871 = vpack.c.b16 %v5183, %v5179
          %v5872 = vpack.c.b16 %v5188, %v5184
          %v5873 = vpack.c.b16 %v5189, %v5185
          %v5874 = vpack.c.b16 %v5190, %v5186
          %v5875 = vpack.c.b16 %v5191, %v5187
          %v5876 = vpack.c.b16 %v5196, %v5192
          %v5877 = vpack.c.b16 %v5197, %v5193
          %v5878 = vpack.c.b16 %v5198, %v5194
          %v5879 = vpack.c.b16 %v5199, %v5195
          %v5880 = vpack.c.b16 %v5204, %v5200
          %v5881 = vpack.c.b16 %v5205, %v5201
          %v5882 = vpack.c.b16 %v5206, %v5202
          %v5883 = vpack.c.b16 %v5207, %v5203
          %v5884 = vpack.c.b16 %v5212, %v5208
          %v5885 = vpack.c.b16 %v5213, %v5209
          %v5886 = vpack.c.b16 %v5214, %v5210
          %v5887 = vpack.c.b16 %v5215, %v5211
          %v5888 = vpack.c.b16 %v5220, %v5216
          %v5889 = vpack.c.b16 %v5221, %v5217
          %v5890 = vpack.c.b16 %v5222, %v5218
          %v5891 = vpack.c.b16 %v5223, %v5219
          %v5892 = vpack.c.b16 %v5228, %v5224
          %v5893 = vpack.c.b16 %v5229, %v5225
          %v5894 = vpack.c.b16 %v5230, %v5226
          %v5895 = vpack.c.b16 %v5231, %v5227
          %v5896 = vpack.c.b16 %v5236, %v5232
          %v5897 = vpack.c.b16 %v5237, %v5233
          %v5898 = vpack.c.b16 %v5238, %v5234
          %v5899 = vpack.c.b16 %v5239, %v5235
          %v5900 = vpack.c.b16 %v5244, %v5240
          %v5901 = vpack.c.b16 %v5245, %v5241
          %v5902 = vpack.c.b16 %v5246, %v5242
          %v5903 = vpack.c.b16 %v5247, %v5243
          %v5904 = vpack.c.b16 %v5252, %v5248
          %v5905 = vpack.c.b16 %v5253, %v5249
          %v5906 = vpack.c.b16 %v5254, %v5250
          %v5907 = vpack.c.b16 %v5255, %v5251
          %v5908 = vpack.c.b16 %v5260, %v5256
          %v5909 = vpack.c.b16 %v5261, %v5257
          %v5910 = vpack.c.b16 %v5262, %v5258
          %v5911 = vpack.c.b16 %v5263, %v5259
          %v5912 = vpack.c.b16 %v5268, %v5264
          %v5913 = vpack.c.b16 %v5269, %v5265
          %v5914 = vpack.c.b16 %v5270, %v5266
          %v5915 = vpack.c.b16 %v5271, %v5267
          %v5916 = vpack.c.b16 %v5276, %v5272
          %v5917 = vpack.c.b16 %v5277, %v5273
          %v5918 = vpack.c.b16 %v5278, %v5274
          %v5919 = vpack.c.b16 %v5279, %v5275
          %v5920 = vpack.c.b16 %v5284, %v5280
          %v5921 = vpack.c.b16 %v5285, %v5281
          %v5922 = vpack.c.b16 %v5286, %v5282
          %v5923 = vpack.c.b16 %v5287, %v5283
          %v5924 = vpack.c.b16 %v5292, %v5288
          %v5925 = vpack.c.b16 %v5293, %v5289
          %v5926 = vpack.c.b16 %v5294, %v5290
          %v5927 = vpack.c.b16 %v5295, %v5291
          %v5928 = vpack.c.b16 %v5300, %v5296
          %v5929 = vpack.c.b16 %v5301, %v5297
          %v5930 = vpack.c.b16 %v5302, %v5298
          %v5931 = vpack.c.b16 %v5303, %v5299
          %v5932 = vpack.c.b16 %v5308, %v5304
          %v5933 = vpack.c.b16 %v5309, %v5305
          %v5934 = vpack.c.b16 %v5310, %v5306
          %v5935 = vpack.c.b16 %v5311, %v5307
          %v5936 = vpack.c.b16 %v5316, %v5312
          %v5937 = vpack.c.b16 %v5317, %v5313
          %v5938 = vpack.c.b16 %v5318, %v5314
          %v5939 = vpack.c.b16 %v5319, %v5315
          %v5940 = vpack.c.b16 %v5324, %v5320
          %v5941 = vpack.c.b16 %v5325, %v5321
          %v5942 = vpack.c.b16 %v5326, %v5322
          %v5943 = vpack.c.b16 %v5327, %v5323
          %v5944 = vpack.c.b16 %v5332, %v5328
          %v5945 = vpack.c.b16 %v5333, %v5329
          %v5946 = vpack.c.b16 %v5334, %v5330
          %v5947 = vpack.c.b16 %v5335, %v5331
          %v5948 = vpack.c.b16 %v5340, %v5336
          %v5949 = vpack.c.b16 %v5341, %v5337
          %v5950 = vpack.c.b16 %v5342, %v5338
          %v5951 = vpack.c.b16 %v5343, %v5339
          %v5952 = vpack.c.b16 %v5348, %v5344
          %v5953 = vpack.c.b16 %v5349, %v5345
          %v5954 = vpack.c.b16 %v5350, %v5346
          %v5955 = vpack.c.b16 %v5351, %v5347
          %v5956 = vpack.c.b16 %v5356, %v5352
          %v5957 = vpack.c.b16 %v5357, %v5353
          %v5958 = vpack.c.b16 %v5358, %v5354
          %v5959 = vpack.c.b16 %v5359, %v5355
          %v5960 = vpack.c.b16 %v5364, %v5360
          %v5961 = vpack.c.b16 %v5365, %v5361
          %v5962 = vpack.c.b16 %v5366, %v5362
          %v5963 = vpack.c.b16 %v5367, %v5363
          %v5964 = vpack.c.b16 %v5372, %v5368
          %v5965 = vpack.c.b16 %v5373, %v5369
          %v5966 = vpack.c.b16 %v5374, %v5370
          %v5967 = vpack.c.b16 %v5375, %v5371
          %v5968 = vpack.c.b16 %v5380, %v5376
          %v5969 = vpack.c.b16 %v5381, %v5377
          %v5970 = vpack.c.b16 %v5382, %v5378
          %v5971 = vpack.c.b16 %v5383, %v5379
          %v5972 = vpack.c.b16 %v5388, %v5384
          %v5973 = vpack.c.b16 %v5389, %v5385
          %v5974 = vpack.c.b16 %v5390, %v5386
          %v5975 = vpack.c.b16 %v5391, %v5387
          %v5976 = vpack.c.b16 %v5396, %v5392
          %v5977 = vpack.c.b16 %v5397, %v5393
          %v5978 = vpack.c.b16 %v5398, %v5394
          %v5979 = vpack.c.b16 %v5399, %v5395
          %v5980 = vpack.c.b16 %v5404, %v5400
          %v5981 = vpack.c.b16 %v5405, %v5401
          %v5982 = vpack.c.b16 %v5406, %v5402
          %v5983 = vpack.c.b16 %v5407, %v5403
          %v5984 = vpack.c.b16 %v5412, %v5408
          %v5985 = vpack.c.b16 %v5413, %v5409
          %v5986 = vpack.c.b16 %v5414, %v5410
          %v5987 = vpack.c.b16 %v5415, %v5411
          %v5988 = vpack.c.b16 %v5420, %v5416
          %v5989 = vpack.c.b16 %v5421, %v5417
          %v5990 = vpack.c.b16 %v5422, %v5418
          %v5991 = vpack.c.b16 %v5423, %v5419
          %v5992 = vpack.c.b16 %v5428, %v5424
          %v5993 = vpack.c.b16 %v5429, %v5425
          %v5994 = vpack.c.b16 %v5430, %v5426
          %v5995 = vpack.c.b16 %v5431, %v5427
          %v5996 = vpack.c.b16 %v5436, %v5432
          %v5997 = vpack.c.b16 %v5437, %v5433
          %v5998 = vpack.c.b16 %v5438, %v5434
          %v5999 = vpack.c.b16 %v5439, %v5435
          %v6000 = vpack.c.b16 %v5444, %v5440
          %v6001 = vpack.c.b16 %v5445, %v5441
          %v6002 = vpack.c.b16 %v5446, %v5442
          %v6003 = vpack.c.b16 %v5447, %v5443
          %v6004 = vpack.c.b16 %v5452, %v5448
          %v6005 = vpack.c.b16 %v5453, %v5449
          %v6006 = vpack.c.b16 %v5454, %v5450
          %v6007 = vpack.c.b16 %v5455, %v5451
          %v6008 = vpack.c.b16 %v5460, %v5456
          %v6009 = vpack.c.b16 %v5461, %v5457
          %v6010 = vpack.c.b16 %v5462, %v5458
          %v6011 = vpack.c.b16 %v5463, %v5459
          %v6012 = vpack.c.b16 %v5468, %v5464
          %v6013 = vpack.c.b16 %v5469, %v5465
          %v6014 = vpack.c.b16 %v5470, %v5466
          %v6015 = vpack.c.b16 %v5471, %v5467
          %v6016 = vpack.c.b16 %v5476, %v5472
          %v6017 = vpack.c.b16 %v5477, %v5473
          %v6018 = vpack.c.b16 %v5478, %v5474
          %v6019 = vpack.c.b16 %v5479, %v5475
          %v6020 = vpack.c.b16 %v5484, %v5480
          %v6021 = vpack.c.b16 %v5485, %v5481
          %v6022 = vpack.c.b16 %v5486, %v5482
          %v6023 = vpack.c.b16 %v5487, %v5483
          %v6024 = vpack.c.b16 %v5492, %v5488
          %v6025 = vpack.c.b16 %v5493, %v5489
          %v6026 = vpack.c.b16 %v5494, %v5490
          %v6027 = vpack.c.b16 %v5495, %v5491
          %v6028 = vpack.c.b16 %v5500, %v5496
          %v6029 = vpack.c.b16 %v5501, %v5497
          %v6030 = vpack.c.b16 %v5502, %v5498
          %v6031 = vpack.c.b16 %v5503, %v5499
          %v6032 = vpack.c.b16 %v5508, %v5504
          %v6033 = vpack.c.b16 %v5509, %v5505
          %v6034 = vpack.c.b16 %v5510, %v5506
          %v6035 = vpack.c.b16 %v5511, %v5507
          %v6036 = vpack.c.b16 %v5516, %v5512
          %v6037 = vpack.c.b16 %v5517, %v5513
          %v6038 = vpack.c.b16 %v5518, %v5514
          %v6039 = vpack.c.b16 %v5519, %v5515
          %v6040 = vpack.c.b16 %v5524, %v5520
          %v6041 = vpack.c.b16 %v5525, %v5521
          %v6042 = vpack.c.b16 %v5526, %v5522
          %v6043 = vpack.c.b16 %v5527, %v5523
          %v6044 = vpack.c.b16 %v5532, %v5528
          %v6045 = vpack.c.b16 %v5533, %v5529
          %v6046 = vpack.c.b16 %v5534, %v5530
          %v6047 = vpack.c.b16 %v5535, %v5531
          %v6048 = vpack.c.b16 %v5540, %v5536
          %v6049 = vpack.c.b16 %v5541, %v5537
          %v6050 = vpack.c.b16 %v5542, %v5538
          %v6051 = vpack.c.b16 %v5543, %v5539
          %v6052 = vpack.c.b16 %v5548, %v5544
          %v6053 = vpack.c.b16 %v5549, %v5545
          %v6054 = vpack.c.b16 %v5550, %v5546
          %v6055 = vpack.c.b16 %v5551, %v5547
          %v6056 = vpack.c.b16 %v5556, %v5552
          %v6057 = vpack.c.b16 %v5557, %v5553
          %v6058 = vpack.c.b16 %v5558, %v5554
          %v6059 = vpack.c.b16 %v5559, %v5555
          %v6060 = vpack.c.b16 %v5564, %v5560
          %v6061 = vpack.c.b16 %v5565, %v5561
          %v6062 = vpack.c.b16 %v5566, %v5562
          %v6063 = vpack.c.b16 %v5567, %v5563
          %v6064 = vpack.c.b16 %v5572, %v5568
          %v6065 = vpack.c.b16 %v5573, %v5569
          %v6066 = vpack.c.b16 %v5574, %v5570
          %v6067 = vpack.c.b16 %v5575, %v5571
          %v6068 = vpack.c.b16 %v5580, %v5576
          %v6069 = vpack.c.b16 %v5581, %v5577
          %v6070 = vpack.c.b16 %v5582, %v5578
          %v6071 = vpack.c.b16 %v5583, %v5579
          %v6072 = vpack.c.b16 %v5588, %v5584
          %v6073 = vpack.c.b16 %v5589, %v5585
          %v6074 = vpack.c.b16 %v5590, %v5586
          %v6075 = vpack.c.b16 %v5591, %v5587
          %v6076 = vpack.c.b16 %v5596, %v5592
          %v6077 = vpack.c.b16 %v5597, %v5593
          %v6078 = vpack.c.b16 %v5598, %v5594
          %v6079 = vpack.c.b16 %v5599, %v5595
          %v6080 = vpack.c.b16 %v5604, %v5600
          %v6081 = vpack.c.b16 %v5605, %v5601
          %v6082 = vpack.c.b16 %v5606, %v5602
          %v6083 = vpack.c.b16 %v5607, %v5603
          %v6084 = vpack.c.b16 %v5612, %v5608
          %v6085 = vpack.c.b16 %v5613, %v5609
          %v6086 = vpack.c.b16 %v5614, %v5610
          %v6087 = vpack.c.b16 %v5615, %v5611
          %v6088 = vpack.c.b16 %v5620, %v5616
          %v6089 = vpack.c.b16 %v5621, %v5617
          %v6090 = vpack.c.b16 %v5622, %v5618
          %v6091 = vpack.c.b16 %v5623, %v5619
          %v6092 = vpack.c.b16 %v5628, %v5624
          %v6093 = vpack.c.b16 %v5629, %v5625
          %v6094 = vpack.c.b16 %v5630, %v5626
          %v6095 = vpack.c.b16 %v5631, %v5627
          %v6096 = vpack.c.b16 %v5636, %v5632
          %v6097 = vpack.c.b16 %v5637, %v5633
          %v6098 = vpack.c.b16 %v5638, %v5634
          %v6099 = vpack.c.b16 %v5639, %v5635
          %v6100 = vpack.c.b16 %v5644, %v5640
          %v6101 = vpack.c.b16 %v5645, %v5641
          %v6102 = vpack.c.b16 %v5646, %v5642
          %v6103 = vpack.c.b16 %v5647, %v5643
          %v6104 = vpack.c.b16 %v5652, %v5648
          %v6105 = vpack.c.b16 %v5653, %v5649
          %v6106 = vpack.c.b16 %v5654, %v5650
          %v6107 = vpack.c.b16 %v5655, %v5651
          %v6108 = vpack.c.b16 %v5660, %v5656
          %v6109 = vpack.c.b16 %v5661, %v5657
          %v6110 = vpack.c.b16 %v5662, %v5658
          %v6111 = vpack.c.b16 %v5663, %v5659
          %v6112 = vpack.c.b16 %v5668, %v5664
          %v6113 = vpack.c.b16 %v5669, %v5665
          %v6114 = vpack.c.b16 %v5670, %v5666
          %v6115 = vpack.c.b16 %v5671, %v5667
          %v6116 = vpack.c.b16 %v5676, %v5672
          %v6117 = vpack.c.b16 %v5677, %v5673
          %v6118 = vpack.c.b16 %v5678, %v5674
          %v6119 = vpack.c.b16 %v5679, %v5675
          %v6120 = vpack.c.b16 %v5684, %v5680
          %v6121 = vpack.c.b16 %v5685, %v5681
          %v6122 = vpack.c.b16 %v5686, %v5682
          %v6123 = vpack.c.b16 %v5687, %v5683
          %v6124 = vpack.c.b16 %v5692, %v5688
          %v6125 = vpack.c.b16 %v5693, %v5689
          %v6126 = vpack.c.b16 %v5694, %v5690
          %v6127 = vpack.c.b16 %v5695, %v5691
          %v6128 = vpack.c.b16 %v5700, %v5696
          %v6129 = vpack.c.b16 %v5701, %v5697
          %v6130 = vpack.c.b16 %v5702, %v5698
          %v6131 = vpack.c.b16 %v5703, %v5699
          %v6132 = vpack.c.b16 %v5708, %v5704
          %v6133 = vpack.c.b16 %v5709, %v5705
          %v6134 = vpack.c.b16 %v5710, %v5706
          %v6135 = vpack.c.b16 %v5711, %v5707
          %v6136 = vpack.c.b16 %v5716, %v5712
          %v6137 = vpack.c.b16 %v5717, %v5713
          %v6138 = vpack.c.b16 %v5718, %v5714
          %v6139 = vpack.c.b16 %v5719, %v5715
          %v6140 = vpack.c.b16 %v5724, %v5720
          %v6141 = vpack.c.b16 %v5725, %v5721
          %v6142 = vpack.c.b16 %v5726, %v5722
          %v6143 = vpack.c.b16 %v5727, %v5723
          %v6144 = vpack.c.b16 %v5732, %v5728
          %v6145 = vpack.c.b16 %v5733, %v5729
          %v6146 = vpack.c.b16 %v5734, %v5730
          %v6147 = vpack.c.b16 %v5735, %v5731
          %v6148 = vpack.c.b16 %v5740, %v5736
          %v6149 = vpack.c.b16 %v5741, %v5737
          %v6150 = vpack.c.b16 %v5742, %v5738
          %v6151 = vpack.c.b16 %v5743, %v5739
          %v6152 = vpack.c.b16 %v5748, %v5744
          %v6153 = vpack.c.b16 %v5749, %v5745
          %v6154 = vpack.c.b16 %v5750, %v5746
          %v6155 = vpack.c.b16 %v5751, %v5747
          %v6156 = vpack.c.b16 %v5756, %v5752
          %v6157 = vpack.c.b16 %v5757, %v5753
          %v6158 = vpack.c.b16 %v5758, %v5754
          %v6159 = vpack.c.b16 %v5759, %v5755
          %v6160 = vpack.c.b16 %v5764, %v5760
          %v6161 = vpack.c.b16 %v5765, %v5761
          %v6162 = vpack.c.b16 %v5766, %v5762
          %v6163 = vpack.c.b16 %v5767, %v5763
          %v6164 = vpack.c.b16 %v5772, %v5768
          %v6165 = vpack.c.b16 %v5773, %v5769
          %v6166 = vpack.c.b16 %v5774, %v5770
          %v6167 = vpack.c.b16 %v5775, %v5771
          %v6168 = vpack.c.b16 %v5780, %v5776
          %v6169 = vpack.c.b16 %v5781, %v5777
          %v6170 = vpack.c.b16 %v5782, %v5778
          %v6171 = vpack.c.b16 %v5783, %v5779
          %v6172 = vpack.c.b16 %v5788, %v5784
          %v6173 = vpack.c.b16 %v5789, %v5785
          %v6174 = vpack.c.b16 %v5790, %v5786
          %v6175 = vpack.c.b16 %v5791, %v5787
          %v6561 = vperm.slane %v4639, 0
          %v6562 = vperm.slane %v4639, 1
          %v6563 = vperm.slane %v4639, 2
          %v6564 = vperm.slane %v4639, 3
          %6569 = vmatpush.bf16.msra.mxu0 %v5820
          %6570 = vmatpush.bf16.msra.mxu0 %v5816
          %6571 = vmatpush.bf16.msra.mxu0 %v5812
          %6572 = vmatpush.bf16.msra.mxu0 %v5808
          %6573 = vmatpush.bf16.msra.mxu0 %v5804
          %6574 = vmatpush.bf16.msra.mxu0 %v5800
          %6575 = vmatpush.bf16.msra.mxu0 %v5796
          %6576 = vmatpush.bf16.msra.mxu0 %v5792
          %6577 = vmatmul.bf16.gmra.mxu0 %v4243
          %v6578 = vpop.f32.mrf.mxu0
          %v6579 = vadd.f32 %v6561, %v6578
          %v6580 = vpop.f32.mrf.mxu0
          %6581 = vdwg.mxu0
          %6582 = vmatpush.bf16.msra.mxu0 %v5852
          %6583 = vmatpush.bf16.msra.mxu0 %v5848
          %6584 = vmatpush.bf16.msra.mxu0 %v5844
          %6585 = vmatpush.bf16.msra.mxu0 %v5840
          %6586 = vmatpush.bf16.msra.mxu0 %v5836
          %6587 = vmatpush.bf16.msra.mxu0 %v5832
          %6588 = vmatpush.bf16.msra.mxu0 %v5828
          %6589 = vmatpush.bf16.msra.mxu0 %v5824
          %6590 = vmatmul.bf16.gmra.mxu0 %v4244
          %v6591 = vpop.f32.mrf.mxu0
          %v6592 = vadd.f32 %v6579, %v6591
          %v6593 = vpop.f32.mrf.mxu0
          %6594 = vdwg.mxu0
          %6595 = vmatpush.bf16.msra.mxu0 %v5884
          %6596 = vmatpush.bf16.msra.mxu0 %v5880
          %6597 = vmatpush.bf16.msra.mxu0 %v5876
          %6598 = vmatpush.bf16.msra.mxu0 %v5872
          %6599 = vmatpush.bf16.msra.mxu0 %v5868
          %6600 = vmatpush.bf16.msra.mxu0 %v5864
          %6601 = vmatpush.bf16.msra.mxu0 %v5860
          %6602 = vmatpush.bf16.msra.mxu0 %v5856
          %6603 = vmatmul.bf16.gmra.mxu0 %v4245
          %v6604 = vpop.f32.mrf.mxu0
          %v6605 = vadd.f32 %v6592, %v6604
          %v6606 = vpop.f32.mrf.mxu0
          %6607 = vdwg.mxu0
          %6608 = vmatpush.bf16.msra.mxu0 %v5916
          %6609 = vmatpush.bf16.msra.mxu0 %v5912
          %6610 = vmatpush.bf16.msra.mxu0 %v5908
          %6611 = vmatpush.bf16.msra.mxu0 %v5904
          %6612 = vmatpush.bf16.msra.mxu0 %v5900
          %6613 = vmatpush.bf16.msra.mxu0 %v5896
          %6614 = vmatpush.bf16.msra.mxu0 %v5892
          %6615 = vmatpush.bf16.msra.mxu0 %v5888
          %6616 = vmatmul.bf16.gmra.mxu0 %v4246
          %v6617 = vpop.f32.mrf.mxu0
          %v6618 = vadd.f32 %v6605, %v6617
          %v6619 = vpop.f32.mrf.mxu0
          %6620 = vdwg.mxu0
          %6621 = vmatpush.bf16.msra.mxu0 %v5948
          %6622 = vmatpush.bf16.msra.mxu0 %v5944
          %6623 = vmatpush.bf16.msra.mxu0 %v5940
          %6624 = vmatpush.bf16.msra.mxu0 %v5936
          %6625 = vmatpush.bf16.msra.mxu0 %v5932
          %6626 = vmatpush.bf16.msra.mxu0 %v5928
          %6627 = vmatpush.bf16.msra.mxu0 %v5924
          %6628 = vmatpush.bf16.msra.mxu0 %v5920
          %6629 = vmatmul.bf16.gmra.mxu0 %v4247
          %v6630 = vpop.f32.mrf.mxu0
          %v6631 = vadd.f32 %v6618, %v6630
          %v6632 = vpop.f32.mrf.mxu0
          %6633 = vdwg.mxu0
          %6634 = vmatpush.bf16.msra.mxu0 %v5980
          %6635 = vmatpush.bf16.msra.mxu0 %v5976
          %6636 = vmatpush.bf16.msra.mxu0 %v5972
          %6637 = vmatpush.bf16.msra.mxu0 %v5968
          %6638 = vmatpush.bf16.msra.mxu0 %v5964
          %6639 = vmatpush.bf16.msra.mxu0 %v5960
          %6640 = vmatpush.bf16.msra.mxu0 %v5956
          %6641 = vmatpush.bf16.msra.mxu0 %v5952
          %6642 = vmatmul.bf16.gmra.mxu0 %v4248
          %v6643 = vpop.f32.mrf.mxu0
          %v6644 = vadd.f32 %v6631, %v6643
          %v6645 = vpop.f32.mrf.mxu0
          %6646 = vdwg.mxu0
          %6647 = vmatpush.bf16.msra.mxu0 %v6012
          %6648 = vmatpush.bf16.msra.mxu0 %v6008
          %6649 = vmatpush.bf16.msra.mxu0 %v6004
          %6650 = vmatpush.bf16.msra.mxu0 %v6000
          %6651 = vmatpush.bf16.msra.mxu0 %v5996
          %6652 = vmatpush.bf16.msra.mxu0 %v5992
          %6653 = vmatpush.bf16.msra.mxu0 %v5988
          %6654 = vmatpush.bf16.msra.mxu0 %v5984
          %6655 = vmatmul.bf16.gmra.mxu0 %v4249
          %v6656 = vpop.f32.mrf.mxu0
          %v6657 = vadd.f32 %v6644, %v6656
          %v6658 = vpop.f32.mrf.mxu0
          %6659 = vdwg.mxu0
          %6660 = vmatpush.bf16.msra.mxu0 %v6044
          %6661 = vmatpush.bf16.msra.mxu0 %v6040
          %6662 = vmatpush.bf16.msra.mxu0 %v6036
          %6663 = vmatpush.bf16.msra.mxu0 %v6032
          %6664 = vmatpush.bf16.msra.mxu0 %v6028
          %6665 = vmatpush.bf16.msra.mxu0 %v6024
          %6666 = vmatpush.bf16.msra.mxu0 %v6020
          %6667 = vmatpush.bf16.msra.mxu0 %v6016
          %6668 = vmatmul.bf16.gmra.mxu0 %v4250
          %v6669 = vpop.f32.mrf.mxu0
          %v6670 = vadd.f32 %v6657, %v6669
          %v6671 = vpop.f32.mrf.mxu0
          %6672 = vdwg.mxu0
          %6673 = vmatpush.bf16.msra.mxu0 %v6076
          %6674 = vmatpush.bf16.msra.mxu0 %v6072
          %6675 = vmatpush.bf16.msra.mxu0 %v6068
          %6676 = vmatpush.bf16.msra.mxu0 %v6064
          %6677 = vmatpush.bf16.msra.mxu0 %v6060
          %6678 = vmatpush.bf16.msra.mxu0 %v6056
          %6679 = vmatpush.bf16.msra.mxu0 %v6052
          %6680 = vmatpush.bf16.msra.mxu0 %v6048
          %6681 = vmatmul.bf16.gmra.mxu0 %v4251
          %v6682 = vpop.f32.mrf.mxu0
          %v6683 = vadd.f32 %v6670, %v6682
          %v6684 = vpop.f32.mrf.mxu0
          %6685 = vdwg.mxu0
          %6686 = vmatpush.bf16.msra.mxu0 %v6108
          %6687 = vmatpush.bf16.msra.mxu0 %v6104
          %6688 = vmatpush.bf16.msra.mxu0 %v6100
          %6689 = vmatpush.bf16.msra.mxu0 %v6096
          %6690 = vmatpush.bf16.msra.mxu0 %v6092
          %6691 = vmatpush.bf16.msra.mxu0 %v6088
          %6692 = vmatpush.bf16.msra.mxu0 %v6084
          %6693 = vmatpush.bf16.msra.mxu0 %v6080
          %6694 = vmatmul.bf16.gmra.mxu0 %v4252
          %v6695 = vpop.f32.mrf.mxu0
          %v6696 = vadd.f32 %v6683, %v6695
          %v6697 = vpop.f32.mrf.mxu0
          %6698 = vdwg.mxu0
          %6699 = vmatpush.bf16.msra.mxu0 %v6140
          %6700 = vmatpush.bf16.msra.mxu0 %v6136
          %6701 = vmatpush.bf16.msra.mxu0 %v6132
          %6702 = vmatpush.bf16.msra.mxu0 %v6128
          %6703 = vmatpush.bf16.msra.mxu0 %v6124
          %6704 = vmatpush.bf16.msra.mxu0 %v6120
          %6705 = vmatpush.bf16.msra.mxu0 %v6116
          %6706 = vmatpush.bf16.msra.mxu0 %v6112
          %6707 = vmatmul.bf16.gmra.mxu0 %v4253
          %v6708 = vpop.f32.mrf.mxu0
          %v6709 = vadd.f32 %v6696, %v6708
          %v6710 = vpop.f32.mrf.mxu0
          %6711 = vdwg.mxu0
          %6712 = vmatpush.bf16.msra.mxu0 %v6172
          %6713 = vmatpush.bf16.msra.mxu0 %v6168
          %6714 = vmatpush.bf16.msra.mxu0 %v6164
          %6715 = vmatpush.bf16.msra.mxu0 %v6160
          %6716 = vmatpush.bf16.msra.mxu0 %v6156
          %6717 = vmatpush.bf16.msra.mxu0 %v6152
          %6718 = vmatpush.bf16.msra.mxu0 %v6148
          %6719 = vmatpush.bf16.msra.mxu0 %v6144
          %6720 = vmatmul.bf16.gmra.mxu0 %v4254
          %v6721 = vpop.f32.mrf.mxu0
          %v6722 = vadd.f32 %v6709, %v6721
          %v6723 = vpop.f32.mrf.mxu0
          %6724 = vdwg.mxu0
          %6725 = vmatpush.bf16.msra.mxu0 %v5821
          %6726 = vmatpush.bf16.msra.mxu0 %v5817
          %6727 = vmatpush.bf16.msra.mxu0 %v5813
          %6728 = vmatpush.bf16.msra.mxu0 %v5809
          %6729 = vmatpush.bf16.msra.mxu0 %v5805
          %6730 = vmatpush.bf16.msra.mxu0 %v5801
          %6731 = vmatpush.bf16.msra.mxu0 %v5797
          %6732 = vmatpush.bf16.msra.mxu0 %v5793
          %6733 = vmatmul.bf16.gmra.mxu0 %v4243
          %v6734 = vpop.f32.mrf.mxu0
          %v6735 = vadd.f32 %v6562, %v6734
          %v6736 = vpop.f32.mrf.mxu0
          %6737 = vdwg.mxu0
          %6738 = vmatpush.bf16.msra.mxu0 %v5853
          %6739 = vmatpush.bf16.msra.mxu0 %v5849
          %6740 = vmatpush.bf16.msra.mxu0 %v5845
          %6741 = vmatpush.bf16.msra.mxu0 %v5841
          %6742 = vmatpush.bf16.msra.mxu0 %v5837
          %6743 = vmatpush.bf16.msra.mxu0 %v5833
          %6744 = vmatpush.bf16.msra.mxu0 %v5829
          %6745 = vmatpush.bf16.msra.mxu0 %v5825
          %6746 = vmatmul.bf16.gmra.mxu0 %v4244
          %v6747 = vpop.f32.mrf.mxu0
          %v6748 = vadd.f32 %v6735, %v6747
          %v6749 = vpop.f32.mrf.mxu0
          %6750 = vdwg.mxu0
          %6751 = vmatpush.bf16.msra.mxu0 %v5885
          %6752 = vmatpush.bf16.msra.mxu0 %v5881
          %6753 = vmatpush.bf16.msra.mxu0 %v5877
          %6754 = vmatpush.bf16.msra.mxu0 %v5873
          %6755 = vmatpush.bf16.msra.mxu0 %v5869
          %6756 = vmatpush.bf16.msra.mxu0 %v5865
          %6757 = vmatpush.bf16.msra.mxu0 %v5861
          %6758 = vmatpush.bf16.msra.mxu0 %v5857
          %6759 = vmatmul.bf16.gmra.mxu0 %v4245
          %v6760 = vpop.f32.mrf.mxu0
          %v6761 = vadd.f32 %v6748, %v6760
          %v6762 = vpop.f32.mrf.mxu0
          %6763 = vdwg.mxu0
          %6764 = vmatpush.bf16.msra.mxu0 %v5917
          %6765 = vmatpush.bf16.msra.mxu0 %v5913
          %6766 = vmatpush.bf16.msra.mxu0 %v5909
          %6767 = vmatpush.bf16.msra.mxu0 %v5905
          %6768 = vmatpush.bf16.msra.mxu0 %v5901
          %6769 = vmatpush.bf16.msra.mxu0 %v5897
          %6770 = vmatpush.bf16.msra.mxu0 %v5893
          %6771 = vmatpush.bf16.msra.mxu0 %v5889
          %6772 = vmatmul.bf16.gmra.mxu0 %v4246
          %v6773 = vpop.f32.mrf.mxu0
          %v6774 = vadd.f32 %v6761, %v6773
          %v6775 = vpop.f32.mrf.mxu0
          %6776 = vdwg.mxu0
          %6777 = vmatpush.bf16.msra.mxu0 %v5949
          %6778 = vmatpush.bf16.msra.mxu0 %v5945
          %6779 = vmatpush.bf16.msra.mxu0 %v5941
          %6780 = vmatpush.bf16.msra.mxu0 %v5937
          %6781 = vmatpush.bf16.msra.mxu0 %v5933
          %6782 = vmatpush.bf16.msra.mxu0 %v5929
          %6783 = vmatpush.bf16.msra.mxu0 %v5925
          %6784 = vmatpush.bf16.msra.mxu0 %v5921
          %6785 = vmatmul.bf16.gmra.mxu0 %v4247
          %v6786 = vpop.f32.mrf.mxu0
          %v6787 = vadd.f32 %v6774, %v6786
          %v6788 = vpop.f32.mrf.mxu0
          %6789 = vdwg.mxu0
          %6790 = vmatpush.bf16.msra.mxu0 %v5981
          %6791 = vmatpush.bf16.msra.mxu0 %v5977
          %6792 = vmatpush.bf16.msra.mxu0 %v5973
          %6793 = vmatpush.bf16.msra.mxu0 %v5969
          %6794 = vmatpush.bf16.msra.mxu0 %v5965
          %6795 = vmatpush.bf16.msra.mxu0 %v5961
          %6796 = vmatpush.bf16.msra.mxu0 %v5957
          %6797 = vmatpush.bf16.msra.mxu0 %v5953
          %6798 = vmatmul.bf16.gmra.mxu0 %v4248
          %v6799 = vpop.f32.mrf.mxu0
          %v6800 = vadd.f32 %v6787, %v6799
          %v6801 = vpop.f32.mrf.mxu0
          %6802 = vdwg.mxu0
          %6803 = vmatpush.bf16.msra.mxu0 %v6013
          %6804 = vmatpush.bf16.msra.mxu0 %v6009
          %6805 = vmatpush.bf16.msra.mxu0 %v6005
          %6806 = vmatpush.bf16.msra.mxu0 %v6001
          %6807 = vmatpush.bf16.msra.mxu0 %v5997
          %6808 = vmatpush.bf16.msra.mxu0 %v5993
          %6809 = vmatpush.bf16.msra.mxu0 %v5989
          %6810 = vmatpush.bf16.msra.mxu0 %v5985
          %6811 = vmatmul.bf16.gmra.mxu0 %v4249
          %v6812 = vpop.f32.mrf.mxu0
          %v6813 = vadd.f32 %v6800, %v6812
          %v6814 = vpop.f32.mrf.mxu0
          %6815 = vdwg.mxu0
          %6816 = vmatpush.bf16.msra.mxu0 %v6045
          %6817 = vmatpush.bf16.msra.mxu0 %v6041
          %6818 = vmatpush.bf16.msra.mxu0 %v6037
          %6819 = vmatpush.bf16.msra.mxu0 %v6033
          %6820 = vmatpush.bf16.msra.mxu0 %v6029
          %6821 = vmatpush.bf16.msra.mxu0 %v6025
          %6822 = vmatpush.bf16.msra.mxu0 %v6021
          %6823 = vmatpush.bf16.msra.mxu0 %v6017
          %6824 = vmatmul.bf16.gmra.mxu0 %v4250
          %v6825 = vpop.f32.mrf.mxu0
          %v6826 = vadd.f32 %v6813, %v6825
          %v6827 = vpop.f32.mrf.mxu0
          %6828 = vdwg.mxu0
          %6829 = vmatpush.bf16.msra.mxu0 %v6077
          %6830 = vmatpush.bf16.msra.mxu0 %v6073
          %6831 = vmatpush.bf16.msra.mxu0 %v6069
          %6832 = vmatpush.bf16.msra.mxu0 %v6065
          %6833 = vmatpush.bf16.msra.mxu0 %v6061
          %6834 = vmatpush.bf16.msra.mxu0 %v6057
          %6835 = vmatpush.bf16.msra.mxu0 %v6053
          %6836 = vmatpush.bf16.msra.mxu0 %v6049
          %6837 = vmatmul.bf16.gmra.mxu0 %v4251
          %v6838 = vpop.f32.mrf.mxu0
          %v6839 = vadd.f32 %v6826, %v6838
          %v6840 = vpop.f32.mrf.mxu0
          %6841 = vdwg.mxu0
          %6842 = vmatpush.bf16.msra.mxu0 %v6109
          %6843 = vmatpush.bf16.msra.mxu0 %v6105
          %6844 = vmatpush.bf16.msra.mxu0 %v6101
          %6845 = vmatpush.bf16.msra.mxu0 %v6097
          %6846 = vmatpush.bf16.msra.mxu0 %v6093
          %6847 = vmatpush.bf16.msra.mxu0 %v6089
          %6848 = vmatpush.bf16.msra.mxu0 %v6085
          %6849 = vmatpush.bf16.msra.mxu0 %v6081
          %6850 = vmatmul.bf16.gmra.mxu0 %v4252
          %v6851 = vpop.f32.mrf.mxu0
          %v6852 = vadd.f32 %v6839, %v6851
          %v6853 = vpop.f32.mrf.mxu0
          %6854 = vdwg.mxu0
          %6855 = vmatpush.bf16.msra.mxu0 %v6141
          %6856 = vmatpush.bf16.msra.mxu0 %v6137
          %6857 = vmatpush.bf16.msra.mxu0 %v6133
          %6858 = vmatpush.bf16.msra.mxu0 %v6129
          %6859 = vmatpush.bf16.msra.mxu0 %v6125
          %6860 = vmatpush.bf16.msra.mxu0 %v6121
          %6861 = vmatpush.bf16.msra.mxu0 %v6117
          %6862 = vmatpush.bf16.msra.mxu0 %v6113
          %6863 = vmatmul.bf16.gmra.mxu0 %v4253
          %v6864 = vpop.f32.mrf.mxu0
          %v6865 = vadd.f32 %v6852, %v6864
          %v6866 = vpop.f32.mrf.mxu0
          %6867 = vdwg.mxu0
          %6868 = vmatpush.bf16.msra.mxu0 %v6173
          %6869 = vmatpush.bf16.msra.mxu0 %v6169
          %6870 = vmatpush.bf16.msra.mxu0 %v6165
          %6871 = vmatpush.bf16.msra.mxu0 %v6161
          %6872 = vmatpush.bf16.msra.mxu0 %v6157
          %6873 = vmatpush.bf16.msra.mxu0 %v6153
          %6874 = vmatpush.bf16.msra.mxu0 %v6149
          %6875 = vmatpush.bf16.msra.mxu0 %v6145
          %6876 = vmatmul.bf16.gmra.mxu0 %v4254
          %v6877 = vpop.f32.mrf.mxu0
          %v6878 = vadd.f32 %v6865, %v6877
          %v6879 = vpop.f32.mrf.mxu0
          %6880 = vdwg.mxu0
          %6881 = vmatpush.bf16.msra.mxu0 %v5822
          %6882 = vmatpush.bf16.msra.mxu0 %v5818
          %6883 = vmatpush.bf16.msra.mxu0 %v5814
          %6884 = vmatpush.bf16.msra.mxu0 %v5810
          %6885 = vmatpush.bf16.msra.mxu0 %v5806
          %6886 = vmatpush.bf16.msra.mxu0 %v5802
          %6887 = vmatpush.bf16.msra.mxu0 %v5798
          %6888 = vmatpush.bf16.msra.mxu0 %v5794
          %6889 = vmatmul.bf16.gmra.mxu0 %v4243
          %v6890 = vpop.f32.mrf.mxu0
          %v6891 = vadd.f32 %v6563, %v6890
          %v6892 = vpop.f32.mrf.mxu0
          %6893 = vdwg.mxu0
          %6894 = vmatpush.bf16.msra.mxu0 %v5854
          %6895 = vmatpush.bf16.msra.mxu0 %v5850
          %6896 = vmatpush.bf16.msra.mxu0 %v5846
          %6897 = vmatpush.bf16.msra.mxu0 %v5842
          %6898 = vmatpush.bf16.msra.mxu0 %v5838
          %6899 = vmatpush.bf16.msra.mxu0 %v5834
          %6900 = vmatpush.bf16.msra.mxu0 %v5830
          %6901 = vmatpush.bf16.msra.mxu0 %v5826
          %6902 = vmatmul.bf16.gmra.mxu0 %v4244
          %v6903 = vpop.f32.mrf.mxu0
          %v6904 = vadd.f32 %v6891, %v6903
          %v6905 = vpop.f32.mrf.mxu0
          %6906 = vdwg.mxu0
          %6907 = vmatpush.bf16.msra.mxu0 %v5886
          %6908 = vmatpush.bf16.msra.mxu0 %v5882
          %6909 = vmatpush.bf16.msra.mxu0 %v5878
          %6910 = vmatpush.bf16.msra.mxu0 %v5874
          %6911 = vmatpush.bf16.msra.mxu0 %v5870
          %6912 = vmatpush.bf16.msra.mxu0 %v5866
          %6913 = vmatpush.bf16.msra.mxu0 %v5862
          %6914 = vmatpush.bf16.msra.mxu0 %v5858
          %6915 = vmatmul.bf16.gmra.mxu0 %v4245
          %v6916 = vpop.f32.mrf.mxu0
          %v6917 = vadd.f32 %v6904, %v6916
          %v6918 = vpop.f32.mrf.mxu0
          %6919 = vdwg.mxu0
          %6920 = vmatpush.bf16.msra.mxu0 %v5918
          %6921 = vmatpush.bf16.msra.mxu0 %v5914
          %6922 = vmatpush.bf16.msra.mxu0 %v5910
          %6923 = vmatpush.bf16.msra.mxu0 %v5906
          %6924 = vmatpush.bf16.msra.mxu0 %v5902
          %6925 = vmatpush.bf16.msra.mxu0 %v5898
          %6926 = vmatpush.bf16.msra.mxu0 %v5894
          %6927 = vmatpush.bf16.msra.mxu0 %v5890
          %6928 = vmatmul.bf16.gmra.mxu0 %v4246
          %v6929 = vpop.f32.mrf.mxu0
          %v6930 = vadd.f32 %v6917, %v6929
          %v6931 = vpop.f32.mrf.mxu0
          %6932 = vdwg.mxu0
          %6933 = vmatpush.bf16.msra.mxu0 %v5950
          %6934 = vmatpush.bf16.msra.mxu0 %v5946
          %6935 = vmatpush.bf16.msra.mxu0 %v5942
          %6936 = vmatpush.bf16.msra.mxu0 %v5938
          %6937 = vmatpush.bf16.msra.mxu0 %v5934
          %6938 = vmatpush.bf16.msra.mxu0 %v5930
          %6939 = vmatpush.bf16.msra.mxu0 %v5926
          %6940 = vmatpush.bf16.msra.mxu0 %v5922
          %6941 = vmatmul.bf16.gmra.mxu0 %v4247
          %v6942 = vpop.f32.mrf.mxu0
          %v6943 = vadd.f32 %v6930, %v6942
          %v6944 = vpop.f32.mrf.mxu0
          %6945 = vdwg.mxu0
          %6946 = vmatpush.bf16.msra.mxu0 %v5982
          %6947 = vmatpush.bf16.msra.mxu0 %v5978
          %6948 = vmatpush.bf16.msra.mxu0 %v5974
          %6949 = vmatpush.bf16.msra.mxu0 %v5970
          %6950 = vmatpush.bf16.msra.mxu0 %v5966
          %6951 = vmatpush.bf16.msra.mxu0 %v5962
          %6952 = vmatpush.bf16.msra.mxu0 %v5958
          %6953 = vmatpush.bf16.msra.mxu0 %v5954
          %6954 = vmatmul.bf16.gmra.mxu0 %v4248
          %v6955 = vpop.f32.mrf.mxu0
          %v6956 = vadd.f32 %v6943, %v6955
          %v6957 = vpop.f32.mrf.mxu0
          %6958 = vdwg.mxu0
          %6959 = vmatpush.bf16.msra.mxu0 %v6014
          %6960 = vmatpush.bf16.msra.mxu0 %v6010
          %6961 = vmatpush.bf16.msra.mxu0 %v6006
          %6962 = vmatpush.bf16.msra.mxu0 %v6002
          %6963 = vmatpush.bf16.msra.mxu0 %v5998
          %6964 = vmatpush.bf16.msra.mxu0 %v5994
          %6965 = vmatpush.bf16.msra.mxu0 %v5990
          %6966 = vmatpush.bf16.msra.mxu0 %v5986
          %6967 = vmatmul.bf16.gmra.mxu0 %v4249
          %v6968 = vpop.f32.mrf.mxu0
          %v6969 = vadd.f32 %v6956, %v6968
          %v6970 = vpop.f32.mrf.mxu0
          %6971 = vdwg.mxu0
          %6972 = vmatpush.bf16.msra.mxu0 %v6046
          %6973 = vmatpush.bf16.msra.mxu0 %v6042
          %6974 = vmatpush.bf16.msra.mxu0 %v6038
          %6975 = vmatpush.bf16.msra.mxu0 %v6034
          %6976 = vmatpush.bf16.msra.mxu0 %v6030
          %6977 = vmatpush.bf16.msra.mxu0 %v6026
          %6978 = vmatpush.bf16.msra.mxu0 %v6022
          %6979 = vmatpush.bf16.msra.mxu0 %v6018
          %6980 = vmatmul.bf16.gmra.mxu0 %v4250
          %v6981 = vpop.f32.mrf.mxu0
          %v6982 = vadd.f32 %v6969, %v6981
          %v6983 = vpop.f32.mrf.mxu0
          %6984 = vdwg.mxu0
          %6985 = vmatpush.bf16.msra.mxu0 %v6078
          %6986 = vmatpush.bf16.msra.mxu0 %v6074
          %6987 = vmatpush.bf16.msra.mxu0 %v6070
          %6988 = vmatpush.bf16.msra.mxu0 %v6066
          %6989 = vmatpush.bf16.msra.mxu0 %v6062
          %6990 = vmatpush.bf16.msra.mxu0 %v6058
          %6991 = vmatpush.bf16.msra.mxu0 %v6054
          %6992 = vmatpush.bf16.msra.mxu0 %v6050
          %6993 = vmatmul.bf16.gmra.mxu0 %v4251
          %v6994 = vpop.f32.mrf.mxu0
          %v6995 = vadd.f32 %v6982, %v6994
          %v6996 = vpop.f32.mrf.mxu0
          %6997 = vdwg.mxu0
          %6998 = vmatpush.bf16.msra.mxu0 %v6110
          %6999 = vmatpush.bf16.msra.mxu0 %v6106
          %7000 = vmatpush.bf16.msra.mxu0 %v6102
          %7001 = vmatpush.bf16.msra.mxu0 %v6098
          %7002 = vmatpush.bf16.msra.mxu0 %v6094
          %7003 = vmatpush.bf16.msra.mxu0 %v6090
          %7004 = vmatpush.bf16.msra.mxu0 %v6086
          %7005 = vmatpush.bf16.msra.mxu0 %v6082
          %7006 = vmatmul.bf16.gmra.mxu0 %v4252
          %v7007 = vpop.f32.mrf.mxu0
          %v7008 = vadd.f32 %v6995, %v7007
          %v7009 = vpop.f32.mrf.mxu0
          %7010 = vdwg.mxu0
          %7011 = vmatpush.bf16.msra.mxu0 %v6142
          %7012 = vmatpush.bf16.msra.mxu0 %v6138
          %7013 = vmatpush.bf16.msra.mxu0 %v6134
          %7014 = vmatpush.bf16.msra.mxu0 %v6130
          %7015 = vmatpush.bf16.msra.mxu0 %v6126
          %7016 = vmatpush.bf16.msra.mxu0 %v6122
          %7017 = vmatpush.bf16.msra.mxu0 %v6118
          %7018 = vmatpush.bf16.msra.mxu0 %v6114
          %7019 = vmatmul.bf16.gmra.mxu0 %v4253
          %v7020 = vpop.f32.mrf.mxu0
          %v7021 = vadd.f32 %v7008, %v7020
          %v7022 = vpop.f32.mrf.mxu0
          %7023 = vdwg.mxu0
          %7024 = vmatpush.bf16.msra.mxu0 %v6174
          %7025 = vmatpush.bf16.msra.mxu0 %v6170
          %7026 = vmatpush.bf16.msra.mxu0 %v6166
          %7027 = vmatpush.bf16.msra.mxu0 %v6162
          %7028 = vmatpush.bf16.msra.mxu0 %v6158
          %7029 = vmatpush.bf16.msra.mxu0 %v6154
          %7030 = vmatpush.bf16.msra.mxu0 %v6150
          %7031 = vmatpush.bf16.msra.mxu0 %v6146
          %7032 = vmatmul.bf16.gmra.mxu0 %v4254
          %v7033 = vpop.f32.mrf.mxu0
          %v7034 = vadd.f32 %v7021, %v7033
          %v7035 = vpop.f32.mrf.mxu0
          %7036 = vdwg.mxu0
          %7037 = vmatpush.bf16.msra.mxu0 %v5823
          %7038 = vmatpush.bf16.msra.mxu0 %v5819
          %7039 = vmatpush.bf16.msra.mxu0 %v5815
          %7040 = vmatpush.bf16.msra.mxu0 %v5811
          %7041 = vmatpush.bf16.msra.mxu0 %v5807
          %7042 = vmatpush.bf16.msra.mxu0 %v5803
          %7043 = vmatpush.bf16.msra.mxu0 %v5799
          %7044 = vmatpush.bf16.msra.mxu0 %v5795
          %7045 = vmatmul.bf16.gmra.mxu0 %v4243
          %v7046 = vpop.f32.mrf.mxu0
          %v7047 = vadd.f32 %v6564, %v7046
          %v7048 = vpop.f32.mrf.mxu0
          %7049 = vdwg.mxu0
          %7050 = vmatpush.bf16.msra.mxu0 %v5855
          %7051 = vmatpush.bf16.msra.mxu0 %v5851
          %7052 = vmatpush.bf16.msra.mxu0 %v5847
          %7053 = vmatpush.bf16.msra.mxu0 %v5843
          %7054 = vmatpush.bf16.msra.mxu0 %v5839
          %7055 = vmatpush.bf16.msra.mxu0 %v5835
          %7056 = vmatpush.bf16.msra.mxu0 %v5831
          %7057 = vmatpush.bf16.msra.mxu0 %v5827
          %7058 = vmatmul.bf16.gmra.mxu0 %v4244
          %v7059 = vpop.f32.mrf.mxu0
          %v7060 = vadd.f32 %v7047, %v7059
          %v7061 = vpop.f32.mrf.mxu0
          %7062 = vdwg.mxu0
          %7063 = vmatpush.bf16.msra.mxu0 %v5887
          %7064 = vmatpush.bf16.msra.mxu0 %v5883
          %7065 = vmatpush.bf16.msra.mxu0 %v5879
          %7066 = vmatpush.bf16.msra.mxu0 %v5875
          %7067 = vmatpush.bf16.msra.mxu0 %v5871
          %7068 = vmatpush.bf16.msra.mxu0 %v5867
          %7069 = vmatpush.bf16.msra.mxu0 %v5863
          %7070 = vmatpush.bf16.msra.mxu0 %v5859
          %7071 = vmatmul.bf16.gmra.mxu0 %v4245
          %v7072 = vpop.f32.mrf.mxu0
          %v7073 = vadd.f32 %v7060, %v7072
          %v7074 = vpop.f32.mrf.mxu0
          %7075 = vdwg.mxu0
          %7076 = vmatpush.bf16.msra.mxu0 %v5919
          %7077 = vmatpush.bf16.msra.mxu0 %v5915
          %7078 = vmatpush.bf16.msra.mxu0 %v5911
          %7079 = vmatpush.bf16.msra.mxu0 %v5907
          %7080 = vmatpush.bf16.msra.mxu0 %v5903
          %7081 = vmatpush.bf16.msra.mxu0 %v5899
          %7082 = vmatpush.bf16.msra.mxu0 %v5895
          %7083 = vmatpush.bf16.msra.mxu0 %v5891
          %7084 = vmatmul.bf16.gmra.mxu0 %v4246
          %v7085 = vpop.f32.mrf.mxu0
          %v7086 = vadd.f32 %v7073, %v7085
          %v7087 = vpop.f32.mrf.mxu0
          %7088 = vdwg.mxu0
          %7089 = vmatpush.bf16.msra.mxu0 %v5951
          %7090 = vmatpush.bf16.msra.mxu0 %v5947
          %7091 = vmatpush.bf16.msra.mxu0 %v5943
          %7092 = vmatpush.bf16.msra.mxu0 %v5939
          %7093 = vmatpush.bf16.msra.mxu0 %v5935
          %7094 = vmatpush.bf16.msra.mxu0 %v5931
          %7095 = vmatpush.bf16.msra.mxu0 %v5927
          %7096 = vmatpush.bf16.msra.mxu0 %v5923
          %7097 = vmatmul.bf16.gmra.mxu0 %v4247
          %v7098 = vpop.f32.mrf.mxu0
          %v7099 = vadd.f32 %v7086, %v7098
          %v7100 = vpop.f32.mrf.mxu0
          %7101 = vdwg.mxu0
          %7102 = vmatpush.bf16.msra.mxu0 %v5983
          %7103 = vmatpush.bf16.msra.mxu0 %v5979
          %7104 = vmatpush.bf16.msra.mxu0 %v5975
          %7105 = vmatpush.bf16.msra.mxu0 %v5971
          %7106 = vmatpush.bf16.msra.mxu0 %v5967
          %7107 = vmatpush.bf16.msra.mxu0 %v5963
          %7108 = vmatpush.bf16.msra.mxu0 %v5959
          %7109 = vmatpush.bf16.msra.mxu0 %v5955
          %7110 = vmatmul.bf16.gmra.mxu0 %v4248
          %v7111 = vpop.f32.mrf.mxu0
          %v7112 = vadd.f32 %v7099, %v7111
          %v7113 = vpop.f32.mrf.mxu0
          %7114 = vdwg.mxu0
          %7115 = vmatpush.bf16.msra.mxu0 %v6015
          %7116 = vmatpush.bf16.msra.mxu0 %v6011
          %7117 = vmatpush.bf16.msra.mxu0 %v6007
          %7118 = vmatpush.bf16.msra.mxu0 %v6003
          %7119 = vmatpush.bf16.msra.mxu0 %v5999
          %7120 = vmatpush.bf16.msra.mxu0 %v5995
          %7121 = vmatpush.bf16.msra.mxu0 %v5991
          %7122 = vmatpush.bf16.msra.mxu0 %v5987
          %7123 = vmatmul.bf16.gmra.mxu0 %v4249
          %v7124 = vpop.f32.mrf.mxu0
          %v7125 = vadd.f32 %v7112, %v7124
          %v7126 = vpop.f32.mrf.mxu0
          %7127 = vdwg.mxu0
          %7128 = vmatpush.bf16.msra.mxu0 %v6047
          %7129 = vmatpush.bf16.msra.mxu0 %v6043
          %7130 = vmatpush.bf16.msra.mxu0 %v6039
          %7131 = vmatpush.bf16.msra.mxu0 %v6035
          %7132 = vmatpush.bf16.msra.mxu0 %v6031
          %7133 = vmatpush.bf16.msra.mxu0 %v6027
          %7134 = vmatpush.bf16.msra.mxu0 %v6023
          %7135 = vmatpush.bf16.msra.mxu0 %v6019
          %7136 = vmatmul.bf16.gmra.mxu0 %v4250
          %v7137 = vpop.f32.mrf.mxu0
          %v7138 = vadd.f32 %v7125, %v7137
          %v7139 = vpop.f32.mrf.mxu0
          %7140 = vdwg.mxu0
          %7141 = vmatpush.bf16.msra.mxu0 %v6079
          %7142 = vmatpush.bf16.msra.mxu0 %v6075
          %7143 = vmatpush.bf16.msra.mxu0 %v6071
          %7144 = vmatpush.bf16.msra.mxu0 %v6067
          %7145 = vmatpush.bf16.msra.mxu0 %v6063
          %7146 = vmatpush.bf16.msra.mxu0 %v6059
          %7147 = vmatpush.bf16.msra.mxu0 %v6055
          %7148 = vmatpush.bf16.msra.mxu0 %v6051
          %7149 = vmatmul.bf16.gmra.mxu0 %v4251
          %v7150 = vpop.f32.mrf.mxu0
          %v7151 = vadd.f32 %v7138, %v7150
          %v7152 = vpop.f32.mrf.mxu0
          %7153 = vdwg.mxu0
          %7154 = vmatpush.bf16.msra.mxu0 %v6111
          %7155 = vmatpush.bf16.msra.mxu0 %v6107
          %7156 = vmatpush.bf16.msra.mxu0 %v6103
          %7157 = vmatpush.bf16.msra.mxu0 %v6099
          %7158 = vmatpush.bf16.msra.mxu0 %v6095
          %7159 = vmatpush.bf16.msra.mxu0 %v6091
          %7160 = vmatpush.bf16.msra.mxu0 %v6087
          %7161 = vmatpush.bf16.msra.mxu0 %v6083
          %7162 = vmatmul.bf16.gmra.mxu0 %v4252
          %v7163 = vpop.f32.mrf.mxu0
          %v7164 = vadd.f32 %v7151, %v7163
          %v7165 = vpop.f32.mrf.mxu0
          %7166 = vdwg.mxu0
          %7167 = vmatpush.bf16.msra.mxu0 %v6143
          %7168 = vmatpush.bf16.msra.mxu0 %v6139
          %7169 = vmatpush.bf16.msra.mxu0 %v6135
          %7170 = vmatpush.bf16.msra.mxu0 %v6131
          %7171 = vmatpush.bf16.msra.mxu0 %v6127
          %7172 = vmatpush.bf16.msra.mxu0 %v6123
          %7173 = vmatpush.bf16.msra.mxu0 %v6119
          %7174 = vmatpush.bf16.msra.mxu0 %v6115
          %7175 = vmatmul.bf16.gmra.mxu0 %v4253
          %v7176 = vpop.f32.mrf.mxu0
          %v7177 = vadd.f32 %v7164, %v7176
          %v7178 = vpop.f32.mrf.mxu0
          %7179 = vdwg.mxu0
          %7180 = vmatpush.bf16.msra.mxu0 %v6175
          %7181 = vmatpush.bf16.msra.mxu0 %v6171
          %7182 = vmatpush.bf16.msra.mxu0 %v6167
          %7183 = vmatpush.bf16.msra.mxu0 %v6163
          %7184 = vmatpush.bf16.msra.mxu0 %v6159
          %7185 = vmatpush.bf16.msra.mxu0 %v6155
          %7186 = vmatpush.bf16.msra.mxu0 %v6151
          %7187 = vmatpush.bf16.msra.mxu0 %v6147
          %7188 = vmatmul.bf16.gmra.mxu0 %v4254
          %v7189 = vpop.f32.mrf.mxu0
          %v7190 = vadd.f32 %v7177, %v7189
          %v7191 = vpop.f32.mrf.mxu0
          %7192 = vdwg.mxu0
          %v7193 = vld [vmem:[#allocation17] sm:$0xf]
          %v7195 = vperm.slane %v7193, 0
          %v7196 = vperm.slane %v7193, 1
          %v7197 = vperm.slane %v7193, 2
          %v7198 = vperm.slane %v7193, 3
          %v7203 = vmul.f32 %v6722, %v7195
          %v7204 = vmul.f32 %v6878, %v7196
          %v7205 = vmul.f32 %v7034, %v7197
          %v7206 = vmul.f32 %v7190, %v7198
          %v7207 = vld [vmem:[#allocation18] sm:$0xf]
          %v7209 = vperm.slane %v7207, 0
          %v7210 = vperm.slane %v7207, 1
          %v7211 = vperm.slane %v7207, 2
          %v7212 = vperm.slane %v7207, 3
          %v7217 = vadd.f32 %v7203, %v7209
          %v7218 = vadd.f32 %v7204, %v7210
          %v7219 = vadd.f32 %v7205, %v7211
          %v7220 = vadd.f32 %v7206, %v7212
          %v7221 = vmax.f32 %v7217, 0.0
          %v7222 = vmax.f32 %v7218, 0.0
          %v7223 = vmax.f32 %v7219, 0.0
          %v7224 = vmax.f32 %v7220, 0.0
          %v7225 = vpack.c.bf16 %v7221, %v7221
          %v7226 = vpack.c.bf16 %v7222, %v7222
          %v7227 = vpack.c.bf16 %v7223, %v7223
          %v7228 = vpack.c.bf16 %v7224, %v7224
          %v7229 = vld [vmem:[%s11] sm:$0xf]
          %v7230 = vld [vmem:[%s11 + $0x4] sm:$0xf]
          %v7231 = vld [vmem:[%s11 + $0x8] sm:$0xf]
          %v7232 = vld [vmem:[%s11 + $0xc] sm:$0xf]
          %v7233 = vld [vmem:[%s11 + $0x10] sm:$0xf]
          %v7234 = vld [vmem:[%s11 + $0x14] sm:$0xf]
          %v7235 = vld [vmem:[%s11 + $0x18] sm:$0xf]
          %v7236 = vld [vmem:[%s11 + $0x1c] sm:$0xf]
          %v7237 = vld [vmem:[%s11 + $0x20] sm:$0xf]
          %v7238 = vld [vmem:[%s11 + $0x24] sm:$0xf]
          %v7239 = vld [vmem:[%s11 + $0x28] sm:$0xf]
          %v7240 = vld [vmem:[%s11 + $0x2c] sm:$0xf]
          %v7241 = vld [vmem:[%s11 + $0x30] sm:$0xf]
          %v7242 = vld [vmem:[%s11 + $0x34] sm:$0xf]
          %v7243 = vld [vmem:[%s11 + $0x38] sm:$0xf]
          %v7244 = vld [vmem:[%s11 + $0x3c] sm:$0xf]
          %v7245 = vld [vmem:[%s11 + $0x40] sm:$0xf]
          %v7246 = vld [vmem:[%s11 + $0x44] sm:$0xf]
          %v7247 = vld [vmem:[%s11 + $0x48] sm:$0xf]
          %v7248 = vld [vmem:[%s11 + $0x4c] sm:$0xf]
          %v7249 = vld [vmem:[%s11 + $0x50] sm:$0xf]
          %v7250 = vld [vmem:[%s11 + $0x54] sm:$0xf]
          %v7251 = vld [vmem:[%s11 + $0x58] sm:$0xf]
          %v7252 = vld [vmem:[%s11 + $0x5c] sm:$0xf]
          %v7253 = vld [vmem:[%s11 + $0x60] sm:$0xf]
          %v7254 = vld [vmem:[%s11 + $0x64] sm:$0xf]
          %v7255 = vld [vmem:[%s11 + $0x68] sm:$0xf]
          %v7256 = vld [vmem:[%s11 + $0x6c] sm:$0xf]
          %v7257 = vld [vmem:[%s11 + $0x70] sm:$0xf]
          %v7258 = vld [vmem:[%s11 + $0x74] sm:$0xf]
          %v7259 = vld [vmem:[%s11 + $0x78] sm:$0xf]
          %v7260 = vld [vmem:[%s11 + $0x7c] sm:$0xf]
          %v7261 = vld [vmem:[%s11 + $0x80] sm:$0xf]
          %v7262 = vld [vmem:[%s11 + $0x84] sm:$0xf]
          %v7263 = vld [vmem:[%s11 + $0x88] sm:$0xf]
          %v7264 = vld [vmem:[%s11 + $0x8c] sm:$0xf]
          %v7265 = vld [vmem:[%s11 + $0x90] sm:$0xf]
          %v7266 = vld [vmem:[%s11 + $0x94] sm:$0xf]
          %v7267 = vld [vmem:[%s11 + $0x98] sm:$0xf]
          %v7268 = vld [vmem:[%s11 + $0x9c] sm:$0xf]
          %v7269 = vld [vmem:[%s11 + $0xa0] sm:$0xf]
          %v7270 = vld [vmem:[%s11 + $0xa4] sm:$0xf]
          %v7271 = vld [vmem:[%s11 + $0xa8] sm:$0xf]
          %v7272 = vld [vmem:[%s11 + $0xac] sm:$0xf]
          %v7273 = vld [vmem:[%s11 + $0xb0] sm:$0xf]
          %v7274 = vld [vmem:[%s11 + $0xb4] sm:$0xf]
          %v7275 = vld [vmem:[%s11 + $0xb8] sm:$0xf]
          %v7276 = vld [vmem:[%s11 + $0xbc] sm:$0xf]
          %v7277 = vld [vmem:[%s11 + $0xc0] sm:$0xf]
          %v7278 = vld [vmem:[%s11 + $0xc4] sm:$0xf]
          %v7279 = vld [vmem:[%s11 + $0xc8] sm:$0xf]
          %v7280 = vld [vmem:[%s11 + $0xcc] sm:$0xf]
          %v7281 = vld [vmem:[%s11 + $0xd0] sm:$0xf]
          %v7282 = vld [vmem:[%s11 + $0xd4] sm:$0xf]
          %v7283 = vld [vmem:[%s11 + $0xd8] sm:$0xf]
          %v7284 = vld [vmem:[%s11 + $0xdc] sm:$0xf]
          %v7285 = vld [vmem:[%s11 + $0xe0] sm:$0xf]
          %v7286 = vld [vmem:[%s11 + $0xe4] sm:$0xf]
          %v7287 = vld [vmem:[%s11 + $0xe8] sm:$0xf]
          %v7288 = vld [vmem:[%s11 + $0xec] sm:$0xf]
          %v7289 = vld [vmem:[%s11 + $0xf0] sm:$0xf]
          %v7290 = vld [vmem:[%s11 + $0xf4] sm:$0xf]
          %v7291 = vld [vmem:[%s11 + $0xf8] sm:$0xf]
          %v7292 = vld [vmem:[%s11 + $0xfc] sm:$0xf]
          %v7293 = vld [vmem:[#allocation20] sm:$0x1]
          %v7358 = vunpack.c.l.b16 %v7229
          %v7359 = vunpack.c.l.b16 %v7230
          %v7360 = vunpack.c.l.b16 %v7231
          %v7361 = vunpack.c.l.b16 %v7232
          %v7362 = vunpack.c.l.b16 %v7233
          %v7363 = vunpack.c.l.b16 %v7234
          %v7364 = vunpack.c.l.b16 %v7235
          %v7365 = vunpack.c.l.b16 %v7236
          %v7366 = vunpack.c.l.b16 %v7237
          %v7367 = vunpack.c.l.b16 %v7238
          %v7368 = vunpack.c.l.b16 %v7239
          %v7369 = vunpack.c.l.b16 %v7240
          %v7370 = vunpack.c.l.b16 %v7241
          %v7371 = vunpack.c.l.b16 %v7242
          %v7372 = vunpack.c.l.b16 %v7243
          %v7373 = vunpack.c.l.b16 %v7244
          %v7374 = vunpack.c.l.b16 %v7245
          %v7375 = vunpack.c.l.b16 %v7246
          %v7376 = vunpack.c.l.b16 %v7247
          %v7377 = vunpack.c.l.b16 %v7248
          %v7378 = vunpack.c.l.b16 %v7249
          %v7379 = vunpack.c.l.b16 %v7250
          %v7380 = vunpack.c.l.b16 %v7251
          %v7381 = vunpack.c.l.b16 %v7252
          %v7382 = vunpack.c.l.b16 %v7253
          %v7383 = vunpack.c.l.b16 %v7254
          %v7384 = vunpack.c.l.b16 %v7255
          %v7385 = vunpack.c.l.b16 %v7256
          %v7386 = vunpack.c.l.b16 %v7257
          %v7387 = vunpack.c.l.b16 %v7258
          %v7388 = vunpack.c.l.b16 %v7259
          %v7389 = vunpack.c.l.b16 %v7260
          %v7390 = vunpack.c.l.b16 %v7261
          %v7391 = vunpack.c.l.b16 %v7262
          %v7392 = vunpack.c.l.b16 %v7263
          %v7393 = vunpack.c.l.b16 %v7264
          %v7394 = vunpack.c.l.b16 %v7265
          %v7395 = vunpack.c.l.b16 %v7266
          %v7396 = vunpack.c.l.b16 %v7267
          %v7397 = vunpack.c.l.b16 %v7268
          %v7398 = vunpack.c.l.b16 %v7269
          %v7399 = vunpack.c.l.b16 %v7270
          %v7400 = vunpack.c.l.b16 %v7271
          %v7401 = vunpack.c.l.b16 %v7272
          %v7402 = vunpack.c.l.b16 %v7273
          %v7403 = vunpack.c.l.b16 %v7274
          %v7404 = vunpack.c.l.b16 %v7275
          %v7405 = vunpack.c.l.b16 %v7276
          %v7406 = vunpack.c.l.b16 %v7277
          %v7407 = vunpack.c.l.b16 %v7278
          %v7408 = vunpack.c.l.b16 %v7279
          %v7409 = vunpack.c.l.b16 %v7280
          %v7410 = vunpack.c.l.b16 %v7281
          %v7411 = vunpack.c.l.b16 %v7282
          %v7412 = vunpack.c.l.b16 %v7283
          %v7413 = vunpack.c.l.b16 %v7284
          %v7414 = vunpack.c.l.b16 %v7285
          %v7415 = vunpack.c.l.b16 %v7286
          %v7416 = vunpack.c.l.b16 %v7287
          %v7417 = vunpack.c.l.b16 %v7288
          %v7418 = vunpack.c.l.b16 %v7289
          %v7419 = vunpack.c.l.b16 %v7290
          %v7420 = vunpack.c.l.b16 %v7291
          %v7421 = vunpack.c.l.b16 %v7292
          %v7422 = vpack.c.b16 %v7359, %v7358
          %v7423 = vpack.c.b16 %v7361, %v7360
          %v7424 = vpack.c.b16 %v7363, %v7362
          %v7425 = vpack.c.b16 %v7365, %v7364
          %v7426 = vpack.c.b16 %v7367, %v7366
          %v7427 = vpack.c.b16 %v7369, %v7368
          %v7428 = vpack.c.b16 %v7371, %v7370
          %v7429 = vpack.c.b16 %v7373, %v7372
          %v7430 = vpack.c.b16 %v7375, %v7374
          %v7431 = vpack.c.b16 %v7377, %v7376
          %v7432 = vpack.c.b16 %v7379, %v7378
          %v7433 = vpack.c.b16 %v7381, %v7380
          %v7434 = vpack.c.b16 %v7383, %v7382
          %v7435 = vpack.c.b16 %v7385, %v7384
          %v7436 = vpack.c.b16 %v7387, %v7386
          %v7437 = vpack.c.b16 %v7389, %v7388
          %v7438 = vpack.c.b16 %v7391, %v7390
          %v7439 = vpack.c.b16 %v7393, %v7392
          %v7440 = vpack.c.b16 %v7395, %v7394
          %v7441 = vpack.c.b16 %v7397, %v7396
          %v7442 = vpack.c.b16 %v7399, %v7398
          %v7443 = vpack.c.b16 %v7401, %v7400
          %v7444 = vpack.c.b16 %v7403, %v7402
          %v7445 = vpack.c.b16 %v7405, %v7404
          %v7446 = vpack.c.b16 %v7407, %v7406
          %v7447 = vpack.c.b16 %v7409, %v7408
          %v7448 = vpack.c.b16 %v7411, %v7410
          %v7449 = vpack.c.b16 %v7413, %v7412
          %v7450 = vpack.c.b16 %v7415, %v7414
          %v7451 = vpack.c.b16 %v7417, %v7416
          %v7452 = vpack.c.b16 %v7419, %v7418
          %v7453 = vpack.c.b16 %v7421, %v7420
          %7486 = vmatpush.bf16.msra.mxu0 %v7429
          %7487 = vmatpush.bf16.msra.mxu0 %v7428
          %7488 = vmatpush.bf16.msra.mxu0 %v7427
          %7489 = vmatpush.bf16.msra.mxu0 %v7426
          %7490 = vmatpush.bf16.msra.mxu0 %v7425
          %7491 = vmatpush.bf16.msra.mxu0 %v7424
          %7492 = vmatpush.bf16.msra.mxu0 %v7423
          %7493 = vmatpush.bf16.msra.mxu0 %v7422
          %7494 = vmatmul.bf16.gmra.mxu0 %v7225
          %v7495 = vpop.f32.mrf.mxu0
          %v7496 = vadd.f32 %v7293, %v7495
          %v7497 = vpop.f32.mrf.mxu0
          %7498 = vdwg.mxu0
          %7499 = vmatpush.bf16.msra.mxu0 %v7437
          %7500 = vmatpush.bf16.msra.mxu0 %v7436
          %7501 = vmatpush.bf16.msra.mxu0 %v7435
          %7502 = vmatpush.bf16.msra.mxu0 %v7434
          %7503 = vmatpush.bf16.msra.mxu0 %v7433
          %7504 = vmatpush.bf16.msra.mxu0 %v7432
          %7505 = vmatpush.bf16.msra.mxu0 %v7431
          %7506 = vmatpush.bf16.msra.mxu0 %v7430
          %7507 = vmatmul.bf16.gmra.mxu0 %v7226
          %v7508 = vpop.f32.mrf.mxu0
          %v7509 = vadd.f32 %v7496, %v7508
          %v7510 = vpop.f32.mrf.mxu0
          %7511 = vdwg.mxu0
          %7512 = vmatpush.bf16.msra.mxu0 %v7445
          %7513 = vmatpush.bf16.msra.mxu0 %v7444
          %7514 = vmatpush.bf16.msra.mxu0 %v7443
          %7515 = vmatpush.bf16.msra.mxu0 %v7442
          %7516 = vmatpush.bf16.msra.mxu0 %v7441
          %7517 = vmatpush.bf16.msra.mxu0 %v7440
          %7518 = vmatpush.bf16.msra.mxu0 %v7439
          %7519 = vmatpush.bf16.msra.mxu0 %v7438
          %7520 = vmatmul.bf16.gmra.mxu0 %v7227
          %v7521 = vpop.f32.mrf.mxu0
          %v7522 = vadd.f32 %v7509, %v7521
          %v7523 = vpop.f32.mrf.mxu0
          %7524 = vdwg.mxu0
          %7525 = vmatpush.bf16.msra.mxu0 %v7453
          %7526 = vmatpush.bf16.msra.mxu0 %v7452
          %7527 = vmatpush.bf16.msra.mxu0 %v7451
          %7528 = vmatpush.bf16.msra.mxu0 %v7450
          %7529 = vmatpush.bf16.msra.mxu0 %v7449
          %7530 = vmatpush.bf16.msra.mxu0 %v7448
          %7531 = vmatpush.bf16.msra.mxu0 %v7447
          %7532 = vmatpush.bf16.msra.mxu0 %v7446
          %7533 = vmatmul.bf16.gmra.mxu0 %v7228
          %v7534 = vpop.f32.mrf.mxu0
          %v7535 = vadd.f32 %v7522, %v7534
          %v7536 = vpop.f32.mrf.mxu0
          %7537 = vdwg.mxu0
          %vm7538 = vcmask 106496
          %7539 = vst.msk [vmem:[%s621] sm:$0x1] %vm7538, %v7535
        $region124: #{chess_piece_model_forward.1} parent=71 // pred_fallthru
          _
        %s7540 = sand.u32 %s333, 1
        %s7541 = scalar_lea.sflag [#allocation5], %s7540
        %s7542 = sand.u32 %s333, 1
        %s7543 = scalar_lea.vmem [#allocation21], %s7542
        // Predicated region
        $region125: #{chess_piece_model_forward.1} parent=71 // pred_check
          %p7544 = pneg %p343
        $region126: #{chess_piece_model_forward.1} parent=71 // pred_check_branch
          %7546 = sbr.rel (%p7544) target = $region128
        $region127: #{chess_piece_model_forward.1} parent=71 // pred_region
          %7548 = vsyncadd %s7541, 0
          %s7549 = scalar_lea.hbm %s13, %s37
          %s7551 = sshll.u32 %s7543, 4
          %s7552 = int_to_ptr.vmem [resolvable:$true] %s7551
          %s7553 = sshll.u32 %s7549, 4
          %s7554 = int_to_ptr.hbm [resolvable:$true] %s7553
          %7556 = dma.vmem_to_hbm [thread:$0]  %s7552, 16, %s7554, %s7541
        $region128: #{chess_piece_model_forward.1} parent=71 // pred_fallthru
          _
      $region72: #{chess_piece_model_forward.1} parent=5 // pred_fallthru
        _
      %p7557 = scmp.le.s32.totalorder 2, %s28
      // Predicated region
      $region129: #{chess_piece_model_forward.1} parent=5 // pred_check
        %p7558 = pneg %p7557
      $region130: #{chess_piece_model_forward.1} parent=5 // pred_check_branch
        %7560 = sbr.rel (%p7558) target = $region132
      $region131: #{chess_piece_model_forward.1} parent=5 // pred_region
        %s7561 = ssub.s32 %s28, 2
        // Predicated region
        $region133: #{chess_piece_model_forward.1} parent=131 // pred_check
          %p7562 = pneg %p349
        $region134: #{chess_piece_model_forward.1} parent=131 // pred_check_branch
          %7564 = sbr.rel (%p7562) target = $region136
        $region135: #{chess_piece_model_forward.1} parent=131 // pred_region
          %s7565 = sand.u32 %s334, 1
          %s7566 = scalar_lea.sflag [#allocation5], %s7565
          %s7567 = sand.u32 %s334, 1
          %s7568 = scalar_lea.vmem [#allocation21], %s7567
          %7570 = dma.done %s7566, 16
        $region136: #{chess_piece_model_forward.1} parent=131 // pred_fallthru
          _
      $region132: #{chess_piece_model_forward.1} parent=5 // pred_fallthru
        _
    $region6: #{chess_piece_model_forward.1} parent=1 // loop_footer
      %s32 = sadd.s32 1, %s28
    $region7: #{chess_piece_model_forward.1} parent=1 // loop_footer_branch
      %27 = sbr.rel target = $region3
    $region8: #{chess_piece_model_forward.1} parent=1 // loop_exit
      _
    %7571 = vsyncpa [#allocation4], 1
    %s7572 = scalar_lea.sflag [#allocation4], 1
    %7573 = vsyncpa %s7572, 1
    %7574 = vsyncpa [#allocation7], 1
    %7575 = vsyncpa [#allocation10], 1
    %7576 = vsyncpa [#allocation13], 1
    %7577 = vsyncpa [#allocation16], 1
    %7578 = vsyncpa [#allocation19], 1
    %7579 = vsyncpa [#allocation5], 1
    %s7580 = scalar_lea.sflag [#allocation5], 1
    %7581 = vsyncpa %s7580, 1

</llo_original>
